<compile_context>
chip_gen: v7x
topology: tpu7x:2x2x1
jax: 0.10.0
libtpu: 0.0.40
codegen_flags: <defaults>
</compile_context>

<pallas_src>
import math

import numpy as np
import jax
import jax.numpy as jnp
from jax.experimental import pallas as pl
from jax.experimental.pallas import tpu as pltpu

# ----------------------------- configuration ---------------------------------
BATCH = 2
NUM_CHANNELS = 4
EMBEDDING_SIZE = 32
NUM_GROUPS = 8
IMG = 16
CONV_K = 7
CONV_STRIDE = 2
POOL_K = 3
POOL_STRIDE = 2
EPS_WS = 1e-8   # weight-standardization eps (WeightStandardizedConv2d)
EPS_GN = 1e-5   # group-norm eps (BitGroupNormActivation)


def same_pad(size, k, s, d=1):
    """DynamicPad2d.compute_padding (TF 'SAME' style total padding)."""
    return max((math.ceil(size / s) - 1) * s + (k - 1) * d + 1 - size, 0)


# ------------------------------ fused Pallas kernel ----------------------------
def bit_stem_kernel(p_ref, w_ref, ra_ref, ga_ref, sel_ref, gamma_ref, beta_ref, o_ref):
    # p_ref     : (B*S, CKK)      im2col patches of the whole batch (S = conv OH*OW)
    # w_ref     : (COUT, CKK)     raw conv weight flattened in (cin, kh, kw) order
    # ra_ref    : (B*S, B*S)      per-sample row-average matrix (1/S inside a sample)
    # ga_ref    : (COUT, COUT)    per-group channel-average matrix (1/cpg inside a group)
    # sel_ref   : (9*B*OP, B*S)   stacked 0/1 pool-window selection matrices (OP = pooled OH*OW)
    # gamma_ref : (1, COUT)       GroupNorm weight
    # beta_ref  : (1, COUT)       GroupNorm bias
    # o_ref     : (B*OP, COUT)    pooled output, batch-major rows
    f32 = jnp.float32
    # Full f32 MXU passes keep parity with the PyTorch module within 1e-3.
    # TODO(synk): at larger sizes feed bf16 operands to the MXU with f32 accumulation (v6e/v7x).
    prec = jax.lax.Precision.HIGHEST

    # --- WeightStandardizedConv2d: standardize weight over fan-in (biased var), once per batch ---
    w = w_ref[...]                                                     # (COUT, CKK)
    wm = jnp.mean(w, axis=1, keepdims=True)
    wv = jnp.mean((w - wm) ** 2, axis=1, keepdims=True)
    w_std = (w - wm) * jax.lax.rsqrt(wv + EPS_WS)

    # --- conv as a single batched im2col matmul; contract CKK of both (no transpose) ---
    x = jax.lax.dot_general(p_ref[...], w_std, (((1,), (1,)), ((), ())),
                            precision=prec, preferred_element_type=f32)   # (B*S, COUT)

    # --- GroupNorm (two-pass, vectorized via constant averaging matmuls) + ReLU ---
    ra = ra_ref[...]                                                   # (B*S, B*S)
    ga = ga_ref[...]                                                   # (COUT, COUT)
    # (ra @ x) broadcasts each sample's spatial mean to all of its rows; @ ga then
    # averages within each channel group -> full (sample, group) GroupNorm mean,
    # already broadcast to (B*S, COUT).
    mean = jnp.dot(jnp.dot(ra, x, precision=prec, preferred_element_type=f32),
                   ga, precision=prec, preferred_element_type=f32)
    xc = x - mean
    var = jnp.dot(jnp.dot(ra, xc * xc, precision=prec, preferred_element_type=f32),
                  ga, precision=prec, preferred_element_type=f32)      # biased group variance
    y = xc * jax.lax.rsqrt(var + EPS_GN) * gamma_ref[...] + beta_ref[...]
    y = jnp.maximum(y, 0.0)                                            # hidden_act = relu, (B*S, COUT)

    # --- BitMaxPool2d 3x3 / stride 2 with dynamic zero pad, via 0/1 selection matmul ---
    # Each selector row picks one input position of one 3x3 window of one sample
    # (block-diagonal across the batch); all-zero rows correspond to padded
    # positions and contribute exactly 0 (== pad value).  Selection matmuls are
    # numerically exact at any MXU precision.
    gathered = jnp.dot(sel_ref[...], y, preferred_element_type=f32)    # (9*B*OP, COUT)
    n_win = POOL_K * POOL_K
    bp, cout = o_ref.shape
    o_ref[...] = jnp.max(gathered.reshape(n_win, bp, cout), axis=0)    # (B*OP, COUT)


# ------------------------------ JAX glue / wrappers ----------------------------
def _im2col(x_nhwc, kh, kw, stride):
    # Patch feature order (cin, kh, kw) matches torch weight.reshape(Cout, -1).
    n, h, w, c = x_nhwc.shape
    oh = (h - kh) // stride + 1
    ow = (w - kw) // stride + 1
    rows = []
    for i in range(kh):
        cols = []
        for j in range(kw):
            cols.append(x_nhwc[:, i:i + stride * (oh - 1) + 1:stride,
                                  j:j + stride * (ow - 1) + 1:stride, :])   # (n, oh, ow, c)
        rows.append(jnp.stack(cols, axis=-1))                               # (n, oh, ow, c, kw)
    patches = jnp.stack(rows, axis=-2)                                      # (n, oh, ow, c, kh, kw)
    return patches.reshape(n, oh * ow, c * kh * kw), oh, ow


def _sample_mean_matrix(b, s):
    # M[i, j] = 1/s if rows i and j belong to the same sample (rows are b*s batch-major).
    m = np.zeros((b * s, b * s), np.float32)
    for bb in range(b):
        m[bb * s:(bb + 1) * s, bb * s:(bb + 1) * s] = 1.0 / s
    return jnp.asarray(m)


def _group_avg_matrix(c, groups):
    # A[c', c] = 1/cpg if channels c' and c are in the same group.
    cpg = c // groups
    a = np.zeros((c, c), np.float32)
    for g in range(groups):
        a[g * cpg:(g + 1) * cpg, g * cpg:(g + 1) * cpg] = 1.0 / cpg
    return jnp.asarray(a)


def _pool_selectors_batched(b, ih, iw, k, stride, pad_top, pad_left, oh, ow):
    # 0/1 matrices gathering each (di, dj) offset of every pool window of every
    # sample.  Row index = d*(b*op) + sample*op + out_pos, column = sample*s + in_pos.
    op = oh * ow
    s = ih * iw
    sel = np.zeros((k * k, b, op, b, s), np.float32)
    for di in range(k):
        for dj in range(k):
            d = di * k + dj
            for bb in range(b):
                for r in range(oh):
                    for q in range(ow):
                        ii = stride * r + di - pad_top
                        jj = stride * q + dj - pad_left
                        if 0 <= ii < ih and 0 <= jj < iw:     # out-of-range -> zero row == zero pad
                            sel[d, bb, r * ow + q, bb, ii * iw + jj] = 1.0
    return jnp.asarray(sel.reshape(k * k * b * op, b * s))


@jax.jit
def bit_embeddings_forward(pixel_values_nchw, conv_w, gn_w, gn_b):
    n, c_in, h, w = pixel_values_nchw.shape
    assert c_in == NUM_CHANNELS
    x = jnp.transpose(pixel_values_nchw, (0, 2, 3, 1))                 # NCHW -> NHWC

    # WeightStandardizedConv2d dynamic 'SAME' pad (DynamicPad2d) -> VALID conv.
    ph = same_pad(h, CONV_K, CONV_STRIDE)
    pw = same_pad(w, CONV_K, CONV_STRIDE)
    x = jnp.pad(x, ((0, 0), (ph // 2, ph - ph // 2), (pw // 2, pw - pw // 2), (0, 0)))

    patches, oh_c, ow_c = _im2col(x, CONV_K, CONV_K, CONV_STRIDE)      # (N, S, CKK)
    s_conv = oh_c * ow_c
    cout = conv_w.shape[0]
    ckk = conv_w.shape[1] * conv_w.shape[2] * conv_w.shape[3]
    patches_flat = patches.reshape(n * s_conv, ckk)                    # batch stacked on matmul M dim
    w2 = conv_w.reshape(cout, ckk)

    # BitMaxPool2d geometry (dynamic zero padding).
    pph = same_pad(oh_c, POOL_K, POOL_STRIDE)
    ppw = same_pad(ow_c, POOL_K, POOL_STRIDE)
    oh_p = (oh_c + pph - POOL_K) // POOL_STRIDE + 1
    ow_p = (ow_c + ppw - POOL_K) // POOL_STRIDE + 1
    s_pool = oh_p * ow_p

    ra = _sample_mean_matrix(n, s_conv)                                # (N*S, N*S)
    ga = _group_avg_matrix(cout, NUM_GROUPS)                           # (Cout, Cout)
    sel = _pool_selectors_batched(n, oh_c, ow_c, POOL_K, POOL_STRIDE,
                                  pph // 2, ppw // 2, oh_p, ow_p)      # (9*N*s_pool, N*s_conv)

    out = pl.pallas_call(
        bit_stem_kernel,
        out_shape=jax.ShapeDtypeStruct((n * s_pool, cout), jnp.float32),
        grid=(1,),                                                     # whole batch in one step
        in_specs=[
            pl.BlockSpec((n * s_conv, ckk), lambda i: (0, 0)),         # im2col patches (whole batch)
            pl.BlockSpec((cout, ckk), lambda i: (0, 0)),               # conv weight
            pl.BlockSpec((n * s_conv, n * s_conv), lambda i: (0, 0)),  # per-sample row-average matrix
            pl.BlockSpec((cout, cout), lambda i: (0, 0)),              # per-group channel-average matrix
            pl.BlockSpec((POOL_K * POOL_K * n * s_pool, n * s_conv), lambda i: (0, 0)),  # pool selectors
            pl.BlockSpec((1, cout), lambda i: (0, 0)),                 # GN gamma
            pl.BlockSpec((1, cout), lambda i: (0, 0)),                 # GN beta
        ],
        out_specs=pl.BlockSpec((n * s_pool, cout), lambda i: (0, 0)),
        compiler_params=pltpu.CompilerParams(
            dimension_semantics=("arbitrary",)),
    )(patches_flat, w2, ra, ga, sel, gn_w.reshape(1, cout), gn_b.reshape(1, cout))

    out = out.reshape(n, oh_p, ow_p, cout)                             # (N, OHp, OWp, C)
    return jnp.transpose(out, (0, 3, 1, 2))                            # NHWC -> NCHW


# ------------------------------ pure-JAX reference ----------------------------
def reference_forward(x_nchw, conv_w, gn_w, gn_b):
    cout = conv_w.shape[0]
    w2 = conv_w.reshape(cout, -1)
    m = jnp.mean(w2, axis=1, keepdims=True)
    v = jnp.mean((w2 - m) ** 2, axis=1, keepdims=True)
    w_std = ((w2 - m) / jnp.sqrt(v + EPS_WS)).reshape(conv_w.shape)

    h, w = x_nchw.shape[2], x_nchw.shape[3]
    ph, pw = same_pad(h, CONV_K, CONV_STRIDE), same_pad(w, CONV_K, CONV_STRIDE)
    xp = jnp.pad(x_nchw, ((0, 0), (0, 0), (ph // 2, ph - ph // 2), (pw // 2, pw - pw // 2)))
    conv = jax.lax.conv_general_dilated(
        xp, w_std, (CONV_STRIDE, CONV_STRIDE), 'VALID',
        dimension_numbers=('NCHW', 'OIHW', 'NCHW'),
        precision=jax.lax.Precision.HIGHEST)

    n, c, hc, wc = conv.shape
    xg = conv.reshape(n, NUM_GROUPS, c // NUM_GROUPS, hc, wc)
    gm = jnp.mean(xg, axis=(2, 3, 4), keepdims=True)
    gv = jnp.mean((xg - gm) ** 2, axis=(2, 3, 4), keepdims=True)
    yn = ((xg - gm) / jnp.sqrt(gv + EPS_GN)).reshape(n, c, hc, wc)
    y = jnp.maximum(yn * gn_w[None, :, None, None] + gn_b[None, :, None, None], 0.0)

    pph, ppw = same_pad(hc, POOL_K, POOL_STRIDE), same_pad(wc, POOL_K, POOL_STRIDE)
    yp = jnp.pad(y, ((0, 0), (0, 0), (pph // 2, pph - pph // 2), (ppw // 2, ppw - ppw // 2)))
    return jax.lax.reduce_window(yp, -jnp.inf, jax.lax.max,
                                 (1, 1, POOL_K, POOL_K), (1, 1, POOL_STRIDE, POOL_STRIDE),
                                 'VALID')


# ------------------------------------ main -------------------------------------
if __name__ == "__main__":
    key = jax.random.PRNGKey(0)
    k1, k2, k3, k4 = jax.random.split(key, 4)
    pixel_values = jax.random.normal(k1, (BATCH, NUM_CHANNELS, IMG, IMG), jnp.float32)
    conv_w = 0.1 * jax.random.normal(k2, (EMBEDDING_SIZE, NUM_CHANNELS, CONV_K, CONV_K), jnp.float32)
    gn_w = 1.0 + 0.1 * jax.random.normal(k3, (EMBEDDING_SIZE,), jnp.float32)
    gn_b = 0.1 * jax.random.normal(k4, (EMBEDDING_SIZE,), jnp.float32)

    out = jax.block_until_ready(bit_embeddings_forward(pixel_values, conv_w, gn_w, gn_b))
    ref = jax.block_until_ready(reference_forward(pixel_values, conv_w, gn_w, gn_b))

    assert out.shape == (BATCH, EMBEDDING_SIZE, 4, 4), out.shape
    assert jnp.allclose(out, ref, atol=1e-3, rtol=1e-3), float(jnp.max(jnp.abs(out - ref)))
    print("KERNEL_OK")
</pallas_src>

<mosaic_0001>
module attributes {stable_mosaic.version = 11 : i64} {
  func.func @bit_stem_kernel(%arg0: i32, %arg1: memref<128x196xf32, #tpu.memory_space<vmem>>, %arg2: memref<32x196xf32, #tpu.memory_space<vmem>>, %arg3: memref<128x128xf32, #tpu.memory_space<vmem>>, %arg4: memref<32x32xf32, #tpu.memory_space<vmem>>, %arg5: memref<288x128xf32, #tpu.memory_space<vmem>>, %arg6: memref<1x32xf32, #tpu.memory_space<vmem>>, %arg7: memref<1x32xf32, #tpu.memory_space<vmem>>, %arg8: memref<32x32xf32, #tpu.memory_space<vmem>>) attributes {dimension_semantics = [#tpu.dimension_semantics<arbitrary>], iteration_bounds = array<i64: 1>, scalar_prefetch = 0 : i64, scratch_operands = 0 : i64, tpu.core_type = #tpu.core_type<tc>, window_params = [{pipeline_mode = #tpu.pipeline_mode<synchronous>, transform_indices = @transform_0, window_bounds = array<i64: 128, 196>}, {pipeline_mode = #tpu.pipeline_mode<synchronous>, transform_indices = @transform_1, window_bounds = array<i64: 32, 196>}, {pipeline_mode = #tpu.pipeline_mode<synchronous>, transform_indices = @transform_2, window_bounds = array<i64: 128, 128>}, {pipeline_mode = #tpu.pipeline_mode<synchronous>, transform_indices = @transform_3, window_bounds = array<i64: 32, 32>}, {pipeline_mode = #tpu.pipeline_mode<synchronous>, transform_indices = @transform_4, window_bounds = array<i64: 288, 128>}, {pipeline_mode = #tpu.pipeline_mode<synchronous>, transform_indices = @transform_5, window_bounds = array<i64: 1, 32>}, {pipeline_mode = #tpu.pipeline_mode<synchronous>, transform_indices = @transform_6, window_bounds = array<i64: 1, 32>}, {pipeline_mode = #tpu.pipeline_mode<synchronous>, transform_indices = @transform_7, window_bounds = array<i64: 32, 32>}]} {
    %c0 = arith.constant 0 : index
    %c0_0 = arith.constant 0 : index
    %0 = vector.load %arg2[%c0, %c0_0] : memref<32x196xf32, #tpu.memory_space<vmem>>, vector<32x196xf32>
    %cst = arith.constant dense<0.000000e+00> : vector<32xf32>
    %1 = vector.multi_reduction <add>, %0, %cst [1] : vector<32x196xf32> to vector<32xf32>
    %2 = vector.shape_cast %1 : vector<32xf32> to vector<32x1xf32>
    %cst_1 = arith.constant 1.960000e+02 : f32
    %3 = vector.broadcast %cst_1 : f32 to vector<32x1xf32>
    %4 = arith.divf %2, %3 : vector<32x1xf32>
    %5 = vector.broadcast %4 : vector<32x1xf32> to vector<32x196xf32>
    %6 = arith.subf %0, %5 : vector<32x196xf32>
    %7 = arith.mulf %6, %6 : vector<32x196xf32>
    %cst_2 = arith.constant dense<0.000000e+00> : vector<32xf32>
    %8 = vector.multi_reduction <add>, %7, %cst_2 [1] : vector<32x196xf32> to vector<32xf32>
    %9 = vector.shape_cast %8 : vector<32xf32> to vector<32x1xf32>
    %cst_3 = arith.constant 1.960000e+02 : f32
    %10 = vector.broadcast %cst_3 : f32 to vector<32x1xf32>
    %11 = arith.divf %9, %10 : vector<32x1xf32>
    %12 = vector.broadcast %4 : vector<32x1xf32> to vector<32x196xf32>
    %13 = arith.subf %0, %12 : vector<32x196xf32>
    %cst_4 = arith.constant 9.99999993E-9 : f32
    %14 = vector.broadcast %cst_4 : f32 to vector<32x1xf32>
    %15 = arith.addf %11, %14 : vector<32x1xf32>
    %16 = math.rsqrt %15 : vector<32x1xf32>
    %17 = vector.broadcast %16 : vector<32x1xf32> to vector<32x196xf32>
    %18 = arith.mulf %13, %17 : vector<32x196xf32>
    %c0_5 = arith.constant 0 : index
    %c0_6 = arith.constant 0 : index
    %19 = vector.load %arg1[%c0_5, %c0_6] : memref<128x196xf32, #tpu.memory_space<vmem>>, vector<128x196xf32>
    %cst_7 = arith.constant dense<0.000000e+00> : vector<128x32xf32>
    %20 = tpu.matmul %19, %18, %cst_7 {dimension_numbers = #tpu.dot_dimension_numbers<[1], [1], [0], [0], [0, 0, 1, 0], [], []>, precision = #tpu.contract_precision<fp32>} : vector<128x196xf32>, vector<32x196xf32>, vector<128x32xf32> -> vector<128x32xf32>
    %c0_8 = arith.constant 0 : index
    %c0_9 = arith.constant 0 : index
    %21 = vector.load %arg3[%c0_8, %c0_9] : memref<128x128xf32, #tpu.memory_space<vmem>>, vector<128x128xf32>
    %c0_10 = arith.constant 0 : index
    %c0_11 = arith.constant 0 : index
    %22 = vector.load %arg4[%c0_10, %c0_11] : memref<32x32xf32, #tpu.memory_space<vmem>>, vector<32x32xf32>
    %cst_12 = arith.constant dense<0.000000e+00> : vector<128x32xf32>
    %23 = tpu.matmul %21, %20, %cst_12 {dimension_numbers = #tpu.dot_dimension_numbers<[1], [0], [0], [1], [0, 0, 1, 1], [], []>, precision = #tpu.contract_precision<fp32>} : vector<128x128xf32>, vector<128x32xf32>, vector<128x32xf32> -> vector<128x32xf32>
    %cst_13 = arith.constant dense<0.000000e+00> : vector<128x32xf32>
    %24 = tpu.matmul %23, %22, %cst_13 {dimension_numbers = #tpu.dot_dimension_numbers<[1], [0], [0], [1], [0, 0, 1, 1], [], []>, precision = #tpu.contract_precision<fp32>} : vector<128x32xf32>, vector<32x32xf32>, vector<128x32xf32> -> vector<128x32xf32>
    %25 = arith.subf %20, %24 : vector<128x32xf32>
    %26 = arith.mulf %25, %25 : vector<128x32xf32>
    %cst_14 = arith.constant dense<0.000000e+00> : vector<128x32xf32>
    %27 = tpu.matmul %21, %26, %cst_14 {dimension_numbers = #tpu.dot_dimension_numbers<[1], [0], [0], [1], [0, 0, 1, 1], [], []>, precision = #tpu.contract_precision<fp32>} : vector<128x128xf32>, vector<128x32xf32>, vector<128x32xf32> -> vector<128x32xf32>
    %cst_15 = arith.constant dense<0.000000e+00> : vector<128x32xf32>
    %28 = tpu.matmul %27, %22, %cst_15 {dimension_numbers = #tpu.dot_dimension_numbers<[1], [0], [0], [1], [0, 0, 1, 1], [], []>, precision = #tpu.contract_precision<fp32>} : vector<128x32xf32>, vector<32x32xf32>, vector<128x32xf32> -> vector<128x32xf32>
    %cst_16 = arith.constant 9.99999974E-6 : f32
    %29 = vector.broadcast %cst_16 : f32 to vector<128x32xf32>
    %30 = arith.addf %28, %29 : vector<128x32xf32>
    %31 = math.rsqrt %30 : vector<128x32xf32>
    %32 = arith.mulf %25, %31 : vector<128x32xf32>
    %c0_17 = arith.constant 0 : index
    %c0_18 = arith.constant 0 : index
    %33 = vector.load %arg6[%c0_17, %c0_18] : memref<1x32xf32, #tpu.memory_space<vmem>>, vector<1x32xf32>
    %34 = vector.broadcast %33 : vector<1x32xf32> to vector<128x32xf32>
    %35 = arith.mulf %32, %34 : vector<128x32xf32>
    %c0_19 = arith.constant 0 : index
    %c0_20 = arith.constant 0 : index
    %36 = vector.load %arg7[%c0_19, %c0_20] : memref<1x32xf32, #tpu.memory_space<vmem>>, vector<1x32xf32>
    %37 = vector.broadcast %36 : vector<1x32xf32> to vector<128x32xf32>
    %38 = arith.addf %35, %37 : vector<128x32xf32>
    %cst_21 = arith.constant 0.000000e+00 : f32
    %39 = vector.broadcast %cst_21 : f32 to vector<128x32xf32>
    %40 = arith.maximumf %38, %39 : vector<128x32xf32>
    %c0_22 = arith.constant 0 : index
    %c0_23 = arith.constant 0 : index
    %41 = vector.load %arg5[%c0_22, %c0_23] : memref<288x128xf32, #tpu.memory_space<vmem>>, vector<288x128xf32>
    %cst_24 = arith.constant dense<0.000000e+00> : vector<288x32xf32>
    %42 = tpu.matmul %41, %40, %cst_24 {dimension_numbers = #tpu.dot_dimension_numbers<[1], [0], [0], [1], [0, 0, 1, 1], [], []>} : vector<288x128xf32>, vector<128x32xf32>, vector<288x32xf32> -> vector<288x32xf32>
    %43 = vector.shape_cast %42 : vector<288x32xf32> to vector<9x32x32xf32>
    %cst_25 = arith.constant dense<0xFF800000> : vector<32x32xf32>
    %44 = vector.multi_reduction <maximumf>, %43, %cst_25 [0] : vector<9x32x32xf32> to vector<32x32xf32>
    %c0_26 = arith.constant 0 : index
    %c0_27 = arith.constant 0 : index
    %45 = vector.load %arg8[%c0_26, %c0_27] : memref<32x32xf32, #tpu.memory_space<vmem>>, vector<32x32xf32>
    tpu.vector_store %arg8[%c0_26, %c0_27], %44 {strides = array<i32>} : memref<32x32xf32, #tpu.memory_space<vmem>>, vector<32x32xf32>,
    return
  }
  func.func @transform_0(%arg0: i32) -> (i32, i32) {
    %c0_i32 = arith.constant 0 : i32
    %c0_i32_0 = arith.constant 0 : i32
    %c0_i32_1 = arith.constant 0 : i32
    return %c0_i32, %c0_i32_0 : i32, i32
  }
  func.func @transform_1(%arg0: i32) -> (i32, i32) {
    %c0_i32 = arith.constant 0 : i32
    %c0_i32_0 = arith.constant 0 : i32
    %c0_i32_1 = arith.constant 0 : i32
    return %c0_i32, %c0_i32_0 : i32, i32
  }
  func.func @transform_2(%arg0: i32) -> (i32, i32) {
    %c0_i32 = arith.constant 0 : i32
    %c0_i32_0 = arith.constant 0 : i32
    %c0_i32_1 = arith.constant 0 : i32
    return %c0_i32, %c0_i32_0 : i32, i32
  }
  func.func @transform_3(%arg0: i32) -> (i32, i32) {
    %c0_i32 = arith.constant 0 : i32
    %c0_i32_0 = arith.constant 0 : i32
    %c0_i32_1 = arith.constant 0 : i32
    return %c0_i32, %c0_i32_0 : i32, i32
  }
  func.func @transform_4(%arg0: i32) -> (i32, i32) {
    %c0_i32 = arith.constant 0 : i32
    %c0_i32_0 = arith.constant 0 : i32
    %c0_i32_1 = arith.constant 0 : i32
    return %c0_i32, %c0_i32_0 : i32, i32
  }
  func.func @transform_5(%arg0: i32) -> (i32, i32) {
    %c0_i32 = arith.constant 0 : i32
    %c0_i32_0 = arith.constant 0 : i32
    %c0_i32_1 = arith.constant 0 : i32
    return %c0_i32, %c0_i32_0 : i32, i32
  }
  func.func @transform_6(%arg0: i32) -> (i32, i32) {
    %c0_i32 = arith.constant 0 : i32
    %c0_i32_0 = arith.constant 0 : i32
    %c0_i32_1 = arith.constant 0 : i32
    return %c0_i32, %c0_i32_0 : i32, i32
  }
  func.func @transform_7(%arg0: i32) -> (i32, i32) {
    %c0_i32 = arith.constant 0 : i32
    %c0_i32_0 = arith.constant 0 : i32
    %c0_i32_1 = arith.constant 0 : i32
    return %c0_i32, %c0_i32_0 : i32, i32
  }
}

</mosaic_0001>

<llo_original>
// kernel: bit_embeddings_forward.1
$region0: #{bit_embeddings_forward.1}
  #allocation0 [shape = 'u32[]', space=smem, size = 0x4, offset = 0x4, fixed_abs, tag = 'smem constant byte address 0x4 - core index']
  #allocation1 [shape = 'u32[144,128]{1,0:T(1,128)}', space=vmem, size = 0x12000, scoped, tag = 'internal scratch']
  %s0 = inlined_call_operand.vmem [shape: f32[128,196], index: 0, kind: input, shape index: {}]
  %s1 = inlined_call_operand.vmem [shape: f32[32,196], index: 1, kind: input, shape index: {}]
  %s2 = inlined_call_operand.vmem [shape: f32[128,128], index: 2, kind: input, shape index: {}]
  %s3 = inlined_call_operand.vmem [shape: f32[32,32], index: 3, kind: input, shape index: {}]
  %s4 = inlined_call_operand.vmem [shape: f32[288,128], index: 4, kind: input, shape index: {}]
  %s5 = inlined_call_operand.vmem [shape: f32[1,32], index: 5, kind: input, shape index: {}]
  %s6 = inlined_call_operand.vmem [shape: f32[1,32], index: 6, kind: input, shape index: {}]
  %s7 = inlined_call_operand.hbm [shape: f32[32,32], index: 7, kind: output, shape index: {}]
  %s8 = sld [smem:[#allocation0]]
  $region38: #{bit_embeddings_forward.1} parent=0
    _
  %s10 = ssub.s32 1, %s8
  %s11 = scalar_select 0, %s10, %s8
  $region1: #{bit_embeddings_forward.1} parent=0
    #allocation2 [shape = 'u8[16384]{0}', space=vmem, size = 0x4000, scoped, tag = 'output window, operand 0, single buffered']
    #allocation3 [shape = 's32[1]{0}', space=sflag, size = 0x4, scoped, tag = 'scoped memory for bit_embeddings_forward.1']
    %12 = vsyncpa [#allocation3], 0
    // Predicated region
    $region2: #{bit_embeddings_forward.1} parent=1 // pred_check
      _
    $region3: #{bit_embeddings_forward.1} parent=1 // pred_check_branch
      %14 = sbr.rel (0) target = $region5
    $region4: #{bit_embeddings_forward.1} parent=1 // pred_region
      _
    $region5: #{bit_embeddings_forward.1} parent=1 // pred_fallthru
      _
    // Predicated region
    $region6: #{bit_embeddings_forward.1} parent=1 // pred_check
      _
    $region7: #{bit_embeddings_forward.1} parent=1 // pred_check_branch
      %16 = sbr.rel (0) target = $region9
    $region8: #{bit_embeddings_forward.1} parent=1 // pred_region
      _
    $region9: #{bit_embeddings_forward.1} parent=1 // pred_fallthru
      _
    // Predicated region
    $region10: #{bit_embeddings_forward.1} parent=1 // pred_check
      _
    $region11: #{bit_embeddings_forward.1} parent=1 // pred_check_branch
      %18 = sbr.rel (0) target = $region13
    $region12: #{bit_embeddings_forward.1} parent=1 // pred_region
      _
    $region13: #{bit_embeddings_forward.1} parent=1 // pred_fallthru
      _
    // Predicated region
    $region14: #{bit_embeddings_forward.1} parent=1 // pred_check
      _
    $region15: #{bit_embeddings_forward.1} parent=1 // pred_check_branch
      %20 = sbr.rel (0) target = $region17
    $region16: #{bit_embeddings_forward.1} parent=1 // pred_region
      _
    $region17: #{bit_embeddings_forward.1} parent=1 // pred_fallthru
      _
    // Predicated region
    $region18: #{bit_embeddings_forward.1} parent=1 // pred_check
      _
    $region19: #{bit_embeddings_forward.1} parent=1 // pred_check_branch
      %22 = sbr.rel (0) target = $region21
    $region20: #{bit_embeddings_forward.1} parent=1 // pred_region
      _
    $region21: #{bit_embeddings_forward.1} parent=1 // pred_fallthru
      _
    // Predicated region
    $region22: #{bit_embeddings_forward.1} parent=1 // pred_check
      _
    $region23: #{bit_embeddings_forward.1} parent=1 // pred_check_branch
      %24 = sbr.rel (0) target = $region25
    $region24: #{bit_embeddings_forward.1} parent=1 // pred_region
      _
    $region25: #{bit_embeddings_forward.1} parent=1 // pred_fallthru
      _
    // Predicated region
    $region26: #{bit_embeddings_forward.1} parent=1 // pred_check
      _
    $region27: #{bit_embeddings_forward.1} parent=1 // pred_check_branch
      %26 = sbr.rel (0) target = $region29
    $region28: #{bit_embeddings_forward.1} parent=1 // pred_region
      _
    $region29: #{bit_embeddings_forward.1} parent=1 // pred_fallthru
      _
    %v27 = vld [vmem:[%s1] sm:$0xff]
    %v28 = vld [vmem:[%s1 + $0x8] sm:$0xff]
    %v29 = vld [vmem:[%s1 + $0x10] sm:$0xff]
    %v30 = vld [vmem:[%s1 + $0x18] sm:$0xff]
    %v31 = vld [vmem:[%s1 + $0x20] sm:$0xff]
    %v32 = vld [vmem:[%s1 + $0x28] sm:$0xff]
    %v33 = vld [vmem:[%s1 + $0x30] sm:$0xff]
    %v34 = vld [vmem:[%s1 + $0x38] sm:$0xff]
    %vm35 = vcmask 556032
    %v36 = vsel %vm35, %v28, 0.0
    %v37 = vadd.f32 %v27, %v36
    %38 = vadd.xlane.f32.xlu0 %v37
    %v39 = vpop.xlane.xlu0 %38
    %v40 = vsel %vm35, %v30, 0.0
    %v41 = vadd.f32 %v29, %v40
    %42 = vadd.xlane.f32.xlu0 %v41
    %v43 = vpop.xlane.xlu0 %42
    %v44 = vsel %vm35, %v32, 0.0
    %v45 = vadd.f32 %v31, %v44
    %46 = vadd.xlane.f32.xlu0 %v45
    %v47 = vpop.xlane.xlu0 %46
    %v48 = vsel %vm35, %v34, 0.0
    %v49 = vadd.f32 %v33, %v48
    %50 = vadd.xlane.f32.xlu0 %v49
    %v51 = vpop.xlane.xlu0 %50
    %v52 = vrcp.pop 196.0
    %v53 = vmul.f32 %v39, %v52
    %v54 = vmul.f32 %v43, %v52
    %v55 = vmul.f32 %v47, %v52
    %v56 = vmul.f32 %v51, %v52
    %v57 = vsub.f32 %v27, %v53
    %v58 = vsub.f32 %v28, %v53
    %v59 = vsub.f32 %v29, %v54
    %v60 = vsub.f32 %v30, %v54
    %v61 = vsub.f32 %v31, %v55
    %v62 = vsub.f32 %v32, %v55
    %v63 = vsub.f32 %v33, %v56
    %v64 = vsub.f32 %v34, %v56
    %v65 = vmul.f32 %v57, %v57
    %v66 = vmul.f32 %v58, %v58
    %v67 = vmul.f32 %v59, %v59
    %v68 = vmul.f32 %v60, %v60
    %v69 = vmul.f32 %v61, %v61
    %v70 = vmul.f32 %v62, %v62
    %v71 = vmul.f32 %v63, %v63
    %v72 = vmul.f32 %v64, %v64
    %v73 = vsel %vm35, %v66, 0.0
    %v74 = vadd.f32 %v65, %v73
    %75 = vadd.xlane.f32.xlu0 %v74
    %v76 = vpop.xlane.xlu0 %75
    %v77 = vsel %vm35, %v68, 0.0
    %v78 = vadd.f32 %v67, %v77
    %79 = vadd.xlane.f32.xlu0 %v78
    %v80 = vpop.xlane.xlu0 %79
    %v81 = vsel %vm35, %v70, 0.0
    %v82 = vadd.f32 %v69, %v81
    %83 = vadd.xlane.f32.xlu0 %v82
    %v84 = vpop.xlane.xlu0 %83
    %v85 = vsel %vm35, %v72, 0.0
    %v86 = vadd.f32 %v71, %v85
    %87 = vadd.xlane.f32.xlu0 %v86
    %v88 = vpop.xlane.xlu0 %87
    %v89 = vmul.f32 %v76, %v52
    %v90 = vmul.f32 %v80, %v52
    %v91 = vmul.f32 %v84, %v52
    %v92 = vmul.f32 %v88, %v52
    %v93 = vadd.f32 %v89, 1e-08
    %v94 = vadd.f32 %v90, 1e-08
    %v95 = vadd.f32 %v91, 1e-08
    %v96 = vadd.f32 %v92, 1e-08
    %v97 = vrsqrt.pop %v93
    %v98 = vrsqrt.pop %v94
    %v99 = vrsqrt.pop %v95
    %v100 = vrsqrt.pop %v96
    %v101 = vmul.f32 %v57, %v97
    %v102 = vmul.f32 %v58, %v97
    %v103 = vmul.f32 %v59, %v98
    %v104 = vmul.f32 %v60, %v98
    %v105 = vmul.f32 %v61, %v99
    %v106 = vmul.f32 %v62, %v99
    %v107 = vmul.f32 %v63, %v100
    %v108 = vmul.f32 %v64, %v100
    %v109 = vld [vmem:[%s0] sm:$0xff]
    %v110 = vld [vmem:[%s0 + $0x8] sm:$0xff]
    %v111 = vld [vmem:[%s0 + $0x10] sm:$0xff]
    %v112 = vld [vmem:[%s0 + $0x18] sm:$0xff]
    %v113 = vld [vmem:[%s0 + $0x20] sm:$0xff]
    %v114 = vld [vmem:[%s0 + $0x28] sm:$0xff]
    %v115 = vld [vmem:[%s0 + $0x30] sm:$0xff]
    %v116 = vld [vmem:[%s0 + $0x38] sm:$0xff]
    %v117 = vld [vmem:[%s0 + $0x40] sm:$0xff]
    %v118 = vld [vmem:[%s0 + $0x48] sm:$0xff]
    %v119 = vld [vmem:[%s0 + $0x50] sm:$0xff]
    %v120 = vld [vmem:[%s0 + $0x58] sm:$0xff]
    %v121 = vld [vmem:[%s0 + $0x60] sm:$0xff]
    %v122 = vld [vmem:[%s0 + $0x68] sm:$0xff]
    %v123 = vld [vmem:[%s0 + $0x70] sm:$0xff]
    %v124 = vld [vmem:[%s0 + $0x78] sm:$0xff]
    %v125 = vld [vmem:[%s0 + $0x80] sm:$0xff]
    %v126 = vld [vmem:[%s0 + $0x88] sm:$0xff]
    %v127 = vld [vmem:[%s0 + $0x90] sm:$0xff]
    %v128 = vld [vmem:[%s0 + $0x98] sm:$0xff]
    %v129 = vld [vmem:[%s0 + $0xa0] sm:$0xff]
    %v130 = vld [vmem:[%s0 + $0xa8] sm:$0xff]
    %v131 = vld [vmem:[%s0 + $0xb0] sm:$0xff]
    %v132 = vld [vmem:[%s0 + $0xb8] sm:$0xff]
    %v133 = vld [vmem:[%s0 + $0xc0] sm:$0xff]
    %v134 = vld [vmem:[%s0 + $0xc8] sm:$0xff]
    %v135 = vld [vmem:[%s0 + $0xd0] sm:$0xff]
    %v136 = vld [vmem:[%s0 + $0xd8] sm:$0xff]
    %v137 = vld [vmem:[%s0 + $0xe0] sm:$0xff]
    %v138 = vld [vmem:[%s0 + $0xe8] sm:$0xff]
    %v139 = vld [vmem:[%s0 + $0xf0] sm:$0xff]
    %v140 = vld [vmem:[%s0 + $0xf8] sm:$0xff]
    %v142 = vsel %vm35, %v110, 0
    %v145 = vsel %vm35, %v112, 0
    %v148 = vsel %vm35, %v114, 0
    %v151 = vsel %vm35, %v116, 0
    %v154 = vsel %vm35, %v118, 0
    %v157 = vsel %vm35, %v120, 0
    %v160 = vsel %vm35, %v122, 0
    %v163 = vsel %vm35, %v124, 0
    %v166 = vsel %vm35, %v126, 0
    %v169 = vsel %vm35, %v128, 0
    %v172 = vsel %vm35, %v130, 0
    %v175 = vsel %vm35, %v132, 0
    %v178 = vsel %vm35, %v134, 0
    %v181 = vsel %vm35, %v136, 0
    %v184 = vsel %vm35, %v138, 0
    %v187 = vsel %vm35, %v140, 0
    %v190 = vsel %vm35, %v102, 0
    %v193 = vsel %vm35, %v104, 0
    %v196 = vsel %vm35, %v106, 0
    %v199 = vsel %vm35, %v108, 0
    %v201 = vand.u32 %v190, 4294901760
    %202 = vmatprep.subr.mxu0 %v201
    %v203 = vand.u32 %v101, 4294901760
    %204 = vmatpush1.xpose.msra.mxu0 %v203
    %v205 = vand.u32 %v193, 4294901760
    %206 = vmatprep.subr.mxu0 %v205
    %v207 = vand.u32 %v103, 4294901760
    %208 = vmatpush1.xpose.msra.mxu0 %v207
    %v209 = vand.u32 %v196, 4294901760
    %210 = vmatprep.subr.mxu0 %v209
    %v211 = vand.u32 %v105, 4294901760
    %212 = vmatpush1.xpose.msra.mxu0 %v211
    %v213 = vand.u32 %v199, 4294901760
    %214 = vmatprep.subr.mxu0 %v213
    %v215 = vand.u32 %v107, 4294901760
    %216 = vmatpush1.xpose.msra.mxu0 %v215
    %217 = vmatprep.subr.mxu0 0.0
    %218 = vmatpush1.xpose.msra.mxu0 0.0
    %219 = vmatprep.subr.mxu0 0.0
    %220 = vmatpush1.xpose.msra.mxu0 0.0
    %221 = vmatprep.subr.mxu0 0.0
    %222 = vmatpush1.xpose.msra.mxu0 0.0
    %223 = vmatprep.subr.mxu0 0.0
    %224 = vmatpush1.xpose.msra.mxu0 0.0
    %225 = vmatprep.subr.mxu0 0.0
    %226 = vmatpush1.xpose.msra.mxu0 0.0
    %227 = vmatprep.subr.mxu0 0.0
    %228 = vmatpush1.xpose.msra.mxu0 0.0
    %229 = vmatprep.subr.mxu0 0.0
    %230 = vmatpush1.xpose.msra.mxu0 0.0
    %231 = vmatprep.subr.mxu0 0.0
    %232 = vmatpush1.xpose.msra.mxu0 0.0
    %233 = vmatprep.subr.mxu0 0.0
    %234 = vmatpush1.xpose.msra.mxu0 0.0
    %235 = vmatprep.subr.mxu0 0.0
    %236 = vmatpush1.xpose.msra.mxu0 0.0
    %237 = vmatprep.subr.mxu0 0.0
    %238 = vmatpush1.xpose.msra.mxu0 0.0
    %239 = vmatprep.subr.mxu0 0.0
    %240 = vmatpush1.xpose.msra.mxu0 0.0
    %241 = vmatprep.subr.mxu0 0.0
    %242 = vmatpush1.xpose.msra.mxu0 0.0
    %243 = vmatprep.subr.mxu0 0.0
    %244 = vmatpush1.xpose.msra.mxu0 0.0
    %245 = vmatprep.subr.mxu0 0.0
    %246 = vmatpush1.xpose.msra.mxu0 0.0
    %247 = vmatprep.subr.mxu0 0.0
    %248 = vmatpush1.xpose.msra.mxu0 0.0
    %249 = vmatprep.subr.mxu0 0.0
    %250 = vmatpush1.xpose.msra.mxu0 0.0
    %251 = vmatprep.subr.mxu0 0.0
    %252 = vmatpush1.xpose.msra.mxu0 0.0
    %253 = vmatprep.subr.mxu0 0.0
    %254 = vmatpush1.xpose.msra.mxu0 0.0
    %255 = vmatprep.subr.mxu0 0.0
    %256 = vmatpush1.xpose.msra.mxu0 0.0
    %257 = vmatprep.subr.mxu0 0.0
    %258 = vmatpush1.xpose.msra.mxu0 0.0
    %259 = vmatprep.subr.mxu0 0.0
    %260 = vmatpush1.xpose.msra.mxu0 0.0
    %261 = vmatprep.subr.mxu0 0.0
    %262 = vmatpush1.xpose.msra.mxu0 0.0
    %263 = vmatprep.subr.mxu0 0.0
    %264 = vmatpush1.xpose.msra.mxu0 0.0
    %265 = vmatprep.subr.mxu0 0.0
    %266 = vmatpush1.xpose.msra.mxu0 0.0
    %267 = vmatprep.subr.mxu0 0.0
    %268 = vmatpush1.xpose.msra.mxu0 0.0
    %269 = vmatprep.subr.mxu0 0.0
    %270 = vmatpush1.xpose.msra.mxu0 0.0
    %271 = vmatprep.subr.mxu0 0.0
    %272 = vmatpush1.xpose.msra.mxu0 0.0
    %v273 = vand.u32 %v142, 4294901760
    %v274 = vsub.f32 %v142, %v273
    %v275 = vand.u32 %v274, 4294901760
    %v276 = vsub.f32 %v274, %v275
    %v277 = vand.u32 %v276, 4294901760
    %278 = vmatprep.mubr.f32.mxu0 %v277
    %v279 = vand.u32 %v109, 4294901760
    %v280 = vsub.f32 %v109, %v279
    %v281 = vand.u32 %v280, 4294901760
    %v282 = vsub.f32 %v280, %v281
    %v283 = vand.u32 %v282, 4294901760
    %284 = vmatmul.mubr.f32.gmra.mrb[0].mxu0 %v283
    %v285 = vpop.f32.mrb[0].mxu0
    %v286 = vadd.f32 0.0, %v285
    %v287 = vpop.f32.mrb[0].mxu0
    %v288 = vand.u32 %v145, 4294901760
    %v289 = vsub.f32 %v145, %v288
    %v290 = vand.u32 %v289, 4294901760
    %v291 = vsub.f32 %v289, %v290
    %v292 = vand.u32 %v291, 4294901760
    %293 = vmatprep.mubr.f32.mxu0 %v292
    %v294 = vand.u32 %v111, 4294901760
    %v295 = vsub.f32 %v111, %v294
    %v296 = vand.u32 %v295, 4294901760
    %v297 = vsub.f32 %v295, %v296
    %v298 = vand.u32 %v297, 4294901760
    %299 = vmatmul.mubr.f32.gmra.mrb[0].mxu0 %v298
    %v300 = vpop.f32.mrb[0].mxu0
    %v301 = vadd.f32 0.0, %v300
    %v302 = vpop.f32.mrb[0].mxu0
    %v303 = vand.u32 %v148, 4294901760
    %v304 = vsub.f32 %v148, %v303
    %v305 = vand.u32 %v304, 4294901760
    %v306 = vsub.f32 %v304, %v305
    %v307 = vand.u32 %v306, 4294901760
    %308 = vmatprep.mubr.f32.mxu0 %v307
    %v309 = vand.u32 %v113, 4294901760
    %v310 = vsub.f32 %v113, %v309
    %v311 = vand.u32 %v310, 4294901760
    %v312 = vsub.f32 %v310, %v311
    %v313 = vand.u32 %v312, 4294901760
    %314 = vmatmul.mubr.f32.gmra.mrb[0].mxu0 %v313
    %v315 = vpop.f32.mrb[0].mxu0
    %v316 = vadd.f32 0.0, %v315
    %v317 = vpop.f32.mrb[0].mxu0
    %v318 = vand.u32 %v151, 4294901760
    %v319 = vsub.f32 %v151, %v318
    %v320 = vand.u32 %v319, 4294901760
    %v321 = vsub.f32 %v319, %v320
    %v322 = vand.u32 %v321, 4294901760
    %323 = vmatprep.mubr.f32.mxu0 %v322
    %v324 = vand.u32 %v115, 4294901760
    %v325 = vsub.f32 %v115, %v324
    %v326 = vand.u32 %v325, 4294901760
    %v327 = vsub.f32 %v325, %v326
    %v328 = vand.u32 %v327, 4294901760
    %329 = vmatmul.mubr.f32.gmra.mrb[0].mxu0 %v328
    %v330 = vpop.f32.mrb[0].mxu0
    %v331 = vadd.f32 0.0, %v330
    %v332 = vpop.f32.mrb[0].mxu0
    %v333 = vand.u32 %v154, 4294901760
    %v334 = vsub.f32 %v154, %v333
    %v335 = vand.u32 %v334, 4294901760
    %v336 = vsub.f32 %v334, %v335
    %v337 = vand.u32 %v336, 4294901760
    %338 = vmatprep.mubr.f32.mxu0 %v337
    %v339 = vand.u32 %v117, 4294901760
    %v340 = vsub.f32 %v117, %v339
    %v341 = vand.u32 %v340, 4294901760
    %v342 = vsub.f32 %v340, %v341
    %v343 = vand.u32 %v342, 4294901760
    %344 = vmatmul.mubr.f32.gmra.mrb[0].mxu0 %v343
    %v345 = vpop.f32.mrb[0].mxu0
    %v346 = vadd.f32 0.0, %v345
    %v347 = vpop.f32.mrb[0].mxu0
    %v348 = vand.u32 %v157, 4294901760
    %v349 = vsub.f32 %v157, %v348
    %v350 = vand.u32 %v349, 4294901760
    %v351 = vsub.f32 %v349, %v350
    %v352 = vand.u32 %v351, 4294901760
    %353 = vmatprep.mubr.f32.mxu0 %v352
    %v354 = vand.u32 %v119, 4294901760
    %v355 = vsub.f32 %v119, %v354
    %v356 = vand.u32 %v355, 4294901760
    %v357 = vsub.f32 %v355, %v356
    %v358 = vand.u32 %v357, 4294901760
    %359 = vmatmul.mubr.f32.gmra.mrb[0].mxu0 %v358
    %v360 = vpop.f32.mrb[0].mxu0
    %v361 = vadd.f32 0.0, %v360
    %v362 = vpop.f32.mrb[0].mxu0
    %v363 = vand.u32 %v160, 4294901760
    %v364 = vsub.f32 %v160, %v363
    %v365 = vand.u32 %v364, 4294901760
    %v366 = vsub.f32 %v364, %v365
    %v367 = vand.u32 %v366, 4294901760
    %368 = vmatprep.mubr.f32.mxu0 %v367
    %v369 = vand.u32 %v121, 4294901760
    %v370 = vsub.f32 %v121, %v369
    %v371 = vand.u32 %v370, 4294901760
    %v372 = vsub.f32 %v370, %v371
    %v373 = vand.u32 %v372, 4294901760
    %374 = vmatmul.mubr.f32.gmra.mrb[0].mxu0 %v373
    %v375 = vpop.f32.mrb[0].mxu0
    %v376 = vadd.f32 0.0, %v375
    %v377 = vpop.f32.mrb[0].mxu0
    %v378 = vand.u32 %v163, 4294901760
    %v379 = vsub.f32 %v163, %v378
    %v380 = vand.u32 %v379, 4294901760
    %v381 = vsub.f32 %v379, %v380
    %v382 = vand.u32 %v381, 4294901760
    %383 = vmatprep.mubr.f32.mxu0 %v382
    %v384 = vand.u32 %v123, 4294901760
    %v385 = vsub.f32 %v123, %v384
    %v386 = vand.u32 %v385, 4294901760
    %v387 = vsub.f32 %v385, %v386
    %v388 = vand.u32 %v387, 4294901760
    %389 = vmatmul.mubr.f32.gmra.mrb[0].mxu0 %v388
    %v390 = vpop.f32.mrb[0].mxu0
    %v391 = vadd.f32 0.0, %v390
    %v392 = vpop.f32.mrb[0].mxu0
    %v393 = vand.u32 %v166, 4294901760
    %v394 = vsub.f32 %v166, %v393
    %v395 = vand.u32 %v394, 4294901760
    %v396 = vsub.f32 %v394, %v395
    %v397 = vand.u32 %v396, 4294901760
    %398 = vmatprep.mubr.f32.mxu0 %v397
    %v399 = vand.u32 %v125, 4294901760
    %v400 = vsub.f32 %v125, %v399
    %v401 = vand.u32 %v400, 4294901760
    %v402 = vsub.f32 %v400, %v401
    %v403 = vand.u32 %v402, 4294901760
    %404 = vmatmul.mubr.f32.gmra.mrb[0].mxu0 %v403
    %v405 = vpop.f32.mrb[0].mxu0
    %v406 = vadd.f32 0.0, %v405
    %v407 = vpop.f32.mrb[0].mxu0
    %v408 = vand.u32 %v169, 4294901760
    %v409 = vsub.f32 %v169, %v408
    %v410 = vand.u32 %v409, 4294901760
    %v411 = vsub.f32 %v409, %v410
    %v412 = vand.u32 %v411, 4294901760
    %413 = vmatprep.mubr.f32.mxu0 %v412
    %v414 = vand.u32 %v127, 4294901760
    %v415 = vsub.f32 %v127, %v414
    %v416 = vand.u32 %v415, 4294901760
    %v417 = vsub.f32 %v415, %v416
    %v418 = vand.u32 %v417, 4294901760
    %419 = vmatmul.mubr.f32.gmra.mrb[0].mxu0 %v418
    %v420 = vpop.f32.mrb[0].mxu0
    %v421 = vadd.f32 0.0, %v420
    %v422 = vpop.f32.mrb[0].mxu0
    %v423 = vand.u32 %v172, 4294901760
    %v424 = vsub.f32 %v172, %v423
    %v425 = vand.u32 %v424, 4294901760
    %v426 = vsub.f32 %v424, %v425
    %v427 = vand.u32 %v426, 4294901760
    %428 = vmatprep.mubr.f32.mxu0 %v427
    %v429 = vand.u32 %v129, 4294901760
    %v430 = vsub.f32 %v129, %v429
    %v431 = vand.u32 %v430, 4294901760
    %v432 = vsub.f32 %v430, %v431
    %v433 = vand.u32 %v432, 4294901760
    %434 = vmatmul.mubr.f32.gmra.mrb[0].mxu0 %v433
    %v435 = vpop.f32.mrb[0].mxu0
    %v436 = vadd.f32 0.0, %v435
    %v437 = vpop.f32.mrb[0].mxu0
    %v438 = vand.u32 %v175, 4294901760
    %v439 = vsub.f32 %v175, %v438
    %v440 = vand.u32 %v439, 4294901760
    %v441 = vsub.f32 %v439, %v440
    %v442 = vand.u32 %v441, 4294901760
    %443 = vmatprep.mubr.f32.mxu0 %v442
    %v444 = vand.u32 %v131, 4294901760
    %v445 = vsub.f32 %v131, %v444
    %v446 = vand.u32 %v445, 4294901760
    %v447 = vsub.f32 %v445, %v446
    %v448 = vand.u32 %v447, 4294901760
    %449 = vmatmul.mubr.f32.gmra.mrb[0].mxu0 %v448
    %v450 = vpop.f32.mrb[0].mxu0
    %v451 = vadd.f32 0.0, %v450
    %v452 = vpop.f32.mrb[0].mxu0
    %v453 = vand.u32 %v178, 4294901760
    %v454 = vsub.f32 %v178, %v453
    %v455 = vand.u32 %v454, 4294901760
    %v456 = vsub.f32 %v454, %v455
    %v457 = vand.u32 %v456, 4294901760
    %458 = vmatprep.mubr.f32.mxu0 %v457
    %v459 = vand.u32 %v133, 4294901760
    %v460 = vsub.f32 %v133, %v459
    %v461 = vand.u32 %v460, 4294901760
    %v462 = vsub.f32 %v460, %v461
    %v463 = vand.u32 %v462, 4294901760
    %464 = vmatmul.mubr.f32.gmra.mrb[0].mxu0 %v463
    %v465 = vpop.f32.mrb[0].mxu0
    %v466 = vadd.f32 0.0, %v465
    %v467 = vpop.f32.mrb[0].mxu0
    %v468 = vand.u32 %v181, 4294901760
    %v469 = vsub.f32 %v181, %v468
    %v470 = vand.u32 %v469, 4294901760
    %v471 = vsub.f32 %v469, %v470
    %v472 = vand.u32 %v471, 4294901760
    %473 = vmatprep.mubr.f32.mxu0 %v472
    %v474 = vand.u32 %v135, 4294901760
    %v475 = vsub.f32 %v135, %v474
    %v476 = vand.u32 %v475, 4294901760
    %v477 = vsub.f32 %v475, %v476
    %v478 = vand.u32 %v477, 4294901760
    %479 = vmatmul.mubr.f32.gmra.mrb[0].mxu0 %v478
    %v480 = vpop.f32.mrb[0].mxu0
    %v481 = vadd.f32 0.0, %v480
    %v482 = vpop.f32.mrb[0].mxu0
    %v483 = vand.u32 %v184, 4294901760
    %v484 = vsub.f32 %v184, %v483
    %v485 = vand.u32 %v484, 4294901760
    %v486 = vsub.f32 %v484, %v485
    %v487 = vand.u32 %v486, 4294901760
    %488 = vmatprep.mubr.f32.mxu0 %v487
    %v489 = vand.u32 %v137, 4294901760
    %v490 = vsub.f32 %v137, %v489
    %v491 = vand.u32 %v490, 4294901760
    %v492 = vsub.f32 %v490, %v491
    %v493 = vand.u32 %v492, 4294901760
    %494 = vmatmul.mubr.f32.gmra.mrb[0].mxu0 %v493
    %v495 = vpop.f32.mrb[0].mxu0
    %v496 = vadd.f32 0.0, %v495
    %v497 = vpop.f32.mrb[0].mxu0
    %v498 = vand.u32 %v187, 4294901760
    %v499 = vsub.f32 %v187, %v498
    %v500 = vand.u32 %v499, 4294901760
    %v501 = vsub.f32 %v499, %v500
    %v502 = vand.u32 %v501, 4294901760
    %503 = vmatprep.mubr.f32.mxu0 %v502
    %v504 = vand.u32 %v139, 4294901760
    %v505 = vsub.f32 %v139, %v504
    %v506 = vand.u32 %v505, 4294901760
    %v507 = vsub.f32 %v505, %v506
    %v508 = vand.u32 %v507, 4294901760
    %509 = vmatmul.mubr.f32.gmra.mrb[0].mxu0 %v508
    %v510 = vpop.f32.mrb[0].mxu0
    %v511 = vadd.f32 0.0, %v510
    %v512 = vpop.f32.mrb[0].mxu0
    %513 = vdwg.mxu0
    %v514 = vand.u32 %v190, 4294901760
    %v515 = vsub.f32 %v190, %v514
    %v516 = vand.u32 %v515, 4294901760
    %v517 = vsub.f32 %v515, %v516
    %v518 = vand.u32 %v517, 4294901760
    %519 = vmatprep.subr.mxu0 %v518
    %v520 = vand.u32 %v101, 4294901760
    %v521 = vsub.f32 %v101, %v520
    %v522 = vand.u32 %v521, 4294901760
    %v523 = vsub.f32 %v521, %v522
    %v524 = vand.u32 %v523, 4294901760
    %525 = vmatpush1.xpose.msra.mxu0 %v524
    %v526 = vand.u32 %v193, 4294901760
    %v527 = vsub.f32 %v193, %v526
    %v528 = vand.u32 %v527, 4294901760
    %v529 = vsub.f32 %v527, %v528
    %v530 = vand.u32 %v529, 4294901760
    %531 = vmatprep.subr.mxu0 %v530
    %v532 = vand.u32 %v103, 4294901760
    %v533 = vsub.f32 %v103, %v532
    %v534 = vand.u32 %v533, 4294901760
    %v535 = vsub.f32 %v533, %v534
    %v536 = vand.u32 %v535, 4294901760
    %537 = vmatpush1.xpose.msra.mxu0 %v536
    %v538 = vand.u32 %v196, 4294901760
    %v539 = vsub.f32 %v196, %v538
    %v540 = vand.u32 %v539, 4294901760
    %v541 = vsub.f32 %v539, %v540
    %v542 = vand.u32 %v541, 4294901760
    %543 = vmatprep.subr.mxu0 %v542
    %v544 = vand.u32 %v105, 4294901760
    %v545 = vsub.f32 %v105, %v544
    %v546 = vand.u32 %v545, 4294901760
    %v547 = vsub.f32 %v545, %v546
    %v548 = vand.u32 %v547, 4294901760
    %549 = vmatpush1.xpose.msra.mxu0 %v548
    %v550 = vand.u32 %v199, 4294901760
    %v551 = vsub.f32 %v199, %v550
    %v552 = vand.u32 %v551, 4294901760
    %v553 = vsub.f32 %v551, %v552
    %v554 = vand.u32 %v553, 4294901760
    %555 = vmatprep.subr.mxu0 %v554
    %v556 = vand.u32 %v107, 4294901760
    %v557 = vsub.f32 %v107, %v556
    %v558 = vand.u32 %v557, 4294901760
    %v559 = vsub.f32 %v557, %v558
    %v560 = vand.u32 %v559, 4294901760
    %561 = vmatpush1.xpose.msra.mxu0 %v560
    %562 = vmatprep.subr.mxu0 0.0
    %563 = vmatpush1.xpose.msra.mxu0 0.0
    %564 = vmatprep.subr.mxu0 0.0
    %565 = vmatpush1.xpose.msra.mxu0 0.0
    %566 = vmatprep.subr.mxu0 0.0
    %567 = vmatpush1.xpose.msra.mxu0 0.0
    %568 = vmatprep.subr.mxu0 0.0
    %569 = vmatpush1.xpose.msra.mxu0 0.0
    %570 = vmatprep.subr.mxu0 0.0
    %571 = vmatpush1.xpose.msra.mxu0 0.0
    %572 = vmatprep.subr.mxu0 0.0
    %573 = vmatpush1.xpose.msra.mxu0 0.0
    %574 = vmatprep.subr.mxu0 0.0
    %575 = vmatpush1.xpose.msra.mxu0 0.0
    %576 = vmatprep.subr.mxu0 0.0
    %577 = vmatpush1.xpose.msra.mxu0 0.0
    %578 = vmatprep.subr.mxu0 0.0
    %579 = vmatpush1.xpose.msra.mxu0 0.0
    %580 = vmatprep.subr.mxu0 0.0
    %581 = vmatpush1.xpose.msra.mxu0 0.0
    %582 = vmatprep.subr.mxu0 0.0
    %583 = vmatpush1.xpose.msra.mxu0 0.0
    %584 = vmatprep.subr.mxu0 0.0
    %585 = vmatpush1.xpose.msra.mxu0 0.0
    %586 = vmatprep.subr.mxu0 0.0
    %587 = vmatpush1.xpose.msra.mxu0 0.0
    %588 = vmatprep.subr.mxu0 0.0
    %589 = vmatpush1.xpose.msra.mxu0 0.0
    %590 = vmatprep.subr.mxu0 0.0
    %591 = vmatpush1.xpose.msra.mxu0 0.0
    %592 = vmatprep.subr.mxu0 0.0
    %593 = vmatpush1.xpose.msra.mxu0 0.0
    %594 = vmatprep.subr.mxu0 0.0
    %595 = vmatpush1.xpose.msra.mxu0 0.0
    %596 = vmatprep.subr.mxu0 0.0
    %597 = vmatpush1.xpose.msra.mxu0 0.0
    %598 = vmatprep.subr.mxu0 0.0
    %599 = vmatpush1.xpose.msra.mxu0 0.0
    %600 = vmatprep.subr.mxu0 0.0
    %601 = vmatpush1.xpose.msra.mxu0 0.0
    %602 = vmatprep.subr.mxu0 0.0
    %603 = vmatpush1.xpose.msra.mxu0 0.0
    %604 = vmatprep.subr.mxu0 0.0
    %605 = vmatpush1.xpose.msra.mxu0 0.0
    %606 = vmatprep.subr.mxu0 0.0
    %607 = vmatpush1.xpose.msra.mxu0 0.0
    %608 = vmatprep.subr.mxu0 0.0
    %609 = vmatpush1.xpose.msra.mxu0 0.0
    %610 = vmatprep.subr.mxu0 0.0
    %611 = vmatpush1.xpose.msra.mxu0 0.0
    %612 = vmatprep.subr.mxu0 0.0
    %613 = vmatpush1.xpose.msra.mxu0 0.0
    %614 = vmatprep.subr.mxu0 0.0
    %615 = vmatpush1.xpose.msra.mxu0 0.0
    %616 = vmatprep.subr.mxu0 0.0
    %617 = vmatpush1.xpose.msra.mxu0 0.0
    %v618 = vand.u32 %v142, 4294901760
    %619 = vmatprep.mubr.f32.mxu0 %v618
    %v620 = vand.u32 %v109, 4294901760
    %621 = vmatmul.mubr.f32.gmra.mrb[0].mxu0 %v620
    %v622 = vpop.f32.mrb[0].mxu0
    %v623 = vadd.f32 %v286, %v622
    %v624 = vpop.f32.mrb[0].mxu0
    %v625 = vand.u32 %v145, 4294901760
    %626 = vmatprep.mubr.f32.mxu0 %v625
    %v627 = vand.u32 %v111, 4294901760
    %628 = vmatmul.mubr.f32.gmra.mrb[0].mxu0 %v627
    %v629 = vpop.f32.mrb[0].mxu0
    %v630 = vadd.f32 %v301, %v629
    %v631 = vpop.f32.mrb[0].mxu0
    %v632 = vand.u32 %v148, 4294901760
    %633 = vmatprep.mubr.f32.mxu0 %v632
    %v634 = vand.u32 %v113, 4294901760
    %635 = vmatmul.mubr.f32.gmra.mrb[0].mxu0 %v634
    %v636 = vpop.f32.mrb[0].mxu0
    %v637 = vadd.f32 %v316, %v636
    %v638 = vpop.f32.mrb[0].mxu0
    %v639 = vand.u32 %v151, 4294901760
    %640 = vmatprep.mubr.f32.mxu0 %v639
    %v641 = vand.u32 %v115, 4294901760
    %642 = vmatmul.mubr.f32.gmra.mrb[0].mxu0 %v641
    %v643 = vpop.f32.mrb[0].mxu0
    %v644 = vadd.f32 %v331, %v643
    %v645 = vpop.f32.mrb[0].mxu0
    %v646 = vand.u32 %v154, 4294901760
    %647 = vmatprep.mubr.f32.mxu0 %v646
    %v648 = vand.u32 %v117, 4294901760
    %649 = vmatmul.mubr.f32.gmra.mrb[0].mxu0 %v648
    %v650 = vpop.f32.mrb[0].mxu0
    %v651 = vadd.f32 %v346, %v650
    %v652 = vpop.f32.mrb[0].mxu0
    %v653 = vand.u32 %v157, 4294901760
    %654 = vmatprep.mubr.f32.mxu0 %v653
    %v655 = vand.u32 %v119, 4294901760
    %656 = vmatmul.mubr.f32.gmra.mrb[0].mxu0 %v655
    %v657 = vpop.f32.mrb[0].mxu0
    %v658 = vadd.f32 %v361, %v657
    %v659 = vpop.f32.mrb[0].mxu0
    %v660 = vand.u32 %v160, 4294901760
    %661 = vmatprep.mubr.f32.mxu0 %v660
    %v662 = vand.u32 %v121, 4294901760
    %663 = vmatmul.mubr.f32.gmra.mrb[0].mxu0 %v662
    %v664 = vpop.f32.mrb[0].mxu0
    %v665 = vadd.f32 %v376, %v664
    %v666 = vpop.f32.mrb[0].mxu0
    %v667 = vand.u32 %v163, 4294901760
    %668 = vmatprep.mubr.f32.mxu0 %v667
    %v669 = vand.u32 %v123, 4294901760
    %670 = vmatmul.mubr.f32.gmra.mrb[0].mxu0 %v669
    %v671 = vpop.f32.mrb[0].mxu0
    %v672 = vadd.f32 %v391, %v671
    %v673 = vpop.f32.mrb[0].mxu0
    %v674 = vand.u32 %v166, 4294901760
    %675 = vmatprep.mubr.f32.mxu0 %v674
    %v676 = vand.u32 %v125, 4294901760
    %677 = vmatmul.mubr.f32.gmra.mrb[0].mxu0 %v676
    %v678 = vpop.f32.mrb[0].mxu0
    %v679 = vadd.f32 %v406, %v678
    %v680 = vpop.f32.mrb[0].mxu0
    %v681 = vand.u32 %v169, 4294901760
    %682 = vmatprep.mubr.f32.mxu0 %v681
    %v683 = vand.u32 %v127, 4294901760
    %684 = vmatmul.mubr.f32.gmra.mrb[0].mxu0 %v683
    %v685 = vpop.f32.mrb[0].mxu0
    %v686 = vadd.f32 %v421, %v685
    %v687 = vpop.f32.mrb[0].mxu0
    %v688 = vand.u32 %v172, 4294901760
    %689 = vmatprep.mubr.f32.mxu0 %v688
    %v690 = vand.u32 %v129, 4294901760
    %691 = vmatmul.mubr.f32.gmra.mrb[0].mxu0 %v690
    %v692 = vpop.f32.mrb[0].mxu0
    %v693 = vadd.f32 %v436, %v692
    %v694 = vpop.f32.mrb[0].mxu0
    %v695 = vand.u32 %v175, 4294901760
    %696 = vmatprep.mubr.f32.mxu0 %v695
    %v697 = vand.u32 %v131, 4294901760
    %698 = vmatmul.mubr.f32.gmra.mrb[0].mxu0 %v697
    %v699 = vpop.f32.mrb[0].mxu0
    %v700 = vadd.f32 %v451, %v699
    %v701 = vpop.f32.mrb[0].mxu0
    %v702 = vand.u32 %v178, 4294901760
    %703 = vmatprep.mubr.f32.mxu0 %v702
    %v704 = vand.u32 %v133, 4294901760
    %705 = vmatmul.mubr.f32.gmra.mrb[0].mxu0 %v704
    %v706 = vpop.f32.mrb[0].mxu0
    %v707 = vadd.f32 %v466, %v706
    %v708 = vpop.f32.mrb[0].mxu0
    %v709 = vand.u32 %v181, 4294901760
    %710 = vmatprep.mubr.f32.mxu0 %v709
    %v711 = vand.u32 %v135, 4294901760
    %712 = vmatmul.mubr.f32.gmra.mrb[0].mxu0 %v711
    %v713 = vpop.f32.mrb[0].mxu0
    %v714 = vadd.f32 %v481, %v713
    %v715 = vpop.f32.mrb[0].mxu0
    %v716 = vand.u32 %v184, 4294901760
    %717 = vmatprep.mubr.f32.mxu0 %v716
    %v718 = vand.u32 %v137, 4294901760
    %719 = vmatmul.mubr.f32.gmra.mrb[0].mxu0 %v718
    %v720 = vpop.f32.mrb[0].mxu0
    %v721 = vadd.f32 %v496, %v720
    %v722 = vpop.f32.mrb[0].mxu0
    %v723 = vand.u32 %v187, 4294901760
    %724 = vmatprep.mubr.f32.mxu0 %v723
    %v725 = vand.u32 %v139, 4294901760
    %726 = vmatmul.mubr.f32.gmra.mrb[0].mxu0 %v725
    %v727 = vpop.f32.mrb[0].mxu0
    %v728 = vadd.f32 %v511, %v727
    %v729 = vpop.f32.mrb[0].mxu0
    %730 = vdwg.mxu0
    %v731 = vand.u32 %v190, 4294901760
    %v732 = vsub.f32 %v190, %v731
    %733 = vmatprep.subr.mxu0 %v732
    %v734 = vand.u32 %v101, 4294901760
    %v735 = vsub.f32 %v101, %v734
    %736 = vmatpush1.xpose.msra.mxu0 %v735
    %v737 = vand.u32 %v193, 4294901760
    %v738 = vsub.f32 %v193, %v737
    %739 = vmatprep.subr.mxu0 %v738
    %v740 = vand.u32 %v103, 4294901760
    %v741 = vsub.f32 %v103, %v740
    %742 = vmatpush1.xpose.msra.mxu0 %v741
    %v743 = vand.u32 %v196, 4294901760
    %v744 = vsub.f32 %v196, %v743
    %745 = vmatprep.subr.mxu0 %v744
    %v746 = vand.u32 %v105, 4294901760
    %v747 = vsub.f32 %v105, %v746
    %748 = vmatpush1.xpose.msra.mxu0 %v747
    %v749 = vand.u32 %v199, 4294901760
    %v750 = vsub.f32 %v199, %v749
    %751 = vmatprep.subr.mxu0 %v750
    %v752 = vand.u32 %v107, 4294901760
    %v753 = vsub.f32 %v107, %v752
    %754 = vmatpush1.xpose.msra.mxu0 %v753
    %755 = vmatprep.subr.mxu0 0.0
    %756 = vmatpush1.xpose.msra.mxu0 0.0
    %757 = vmatprep.subr.mxu0 0.0
    %758 = vmatpush1.xpose.msra.mxu0 0.0
    %759 = vmatprep.subr.mxu0 0.0
    %760 = vmatpush1.xpose.msra.mxu0 0.0
    %761 = vmatprep.subr.mxu0 0.0
    %762 = vmatpush1.xpose.msra.mxu0 0.0
    %763 = vmatprep.subr.mxu0 0.0
    %764 = vmatpush1.xpose.msra.mxu0 0.0
    %765 = vmatprep.subr.mxu0 0.0
    %766 = vmatpush1.xpose.msra.mxu0 0.0
    %767 = vmatprep.subr.mxu0 0.0
    %768 = vmatpush1.xpose.msra.mxu0 0.0
    %769 = vmatprep.subr.mxu0 0.0
    %770 = vmatpush1.xpose.msra.mxu0 0.0
    %771 = vmatprep.subr.mxu0 0.0
    %772 = vmatpush1.xpose.msra.mxu0 0.0
    %773 = vmatprep.subr.mxu0 0.0
    %774 = vmatpush1.xpose.msra.mxu0 0.0
    %775 = vmatprep.subr.mxu0 0.0
    %776 = vmatpush1.xpose.msra.mxu0 0.0
    %777 = vmatprep.subr.mxu0 0.0
    %778 = vmatpush1.xpose.msra.mxu0 0.0
    %779 = vmatprep.subr.mxu0 0.0
    %780 = vmatpush1.xpose.msra.mxu0 0.0
    %781 = vmatprep.subr.mxu0 0.0
    %782 = vmatpush1.xpose.msra.mxu0 0.0
    %783 = vmatprep.subr.mxu0 0.0
    %784 = vmatpush1.xpose.msra.mxu0 0.0
    %785 = vmatprep.subr.mxu0 0.0
    %786 = vmatpush1.xpose.msra.mxu0 0.0
    %787 = vmatprep.subr.mxu0 0.0
    %788 = vmatpush1.xpose.msra.mxu0 0.0
    %789 = vmatprep.subr.mxu0 0.0
    %790 = vmatpush1.xpose.msra.mxu0 0.0
    %791 = vmatprep.subr.mxu0 0.0
    %792 = vmatpush1.xpose.msra.mxu0 0.0
    %793 = vmatprep.subr.mxu0 0.0
    %794 = vmatpush1.xpose.msra.mxu0 0.0
    %795 = vmatprep.subr.mxu0 0.0
    %796 = vmatpush1.xpose.msra.mxu0 0.0
    %797 = vmatprep.subr.mxu0 0.0
    %798 = vmatpush1.xpose.msra.mxu0 0.0
    %799 = vmatprep.subr.mxu0 0.0
    %800 = vmatpush1.xpose.msra.mxu0 0.0
    %801 = vmatprep.subr.mxu0 0.0
    %802 = vmatpush1.xpose.msra.mxu0 0.0
    %803 = vmatprep.subr.mxu0 0.0
    %804 = vmatpush1.xpose.msra.mxu0 0.0
    %805 = vmatprep.subr.mxu0 0.0
    %806 = vmatpush1.xpose.msra.mxu0 0.0
    %807 = vmatprep.subr.mxu0 0.0
    %808 = vmatpush1.xpose.msra.mxu0 0.0
    %809 = vmatprep.subr.mxu0 0.0
    %810 = vmatpush1.xpose.msra.mxu0 0.0
    %v811 = vand.u32 %v142, 4294901760
    %v812 = vsub.f32 %v142, %v811
    %813 = vmatprep.mubr.f32.mxu0 %v812
    %v814 = vand.u32 %v109, 4294901760
    %v815 = vsub.f32 %v109, %v814
    %816 = vmatmul.mubr.f32.gmra.mrb[0].mxu0 %v815
    %v817 = vpop.f32.mrb[0].mxu0
    %v818 = vadd.f32 %v623, %v817
    %v819 = vpop.f32.mrb[0].mxu0
    %v820 = vand.u32 %v145, 4294901760
    %v821 = vsub.f32 %v145, %v820
    %822 = vmatprep.mubr.f32.mxu0 %v821
    %v823 = vand.u32 %v111, 4294901760
    %v824 = vsub.f32 %v111, %v823
    %825 = vmatmul.mubr.f32.gmra.mrb[0].mxu0 %v824
    %v826 = vpop.f32.mrb[0].mxu0
    %v827 = vadd.f32 %v630, %v826
    %v828 = vpop.f32.mrb[0].mxu0
    %v829 = vand.u32 %v148, 4294901760
    %v830 = vsub.f32 %v148, %v829
    %831 = vmatprep.mubr.f32.mxu0 %v830
    %v832 = vand.u32 %v113, 4294901760
    %v833 = vsub.f32 %v113, %v832
    %834 = vmatmul.mubr.f32.gmra.mrb[0].mxu0 %v833
    %v835 = vpop.f32.mrb[0].mxu0
    %v836 = vadd.f32 %v637, %v835
    %v837 = vpop.f32.mrb[0].mxu0
    %v838 = vand.u32 %v151, 4294901760
    %v839 = vsub.f32 %v151, %v838
    %840 = vmatprep.mubr.f32.mxu0 %v839
    %v841 = vand.u32 %v115, 4294901760
    %v842 = vsub.f32 %v115, %v841
    %843 = vmatmul.mubr.f32.gmra.mrb[0].mxu0 %v842
    %v844 = vpop.f32.mrb[0].mxu0
    %v845 = vadd.f32 %v644, %v844
    %v846 = vpop.f32.mrb[0].mxu0
    %v847 = vand.u32 %v154, 4294901760
    %v848 = vsub.f32 %v154, %v847
    %849 = vmatprep.mubr.f32.mxu0 %v848
    %v850 = vand.u32 %v117, 4294901760
    %v851 = vsub.f32 %v117, %v850
    %852 = vmatmul.mubr.f32.gmra.mrb[0].mxu0 %v851
    %v853 = vpop.f32.mrb[0].mxu0
    %v854 = vadd.f32 %v651, %v853
    %v855 = vpop.f32.mrb[0].mxu0
    %v856 = vand.u32 %v157, 4294901760
    %v857 = vsub.f32 %v157, %v856
    %858 = vmatprep.mubr.f32.mxu0 %v857
    %v859 = vand.u32 %v119, 4294901760
    %v860 = vsub.f32 %v119, %v859
    %861 = vmatmul.mubr.f32.gmra.mrb[0].mxu0 %v860
    %v862 = vpop.f32.mrb[0].mxu0
    %v863 = vadd.f32 %v658, %v862
    %v864 = vpop.f32.mrb[0].mxu0
    %v865 = vand.u32 %v160, 4294901760
    %v866 = vsub.f32 %v160, %v865
    %867 = vmatprep.mubr.f32.mxu0 %v866
    %v868 = vand.u32 %v121, 4294901760
    %v869 = vsub.f32 %v121, %v868
    %870 = vmatmul.mubr.f32.gmra.mrb[0].mxu0 %v869
    %v871 = vpop.f32.mrb[0].mxu0
    %v872 = vadd.f32 %v665, %v871
    %v873 = vpop.f32.mrb[0].mxu0
    %v874 = vand.u32 %v163, 4294901760
    %v875 = vsub.f32 %v163, %v874
    %876 = vmatprep.mubr.f32.mxu0 %v875
    %v877 = vand.u32 %v123, 4294901760
    %v878 = vsub.f32 %v123, %v877
    %879 = vmatmul.mubr.f32.gmra.mrb[0].mxu0 %v878
    %v880 = vpop.f32.mrb[0].mxu0
    %v881 = vadd.f32 %v672, %v880
    %v882 = vpop.f32.mrb[0].mxu0
    %v883 = vand.u32 %v166, 4294901760
    %v884 = vsub.f32 %v166, %v883
    %885 = vmatprep.mubr.f32.mxu0 %v884
    %v886 = vand.u32 %v125, 4294901760
    %v887 = vsub.f32 %v125, %v886
    %888 = vmatmul.mubr.f32.gmra.mrb[0].mxu0 %v887
    %v889 = vpop.f32.mrb[0].mxu0
    %v890 = vadd.f32 %v679, %v889
    %v891 = vpop.f32.mrb[0].mxu0
    %v892 = vand.u32 %v169, 4294901760
    %v893 = vsub.f32 %v169, %v892
    %894 = vmatprep.mubr.f32.mxu0 %v893
    %v895 = vand.u32 %v127, 4294901760
    %v896 = vsub.f32 %v127, %v895
    %897 = vmatmul.mubr.f32.gmra.mrb[0].mxu0 %v896
    %v898 = vpop.f32.mrb[0].mxu0
    %v899 = vadd.f32 %v686, %v898
    %v900 = vpop.f32.mrb[0].mxu0
    %v901 = vand.u32 %v172, 4294901760
    %v902 = vsub.f32 %v172, %v901
    %903 = vmatprep.mubr.f32.mxu0 %v902
    %v904 = vand.u32 %v129, 4294901760
    %v905 = vsub.f32 %v129, %v904
    %906 = vmatmul.mubr.f32.gmra.mrb[0].mxu0 %v905
    %v907 = vpop.f32.mrb[0].mxu0
    %v908 = vadd.f32 %v693, %v907
    %v909 = vpop.f32.mrb[0].mxu0
    %v910 = vand.u32 %v175, 4294901760
    %v911 = vsub.f32 %v175, %v910
    %912 = vmatprep.mubr.f32.mxu0 %v911
    %v913 = vand.u32 %v131, 4294901760
    %v914 = vsub.f32 %v131, %v913
    %915 = vmatmul.mubr.f32.gmra.mrb[0].mxu0 %v914
    %v916 = vpop.f32.mrb[0].mxu0
    %v917 = vadd.f32 %v700, %v916
    %v918 = vpop.f32.mrb[0].mxu0
    %v919 = vand.u32 %v178, 4294901760
    %v920 = vsub.f32 %v178, %v919
    %921 = vmatprep.mubr.f32.mxu0 %v920
    %v922 = vand.u32 %v133, 4294901760
    %v923 = vsub.f32 %v133, %v922
    %924 = vmatmul.mubr.f32.gmra.mrb[0].mxu0 %v923
    %v925 = vpop.f32.mrb[0].mxu0
    %v926 = vadd.f32 %v707, %v925
    %v927 = vpop.f32.mrb[0].mxu0
    %v928 = vand.u32 %v181, 4294901760
    %v929 = vsub.f32 %v181, %v928
    %930 = vmatprep.mubr.f32.mxu0 %v929
    %v931 = vand.u32 %v135, 4294901760
    %v932 = vsub.f32 %v135, %v931
    %933 = vmatmul.mubr.f32.gmra.mrb[0].mxu0 %v932
    %v934 = vpop.f32.mrb[0].mxu0
    %v935 = vadd.f32 %v714, %v934
    %v936 = vpop.f32.mrb[0].mxu0
    %v937 = vand.u32 %v184, 4294901760
    %v938 = vsub.f32 %v184, %v937
    %939 = vmatprep.mubr.f32.mxu0 %v938
    %v940 = vand.u32 %v137, 4294901760
    %v941 = vsub.f32 %v137, %v940
    %942 = vmatmul.mubr.f32.gmra.mrb[0].mxu0 %v941
    %v943 = vpop.f32.mrb[0].mxu0
    %v944 = vadd.f32 %v721, %v943
    %v945 = vpop.f32.mrb[0].mxu0
    %v946 = vand.u32 %v187, 4294901760
    %v947 = vsub.f32 %v187, %v946
    %948 = vmatprep.mubr.f32.mxu0 %v947
    %v949 = vand.u32 %v139, 4294901760
    %v950 = vsub.f32 %v139, %v949
    %951 = vmatmul.mubr.f32.gmra.mrb[0].mxu0 %v950
    %v952 = vpop.f32.mrb[0].mxu0
    %v953 = vadd.f32 %v728, %v952
    %v954 = vpop.f32.mrb[0].mxu0
    %955 = vdwg.mxu0
    %v956 = vand.u32 %v190, 4294901760
    %957 = vmatprep.subr.mxu0 %v956
    %v958 = vand.u32 %v101, 4294901760
    %959 = vmatpush1.xpose.msra.mxu0 %v958
    %v960 = vand.u32 %v193, 4294901760
    %961 = vmatprep.subr.mxu0 %v960
    %v962 = vand.u32 %v103, 4294901760
    %963 = vmatpush1.xpose.msra.mxu0 %v962
    %v964 = vand.u32 %v196, 4294901760
    %965 = vmatprep.subr.mxu0 %v964
    %v966 = vand.u32 %v105, 4294901760
    %967 = vmatpush1.xpose.msra.mxu0 %v966
    %v968 = vand.u32 %v199, 4294901760
    %969 = vmatprep.subr.mxu0 %v968
    %v970 = vand.u32 %v107, 4294901760
    %971 = vmatpush1.xpose.msra.mxu0 %v970
    %972 = vmatprep.subr.mxu0 0.0
    %973 = vmatpush1.xpose.msra.mxu0 0.0
    %974 = vmatprep.subr.mxu0 0.0
    %975 = vmatpush1.xpose.msra.mxu0 0.0
    %976 = vmatprep.subr.mxu0 0.0
    %977 = vmatpush1.xpose.msra.mxu0 0.0
    %978 = vmatprep.subr.mxu0 0.0
    %979 = vmatpush1.xpose.msra.mxu0 0.0
    %980 = vmatprep.subr.mxu0 0.0
    %981 = vmatpush1.xpose.msra.mxu0 0.0
    %982 = vmatprep.subr.mxu0 0.0
    %983 = vmatpush1.xpose.msra.mxu0 0.0
    %984 = vmatprep.subr.mxu0 0.0
    %985 = vmatpush1.xpose.msra.mxu0 0.0
    %986 = vmatprep.subr.mxu0 0.0
    %987 = vmatpush1.xpose.msra.mxu0 0.0
    %988 = vmatprep.subr.mxu0 0.0
    %989 = vmatpush1.xpose.msra.mxu0 0.0
    %990 = vmatprep.subr.mxu0 0.0
    %991 = vmatpush1.xpose.msra.mxu0 0.0
    %992 = vmatprep.subr.mxu0 0.0
    %993 = vmatpush1.xpose.msra.mxu0 0.0
    %994 = vmatprep.subr.mxu0 0.0
    %995 = vmatpush1.xpose.msra.mxu0 0.0
    %996 = vmatprep.subr.mxu0 0.0
    %997 = vmatpush1.xpose.msra.mxu0 0.0
    %998 = vmatprep.subr.mxu0 0.0
    %999 = vmatpush1.xpose.msra.mxu0 0.0
    %1000 = vmatprep.subr.mxu0 0.0
    %1001 = vmatpush1.xpose.msra.mxu0 0.0
    %1002 = vmatprep.subr.mxu0 0.0
    %1003 = vmatpush1.xpose.msra.mxu0 0.0
    %1004 = vmatprep.subr.mxu0 0.0
    %1005 = vmatpush1.xpose.msra.mxu0 0.0
    %1006 = vmatprep.subr.mxu0 0.0
    %1007 = vmatpush1.xpose.msra.mxu0 0.0
    %1008 = vmatprep.subr.mxu0 0.0
    %1009 = vmatpush1.xpose.msra.mxu0 0.0
    %1010 = vmatprep.subr.mxu0 0.0
    %1011 = vmatpush1.xpose.msra.mxu0 0.0
    %1012 = vmatprep.subr.mxu0 0.0
    %1013 = vmatpush1.xpose.msra.mxu0 0.0
    %1014 = vmatprep.subr.mxu0 0.0
    %1015 = vmatpush1.xpose.msra.mxu0 0.0
    %1016 = vmatprep.subr.mxu0 0.0
    %1017 = vmatpush1.xpose.msra.mxu0 0.0
    %1018 = vmatprep.subr.mxu0 0.0
    %1019 = vmatpush1.xpose.msra.mxu0 0.0
    %1020 = vmatprep.subr.mxu0 0.0
    %1021 = vmatpush1.xpose.msra.mxu0 0.0
    %1022 = vmatprep.subr.mxu0 0.0
    %1023 = vmatpush1.xpose.msra.mxu0 0.0
    %1024 = vmatprep.subr.mxu0 0.0
    %1025 = vmatpush1.xpose.msra.mxu0 0.0
    %1026 = vmatprep.subr.mxu0 0.0
    %1027 = vmatpush1.xpose.msra.mxu0 0.0
    %v1028 = vand.u32 %v142, 4294901760
    %v1029 = vsub.f32 %v142, %v1028
    %v1030 = vand.u32 %v1029, 4294901760
    %1031 = vmatprep.mubr.f32.mxu0 %v1030
    %v1032 = vand.u32 %v109, 4294901760
    %v1033 = vsub.f32 %v109, %v1032
    %v1034 = vand.u32 %v1033, 4294901760
    %1035 = vmatmul.mubr.f32.gmra.mrb[0].mxu0 %v1034
    %v1036 = vpop.f32.mrb[0].mxu0
    %v1037 = vadd.f32 %v818, %v1036
    %v1038 = vpop.f32.mrb[0].mxu0
    %v1039 = vand.u32 %v145, 4294901760
    %v1040 = vsub.f32 %v145, %v1039
    %v1041 = vand.u32 %v1040, 4294901760
    %1042 = vmatprep.mubr.f32.mxu0 %v1041
    %v1043 = vand.u32 %v111, 4294901760
    %v1044 = vsub.f32 %v111, %v1043
    %v1045 = vand.u32 %v1044, 4294901760
    %1046 = vmatmul.mubr.f32.gmra.mrb[0].mxu0 %v1045
    %v1047 = vpop.f32.mrb[0].mxu0
    %v1048 = vadd.f32 %v827, %v1047
    %v1049 = vpop.f32.mrb[0].mxu0
    %v1050 = vand.u32 %v148, 4294901760
    %v1051 = vsub.f32 %v148, %v1050
    %v1052 = vand.u32 %v1051, 4294901760
    %1053 = vmatprep.mubr.f32.mxu0 %v1052
    %v1054 = vand.u32 %v113, 4294901760
    %v1055 = vsub.f32 %v113, %v1054
    %v1056 = vand.u32 %v1055, 4294901760
    %1057 = vmatmul.mubr.f32.gmra.mrb[0].mxu0 %v1056
    %v1058 = vpop.f32.mrb[0].mxu0
    %v1059 = vadd.f32 %v836, %v1058
    %v1060 = vpop.f32.mrb[0].mxu0
    %v1061 = vand.u32 %v151, 4294901760
    %v1062 = vsub.f32 %v151, %v1061
    %v1063 = vand.u32 %v1062, 4294901760
    %1064 = vmatprep.mubr.f32.mxu0 %v1063
    %v1065 = vand.u32 %v115, 4294901760
    %v1066 = vsub.f32 %v115, %v1065
    %v1067 = vand.u32 %v1066, 4294901760
    %1068 = vmatmul.mubr.f32.gmra.mrb[0].mxu0 %v1067
    %v1069 = vpop.f32.mrb[0].mxu0
    %v1070 = vadd.f32 %v845, %v1069
    %v1071 = vpop.f32.mrb[0].mxu0
    %v1072 = vand.u32 %v154, 4294901760
    %v1073 = vsub.f32 %v154, %v1072
    %v1074 = vand.u32 %v1073, 4294901760
    %1075 = vmatprep.mubr.f32.mxu0 %v1074
    %v1076 = vand.u32 %v117, 4294901760
    %v1077 = vsub.f32 %v117, %v1076
    %v1078 = vand.u32 %v1077, 4294901760
    %1079 = vmatmul.mubr.f32.gmra.mrb[0].mxu0 %v1078
    %v1080 = vpop.f32.mrb[0].mxu0
    %v1081 = vadd.f32 %v854, %v1080
    %v1082 = vpop.f32.mrb[0].mxu0
    %v1083 = vand.u32 %v157, 4294901760
    %v1084 = vsub.f32 %v157, %v1083
    %v1085 = vand.u32 %v1084, 4294901760
    %1086 = vmatprep.mubr.f32.mxu0 %v1085
    %v1087 = vand.u32 %v119, 4294901760
    %v1088 = vsub.f32 %v119, %v1087
    %v1089 = vand.u32 %v1088, 4294901760
    %1090 = vmatmul.mubr.f32.gmra.mrb[0].mxu0 %v1089
    %v1091 = vpop.f32.mrb[0].mxu0
    %v1092 = vadd.f32 %v863, %v1091
    %v1093 = vpop.f32.mrb[0].mxu0
    %v1094 = vand.u32 %v160, 4294901760
    %v1095 = vsub.f32 %v160, %v1094
    %v1096 = vand.u32 %v1095, 4294901760
    %1097 = vmatprep.mubr.f32.mxu0 %v1096
    %v1098 = vand.u32 %v121, 4294901760
    %v1099 = vsub.f32 %v121, %v1098
    %v1100 = vand.u32 %v1099, 4294901760
    %1101 = vmatmul.mubr.f32.gmra.mrb[0].mxu0 %v1100
    %v1102 = vpop.f32.mrb[0].mxu0
    %v1103 = vadd.f32 %v872, %v1102
    %v1104 = vpop.f32.mrb[0].mxu0
    %v1105 = vand.u32 %v163, 4294901760
    %v1106 = vsub.f32 %v163, %v1105
    %v1107 = vand.u32 %v1106, 4294901760
    %1108 = vmatprep.mubr.f32.mxu0 %v1107
    %v1109 = vand.u32 %v123, 4294901760
    %v1110 = vsub.f32 %v123, %v1109
    %v1111 = vand.u32 %v1110, 4294901760
    %1112 = vmatmul.mubr.f32.gmra.mrb[0].mxu0 %v1111
    %v1113 = vpop.f32.mrb[0].mxu0
    %v1114 = vadd.f32 %v881, %v1113
    %v1115 = vpop.f32.mrb[0].mxu0
    %v1116 = vand.u32 %v166, 4294901760
    %v1117 = vsub.f32 %v166, %v1116
    %v1118 = vand.u32 %v1117, 4294901760
    %1119 = vmatprep.mubr.f32.mxu0 %v1118
    %v1120 = vand.u32 %v125, 4294901760
    %v1121 = vsub.f32 %v125, %v1120
    %v1122 = vand.u32 %v1121, 4294901760
    %1123 = vmatmul.mubr.f32.gmra.mrb[0].mxu0 %v1122
    %v1124 = vpop.f32.mrb[0].mxu0
    %v1125 = vadd.f32 %v890, %v1124
    %v1126 = vpop.f32.mrb[0].mxu0
    %v1127 = vand.u32 %v169, 4294901760
    %v1128 = vsub.f32 %v169, %v1127
    %v1129 = vand.u32 %v1128, 4294901760
    %1130 = vmatprep.mubr.f32.mxu0 %v1129
    %v1131 = vand.u32 %v127, 4294901760
    %v1132 = vsub.f32 %v127, %v1131
    %v1133 = vand.u32 %v1132, 4294901760
    %1134 = vmatmul.mubr.f32.gmra.mrb[0].mxu0 %v1133
    %v1135 = vpop.f32.mrb[0].mxu0
    %v1136 = vadd.f32 %v899, %v1135
    %v1137 = vpop.f32.mrb[0].mxu0
    %v1138 = vand.u32 %v172, 4294901760
    %v1139 = vsub.f32 %v172, %v1138
    %v1140 = vand.u32 %v1139, 4294901760
    %1141 = vmatprep.mubr.f32.mxu0 %v1140
    %v1142 = vand.u32 %v129, 4294901760
    %v1143 = vsub.f32 %v129, %v1142
    %v1144 = vand.u32 %v1143, 4294901760
    %1145 = vmatmul.mubr.f32.gmra.mrb[0].mxu0 %v1144
    %v1146 = vpop.f32.mrb[0].mxu0
    %v1147 = vadd.f32 %v908, %v1146
    %v1148 = vpop.f32.mrb[0].mxu0
    %v1149 = vand.u32 %v175, 4294901760
    %v1150 = vsub.f32 %v175, %v1149
    %v1151 = vand.u32 %v1150, 4294901760
    %1152 = vmatprep.mubr.f32.mxu0 %v1151
    %v1153 = vand.u32 %v131, 4294901760
    %v1154 = vsub.f32 %v131, %v1153
    %v1155 = vand.u32 %v1154, 4294901760
    %1156 = vmatmul.mubr.f32.gmra.mrb[0].mxu0 %v1155
    %v1157 = vpop.f32.mrb[0].mxu0
    %v1158 = vadd.f32 %v917, %v1157
    %v1159 = vpop.f32.mrb[0].mxu0
    %v1160 = vand.u32 %v178, 4294901760
    %v1161 = vsub.f32 %v178, %v1160
    %v1162 = vand.u32 %v1161, 4294901760
    %1163 = vmatprep.mubr.f32.mxu0 %v1162
    %v1164 = vand.u32 %v133, 4294901760
    %v1165 = vsub.f32 %v133, %v1164
    %v1166 = vand.u32 %v1165, 4294901760
    %1167 = vmatmul.mubr.f32.gmra.mrb[0].mxu0 %v1166
    %v1168 = vpop.f32.mrb[0].mxu0
    %v1169 = vadd.f32 %v926, %v1168
    %v1170 = vpop.f32.mrb[0].mxu0
    %v1171 = vand.u32 %v181, 4294901760
    %v1172 = vsub.f32 %v181, %v1171
    %v1173 = vand.u32 %v1172, 4294901760
    %1174 = vmatprep.mubr.f32.mxu0 %v1173
    %v1175 = vand.u32 %v135, 4294901760
    %v1176 = vsub.f32 %v135, %v1175
    %v1177 = vand.u32 %v1176, 4294901760
    %1178 = vmatmul.mubr.f32.gmra.mrb[0].mxu0 %v1177
    %v1179 = vpop.f32.mrb[0].mxu0
    %v1180 = vadd.f32 %v935, %v1179
    %v1181 = vpop.f32.mrb[0].mxu0
    %v1182 = vand.u32 %v184, 4294901760
    %v1183 = vsub.f32 %v184, %v1182
    %v1184 = vand.u32 %v1183, 4294901760
    %1185 = vmatprep.mubr.f32.mxu0 %v1184
    %v1186 = vand.u32 %v137, 4294901760
    %v1187 = vsub.f32 %v137, %v1186
    %v1188 = vand.u32 %v1187, 4294901760
    %1189 = vmatmul.mubr.f32.gmra.mrb[0].mxu0 %v1188
    %v1190 = vpop.f32.mrb[0].mxu0
    %v1191 = vadd.f32 %v944, %v1190
    %v1192 = vpop.f32.mrb[0].mxu0
    %v1193 = vand.u32 %v187, 4294901760
    %v1194 = vsub.f32 %v187, %v1193
    %v1195 = vand.u32 %v1194, 4294901760
    %1196 = vmatprep.mubr.f32.mxu0 %v1195
    %v1197 = vand.u32 %v139, 4294901760
    %v1198 = vsub.f32 %v139, %v1197
    %v1199 = vand.u32 %v1198, 4294901760
    %1200 = vmatmul.mubr.f32.gmra.mrb[0].mxu0 %v1199
    %v1201 = vpop.f32.mrb[0].mxu0
    %v1202 = vadd.f32 %v953, %v1201
    %v1203 = vpop.f32.mrb[0].mxu0
    %1204 = vdwg.mxu0
    %v1205 = vand.u32 %v190, 4294901760
    %v1206 = vsub.f32 %v190, %v1205
    %v1207 = vand.u32 %v1206, 4294901760
    %1208 = vmatprep.subr.mxu0 %v1207
    %v1209 = vand.u32 %v101, 4294901760
    %v1210 = vsub.f32 %v101, %v1209
    %v1211 = vand.u32 %v1210, 4294901760
    %1212 = vmatpush1.xpose.msra.mxu0 %v1211
    %v1213 = vand.u32 %v193, 4294901760
    %v1214 = vsub.f32 %v193, %v1213
    %v1215 = vand.u32 %v1214, 4294901760
    %1216 = vmatprep.subr.mxu0 %v1215
    %v1217 = vand.u32 %v103, 4294901760
    %v1218 = vsub.f32 %v103, %v1217
    %v1219 = vand.u32 %v1218, 4294901760
    %1220 = vmatpush1.xpose.msra.mxu0 %v1219
    %v1221 = vand.u32 %v196, 4294901760
    %v1222 = vsub.f32 %v196, %v1221
    %v1223 = vand.u32 %v1222, 4294901760
    %1224 = vmatprep.subr.mxu0 %v1223
    %v1225 = vand.u32 %v105, 4294901760
    %v1226 = vsub.f32 %v105, %v1225
    %v1227 = vand.u32 %v1226, 4294901760
    %1228 = vmatpush1.xpose.msra.mxu0 %v1227
    %v1229 = vand.u32 %v199, 4294901760
    %v1230 = vsub.f32 %v199, %v1229
    %v1231 = vand.u32 %v1230, 4294901760
    %1232 = vmatprep.subr.mxu0 %v1231
    %v1233 = vand.u32 %v107, 4294901760
    %v1234 = vsub.f32 %v107, %v1233
    %v1235 = vand.u32 %v1234, 4294901760
    %1236 = vmatpush1.xpose.msra.mxu0 %v1235
    %1237 = vmatprep.subr.mxu0 0.0
    %1238 = vmatpush1.xpose.msra.mxu0 0.0
    %1239 = vmatprep.subr.mxu0 0.0
    %1240 = vmatpush1.xpose.msra.mxu0 0.0
    %1241 = vmatprep.subr.mxu0 0.0
    %1242 = vmatpush1.xpose.msra.mxu0 0.0
    %1243 = vmatprep.subr.mxu0 0.0
    %1244 = vmatpush1.xpose.msra.mxu0 0.0
    %1245 = vmatprep.subr.mxu0 0.0
    %1246 = vmatpush1.xpose.msra.mxu0 0.0
    %1247 = vmatprep.subr.mxu0 0.0
    %1248 = vmatpush1.xpose.msra.mxu0 0.0
    %1249 = vmatprep.subr.mxu0 0.0
    %1250 = vmatpush1.xpose.msra.mxu0 0.0
    %1251 = vmatprep.subr.mxu0 0.0
    %1252 = vmatpush1.xpose.msra.mxu0 0.0
    %1253 = vmatprep.subr.mxu0 0.0
    %1254 = vmatpush1.xpose.msra.mxu0 0.0
    %1255 = vmatprep.subr.mxu0 0.0
    %1256 = vmatpush1.xpose.msra.mxu0 0.0
    %1257 = vmatprep.subr.mxu0 0.0
    %1258 = vmatpush1.xpose.msra.mxu0 0.0
    %1259 = vmatprep.subr.mxu0 0.0
    %1260 = vmatpush1.xpose.msra.mxu0 0.0
    %1261 = vmatprep.subr.mxu0 0.0
    %1262 = vmatpush1.xpose.msra.mxu0 0.0
    %1263 = vmatprep.subr.mxu0 0.0
    %1264 = vmatpush1.xpose.msra.mxu0 0.0
    %1265 = vmatprep.subr.mxu0 0.0
    %1266 = vmatpush1.xpose.msra.mxu0 0.0
    %1267 = vmatprep.subr.mxu0 0.0
    %1268 = vmatpush1.xpose.msra.mxu0 0.0
    %1269 = vmatprep.subr.mxu0 0.0
    %1270 = vmatpush1.xpose.msra.mxu0 0.0
    %1271 = vmatprep.subr.mxu0 0.0
    %1272 = vmatpush1.xpose.msra.mxu0 0.0
    %1273 = vmatprep.subr.mxu0 0.0
    %1274 = vmatpush1.xpose.msra.mxu0 0.0
    %1275 = vmatprep.subr.mxu0 0.0
    %1276 = vmatpush1.xpose.msra.mxu0 0.0
    %1277 = vmatprep.subr.mxu0 0.0
    %1278 = vmatpush1.xpose.msra.mxu0 0.0
    %1279 = vmatprep.subr.mxu0 0.0
    %1280 = vmatpush1.xpose.msra.mxu0 0.0
    %1281 = vmatprep.subr.mxu0 0.0
    %1282 = vmatpush1.xpose.msra.mxu0 0.0
    %1283 = vmatprep.subr.mxu0 0.0
    %1284 = vmatpush1.xpose.msra.mxu0 0.0
    %1285 = vmatprep.subr.mxu0 0.0
    %1286 = vmatpush1.xpose.msra.mxu0 0.0
    %1287 = vmatprep.subr.mxu0 0.0
    %1288 = vmatpush1.xpose.msra.mxu0 0.0
    %1289 = vmatprep.subr.mxu0 0.0
    %1290 = vmatpush1.xpose.msra.mxu0 0.0
    %1291 = vmatprep.subr.mxu0 0.0
    %1292 = vmatpush1.xpose.msra.mxu0 0.0
    %v1293 = vand.u32 %v142, 4294901760
    %1294 = vmatprep.mubr.f32.mxu0 %v1293
    %v1295 = vand.u32 %v109, 4294901760
    %1296 = vmatmul.mubr.f32.gmra.mrb[0].mxu0 %v1295
    %v1297 = vpop.f32.mrb[0].mxu0
    %v1298 = vadd.f32 %v1037, %v1297
    %v1299 = vpop.f32.mrb[0].mxu0
    %v1300 = vand.u32 %v145, 4294901760
    %1301 = vmatprep.mubr.f32.mxu0 %v1300
    %v1302 = vand.u32 %v111, 4294901760
    %1303 = vmatmul.mubr.f32.gmra.mrb[0].mxu0 %v1302
    %v1304 = vpop.f32.mrb[0].mxu0
    %v1305 = vadd.f32 %v1048, %v1304
    %v1306 = vpop.f32.mrb[0].mxu0
    %v1307 = vand.u32 %v148, 4294901760
    %1308 = vmatprep.mubr.f32.mxu0 %v1307
    %v1309 = vand.u32 %v113, 4294901760
    %1310 = vmatmul.mubr.f32.gmra.mrb[0].mxu0 %v1309
    %v1311 = vpop.f32.mrb[0].mxu0
    %v1312 = vadd.f32 %v1059, %v1311
    %v1313 = vpop.f32.mrb[0].mxu0
    %v1314 = vand.u32 %v151, 4294901760
    %1315 = vmatprep.mubr.f32.mxu0 %v1314
    %v1316 = vand.u32 %v115, 4294901760
    %1317 = vmatmul.mubr.f32.gmra.mrb[0].mxu0 %v1316
    %v1318 = vpop.f32.mrb[0].mxu0
    %v1319 = vadd.f32 %v1070, %v1318
    %v1320 = vpop.f32.mrb[0].mxu0
    %v1321 = vand.u32 %v154, 4294901760
    %1322 = vmatprep.mubr.f32.mxu0 %v1321
    %v1323 = vand.u32 %v117, 4294901760
    %1324 = vmatmul.mubr.f32.gmra.mrb[0].mxu0 %v1323
    %v1325 = vpop.f32.mrb[0].mxu0
    %v1326 = vadd.f32 %v1081, %v1325
    %v1327 = vpop.f32.mrb[0].mxu0
    %v1328 = vand.u32 %v157, 4294901760
    %1329 = vmatprep.mubr.f32.mxu0 %v1328
    %v1330 = vand.u32 %v119, 4294901760
    %1331 = vmatmul.mubr.f32.gmra.mrb[0].mxu0 %v1330
    %v1332 = vpop.f32.mrb[0].mxu0
    %v1333 = vadd.f32 %v1092, %v1332
    %v1334 = vpop.f32.mrb[0].mxu0
    %v1335 = vand.u32 %v160, 4294901760
    %1336 = vmatprep.mubr.f32.mxu0 %v1335
    %v1337 = vand.u32 %v121, 4294901760
    %1338 = vmatmul.mubr.f32.gmra.mrb[0].mxu0 %v1337
    %v1339 = vpop.f32.mrb[0].mxu0
    %v1340 = vadd.f32 %v1103, %v1339
    %v1341 = vpop.f32.mrb[0].mxu0
    %v1342 = vand.u32 %v163, 4294901760
    %1343 = vmatprep.mubr.f32.mxu0 %v1342
    %v1344 = vand.u32 %v123, 4294901760
    %1345 = vmatmul.mubr.f32.gmra.mrb[0].mxu0 %v1344
    %v1346 = vpop.f32.mrb[0].mxu0
    %v1347 = vadd.f32 %v1114, %v1346
    %v1348 = vpop.f32.mrb[0].mxu0
    %v1349 = vand.u32 %v166, 4294901760
    %1350 = vmatprep.mubr.f32.mxu0 %v1349
    %v1351 = vand.u32 %v125, 4294901760
    %1352 = vmatmul.mubr.f32.gmra.mrb[0].mxu0 %v1351
    %v1353 = vpop.f32.mrb[0].mxu0
    %v1354 = vadd.f32 %v1125, %v1353
    %v1355 = vpop.f32.mrb[0].mxu0
    %v1356 = vand.u32 %v169, 4294901760
    %1357 = vmatprep.mubr.f32.mxu0 %v1356
    %v1358 = vand.u32 %v127, 4294901760
    %1359 = vmatmul.mubr.f32.gmra.mrb[0].mxu0 %v1358
    %v1360 = vpop.f32.mrb[0].mxu0
    %v1361 = vadd.f32 %v1136, %v1360
    %v1362 = vpop.f32.mrb[0].mxu0
    %v1363 = vand.u32 %v172, 4294901760
    %1364 = vmatprep.mubr.f32.mxu0 %v1363
    %v1365 = vand.u32 %v129, 4294901760
    %1366 = vmatmul.mubr.f32.gmra.mrb[0].mxu0 %v1365
    %v1367 = vpop.f32.mrb[0].mxu0
    %v1368 = vadd.f32 %v1147, %v1367
    %v1369 = vpop.f32.mrb[0].mxu0
    %v1370 = vand.u32 %v175, 4294901760
    %1371 = vmatprep.mubr.f32.mxu0 %v1370
    %v1372 = vand.u32 %v131, 4294901760
    %1373 = vmatmul.mubr.f32.gmra.mrb[0].mxu0 %v1372
    %v1374 = vpop.f32.mrb[0].mxu0
    %v1375 = vadd.f32 %v1158, %v1374
    %v1376 = vpop.f32.mrb[0].mxu0
    %v1377 = vand.u32 %v178, 4294901760
    %1378 = vmatprep.mubr.f32.mxu0 %v1377
    %v1379 = vand.u32 %v133, 4294901760
    %1380 = vmatmul.mubr.f32.gmra.mrb[0].mxu0 %v1379
    %v1381 = vpop.f32.mrb[0].mxu0
    %v1382 = vadd.f32 %v1169, %v1381
    %v1383 = vpop.f32.mrb[0].mxu0
    %v1384 = vand.u32 %v181, 4294901760
    %1385 = vmatprep.mubr.f32.mxu0 %v1384
    %v1386 = vand.u32 %v135, 4294901760
    %1387 = vmatmul.mubr.f32.gmra.mrb[0].mxu0 %v1386
    %v1388 = vpop.f32.mrb[0].mxu0
    %v1389 = vadd.f32 %v1180, %v1388
    %v1390 = vpop.f32.mrb[0].mxu0
    %v1391 = vand.u32 %v184, 4294901760
    %1392 = vmatprep.mubr.f32.mxu0 %v1391
    %v1393 = vand.u32 %v137, 4294901760
    %1394 = vmatmul.mubr.f32.gmra.mrb[0].mxu0 %v1393
    %v1395 = vpop.f32.mrb[0].mxu0
    %v1396 = vadd.f32 %v1191, %v1395
    %v1397 = vpop.f32.mrb[0].mxu0
    %v1398 = vand.u32 %v187, 4294901760
    %1399 = vmatprep.mubr.f32.mxu0 %v1398
    %v1400 = vand.u32 %v139, 4294901760
    %1401 = vmatmul.mubr.f32.gmra.mrb[0].mxu0 %v1400
    %v1402 = vpop.f32.mrb[0].mxu0
    %v1403 = vadd.f32 %v1202, %v1402
    %v1404 = vpop.f32.mrb[0].mxu0
    %1405 = vdwg.mxu0
    %v1406 = vand.u32 %v190, 4294901760
    %1407 = vmatprep.subr.mxu0 %v1406
    %v1408 = vand.u32 %v101, 4294901760
    %1409 = vmatpush1.xpose.msra.mxu0 %v1408
    %v1410 = vand.u32 %v193, 4294901760
    %1411 = vmatprep.subr.mxu0 %v1410
    %v1412 = vand.u32 %v103, 4294901760
    %1413 = vmatpush1.xpose.msra.mxu0 %v1412
    %v1414 = vand.u32 %v196, 4294901760
    %1415 = vmatprep.subr.mxu0 %v1414
    %v1416 = vand.u32 %v105, 4294901760
    %1417 = vmatpush1.xpose.msra.mxu0 %v1416
    %v1418 = vand.u32 %v199, 4294901760
    %1419 = vmatprep.subr.mxu0 %v1418
    %v1420 = vand.u32 %v107, 4294901760
    %1421 = vmatpush1.xpose.msra.mxu0 %v1420
    %1422 = vmatprep.subr.mxu0 0.0
    %1423 = vmatpush1.xpose.msra.mxu0 0.0
    %1424 = vmatprep.subr.mxu0 0.0
    %1425 = vmatpush1.xpose.msra.mxu0 0.0
    %1426 = vmatprep.subr.mxu0 0.0
    %1427 = vmatpush1.xpose.msra.mxu0 0.0
    %1428 = vmatprep.subr.mxu0 0.0
    %1429 = vmatpush1.xpose.msra.mxu0 0.0
    %1430 = vmatprep.subr.mxu0 0.0
    %1431 = vmatpush1.xpose.msra.mxu0 0.0
    %1432 = vmatprep.subr.mxu0 0.0
    %1433 = vmatpush1.xpose.msra.mxu0 0.0
    %1434 = vmatprep.subr.mxu0 0.0
    %1435 = vmatpush1.xpose.msra.mxu0 0.0
    %1436 = vmatprep.subr.mxu0 0.0
    %1437 = vmatpush1.xpose.msra.mxu0 0.0
    %1438 = vmatprep.subr.mxu0 0.0
    %1439 = vmatpush1.xpose.msra.mxu0 0.0
    %1440 = vmatprep.subr.mxu0 0.0
    %1441 = vmatpush1.xpose.msra.mxu0 0.0
    %1442 = vmatprep.subr.mxu0 0.0
    %1443 = vmatpush1.xpose.msra.mxu0 0.0
    %1444 = vmatprep.subr.mxu0 0.0
    %1445 = vmatpush1.xpose.msra.mxu0 0.0
    %1446 = vmatprep.subr.mxu0 0.0
    %1447 = vmatpush1.xpose.msra.mxu0 0.0
    %1448 = vmatprep.subr.mxu0 0.0
    %1449 = vmatpush1.xpose.msra.mxu0 0.0
    %1450 = vmatprep.subr.mxu0 0.0
    %1451 = vmatpush1.xpose.msra.mxu0 0.0
    %1452 = vmatprep.subr.mxu0 0.0
    %1453 = vmatpush1.xpose.msra.mxu0 0.0
    %1454 = vmatprep.subr.mxu0 0.0
    %1455 = vmatpush1.xpose.msra.mxu0 0.0
    %1456 = vmatprep.subr.mxu0 0.0
    %1457 = vmatpush1.xpose.msra.mxu0 0.0
    %1458 = vmatprep.subr.mxu0 0.0
    %1459 = vmatpush1.xpose.msra.mxu0 0.0
    %1460 = vmatprep.subr.mxu0 0.0
    %1461 = vmatpush1.xpose.msra.mxu0 0.0
    %1462 = vmatprep.subr.mxu0 0.0
    %1463 = vmatpush1.xpose.msra.mxu0 0.0
    %1464 = vmatprep.subr.mxu0 0.0
    %1465 = vmatpush1.xpose.msra.mxu0 0.0
    %1466 = vmatprep.subr.mxu0 0.0
    %1467 = vmatpush1.xpose.msra.mxu0 0.0
    %1468 = vmatprep.subr.mxu0 0.0
    %1469 = vmatpush1.xpose.msra.mxu0 0.0
    %1470 = vmatprep.subr.mxu0 0.0
    %1471 = vmatpush1.xpose.msra.mxu0 0.0
    %1472 = vmatprep.subr.mxu0 0.0
    %1473 = vmatpush1.xpose.msra.mxu0 0.0
    %1474 = vmatprep.subr.mxu0 0.0
    %1475 = vmatpush1.xpose.msra.mxu0 0.0
    %1476 = vmatprep.subr.mxu0 0.0
    %1477 = vmatpush1.xpose.msra.mxu0 0.0
    %v1478 = vand.u32 %v142, 4294901760
    %1479 = vmatprep.mubr.f32.mxu0 %v1478
    %v1480 = vand.u32 %v109, 4294901760
    %1481 = vmatmul.mubr.f32.gmra.mrb[0].mxu0 %v1480
    %v1482 = vpop.f32.mrb[0].mxu0
    %v1483 = vadd.f32 %v1298, %v1482
    %v1484 = vpop.f32.mrb[0].mxu0
    %v1485 = vand.u32 %v145, 4294901760
    %1486 = vmatprep.mubr.f32.mxu0 %v1485
    %v1487 = vand.u32 %v111, 4294901760
    %1488 = vmatmul.mubr.f32.gmra.mrb[0].mxu0 %v1487
    %v1489 = vpop.f32.mrb[0].mxu0
    %v1490 = vadd.f32 %v1305, %v1489
    %v1491 = vpop.f32.mrb[0].mxu0
    %v1492 = vand.u32 %v148, 4294901760
    %1493 = vmatprep.mubr.f32.mxu0 %v1492
    %v1494 = vand.u32 %v113, 4294901760
    %1495 = vmatmul.mubr.f32.gmra.mrb[0].mxu0 %v1494
    %v1496 = vpop.f32.mrb[0].mxu0
    %v1497 = vadd.f32 %v1312, %v1496
    %v1498 = vpop.f32.mrb[0].mxu0
    %v1499 = vand.u32 %v151, 4294901760
    %1500 = vmatprep.mubr.f32.mxu0 %v1499
    %v1501 = vand.u32 %v115, 4294901760
    %1502 = vmatmul.mubr.f32.gmra.mrb[0].mxu0 %v1501
    %v1503 = vpop.f32.mrb[0].mxu0
    %v1504 = vadd.f32 %v1319, %v1503
    %v1505 = vpop.f32.mrb[0].mxu0
    %v1506 = vand.u32 %v154, 4294901760
    %1507 = vmatprep.mubr.f32.mxu0 %v1506
    %v1508 = vand.u32 %v117, 4294901760
    %1509 = vmatmul.mubr.f32.gmra.mrb[0].mxu0 %v1508
    %v1510 = vpop.f32.mrb[0].mxu0
    %v1511 = vadd.f32 %v1326, %v1510
    %v1512 = vpop.f32.mrb[0].mxu0
    %v1513 = vand.u32 %v157, 4294901760
    %1514 = vmatprep.mubr.f32.mxu0 %v1513
    %v1515 = vand.u32 %v119, 4294901760
    %1516 = vmatmul.mubr.f32.gmra.mrb[0].mxu0 %v1515
    %v1517 = vpop.f32.mrb[0].mxu0
    %v1518 = vadd.f32 %v1333, %v1517
    %v1519 = vpop.f32.mrb[0].mxu0
    %v1520 = vand.u32 %v160, 4294901760
    %1521 = vmatprep.mubr.f32.mxu0 %v1520
    %v1522 = vand.u32 %v121, 4294901760
    %1523 = vmatmul.mubr.f32.gmra.mrb[0].mxu0 %v1522
    %v1524 = vpop.f32.mrb[0].mxu0
    %v1525 = vadd.f32 %v1340, %v1524
    %v1526 = vpop.f32.mrb[0].mxu0
    %v1527 = vand.u32 %v163, 4294901760
    %1528 = vmatprep.mubr.f32.mxu0 %v1527
    %v1529 = vand.u32 %v123, 4294901760
    %1530 = vmatmul.mubr.f32.gmra.mrb[0].mxu0 %v1529
    %v1531 = vpop.f32.mrb[0].mxu0
    %v1532 = vadd.f32 %v1347, %v1531
    %v1533 = vpop.f32.mrb[0].mxu0
    %v1534 = vand.u32 %v166, 4294901760
    %1535 = vmatprep.mubr.f32.mxu0 %v1534
    %v1536 = vand.u32 %v125, 4294901760
    %1537 = vmatmul.mubr.f32.gmra.mrb[0].mxu0 %v1536
    %v1538 = vpop.f32.mrb[0].mxu0
    %v1539 = vadd.f32 %v1354, %v1538
    %v1540 = vpop.f32.mrb[0].mxu0
    %v1541 = vand.u32 %v169, 4294901760
    %1542 = vmatprep.mubr.f32.mxu0 %v1541
    %v1543 = vand.u32 %v127, 4294901760
    %1544 = vmatmul.mubr.f32.gmra.mrb[0].mxu0 %v1543
    %v1545 = vpop.f32.mrb[0].mxu0
    %v1546 = vadd.f32 %v1361, %v1545
    %v1547 = vpop.f32.mrb[0].mxu0
    %v1548 = vand.u32 %v172, 4294901760
    %1549 = vmatprep.mubr.f32.mxu0 %v1548
    %v1550 = vand.u32 %v129, 4294901760
    %1551 = vmatmul.mubr.f32.gmra.mrb[0].mxu0 %v1550
    %v1552 = vpop.f32.mrb[0].mxu0
    %v1553 = vadd.f32 %v1368, %v1552
    %v1554 = vpop.f32.mrb[0].mxu0
    %v1555 = vand.u32 %v175, 4294901760
    %1556 = vmatprep.mubr.f32.mxu0 %v1555
    %v1557 = vand.u32 %v131, 4294901760
    %1558 = vmatmul.mubr.f32.gmra.mrb[0].mxu0 %v1557
    %v1559 = vpop.f32.mrb[0].mxu0
    %v1560 = vadd.f32 %v1375, %v1559
    %v1561 = vpop.f32.mrb[0].mxu0
    %v1562 = vand.u32 %v178, 4294901760
    %1563 = vmatprep.mubr.f32.mxu0 %v1562
    %v1564 = vand.u32 %v133, 4294901760
    %1565 = vmatmul.mubr.f32.gmra.mrb[0].mxu0 %v1564
    %v1566 = vpop.f32.mrb[0].mxu0
    %v1567 = vadd.f32 %v1382, %v1566
    %v1568 = vpop.f32.mrb[0].mxu0
    %v1569 = vand.u32 %v181, 4294901760
    %1570 = vmatprep.mubr.f32.mxu0 %v1569
    %v1571 = vand.u32 %v135, 4294901760
    %1572 = vmatmul.mubr.f32.gmra.mrb[0].mxu0 %v1571
    %v1573 = vpop.f32.mrb[0].mxu0
    %v1574 = vadd.f32 %v1389, %v1573
    %v1575 = vpop.f32.mrb[0].mxu0
    %v1576 = vand.u32 %v184, 4294901760
    %1577 = vmatprep.mubr.f32.mxu0 %v1576
    %v1578 = vand.u32 %v137, 4294901760
    %1579 = vmatmul.mubr.f32.gmra.mrb[0].mxu0 %v1578
    %v1580 = vpop.f32.mrb[0].mxu0
    %v1581 = vadd.f32 %v1396, %v1580
    %v1582 = vpop.f32.mrb[0].mxu0
    %v1583 = vand.u32 %v187, 4294901760
    %1584 = vmatprep.mubr.f32.mxu0 %v1583
    %v1585 = vand.u32 %v139, 4294901760
    %1586 = vmatmul.mubr.f32.gmra.mrb[0].mxu0 %v1585
    %v1587 = vpop.f32.mrb[0].mxu0
    %v1588 = vadd.f32 %v1403, %v1587
    %v1589 = vpop.f32.mrb[0].mxu0
    %1590 = vdwg.mxu0
    %v1591 = vld [vmem:[%s2] sm:$0xff]
    %v1592 = vld [vmem:[%s2 + $0x8] sm:$0xff]
    %v1593 = vld [vmem:[%s2 + $0x10] sm:$0xff]
    %v1594 = vld [vmem:[%s2 + $0x18] sm:$0xff]
    %v1595 = vld [vmem:[%s2 + $0x20] sm:$0xff]
    %v1596 = vld [vmem:[%s2 + $0x28] sm:$0xff]
    %v1597 = vld [vmem:[%s2 + $0x30] sm:$0xff]
    %v1598 = vld [vmem:[%s2 + $0x38] sm:$0xff]
    %v1599 = vld [vmem:[%s2 + $0x40] sm:$0xff]
    %v1600 = vld [vmem:[%s2 + $0x48] sm:$0xff]
    %v1601 = vld [vmem:[%s2 + $0x50] sm:$0xff]
    %v1602 = vld [vmem:[%s2 + $0x58] sm:$0xff]
    %v1603 = vld [vmem:[%s2 + $0x60] sm:$0xff]
    %v1604 = vld [vmem:[%s2 + $0x68] sm:$0xff]
    %v1605 = vld [vmem:[%s2 + $0x70] sm:$0xff]
    %v1606 = vld [vmem:[%s2 + $0x78] sm:$0xff]
    %v1607 = vld [vmem:[%s3] sm:$0xff]
    %v1608 = vld [vmem:[%s3 + $0x8] sm:$0xff]
    %v1609 = vld [vmem:[%s3 + $0x10] sm:$0xff]
    %v1610 = vld [vmem:[%s3 + $0x18] sm:$0xff]
    %1611 = vmatprep.subr.mxu0 0.0
    %v1612 = vand.u32 %v1483, 4294901760
    %1613 = vmatpush1.msra.mxu0 %v1612
    %1614 = vmatprep.subr.mxu0 0.0
    %v1615 = vand.u32 %v1490, 4294901760
    %1616 = vmatpush1.msra.mxu0 %v1615
    %1617 = vmatprep.subr.mxu0 0.0
    %v1618 = vand.u32 %v1497, 4294901760
    %1619 = vmatpush1.msra.mxu0 %v1618
    %1620 = vmatprep.subr.mxu0 0.0
    %v1621 = vand.u32 %v1504, 4294901760
    %1622 = vmatpush1.msra.mxu0 %v1621
    %1623 = vmatprep.subr.mxu0 0.0
    %v1624 = vand.u32 %v1511, 4294901760
    %1625 = vmatpush1.msra.mxu0 %v1624
    %1626 = vmatprep.subr.mxu0 0.0
    %v1627 = vand.u32 %v1518, 4294901760
    %1628 = vmatpush1.msra.mxu0 %v1627
    %1629 = vmatprep.subr.mxu0 0.0
    %v1630 = vand.u32 %v1525, 4294901760
    %1631 = vmatpush1.msra.mxu0 %v1630
    %1632 = vmatprep.subr.mxu0 0.0
    %v1633 = vand.u32 %v1532, 4294901760
    %1634 = vmatpush1.msra.mxu0 %v1633
    %1635 = vmatprep.subr.mxu0 0.0
    %v1636 = vand.u32 %v1539, 4294901760
    %1637 = vmatpush1.msra.mxu0 %v1636
    %1638 = vmatprep.subr.mxu0 0.0
    %v1639 = vand.u32 %v1546, 4294901760
    %1640 = vmatpush1.msra.mxu0 %v1639
    %1641 = vmatprep.subr.mxu0 0.0
    %v1642 = vand.u32 %v1553, 4294901760
    %1643 = vmatpush1.msra.mxu0 %v1642
    %1644 = vmatprep.subr.mxu0 0.0
    %v1645 = vand.u32 %v1560, 4294901760
    %1646 = vmatpush1.msra.mxu0 %v1645
    %1647 = vmatprep.subr.mxu0 0.0
    %v1648 = vand.u32 %v1567, 4294901760
    %1649 = vmatpush1.msra.mxu0 %v1648
    %1650 = vmatprep.subr.mxu0 0.0
    %v1651 = vand.u32 %v1574, 4294901760
    %1652 = vmatpush1.msra.mxu0 %v1651
    %1653 = vmatprep.subr.mxu0 0.0
    %v1654 = vand.u32 %v1581, 4294901760
    %1655 = vmatpush1.msra.mxu0 %v1654
    %1656 = vmatprep.subr.mxu0 0.0
    %v1657 = vand.u32 %v1588, 4294901760
    %1658 = vmatpush1.msra.mxu0 %v1657
    %1659 = vmatprep.subr.mxu0 0.0
    %1660 = vmatpush1.msra.mxu0 0.0
    %1661 = vmatprep.subr.mxu0 0.0
    %1662 = vmatpush1.msra.mxu0 0.0
    %1663 = vmatprep.subr.mxu0 0.0
    %1664 = vmatpush1.msra.mxu0 0.0
    %1665 = vmatprep.subr.mxu0 0.0
    %1666 = vmatpush1.msra.mxu0 0.0
    %1667 = vmatprep.subr.mxu0 0.0
    %1668 = vmatpush1.msra.mxu0 0.0
    %1669 = vmatprep.subr.mxu0 0.0
    %1670 = vmatpush1.msra.mxu0 0.0
    %1671 = vmatprep.subr.mxu0 0.0
    %1672 = vmatpush1.msra.mxu0 0.0
    %1673 = vmatprep.subr.mxu0 0.0
    %1674 = vmatpush1.msra.mxu0 0.0
    %1675 = vmatprep.subr.mxu0 0.0
    %1676 = vmatpush1.msra.mxu0 0.0
    %1677 = vmatprep.subr.mxu0 0.0
    %1678 = vmatpush1.msra.mxu0 0.0
    %1679 = vmatprep.subr.mxu0 0.0
    %1680 = vmatpush1.msra.mxu0 0.0
    %1681 = vmatprep.subr.mxu0 0.0
    %1682 = vmatpush1.msra.mxu0 0.0
    %1683 = vmatprep.subr.mxu0 0.0
    %1684 = vmatpush1.msra.mxu0 0.0
    %1685 = vmatprep.subr.mxu0 0.0
    %1686 = vmatpush1.msra.mxu0 0.0
    %1687 = vmatprep.subr.mxu0 0.0
    %1688 = vmatpush1.msra.mxu0 0.0
    %1689 = vmatprep.subr.mxu0 0.0
    %1690 = vmatpush1.msra.mxu0 0.0
    %1691 = vmatprep.mubr.f32.mxu0 0.0
    %v1692 = vand.u32 %v1591, 4294901760
    %v1693 = vsub.f32 %v1591, %v1692
    %v1694 = vand.u32 %v1693, 4294901760
    %v1695 = vsub.f32 %v1693, %v1694
    %v1696 = vand.u32 %v1695, 4294901760
    %1697 = vmatmul.mubr.f32.gmra.mrb[0].mxu0 %v1696
    %v1698 = vpop.f32.mrb[0].mxu0
    %v1699 = vadd.f32 0.0, %v1698
    %v1700 = vpop.f32.mrb[0].mxu0
    %1701 = vmatprep.mubr.f32.mxu0 0.0
    %v1702 = vand.u32 %v1592, 4294901760
    %v1703 = vsub.f32 %v1592, %v1702
    %v1704 = vand.u32 %v1703, 4294901760
    %v1705 = vsub.f32 %v1703, %v1704
    %v1706 = vand.u32 %v1705, 4294901760
    %1707 = vmatmul.mubr.f32.gmra.mrb[0].mxu0 %v1706
    %v1708 = vpop.f32.mrb[0].mxu0
    %v1709 = vadd.f32 0.0, %v1708
    %v1710 = vpop.f32.mrb[0].mxu0
    %1711 = vmatprep.mubr.f32.mxu0 0.0
    %v1712 = vand.u32 %v1593, 4294901760
    %v1713 = vsub.f32 %v1593, %v1712
    %v1714 = vand.u32 %v1713, 4294901760
    %v1715 = vsub.f32 %v1713, %v1714
    %v1716 = vand.u32 %v1715, 4294901760
    %1717 = vmatmul.mubr.f32.gmra.mrb[0].mxu0 %v1716
    %v1718 = vpop.f32.mrb[0].mxu0
    %v1719 = vadd.f32 0.0, %v1718
    %v1720 = vpop.f32.mrb[0].mxu0
    %1721 = vmatprep.mubr.f32.mxu0 0.0
    %v1722 = vand.u32 %v1594, 4294901760
    %v1723 = vsub.f32 %v1594, %v1722
    %v1724 = vand.u32 %v1723, 4294901760
    %v1725 = vsub.f32 %v1723, %v1724
    %v1726 = vand.u32 %v1725, 4294901760
    %1727 = vmatmul.mubr.f32.gmra.mrb[0].mxu0 %v1726
    %v1728 = vpop.f32.mrb[0].mxu0
    %v1729 = vadd.f32 0.0, %v1728
    %v1730 = vpop.f32.mrb[0].mxu0
    %1731 = vmatprep.mubr.f32.mxu0 0.0
    %v1732 = vand.u32 %v1595, 4294901760
    %v1733 = vsub.f32 %v1595, %v1732
    %v1734 = vand.u32 %v1733, 4294901760
    %v1735 = vsub.f32 %v1733, %v1734
    %v1736 = vand.u32 %v1735, 4294901760
    %1737 = vmatmul.mubr.f32.gmra.mrb[0].mxu0 %v1736
    %v1738 = vpop.f32.mrb[0].mxu0
    %v1739 = vadd.f32 0.0, %v1738
    %v1740 = vpop.f32.mrb[0].mxu0
    %1741 = vmatprep.mubr.f32.mxu0 0.0
    %v1742 = vand.u32 %v1596, 4294901760
    %v1743 = vsub.f32 %v1596, %v1742
    %v1744 = vand.u32 %v1743, 4294901760
    %v1745 = vsub.f32 %v1743, %v1744
    %v1746 = vand.u32 %v1745, 4294901760
    %1747 = vmatmul.mubr.f32.gmra.mrb[0].mxu0 %v1746
    %v1748 = vpop.f32.mrb[0].mxu0
    %v1749 = vadd.f32 0.0, %v1748
    %v1750 = vpop.f32.mrb[0].mxu0
    %1751 = vmatprep.mubr.f32.mxu0 0.0
    %v1752 = vand.u32 %v1597, 4294901760
    %v1753 = vsub.f32 %v1597, %v1752
    %v1754 = vand.u32 %v1753, 4294901760
    %v1755 = vsub.f32 %v1753, %v1754
    %v1756 = vand.u32 %v1755, 4294901760
    %1757 = vmatmul.mubr.f32.gmra.mrb[0].mxu0 %v1756
    %v1758 = vpop.f32.mrb[0].mxu0
    %v1759 = vadd.f32 0.0, %v1758
    %v1760 = vpop.f32.mrb[0].mxu0
    %1761 = vmatprep.mubr.f32.mxu0 0.0
    %v1762 = vand.u32 %v1598, 4294901760
    %v1763 = vsub.f32 %v1598, %v1762
    %v1764 = vand.u32 %v1763, 4294901760
    %v1765 = vsub.f32 %v1763, %v1764
    %v1766 = vand.u32 %v1765, 4294901760
    %1767 = vmatmul.mubr.f32.gmra.mrb[0].mxu0 %v1766
    %v1768 = vpop.f32.mrb[0].mxu0
    %v1769 = vadd.f32 0.0, %v1768
    %v1770 = vpop.f32.mrb[0].mxu0
    %1771 = vmatprep.mubr.f32.mxu0 0.0
    %v1772 = vand.u32 %v1599, 4294901760
    %v1773 = vsub.f32 %v1599, %v1772
    %v1774 = vand.u32 %v1773, 4294901760
    %v1775 = vsub.f32 %v1773, %v1774
    %v1776 = vand.u32 %v1775, 4294901760
    %1777 = vmatmul.mubr.f32.gmra.mrb[0].mxu0 %v1776
    %v1778 = vpop.f32.mrb[0].mxu0
    %v1779 = vadd.f32 0.0, %v1778
    %v1780 = vpop.f32.mrb[0].mxu0
    %1781 = vmatprep.mubr.f32.mxu0 0.0
    %v1782 = vand.u32 %v1600, 4294901760
    %v1783 = vsub.f32 %v1600, %v1782
    %v1784 = vand.u32 %v1783, 4294901760
    %v1785 = vsub.f32 %v1783, %v1784
    %v1786 = vand.u32 %v1785, 4294901760
    %1787 = vmatmul.mubr.f32.gmra.mrb[0].mxu0 %v1786
    %v1788 = vpop.f32.mrb[0].mxu0
    %v1789 = vadd.f32 0.0, %v1788
    %v1790 = vpop.f32.mrb[0].mxu0
    %1791 = vmatprep.mubr.f32.mxu0 0.0
    %v1792 = vand.u32 %v1601, 4294901760
    %v1793 = vsub.f32 %v1601, %v1792
    %v1794 = vand.u32 %v1793, 4294901760
    %v1795 = vsub.f32 %v1793, %v1794
    %v1796 = vand.u32 %v1795, 4294901760
    %1797 = vmatmul.mubr.f32.gmra.mrb[0].mxu0 %v1796
    %v1798 = vpop.f32.mrb[0].mxu0
    %v1799 = vadd.f32 0.0, %v1798
    %v1800 = vpop.f32.mrb[0].mxu0
    %1801 = vmatprep.mubr.f32.mxu0 0.0
    %v1802 = vand.u32 %v1602, 4294901760
    %v1803 = vsub.f32 %v1602, %v1802
    %v1804 = vand.u32 %v1803, 4294901760
    %v1805 = vsub.f32 %v1803, %v1804
    %v1806 = vand.u32 %v1805, 4294901760
    %1807 = vmatmul.mubr.f32.gmra.mrb[0].mxu0 %v1806
    %v1808 = vpop.f32.mrb[0].mxu0
    %v1809 = vadd.f32 0.0, %v1808
    %v1810 = vpop.f32.mrb[0].mxu0
    %1811 = vmatprep.mubr.f32.mxu0 0.0
    %v1812 = vand.u32 %v1603, 4294901760
    %v1813 = vsub.f32 %v1603, %v1812
    %v1814 = vand.u32 %v1813, 4294901760
    %v1815 = vsub.f32 %v1813, %v1814
    %v1816 = vand.u32 %v1815, 4294901760
    %1817 = vmatmul.mubr.f32.gmra.mrb[0].mxu0 %v1816
    %v1818 = vpop.f32.mrb[0].mxu0
    %v1819 = vadd.f32 0.0, %v1818
    %v1820 = vpop.f32.mrb[0].mxu0
    %1821 = vmatprep.mubr.f32.mxu0 0.0
    %v1822 = vand.u32 %v1604, 4294901760
    %v1823 = vsub.f32 %v1604, %v1822
    %v1824 = vand.u32 %v1823, 4294901760
    %v1825 = vsub.f32 %v1823, %v1824
    %v1826 = vand.u32 %v1825, 4294901760
    %1827 = vmatmul.mubr.f32.gmra.mrb[0].mxu0 %v1826
    %v1828 = vpop.f32.mrb[0].mxu0
    %v1829 = vadd.f32 0.0, %v1828
    %v1830 = vpop.f32.mrb[0].mxu0
    %1831 = vmatprep.mubr.f32.mxu0 0.0
    %v1832 = vand.u32 %v1605, 4294901760
    %v1833 = vsub.f32 %v1605, %v1832
    %v1834 = vand.u32 %v1833, 4294901760
    %v1835 = vsub.f32 %v1833, %v1834
    %v1836 = vand.u32 %v1835, 4294901760
    %1837 = vmatmul.mubr.f32.gmra.mrb[0].mxu0 %v1836
    %v1838 = vpop.f32.mrb[0].mxu0
    %v1839 = vadd.f32 0.0, %v1838
    %v1840 = vpop.f32.mrb[0].mxu0
    %1841 = vmatprep.mubr.f32.mxu0 0.0
    %v1842 = vand.u32 %v1606, 4294901760
    %v1843 = vsub.f32 %v1606, %v1842
    %v1844 = vand.u32 %v1843, 4294901760
    %v1845 = vsub.f32 %v1843, %v1844
    %v1846 = vand.u32 %v1845, 4294901760
    %1847 = vmatmul.mubr.f32.gmra.mrb[0].mxu0 %v1846
    %v1848 = vpop.f32.mrb[0].mxu0
    %v1849 = vadd.f32 0.0, %v1848
    %v1850 = vpop.f32.mrb[0].mxu0
    %1851 = vdwg.mxu0
    %1852 = vmatprep.subr.mxu0 0.0
    %v1853 = vand.u32 %v1483, 4294901760
    %v1854 = vsub.f32 %v1483, %v1853
    %v1855 = vand.u32 %v1854, 4294901760
    %v1856 = vsub.f32 %v1854, %v1855
    %v1857 = vand.u32 %v1856, 4294901760
    %1858 = vmatpush1.msra.mxu0 %v1857
    %1859 = vmatprep.subr.mxu0 0.0
    %v1860 = vand.u32 %v1490, 4294901760
    %v1861 = vsub.f32 %v1490, %v1860
    %v1862 = vand.u32 %v1861, 4294901760
    %v1863 = vsub.f32 %v1861, %v1862
    %v1864 = vand.u32 %v1863, 4294901760
    %1865 = vmatpush1.msra.mxu0 %v1864
    %1866 = vmatprep.subr.mxu0 0.0
    %v1867 = vand.u32 %v1497, 4294901760
    %v1868 = vsub.f32 %v1497, %v1867
    %v1869 = vand.u32 %v1868, 4294901760
    %v1870 = vsub.f32 %v1868, %v1869
    %v1871 = vand.u32 %v1870, 4294901760
    %1872 = vmatpush1.msra.mxu0 %v1871
    %1873 = vmatprep.subr.mxu0 0.0
    %v1874 = vand.u32 %v1504, 4294901760
    %v1875 = vsub.f32 %v1504, %v1874
    %v1876 = vand.u32 %v1875, 4294901760
    %v1877 = vsub.f32 %v1875, %v1876
    %v1878 = vand.u32 %v1877, 4294901760
    %1879 = vmatpush1.msra.mxu0 %v1878
    %1880 = vmatprep.subr.mxu0 0.0
    %v1881 = vand.u32 %v1511, 4294901760
    %v1882 = vsub.f32 %v1511, %v1881
    %v1883 = vand.u32 %v1882, 4294901760
    %v1884 = vsub.f32 %v1882, %v1883
    %v1885 = vand.u32 %v1884, 4294901760
    %1886 = vmatpush1.msra.mxu0 %v1885
    %1887 = vmatprep.subr.mxu0 0.0
    %v1888 = vand.u32 %v1518, 4294901760
    %v1889 = vsub.f32 %v1518, %v1888
    %v1890 = vand.u32 %v1889, 4294901760
    %v1891 = vsub.f32 %v1889, %v1890
    %v1892 = vand.u32 %v1891, 4294901760
    %1893 = vmatpush1.msra.mxu0 %v1892
    %1894 = vmatprep.subr.mxu0 0.0
    %v1895 = vand.u32 %v1525, 4294901760
    %v1896 = vsub.f32 %v1525, %v1895
    %v1897 = vand.u32 %v1896, 4294901760
    %v1898 = vsub.f32 %v1896, %v1897
    %v1899 = vand.u32 %v1898, 4294901760
    %1900 = vmatpush1.msra.mxu0 %v1899
    %1901 = vmatprep.subr.mxu0 0.0
    %v1902 = vand.u32 %v1532, 4294901760
    %v1903 = vsub.f32 %v1532, %v1902
    %v1904 = vand.u32 %v1903, 4294901760
    %v1905 = vsub.f32 %v1903, %v1904
    %v1906 = vand.u32 %v1905, 4294901760
    %1907 = vmatpush1.msra.mxu0 %v1906
    %1908 = vmatprep.subr.mxu0 0.0
    %v1909 = vand.u32 %v1539, 4294901760
    %v1910 = vsub.f32 %v1539, %v1909
    %v1911 = vand.u32 %v1910, 4294901760
    %v1912 = vsub.f32 %v1910, %v1911
    %v1913 = vand.u32 %v1912, 4294901760
    %1914 = vmatpush1.msra.mxu0 %v1913
    %1915 = vmatprep.subr.mxu0 0.0
    %v1916 = vand.u32 %v1546, 4294901760
    %v1917 = vsub.f32 %v1546, %v1916
    %v1918 = vand.u32 %v1917, 4294901760
    %v1919 = vsub.f32 %v1917, %v1918
    %v1920 = vand.u32 %v1919, 4294901760
    %1921 = vmatpush1.msra.mxu0 %v1920
    %1922 = vmatprep.subr.mxu0 0.0
    %v1923 = vand.u32 %v1553, 4294901760
    %v1924 = vsub.f32 %v1553, %v1923
    %v1925 = vand.u32 %v1924, 4294901760
    %v1926 = vsub.f32 %v1924, %v1925
    %v1927 = vand.u32 %v1926, 4294901760
    %1928 = vmatpush1.msra.mxu0 %v1927
    %1929 = vmatprep.subr.mxu0 0.0
    %v1930 = vand.u32 %v1560, 4294901760
    %v1931 = vsub.f32 %v1560, %v1930
    %v1932 = vand.u32 %v1931, 4294901760
    %v1933 = vsub.f32 %v1931, %v1932
    %v1934 = vand.u32 %v1933, 4294901760
    %1935 = vmatpush1.msra.mxu0 %v1934
    %1936 = vmatprep.subr.mxu0 0.0
    %v1937 = vand.u32 %v1567, 4294901760
    %v1938 = vsub.f32 %v1567, %v1937
    %v1939 = vand.u32 %v1938, 4294901760
    %v1940 = vsub.f32 %v1938, %v1939
    %v1941 = vand.u32 %v1940, 4294901760
    %1942 = vmatpush1.msra.mxu0 %v1941
    %1943 = vmatprep.subr.mxu0 0.0
    %v1944 = vand.u32 %v1574, 4294901760
    %v1945 = vsub.f32 %v1574, %v1944
    %v1946 = vand.u32 %v1945, 4294901760
    %v1947 = vsub.f32 %v1945, %v1946
    %v1948 = vand.u32 %v1947, 4294901760
    %1949 = vmatpush1.msra.mxu0 %v1948
    %1950 = vmatprep.subr.mxu0 0.0
    %v1951 = vand.u32 %v1581, 4294901760
    %v1952 = vsub.f32 %v1581, %v1951
    %v1953 = vand.u32 %v1952, 4294901760
    %v1954 = vsub.f32 %v1952, %v1953
    %v1955 = vand.u32 %v1954, 4294901760
    %1956 = vmatpush1.msra.mxu0 %v1955
    %1957 = vmatprep.subr.mxu0 0.0
    %v1958 = vand.u32 %v1588, 4294901760
    %v1959 = vsub.f32 %v1588, %v1958
    %v1960 = vand.u32 %v1959, 4294901760
    %v1961 = vsub.f32 %v1959, %v1960
    %v1962 = vand.u32 %v1961, 4294901760
    %1963 = vmatpush1.msra.mxu0 %v1962
    %1964 = vmatprep.subr.mxu0 0.0
    %1965 = vmatpush1.msra.mxu0 0.0
    %1966 = vmatprep.subr.mxu0 0.0
    %1967 = vmatpush1.msra.mxu0 0.0
    %1968 = vmatprep.subr.mxu0 0.0
    %1969 = vmatpush1.msra.mxu0 0.0
    %1970 = vmatprep.subr.mxu0 0.0
    %1971 = vmatpush1.msra.mxu0 0.0
    %1972 = vmatprep.subr.mxu0 0.0
    %1973 = vmatpush1.msra.mxu0 0.0
    %1974 = vmatprep.subr.mxu0 0.0
    %1975 = vmatpush1.msra.mxu0 0.0
    %1976 = vmatprep.subr.mxu0 0.0
    %1977 = vmatpush1.msra.mxu0 0.0
    %1978 = vmatprep.subr.mxu0 0.0
    %1979 = vmatpush1.msra.mxu0 0.0
    %1980 = vmatprep.subr.mxu0 0.0
    %1981 = vmatpush1.msra.mxu0 0.0
    %1982 = vmatprep.subr.mxu0 0.0
    %1983 = vmatpush1.msra.mxu0 0.0
    %1984 = vmatprep.subr.mxu0 0.0
    %1985 = vmatpush1.msra.mxu0 0.0
    %1986 = vmatprep.subr.mxu0 0.0
    %1987 = vmatpush1.msra.mxu0 0.0
    %1988 = vmatprep.subr.mxu0 0.0
    %1989 = vmatpush1.msra.mxu0 0.0
    %1990 = vmatprep.subr.mxu0 0.0
    %1991 = vmatpush1.msra.mxu0 0.0
    %1992 = vmatprep.subr.mxu0 0.0
    %1993 = vmatpush1.msra.mxu0 0.0
    %1994 = vmatprep.subr.mxu0 0.0
    %1995 = vmatpush1.msra.mxu0 0.0
    %1996 = vmatprep.mubr.f32.mxu0 0.0
    %v1997 = vand.u32 %v1591, 4294901760
    %1998 = vmatmul.mubr.f32.gmra.mrb[0].mxu0 %v1997
    %v1999 = vpop.f32.mrb[0].mxu0
    %v2000 = vadd.f32 %v1699, %v1999
    %v2001 = vpop.f32.mrb[0].mxu0
    %2002 = vmatprep.mubr.f32.mxu0 0.0
    %v2003 = vand.u32 %v1592, 4294901760
    %2004 = vmatmul.mubr.f32.gmra.mrb[0].mxu0 %v2003
    %v2005 = vpop.f32.mrb[0].mxu0
    %v2006 = vadd.f32 %v1709, %v2005
    %v2007 = vpop.f32.mrb[0].mxu0
    %2008 = vmatprep.mubr.f32.mxu0 0.0
    %v2009 = vand.u32 %v1593, 4294901760
    %2010 = vmatmul.mubr.f32.gmra.mrb[0].mxu0 %v2009
    %v2011 = vpop.f32.mrb[0].mxu0
    %v2012 = vadd.f32 %v1719, %v2011
    %v2013 = vpop.f32.mrb[0].mxu0
    %2014 = vmatprep.mubr.f32.mxu0 0.0
    %v2015 = vand.u32 %v1594, 4294901760
    %2016 = vmatmul.mubr.f32.gmra.mrb[0].mxu0 %v2015
    %v2017 = vpop.f32.mrb[0].mxu0
    %v2018 = vadd.f32 %v1729, %v2017
    %v2019 = vpop.f32.mrb[0].mxu0
    %2020 = vmatprep.mubr.f32.mxu0 0.0
    %v2021 = vand.u32 %v1595, 4294901760
    %2022 = vmatmul.mubr.f32.gmra.mrb[0].mxu0 %v2021
    %v2023 = vpop.f32.mrb[0].mxu0
    %v2024 = vadd.f32 %v1739, %v2023
    %v2025 = vpop.f32.mrb[0].mxu0
    %2026 = vmatprep.mubr.f32.mxu0 0.0
    %v2027 = vand.u32 %v1596, 4294901760
    %2028 = vmatmul.mubr.f32.gmra.mrb[0].mxu0 %v2027
    %v2029 = vpop.f32.mrb[0].mxu0
    %v2030 = vadd.f32 %v1749, %v2029
    %v2031 = vpop.f32.mrb[0].mxu0
    %2032 = vmatprep.mubr.f32.mxu0 0.0
    %v2033 = vand.u32 %v1597, 4294901760
    %2034 = vmatmul.mubr.f32.gmra.mrb[0].mxu0 %v2033
    %v2035 = vpop.f32.mrb[0].mxu0
    %v2036 = vadd.f32 %v1759, %v2035
    %v2037 = vpop.f32.mrb[0].mxu0
    %2038 = vmatprep.mubr.f32.mxu0 0.0
    %v2039 = vand.u32 %v1598, 4294901760
    %2040 = vmatmul.mubr.f32.gmra.mrb[0].mxu0 %v2039
    %v2041 = vpop.f32.mrb[0].mxu0
    %v2042 = vadd.f32 %v1769, %v2041
    %v2043 = vpop.f32.mrb[0].mxu0
    %2044 = vmatprep.mubr.f32.mxu0 0.0
    %v2045 = vand.u32 %v1599, 4294901760
    %2046 = vmatmul.mubr.f32.gmra.mrb[0].mxu0 %v2045
    %v2047 = vpop.f32.mrb[0].mxu0
    %v2048 = vadd.f32 %v1779, %v2047
    %v2049 = vpop.f32.mrb[0].mxu0
    %2050 = vmatprep.mubr.f32.mxu0 0.0
    %v2051 = vand.u32 %v1600, 4294901760
    %2052 = vmatmul.mubr.f32.gmra.mrb[0].mxu0 %v2051
    %v2053 = vpop.f32.mrb[0].mxu0
    %v2054 = vadd.f32 %v1789, %v2053
    %v2055 = vpop.f32.mrb[0].mxu0
    %2056 = vmatprep.mubr.f32.mxu0 0.0
    %v2057 = vand.u32 %v1601, 4294901760
    %2058 = vmatmul.mubr.f32.gmra.mrb[0].mxu0 %v2057
    %v2059 = vpop.f32.mrb[0].mxu0
    %v2060 = vadd.f32 %v1799, %v2059
    %v2061 = vpop.f32.mrb[0].mxu0
    %2062 = vmatprep.mubr.f32.mxu0 0.0
    %v2063 = vand.u32 %v1602, 4294901760
    %2064 = vmatmul.mubr.f32.gmra.mrb[0].mxu0 %v2063
    %v2065 = vpop.f32.mrb[0].mxu0
    %v2066 = vadd.f32 %v1809, %v2065
    %v2067 = vpop.f32.mrb[0].mxu0
    %2068 = vmatprep.mubr.f32.mxu0 0.0
    %v2069 = vand.u32 %v1603, 4294901760
    %2070 = vmatmul.mubr.f32.gmra.mrb[0].mxu0 %v2069
    %v2071 = vpop.f32.mrb[0].mxu0
    %v2072 = vadd.f32 %v1819, %v2071
    %v2073 = vpop.f32.mrb[0].mxu0
    %2074 = vmatprep.mubr.f32.mxu0 0.0
    %v2075 = vand.u32 %v1604, 4294901760
    %2076 = vmatmul.mubr.f32.gmra.mrb[0].mxu0 %v2075
    %v2077 = vpop.f32.mrb[0].mxu0
    %v2078 = vadd.f32 %v1829, %v2077
    %v2079 = vpop.f32.mrb[0].mxu0
    %2080 = vmatprep.mubr.f32.mxu0 0.0
    %v2081 = vand.u32 %v1605, 4294901760
    %2082 = vmatmul.mubr.f32.gmra.mrb[0].mxu0 %v2081
    %v2083 = vpop.f32.mrb[0].mxu0
    %v2084 = vadd.f32 %v1839, %v2083
    %v2085 = vpop.f32.mrb[0].mxu0
    %2086 = vmatprep.mubr.f32.mxu0 0.0
    %v2087 = vand.u32 %v1606, 4294901760
    %2088 = vmatmul.mubr.f32.gmra.mrb[0].mxu0 %v2087
    %v2089 = vpop.f32.mrb[0].mxu0
    %v2090 = vadd.f32 %v1849, %v2089
    %v2091 = vpop.f32.mrb[0].mxu0
    %2092 = vdwg.mxu0
    %2093 = vmatprep.subr.mxu0 0.0
    %v2094 = vand.u32 %v1483, 4294901760
    %v2095 = vsub.f32 %v1483, %v2094
    %2096 = vmatpush1.msra.mxu0 %v2095
    %2097 = vmatprep.subr.mxu0 0.0
    %v2098 = vand.u32 %v1490, 4294901760
    %v2099 = vsub.f32 %v1490, %v2098
    %2100 = vmatpush1.msra.mxu0 %v2099
    %2101 = vmatprep.subr.mxu0 0.0
    %v2102 = vand.u32 %v1497, 4294901760
    %v2103 = vsub.f32 %v1497, %v2102
    %2104 = vmatpush1.msra.mxu0 %v2103
    %2105 = vmatprep.subr.mxu0 0.0
    %v2106 = vand.u32 %v1504, 4294901760
    %v2107 = vsub.f32 %v1504, %v2106
    %2108 = vmatpush1.msra.mxu0 %v2107
    %2109 = vmatprep.subr.mxu0 0.0
    %v2110 = vand.u32 %v1511, 4294901760
    %v2111 = vsub.f32 %v1511, %v2110
    %2112 = vmatpush1.msra.mxu0 %v2111
    %2113 = vmatprep.subr.mxu0 0.0
    %v2114 = vand.u32 %v1518, 4294901760
    %v2115 = vsub.f32 %v1518, %v2114
    %2116 = vmatpush1.msra.mxu0 %v2115
    %2117 = vmatprep.subr.mxu0 0.0
    %v2118 = vand.u32 %v1525, 4294901760
    %v2119 = vsub.f32 %v1525, %v2118
    %2120 = vmatpush1.msra.mxu0 %v2119
    %2121 = vmatprep.subr.mxu0 0.0
    %v2122 = vand.u32 %v1532, 4294901760
    %v2123 = vsub.f32 %v1532, %v2122
    %2124 = vmatpush1.msra.mxu0 %v2123
    %2125 = vmatprep.subr.mxu0 0.0
    %v2126 = vand.u32 %v1539, 4294901760
    %v2127 = vsub.f32 %v1539, %v2126
    %2128 = vmatpush1.msra.mxu0 %v2127
    %2129 = vmatprep.subr.mxu0 0.0
    %v2130 = vand.u32 %v1546, 4294901760
    %v2131 = vsub.f32 %v1546, %v2130
    %2132 = vmatpush1.msra.mxu0 %v2131
    %2133 = vmatprep.subr.mxu0 0.0
    %v2134 = vand.u32 %v1553, 4294901760
    %v2135 = vsub.f32 %v1553, %v2134
    %2136 = vmatpush1.msra.mxu0 %v2135
    %2137 = vmatprep.subr.mxu0 0.0
    %v2138 = vand.u32 %v1560, 4294901760
    %v2139 = vsub.f32 %v1560, %v2138
    %2140 = vmatpush1.msra.mxu0 %v2139
    %2141 = vmatprep.subr.mxu0 0.0
    %v2142 = vand.u32 %v1567, 4294901760
    %v2143 = vsub.f32 %v1567, %v2142
    %2144 = vmatpush1.msra.mxu0 %v2143
    %2145 = vmatprep.subr.mxu0 0.0
    %v2146 = vand.u32 %v1574, 4294901760
    %v2147 = vsub.f32 %v1574, %v2146
    %2148 = vmatpush1.msra.mxu0 %v2147
    %2149 = vmatprep.subr.mxu0 0.0
    %v2150 = vand.u32 %v1581, 4294901760
    %v2151 = vsub.f32 %v1581, %v2150
    %2152 = vmatpush1.msra.mxu0 %v2151
    %2153 = vmatprep.subr.mxu0 0.0
    %v2154 = vand.u32 %v1588, 4294901760
    %v2155 = vsub.f32 %v1588, %v2154
    %2156 = vmatpush1.msra.mxu0 %v2155
    %2157 = vmatprep.subr.mxu0 0.0
    %2158 = vmatpush1.msra.mxu0 0.0
    %2159 = vmatprep.subr.mxu0 0.0
    %2160 = vmatpush1.msra.mxu0 0.0
    %2161 = vmatprep.subr.mxu0 0.0
    %2162 = vmatpush1.msra.mxu0 0.0
    %2163 = vmatprep.subr.mxu0 0.0
    %2164 = vmatpush1.msra.mxu0 0.0
    %2165 = vmatprep.subr.mxu0 0.0
    %2166 = vmatpush1.msra.mxu0 0.0
    %2167 = vmatprep.subr.mxu0 0.0
    %2168 = vmatpush1.msra.mxu0 0.0
    %2169 = vmatprep.subr.mxu0 0.0
    %2170 = vmatpush1.msra.mxu0 0.0
    %2171 = vmatprep.subr.mxu0 0.0
    %2172 = vmatpush1.msra.mxu0 0.0
    %2173 = vmatprep.subr.mxu0 0.0
    %2174 = vmatpush1.msra.mxu0 0.0
    %2175 = vmatprep.subr.mxu0 0.0
    %2176 = vmatpush1.msra.mxu0 0.0
    %2177 = vmatprep.subr.mxu0 0.0
    %2178 = vmatpush1.msra.mxu0 0.0
    %2179 = vmatprep.subr.mxu0 0.0
    %2180 = vmatpush1.msra.mxu0 0.0
    %2181 = vmatprep.subr.mxu0 0.0
    %2182 = vmatpush1.msra.mxu0 0.0
    %2183 = vmatprep.subr.mxu0 0.0
    %2184 = vmatpush1.msra.mxu0 0.0
    %2185 = vmatprep.subr.mxu0 0.0
    %2186 = vmatpush1.msra.mxu0 0.0
    %2187 = vmatprep.subr.mxu0 0.0
    %2188 = vmatpush1.msra.mxu0 0.0
    %2189 = vmatprep.mubr.f32.mxu0 0.0
    %v2190 = vand.u32 %v1591, 4294901760
    %v2191 = vsub.f32 %v1591, %v2190
    %2192 = vmatmul.mubr.f32.gmra.mrb[0].mxu0 %v2191
    %v2193 = vpop.f32.mrb[0].mxu0
    %v2194 = vadd.f32 %v2000, %v2193
    %v2195 = vpop.f32.mrb[0].mxu0
    %2196 = vmatprep.mubr.f32.mxu0 0.0
    %v2197 = vand.u32 %v1592, 4294901760
    %v2198 = vsub.f32 %v1592, %v2197
    %2199 = vmatmul.mubr.f32.gmra.mrb[0].mxu0 %v2198
    %v2200 = vpop.f32.mrb[0].mxu0
    %v2201 = vadd.f32 %v2006, %v2200
    %v2202 = vpop.f32.mrb[0].mxu0
    %2203 = vmatprep.mubr.f32.mxu0 0.0
    %v2204 = vand.u32 %v1593, 4294901760
    %v2205 = vsub.f32 %v1593, %v2204
    %2206 = vmatmul.mubr.f32.gmra.mrb[0].mxu0 %v2205
    %v2207 = vpop.f32.mrb[0].mxu0
    %v2208 = vadd.f32 %v2012, %v2207
    %v2209 = vpop.f32.mrb[0].mxu0
    %2210 = vmatprep.mubr.f32.mxu0 0.0
    %v2211 = vand.u32 %v1594, 4294901760
    %v2212 = vsub.f32 %v1594, %v2211
    %2213 = vmatmul.mubr.f32.gmra.mrb[0].mxu0 %v2212
    %v2214 = vpop.f32.mrb[0].mxu0
    %v2215 = vadd.f32 %v2018, %v2214
    %v2216 = vpop.f32.mrb[0].mxu0
    %2217 = vmatprep.mubr.f32.mxu0 0.0
    %v2218 = vand.u32 %v1595, 4294901760
    %v2219 = vsub.f32 %v1595, %v2218
    %2220 = vmatmul.mubr.f32.gmra.mrb[0].mxu0 %v2219
    %v2221 = vpop.f32.mrb[0].mxu0
    %v2222 = vadd.f32 %v2024, %v2221
    %v2223 = vpop.f32.mrb[0].mxu0
    %2224 = vmatprep.mubr.f32.mxu0 0.0
    %v2225 = vand.u32 %v1596, 4294901760
    %v2226 = vsub.f32 %v1596, %v2225
    %2227 = vmatmul.mubr.f32.gmra.mrb[0].mxu0 %v2226
    %v2228 = vpop.f32.mrb[0].mxu0
    %v2229 = vadd.f32 %v2030, %v2228
    %v2230 = vpop.f32.mrb[0].mxu0
    %2231 = vmatprep.mubr.f32.mxu0 0.0
    %v2232 = vand.u32 %v1597, 4294901760
    %v2233 = vsub.f32 %v1597, %v2232
    %2234 = vmatmul.mubr.f32.gmra.mrb[0].mxu0 %v2233
    %v2235 = vpop.f32.mrb[0].mxu0
    %v2236 = vadd.f32 %v2036, %v2235
    %v2237 = vpop.f32.mrb[0].mxu0
    %2238 = vmatprep.mubr.f32.mxu0 0.0
    %v2239 = vand.u32 %v1598, 4294901760
    %v2240 = vsub.f32 %v1598, %v2239
    %2241 = vmatmul.mubr.f32.gmra.mrb[0].mxu0 %v2240
    %v2242 = vpop.f32.mrb[0].mxu0
    %v2243 = vadd.f32 %v2042, %v2242
    %v2244 = vpop.f32.mrb[0].mxu0
    %2245 = vmatprep.mubr.f32.mxu0 0.0
    %v2246 = vand.u32 %v1599, 4294901760
    %v2247 = vsub.f32 %v1599, %v2246
    %2248 = vmatmul.mubr.f32.gmra.mrb[0].mxu0 %v2247
    %v2249 = vpop.f32.mrb[0].mxu0
    %v2250 = vadd.f32 %v2048, %v2249
    %v2251 = vpop.f32.mrb[0].mxu0
    %2252 = vmatprep.mubr.f32.mxu0 0.0
    %v2253 = vand.u32 %v1600, 4294901760
    %v2254 = vsub.f32 %v1600, %v2253
    %2255 = vmatmul.mubr.f32.gmra.mrb[0].mxu0 %v2254
    %v2256 = vpop.f32.mrb[0].mxu0
    %v2257 = vadd.f32 %v2054, %v2256
    %v2258 = vpop.f32.mrb[0].mxu0
    %2259 = vmatprep.mubr.f32.mxu0 0.0
    %v2260 = vand.u32 %v1601, 4294901760
    %v2261 = vsub.f32 %v1601, %v2260
    %2262 = vmatmul.mubr.f32.gmra.mrb[0].mxu0 %v2261
    %v2263 = vpop.f32.mrb[0].mxu0
    %v2264 = vadd.f32 %v2060, %v2263
    %v2265 = vpop.f32.mrb[0].mxu0
    %2266 = vmatprep.mubr.f32.mxu0 0.0
    %v2267 = vand.u32 %v1602, 4294901760
    %v2268 = vsub.f32 %v1602, %v2267
    %2269 = vmatmul.mubr.f32.gmra.mrb[0].mxu0 %v2268
    %v2270 = vpop.f32.mrb[0].mxu0
    %v2271 = vadd.f32 %v2066, %v2270
    %v2272 = vpop.f32.mrb[0].mxu0
    %2273 = vmatprep.mubr.f32.mxu0 0.0
    %v2274 = vand.u32 %v1603, 4294901760
    %v2275 = vsub.f32 %v1603, %v2274
    %2276 = vmatmul.mubr.f32.gmra.mrb[0].mxu0 %v2275
    %v2277 = vpop.f32.mrb[0].mxu0
    %v2278 = vadd.f32 %v2072, %v2277
    %v2279 = vpop.f32.mrb[0].mxu0
    %2280 = vmatprep.mubr.f32.mxu0 0.0
    %v2281 = vand.u32 %v1604, 4294901760
    %v2282 = vsub.f32 %v1604, %v2281
    %2283 = vmatmul.mubr.f32.gmra.mrb[0].mxu0 %v2282
    %v2284 = vpop.f32.mrb[0].mxu0
    %v2285 = vadd.f32 %v2078, %v2284
    %v2286 = vpop.f32.mrb[0].mxu0
    %2287 = vmatprep.mubr.f32.mxu0 0.0
    %v2288 = vand.u32 %v1605, 4294901760
    %v2289 = vsub.f32 %v1605, %v2288
    %2290 = vmatmul.mubr.f32.gmra.mrb[0].mxu0 %v2289
    %v2291 = vpop.f32.mrb[0].mxu0
    %v2292 = vadd.f32 %v2084, %v2291
    %v2293 = vpop.f32.mrb[0].mxu0
    %2294 = vmatprep.mubr.f32.mxu0 0.0
    %v2295 = vand.u32 %v1606, 4294901760
    %v2296 = vsub.f32 %v1606, %v2295
    %2297 = vmatmul.mubr.f32.gmra.mrb[0].mxu0 %v2296
    %v2298 = vpop.f32.mrb[0].mxu0
    %v2299 = vadd.f32 %v2090, %v2298
    %v2300 = vpop.f32.mrb[0].mxu0
    %2301 = vdwg.mxu0
    %2302 = vmatprep.subr.mxu0 0.0
    %v2303 = vand.u32 %v1483, 4294901760
    %2304 = vmatpush1.msra.mxu0 %v2303
    %2305 = vmatprep.subr.mxu0 0.0
    %v2306 = vand.u32 %v1490, 4294901760
    %2307 = vmatpush1.msra.mxu0 %v2306
    %2308 = vmatprep.subr.mxu0 0.0
    %v2309 = vand.u32 %v1497, 4294901760
    %2310 = vmatpush1.msra.mxu0 %v2309
    %2311 = vmatprep.subr.mxu0 0.0
    %v2312 = vand.u32 %v1504, 4294901760
    %2313 = vmatpush1.msra.mxu0 %v2312
    %2314 = vmatprep.subr.mxu0 0.0
    %v2315 = vand.u32 %v1511, 4294901760
    %2316 = vmatpush1.msra.mxu0 %v2315
    %2317 = vmatprep.subr.mxu0 0.0
    %v2318 = vand.u32 %v1518, 4294901760
    %2319 = vmatpush1.msra.mxu0 %v2318
    %2320 = vmatprep.subr.mxu0 0.0
    %v2321 = vand.u32 %v1525, 4294901760
    %2322 = vmatpush1.msra.mxu0 %v2321
    %2323 = vmatprep.subr.mxu0 0.0
    %v2324 = vand.u32 %v1532, 4294901760
    %2325 = vmatpush1.msra.mxu0 %v2324
    %2326 = vmatprep.subr.mxu0 0.0
    %v2327 = vand.u32 %v1539, 4294901760
    %2328 = vmatpush1.msra.mxu0 %v2327
    %2329 = vmatprep.subr.mxu0 0.0
    %v2330 = vand.u32 %v1546, 4294901760
    %2331 = vmatpush1.msra.mxu0 %v2330
    %2332 = vmatprep.subr.mxu0 0.0
    %v2333 = vand.u32 %v1553, 4294901760
    %2334 = vmatpush1.msra.mxu0 %v2333
    %2335 = vmatprep.subr.mxu0 0.0
    %v2336 = vand.u32 %v1560, 4294901760
    %2337 = vmatpush1.msra.mxu0 %v2336
    %2338 = vmatprep.subr.mxu0 0.0
    %v2339 = vand.u32 %v1567, 4294901760
    %2340 = vmatpush1.msra.mxu0 %v2339
    %2341 = vmatprep.subr.mxu0 0.0
    %v2342 = vand.u32 %v1574, 4294901760
    %2343 = vmatpush1.msra.mxu0 %v2342
    %2344 = vmatprep.subr.mxu0 0.0
    %v2345 = vand.u32 %v1581, 4294901760
    %2346 = vmatpush1.msra.mxu0 %v2345
    %2347 = vmatprep.subr.mxu0 0.0
    %v2348 = vand.u32 %v1588, 4294901760
    %2349 = vmatpush1.msra.mxu0 %v2348
    %2350 = vmatprep.subr.mxu0 0.0
    %2351 = vmatpush1.msra.mxu0 0.0
    %2352 = vmatprep.subr.mxu0 0.0
    %2353 = vmatpush1.msra.mxu0 0.0
    %2354 = vmatprep.subr.mxu0 0.0
    %2355 = vmatpush1.msra.mxu0 0.0
    %2356 = vmatprep.subr.mxu0 0.0
    %2357 = vmatpush1.msra.mxu0 0.0
    %2358 = vmatprep.subr.mxu0 0.0
    %2359 = vmatpush1.msra.mxu0 0.0
    %2360 = vmatprep.subr.mxu0 0.0
    %2361 = vmatpush1.msra.mxu0 0.0
    %2362 = vmatprep.subr.mxu0 0.0
    %2363 = vmatpush1.msra.mxu0 0.0
    %2364 = vmatprep.subr.mxu0 0.0
    %2365 = vmatpush1.msra.mxu0 0.0
    %2366 = vmatprep.subr.mxu0 0.0
    %2367 = vmatpush1.msra.mxu0 0.0
    %2368 = vmatprep.subr.mxu0 0.0
    %2369 = vmatpush1.msra.mxu0 0.0
    %2370 = vmatprep.subr.mxu0 0.0
    %2371 = vmatpush1.msra.mxu0 0.0
    %2372 = vmatprep.subr.mxu0 0.0
    %2373 = vmatpush1.msra.mxu0 0.0
    %2374 = vmatprep.subr.mxu0 0.0
    %2375 = vmatpush1.msra.mxu0 0.0
    %2376 = vmatprep.subr.mxu0 0.0
    %2377 = vmatpush1.msra.mxu0 0.0
    %2378 = vmatprep.subr.mxu0 0.0
    %2379 = vmatpush1.msra.mxu0 0.0
    %2380 = vmatprep.subr.mxu0 0.0
    %2381 = vmatpush1.msra.mxu0 0.0
    %2382 = vmatprep.mubr.f32.mxu0 0.0
    %v2383 = vand.u32 %v1591, 4294901760
    %v2384 = vsub.f32 %v1591, %v2383
    %v2385 = vand.u32 %v2384, 4294901760
    %2386 = vmatmul.mubr.f32.gmra.mrb[0].mxu0 %v2385
    %v2387 = vpop.f32.mrb[0].mxu0
    %v2388 = vadd.f32 %v2194, %v2387
    %v2389 = vpop.f32.mrb[0].mxu0
    %2390 = vmatprep.mubr.f32.mxu0 0.0
    %v2391 = vand.u32 %v1592, 4294901760
    %v2392 = vsub.f32 %v1592, %v2391
    %v2393 = vand.u32 %v2392, 4294901760
    %2394 = vmatmul.mubr.f32.gmra.mrb[0].mxu0 %v2393
    %v2395 = vpop.f32.mrb[0].mxu0
    %v2396 = vadd.f32 %v2201, %v2395
    %v2397 = vpop.f32.mrb[0].mxu0
    %2398 = vmatprep.mubr.f32.mxu0 0.0
    %v2399 = vand.u32 %v1593, 4294901760
    %v2400 = vsub.f32 %v1593, %v2399
    %v2401 = vand.u32 %v2400, 4294901760
    %2402 = vmatmul.mubr.f32.gmra.mrb[0].mxu0 %v2401
    %v2403 = vpop.f32.mrb[0].mxu0
    %v2404 = vadd.f32 %v2208, %v2403
    %v2405 = vpop.f32.mrb[0].mxu0
    %2406 = vmatprep.mubr.f32.mxu0 0.0
    %v2407 = vand.u32 %v1594, 4294901760
    %v2408 = vsub.f32 %v1594, %v2407
    %v2409 = vand.u32 %v2408, 4294901760
    %2410 = vmatmul.mubr.f32.gmra.mrb[0].mxu0 %v2409
    %v2411 = vpop.f32.mrb[0].mxu0
    %v2412 = vadd.f32 %v2215, %v2411
    %v2413 = vpop.f32.mrb[0].mxu0
    %2414 = vmatprep.mubr.f32.mxu0 0.0
    %v2415 = vand.u32 %v1595, 4294901760
    %v2416 = vsub.f32 %v1595, %v2415
    %v2417 = vand.u32 %v2416, 4294901760
    %2418 = vmatmul.mubr.f32.gmra.mrb[0].mxu0 %v2417
    %v2419 = vpop.f32.mrb[0].mxu0
    %v2420 = vadd.f32 %v2222, %v2419
    %v2421 = vpop.f32.mrb[0].mxu0
    %2422 = vmatprep.mubr.f32.mxu0 0.0
    %v2423 = vand.u32 %v1596, 4294901760
    %v2424 = vsub.f32 %v1596, %v2423
    %v2425 = vand.u32 %v2424, 4294901760
    %2426 = vmatmul.mubr.f32.gmra.mrb[0].mxu0 %v2425
    %v2427 = vpop.f32.mrb[0].mxu0
    %v2428 = vadd.f32 %v2229, %v2427
    %v2429 = vpop.f32.mrb[0].mxu0
    %2430 = vmatprep.mubr.f32.mxu0 0.0
    %v2431 = vand.u32 %v1597, 4294901760
    %v2432 = vsub.f32 %v1597, %v2431
    %v2433 = vand.u32 %v2432, 4294901760
    %2434 = vmatmul.mubr.f32.gmra.mrb[0].mxu0 %v2433
    %v2435 = vpop.f32.mrb[0].mxu0
    %v2436 = vadd.f32 %v2236, %v2435
    %v2437 = vpop.f32.mrb[0].mxu0
    %2438 = vmatprep.mubr.f32.mxu0 0.0
    %v2439 = vand.u32 %v1598, 4294901760
    %v2440 = vsub.f32 %v1598, %v2439
    %v2441 = vand.u32 %v2440, 4294901760
    %2442 = vmatmul.mubr.f32.gmra.mrb[0].mxu0 %v2441
    %v2443 = vpop.f32.mrb[0].mxu0
    %v2444 = vadd.f32 %v2243, %v2443
    %v2445 = vpop.f32.mrb[0].mxu0
    %2446 = vmatprep.mubr.f32.mxu0 0.0
    %v2447 = vand.u32 %v1599, 4294901760
    %v2448 = vsub.f32 %v1599, %v2447
    %v2449 = vand.u32 %v2448, 4294901760
    %2450 = vmatmul.mubr.f32.gmra.mrb[0].mxu0 %v2449
    %v2451 = vpop.f32.mrb[0].mxu0
    %v2452 = vadd.f32 %v2250, %v2451
    %v2453 = vpop.f32.mrb[0].mxu0
    %2454 = vmatprep.mubr.f32.mxu0 0.0
    %v2455 = vand.u32 %v1600, 4294901760
    %v2456 = vsub.f32 %v1600, %v2455
    %v2457 = vand.u32 %v2456, 4294901760
    %2458 = vmatmul.mubr.f32.gmra.mrb[0].mxu0 %v2457
    %v2459 = vpop.f32.mrb[0].mxu0
    %v2460 = vadd.f32 %v2257, %v2459
    %v2461 = vpop.f32.mrb[0].mxu0
    %2462 = vmatprep.mubr.f32.mxu0 0.0
    %v2463 = vand.u32 %v1601, 4294901760
    %v2464 = vsub.f32 %v1601, %v2463
    %v2465 = vand.u32 %v2464, 4294901760
    %2466 = vmatmul.mubr.f32.gmra.mrb[0].mxu0 %v2465
    %v2467 = vpop.f32.mrb[0].mxu0
    %v2468 = vadd.f32 %v2264, %v2467
    %v2469 = vpop.f32.mrb[0].mxu0
    %2470 = vmatprep.mubr.f32.mxu0 0.0
    %v2471 = vand.u32 %v1602, 4294901760
    %v2472 = vsub.f32 %v1602, %v2471
    %v2473 = vand.u32 %v2472, 4294901760
    %2474 = vmatmul.mubr.f32.gmra.mrb[0].mxu0 %v2473
    %v2475 = vpop.f32.mrb[0].mxu0
    %v2476 = vadd.f32 %v2271, %v2475
    %v2477 = vpop.f32.mrb[0].mxu0
    %2478 = vmatprep.mubr.f32.mxu0 0.0
    %v2479 = vand.u32 %v1603, 4294901760
    %v2480 = vsub.f32 %v1603, %v2479
    %v2481 = vand.u32 %v2480, 4294901760
    %2482 = vmatmul.mubr.f32.gmra.mrb[0].mxu0 %v2481
    %v2483 = vpop.f32.mrb[0].mxu0
    %v2484 = vadd.f32 %v2278, %v2483
    %v2485 = vpop.f32.mrb[0].mxu0
    %2486 = vmatprep.mubr.f32.mxu0 0.0
    %v2487 = vand.u32 %v1604, 4294901760
    %v2488 = vsub.f32 %v1604, %v2487
    %v2489 = vand.u32 %v2488, 4294901760
    %2490 = vmatmul.mubr.f32.gmra.mrb[0].mxu0 %v2489
    %v2491 = vpop.f32.mrb[0].mxu0
    %v2492 = vadd.f32 %v2285, %v2491
    %v2493 = vpop.f32.mrb[0].mxu0
    %2494 = vmatprep.mubr.f32.mxu0 0.0
    %v2495 = vand.u32 %v1605, 4294901760
    %v2496 = vsub.f32 %v1605, %v2495
    %v2497 = vand.u32 %v2496, 4294901760
    %2498 = vmatmul.mubr.f32.gmra.mrb[0].mxu0 %v2497
    %v2499 = vpop.f32.mrb[0].mxu0
    %v2500 = vadd.f32 %v2292, %v2499
    %v2501 = vpop.f32.mrb[0].mxu0
    %2502 = vmatprep.mubr.f32.mxu0 0.0
    %v2503 = vand.u32 %v1606, 4294901760
    %v2504 = vsub.f32 %v1606, %v2503
    %v2505 = vand.u32 %v2504, 4294901760
    %2506 = vmatmul.mubr.f32.gmra.mrb[0].mxu0 %v2505
    %v2507 = vpop.f32.mrb[0].mxu0
    %v2508 = vadd.f32 %v2299, %v2507
    %v2509 = vpop.f32.mrb[0].mxu0
    %2510 = vdwg.mxu0
    %2511 = vmatprep.subr.mxu0 0.0
    %v2512 = vand.u32 %v1483, 4294901760
    %v2513 = vsub.f32 %v1483, %v2512
    %v2514 = vand.u32 %v2513, 4294901760
    %2515 = vmatpush1.msra.mxu0 %v2514
    %2516 = vmatprep.subr.mxu0 0.0
    %v2517 = vand.u32 %v1490, 4294901760
    %v2518 = vsub.f32 %v1490, %v2517
    %v2519 = vand.u32 %v2518, 4294901760
    %2520 = vmatpush1.msra.mxu0 %v2519
    %2521 = vmatprep.subr.mxu0 0.0
    %v2522 = vand.u32 %v1497, 4294901760
    %v2523 = vsub.f32 %v1497, %v2522
    %v2524 = vand.u32 %v2523, 4294901760
    %2525 = vmatpush1.msra.mxu0 %v2524
    %2526 = vmatprep.subr.mxu0 0.0
    %v2527 = vand.u32 %v1504, 4294901760
    %v2528 = vsub.f32 %v1504, %v2527
    %v2529 = vand.u32 %v2528, 4294901760
    %2530 = vmatpush1.msra.mxu0 %v2529
    %2531 = vmatprep.subr.mxu0 0.0
    %v2532 = vand.u32 %v1511, 4294901760
    %v2533 = vsub.f32 %v1511, %v2532
    %v2534 = vand.u32 %v2533, 4294901760
    %2535 = vmatpush1.msra.mxu0 %v2534
    %2536 = vmatprep.subr.mxu0 0.0
    %v2537 = vand.u32 %v1518, 4294901760
    %v2538 = vsub.f32 %v1518, %v2537
    %v2539 = vand.u32 %v2538, 4294901760
    %2540 = vmatpush1.msra.mxu0 %v2539
    %2541 = vmatprep.subr.mxu0 0.0
    %v2542 = vand.u32 %v1525, 4294901760
    %v2543 = vsub.f32 %v1525, %v2542
    %v2544 = vand.u32 %v2543, 4294901760
    %2545 = vmatpush1.msra.mxu0 %v2544
    %2546 = vmatprep.subr.mxu0 0.0
    %v2547 = vand.u32 %v1532, 4294901760
    %v2548 = vsub.f32 %v1532, %v2547
    %v2549 = vand.u32 %v2548, 4294901760
    %2550 = vmatpush1.msra.mxu0 %v2549
    %2551 = vmatprep.subr.mxu0 0.0
    %v2552 = vand.u32 %v1539, 4294901760
    %v2553 = vsub.f32 %v1539, %v2552
    %v2554 = vand.u32 %v2553, 4294901760
    %2555 = vmatpush1.msra.mxu0 %v2554
    %2556 = vmatprep.subr.mxu0 0.0
    %v2557 = vand.u32 %v1546, 4294901760
    %v2558 = vsub.f32 %v1546, %v2557
    %v2559 = vand.u32 %v2558, 4294901760
    %2560 = vmatpush1.msra.mxu0 %v2559
    %2561 = vmatprep.subr.mxu0 0.0
    %v2562 = vand.u32 %v1553, 4294901760
    %v2563 = vsub.f32 %v1553, %v2562
    %v2564 = vand.u32 %v2563, 4294901760
    %2565 = vmatpush1.msra.mxu0 %v2564
    %2566 = vmatprep.subr.mxu0 0.0
    %v2567 = vand.u32 %v1560, 4294901760
    %v2568 = vsub.f32 %v1560, %v2567
    %v2569 = vand.u32 %v2568, 4294901760
    %2570 = vmatpush1.msra.mxu0 %v2569
    %2571 = vmatprep.subr.mxu0 0.0
    %v2572 = vand.u32 %v1567, 4294901760
    %v2573 = vsub.f32 %v1567, %v2572
    %v2574 = vand.u32 %v2573, 4294901760
    %2575 = vmatpush1.msra.mxu0 %v2574
    %2576 = vmatprep.subr.mxu0 0.0
    %v2577 = vand.u32 %v1574, 4294901760
    %v2578 = vsub.f32 %v1574, %v2577
    %v2579 = vand.u32 %v2578, 4294901760
    %2580 = vmatpush1.msra.mxu0 %v2579
    %2581 = vmatprep.subr.mxu0 0.0
    %v2582 = vand.u32 %v1581, 4294901760
    %v2583 = vsub.f32 %v1581, %v2582
    %v2584 = vand.u32 %v2583, 4294901760
    %2585 = vmatpush1.msra.mxu0 %v2584
    %2586 = vmatprep.subr.mxu0 0.0
    %v2587 = vand.u32 %v1588, 4294901760
    %v2588 = vsub.f32 %v1588, %v2587
    %v2589 = vand.u32 %v2588, 4294901760
    %2590 = vmatpush1.msra.mxu0 %v2589
    %2591 = vmatprep.subr.mxu0 0.0
    %2592 = vmatpush1.msra.mxu0 0.0
    %2593 = vmatprep.subr.mxu0 0.0
    %2594 = vmatpush1.msra.mxu0 0.0
    %2595 = vmatprep.subr.mxu0 0.0
    %2596 = vmatpush1.msra.mxu0 0.0
    %2597 = vmatprep.subr.mxu0 0.0
    %2598 = vmatpush1.msra.mxu0 0.0
    %2599 = vmatprep.subr.mxu0 0.0
    %2600 = vmatpush1.msra.mxu0 0.0
    %2601 = vmatprep.subr.mxu0 0.0
    %2602 = vmatpush1.msra.mxu0 0.0
    %2603 = vmatprep.subr.mxu0 0.0
    %2604 = vmatpush1.msra.mxu0 0.0
    %2605 = vmatprep.subr.mxu0 0.0
    %2606 = vmatpush1.msra.mxu0 0.0
    %2607 = vmatprep.subr.mxu0 0.0
    %2608 = vmatpush1.msra.mxu0 0.0
    %2609 = vmatprep.subr.mxu0 0.0
    %2610 = vmatpush1.msra.mxu0 0.0
    %2611 = vmatprep.subr.mxu0 0.0
    %2612 = vmatpush1.msra.mxu0 0.0
    %2613 = vmatprep.subr.mxu0 0.0
    %2614 = vmatpush1.msra.mxu0 0.0
    %2615 = vmatprep.subr.mxu0 0.0
    %2616 = vmatpush1.msra.mxu0 0.0
    %2617 = vmatprep.subr.mxu0 0.0
    %2618 = vmatpush1.msra.mxu0 0.0
    %2619 = vmatprep.subr.mxu0 0.0
    %2620 = vmatpush1.msra.mxu0 0.0
    %2621 = vmatprep.subr.mxu0 0.0
    %2622 = vmatpush1.msra.mxu0 0.0
    %2623 = vmatprep.mubr.f32.mxu0 0.0
    %v2624 = vand.u32 %v1591, 4294901760
    %2625 = vmatmul.mubr.f32.gmra.mrb[0].mxu0 %v2624
    %v2626 = vpop.f32.mrb[0].mxu0
    %v2627 = vadd.f32 %v2388, %v2626
    %v2628 = vpop.f32.mrb[0].mxu0
    %2629 = vmatprep.mubr.f32.mxu0 0.0
    %v2630 = vand.u32 %v1592, 4294901760
    %2631 = vmatmul.mubr.f32.gmra.mrb[0].mxu0 %v2630
    %v2632 = vpop.f32.mrb[0].mxu0
    %v2633 = vadd.f32 %v2396, %v2632
    %v2634 = vpop.f32.mrb[0].mxu0
    %2635 = vmatprep.mubr.f32.mxu0 0.0
    %v2636 = vand.u32 %v1593, 4294901760
    %2637 = vmatmul.mubr.f32.gmra.mrb[0].mxu0 %v2636
    %v2638 = vpop.f32.mrb[0].mxu0
    %v2639 = vadd.f32 %v2404, %v2638
    %v2640 = vpop.f32.mrb[0].mxu0
    %2641 = vmatprep.mubr.f32.mxu0 0.0
    %v2642 = vand.u32 %v1594, 4294901760
    %2643 = vmatmul.mubr.f32.gmra.mrb[0].mxu0 %v2642
    %v2644 = vpop.f32.mrb[0].mxu0
    %v2645 = vadd.f32 %v2412, %v2644
    %v2646 = vpop.f32.mrb[0].mxu0
    %2647 = vmatprep.mubr.f32.mxu0 0.0
    %v2648 = vand.u32 %v1595, 4294901760
    %2649 = vmatmul.mubr.f32.gmra.mrb[0].mxu0 %v2648
    %v2650 = vpop.f32.mrb[0].mxu0
    %v2651 = vadd.f32 %v2420, %v2650
    %v2652 = vpop.f32.mrb[0].mxu0
    %2653 = vmatprep.mubr.f32.mxu0 0.0
    %v2654 = vand.u32 %v1596, 4294901760
    %2655 = vmatmul.mubr.f32.gmra.mrb[0].mxu0 %v2654
    %v2656 = vpop.f32.mrb[0].mxu0
    %v2657 = vadd.f32 %v2428, %v2656
    %v2658 = vpop.f32.mrb[0].mxu0
    %2659 = vmatprep.mubr.f32.mxu0 0.0
    %v2660 = vand.u32 %v1597, 4294901760
    %2661 = vmatmul.mubr.f32.gmra.mrb[0].mxu0 %v2660
    %v2662 = vpop.f32.mrb[0].mxu0
    %v2663 = vadd.f32 %v2436, %v2662
    %v2664 = vpop.f32.mrb[0].mxu0
    %2665 = vmatprep.mubr.f32.mxu0 0.0
    %v2666 = vand.u32 %v1598, 4294901760
    %2667 = vmatmul.mubr.f32.gmra.mrb[0].mxu0 %v2666
    %v2668 = vpop.f32.mrb[0].mxu0
    %v2669 = vadd.f32 %v2444, %v2668
    %v2670 = vpop.f32.mrb[0].mxu0
    %2671 = vmatprep.mubr.f32.mxu0 0.0
    %v2672 = vand.u32 %v1599, 4294901760
    %2673 = vmatmul.mubr.f32.gmra.mrb[0].mxu0 %v2672
    %v2674 = vpop.f32.mrb[0].mxu0
    %v2675 = vadd.f32 %v2452, %v2674
    %v2676 = vpop.f32.mrb[0].mxu0
    %2677 = vmatprep.mubr.f32.mxu0 0.0
    %v2678 = vand.u32 %v1600, 4294901760
    %2679 = vmatmul.mubr.f32.gmra.mrb[0].mxu0 %v2678
    %v2680 = vpop.f32.mrb[0].mxu0
    %v2681 = vadd.f32 %v2460, %v2680
    %v2682 = vpop.f32.mrb[0].mxu0
    %2683 = vmatprep.mubr.f32.mxu0 0.0
    %v2684 = vand.u32 %v1601, 4294901760
    %2685 = vmatmul.mubr.f32.gmra.mrb[0].mxu0 %v2684
    %v2686 = vpop.f32.mrb[0].mxu0
    %v2687 = vadd.f32 %v2468, %v2686
    %v2688 = vpop.f32.mrb[0].mxu0
    %2689 = vmatprep.mubr.f32.mxu0 0.0
    %v2690 = vand.u32 %v1602, 4294901760
    %2691 = vmatmul.mubr.f32.gmra.mrb[0].mxu0 %v2690
    %v2692 = vpop.f32.mrb[0].mxu0
    %v2693 = vadd.f32 %v2476, %v2692
    %v2694 = vpop.f32.mrb[0].mxu0
    %2695 = vmatprep.mubr.f32.mxu0 0.0
    %v2696 = vand.u32 %v1603, 4294901760
    %2697 = vmatmul.mubr.f32.gmra.mrb[0].mxu0 %v2696
    %v2698 = vpop.f32.mrb[0].mxu0
    %v2699 = vadd.f32 %v2484, %v2698
    %v2700 = vpop.f32.mrb[0].mxu0
    %2701 = vmatprep.mubr.f32.mxu0 0.0
    %v2702 = vand.u32 %v1604, 4294901760
    %2703 = vmatmul.mubr.f32.gmra.mrb[0].mxu0 %v2702
    %v2704 = vpop.f32.mrb[0].mxu0
    %v2705 = vadd.f32 %v2492, %v2704
    %v2706 = vpop.f32.mrb[0].mxu0
    %2707 = vmatprep.mubr.f32.mxu0 0.0
    %v2708 = vand.u32 %v1605, 4294901760
    %2709 = vmatmul.mubr.f32.gmra.mrb[0].mxu0 %v2708
    %v2710 = vpop.f32.mrb[0].mxu0
    %v2711 = vadd.f32 %v2500, %v2710
    %v2712 = vpop.f32.mrb[0].mxu0
    %2713 = vmatprep.mubr.f32.mxu0 0.0
    %v2714 = vand.u32 %v1606, 4294901760
    %2715 = vmatmul.mubr.f32.gmra.mrb[0].mxu0 %v2714
    %v2716 = vpop.f32.mrb[0].mxu0
    %v2717 = vadd.f32 %v2508, %v2716
    %v2718 = vpop.f32.mrb[0].mxu0
    %2719 = vdwg.mxu0
    %2720 = vmatprep.subr.mxu0 0.0
    %v2721 = vand.u32 %v1483, 4294901760
    %2722 = vmatpush1.msra.mxu0 %v2721
    %2723 = vmatprep.subr.mxu0 0.0
    %v2724 = vand.u32 %v1490, 4294901760
    %2725 = vmatpush1.msra.mxu0 %v2724
    %2726 = vmatprep.subr.mxu0 0.0
    %v2727 = vand.u32 %v1497, 4294901760
    %2728 = vmatpush1.msra.mxu0 %v2727
    %2729 = vmatprep.subr.mxu0 0.0
    %v2730 = vand.u32 %v1504, 4294901760
    %2731 = vmatpush1.msra.mxu0 %v2730
    %2732 = vmatprep.subr.mxu0 0.0
    %v2733 = vand.u32 %v1511, 4294901760
    %2734 = vmatpush1.msra.mxu0 %v2733
    %2735 = vmatprep.subr.mxu0 0.0
    %v2736 = vand.u32 %v1518, 4294901760
    %2737 = vmatpush1.msra.mxu0 %v2736
    %2738 = vmatprep.subr.mxu0 0.0
    %v2739 = vand.u32 %v1525, 4294901760
    %2740 = vmatpush1.msra.mxu0 %v2739
    %2741 = vmatprep.subr.mxu0 0.0
    %v2742 = vand.u32 %v1532, 4294901760
    %2743 = vmatpush1.msra.mxu0 %v2742
    %2744 = vmatprep.subr.mxu0 0.0
    %v2745 = vand.u32 %v1539, 4294901760
    %2746 = vmatpush1.msra.mxu0 %v2745
    %2747 = vmatprep.subr.mxu0 0.0
    %v2748 = vand.u32 %v1546, 4294901760
    %2749 = vmatpush1.msra.mxu0 %v2748
    %2750 = vmatprep.subr.mxu0 0.0
    %v2751 = vand.u32 %v1553, 4294901760
    %2752 = vmatpush1.msra.mxu0 %v2751
    %2753 = vmatprep.subr.mxu0 0.0
    %v2754 = vand.u32 %v1560, 4294901760
    %2755 = vmatpush1.msra.mxu0 %v2754
    %2756 = vmatprep.subr.mxu0 0.0
    %v2757 = vand.u32 %v1567, 4294901760
    %2758 = vmatpush1.msra.mxu0 %v2757
    %2759 = vmatprep.subr.mxu0 0.0
    %v2760 = vand.u32 %v1574, 4294901760
    %2761 = vmatpush1.msra.mxu0 %v2760
    %2762 = vmatprep.subr.mxu0 0.0
    %v2763 = vand.u32 %v1581, 4294901760
    %2764 = vmatpush1.msra.mxu0 %v2763
    %2765 = vmatprep.subr.mxu0 0.0
    %v2766 = vand.u32 %v1588, 4294901760
    %2767 = vmatpush1.msra.mxu0 %v2766
    %2768 = vmatprep.subr.mxu0 0.0
    %2769 = vmatpush1.msra.mxu0 0.0
    %2770 = vmatprep.subr.mxu0 0.0
    %2771 = vmatpush1.msra.mxu0 0.0
    %2772 = vmatprep.subr.mxu0 0.0
    %2773 = vmatpush1.msra.mxu0 0.0
    %2774 = vmatprep.subr.mxu0 0.0
    %2775 = vmatpush1.msra.mxu0 0.0
    %2776 = vmatprep.subr.mxu0 0.0
    %2777 = vmatpush1.msra.mxu0 0.0
    %2778 = vmatprep.subr.mxu0 0.0
    %2779 = vmatpush1.msra.mxu0 0.0
    %2780 = vmatprep.subr.mxu0 0.0
    %2781 = vmatpush1.msra.mxu0 0.0
    %2782 = vmatprep.subr.mxu0 0.0
    %2783 = vmatpush1.msra.mxu0 0.0
    %2784 = vmatprep.subr.mxu0 0.0
    %2785 = vmatpush1.msra.mxu0 0.0
    %2786 = vmatprep.subr.mxu0 0.0
    %2787 = vmatpush1.msra.mxu0 0.0
    %2788 = vmatprep.subr.mxu0 0.0
    %2789 = vmatpush1.msra.mxu0 0.0
    %2790 = vmatprep.subr.mxu0 0.0
    %2791 = vmatpush1.msra.mxu0 0.0
    %2792 = vmatprep.subr.mxu0 0.0
    %2793 = vmatpush1.msra.mxu0 0.0
    %2794 = vmatprep.subr.mxu0 0.0
    %2795 = vmatpush1.msra.mxu0 0.0
    %2796 = vmatprep.subr.mxu0 0.0
    %2797 = vmatpush1.msra.mxu0 0.0
    %2798 = vmatprep.subr.mxu0 0.0
    %2799 = vmatpush1.msra.mxu0 0.0
    %2800 = vmatprep.mubr.f32.mxu0 0.0
    %v2801 = vand.u32 %v1591, 4294901760
    %2802 = vmatmul.mubr.f32.gmra.mrb[0].mxu0 %v2801
    %v2803 = vpop.f32.mrb[0].mxu0
    %v2804 = vadd.f32 %v2627, %v2803
    %v2805 = vpop.f32.mrb[0].mxu0
    %2806 = vmatprep.mubr.f32.mxu0 0.0
    %v2807 = vand.u32 %v1592, 4294901760
    %2808 = vmatmul.mubr.f32.gmra.mrb[0].mxu0 %v2807
    %v2809 = vpop.f32.mrb[0].mxu0
    %v2810 = vadd.f32 %v2633, %v2809
    %v2811 = vpop.f32.mrb[0].mxu0
    %2812 = vmatprep.mubr.f32.mxu0 0.0
    %v2813 = vand.u32 %v1593, 4294901760
    %2814 = vmatmul.mubr.f32.gmra.mrb[0].mxu0 %v2813
    %v2815 = vpop.f32.mrb[0].mxu0
    %v2816 = vadd.f32 %v2639, %v2815
    %v2817 = vpop.f32.mrb[0].mxu0
    %2818 = vmatprep.mubr.f32.mxu0 0.0
    %v2819 = vand.u32 %v1594, 4294901760
    %2820 = vmatmul.mubr.f32.gmra.mrb[0].mxu0 %v2819
    %v2821 = vpop.f32.mrb[0].mxu0
    %v2822 = vadd.f32 %v2645, %v2821
    %v2823 = vpop.f32.mrb[0].mxu0
    %2824 = vmatprep.mubr.f32.mxu0 0.0
    %v2825 = vand.u32 %v1595, 4294901760
    %2826 = vmatmul.mubr.f32.gmra.mrb[0].mxu0 %v2825
    %v2827 = vpop.f32.mrb[0].mxu0
    %v2828 = vadd.f32 %v2651, %v2827
    %v2829 = vpop.f32.mrb[0].mxu0
    %2830 = vmatprep.mubr.f32.mxu0 0.0
    %v2831 = vand.u32 %v1596, 4294901760
    %2832 = vmatmul.mubr.f32.gmra.mrb[0].mxu0 %v2831
    %v2833 = vpop.f32.mrb[0].mxu0
    %v2834 = vadd.f32 %v2657, %v2833
    %v2835 = vpop.f32.mrb[0].mxu0
    %2836 = vmatprep.mubr.f32.mxu0 0.0
    %v2837 = vand.u32 %v1597, 4294901760
    %2838 = vmatmul.mubr.f32.gmra.mrb[0].mxu0 %v2837
    %v2839 = vpop.f32.mrb[0].mxu0
    %v2840 = vadd.f32 %v2663, %v2839
    %v2841 = vpop.f32.mrb[0].mxu0
    %2842 = vmatprep.mubr.f32.mxu0 0.0
    %v2843 = vand.u32 %v1598, 4294901760
    %2844 = vmatmul.mubr.f32.gmra.mrb[0].mxu0 %v2843
    %v2845 = vpop.f32.mrb[0].mxu0
    %v2846 = vadd.f32 %v2669, %v2845
    %v2847 = vpop.f32.mrb[0].mxu0
    %2848 = vmatprep.mubr.f32.mxu0 0.0
    %v2849 = vand.u32 %v1599, 4294901760
    %2850 = vmatmul.mubr.f32.gmra.mrb[0].mxu0 %v2849
    %v2851 = vpop.f32.mrb[0].mxu0
    %v2852 = vadd.f32 %v2675, %v2851
    %v2853 = vpop.f32.mrb[0].mxu0
    %2854 = vmatprep.mubr.f32.mxu0 0.0
    %v2855 = vand.u32 %v1600, 4294901760
    %2856 = vmatmul.mubr.f32.gmra.mrb[0].mxu0 %v2855
    %v2857 = vpop.f32.mrb[0].mxu0
    %v2858 = vadd.f32 %v2681, %v2857
    %v2859 = vpop.f32.mrb[0].mxu0
    %2860 = vmatprep.mubr.f32.mxu0 0.0
    %v2861 = vand.u32 %v1601, 4294901760
    %2862 = vmatmul.mubr.f32.gmra.mrb[0].mxu0 %v2861
    %v2863 = vpop.f32.mrb[0].mxu0
    %v2864 = vadd.f32 %v2687, %v2863
    %v2865 = vpop.f32.mrb[0].mxu0
    %2866 = vmatprep.mubr.f32.mxu0 0.0
    %v2867 = vand.u32 %v1602, 4294901760
    %2868 = vmatmul.mubr.f32.gmra.mrb[0].mxu0 %v2867
    %v2869 = vpop.f32.mrb[0].mxu0
    %v2870 = vadd.f32 %v2693, %v2869
    %v2871 = vpop.f32.mrb[0].mxu0
    %2872 = vmatprep.mubr.f32.mxu0 0.0
    %v2873 = vand.u32 %v1603, 4294901760
    %2874 = vmatmul.mubr.f32.gmra.mrb[0].mxu0 %v2873
    %v2875 = vpop.f32.mrb[0].mxu0
    %v2876 = vadd.f32 %v2699, %v2875
    %v2877 = vpop.f32.mrb[0].mxu0
    %2878 = vmatprep.mubr.f32.mxu0 0.0
    %v2879 = vand.u32 %v1604, 4294901760
    %2880 = vmatmul.mubr.f32.gmra.mrb[0].mxu0 %v2879
    %v2881 = vpop.f32.mrb[0].mxu0
    %v2882 = vadd.f32 %v2705, %v2881
    %v2883 = vpop.f32.mrb[0].mxu0
    %2884 = vmatprep.mubr.f32.mxu0 0.0
    %v2885 = vand.u32 %v1605, 4294901760
    %2886 = vmatmul.mubr.f32.gmra.mrb[0].mxu0 %v2885
    %v2887 = vpop.f32.mrb[0].mxu0
    %v2888 = vadd.f32 %v2711, %v2887
    %v2889 = vpop.f32.mrb[0].mxu0
    %2890 = vmatprep.mubr.f32.mxu0 0.0
    %v2891 = vand.u32 %v1606, 4294901760
    %2892 = vmatmul.mubr.f32.gmra.mrb[0].mxu0 %v2891
    %v2893 = vpop.f32.mrb[0].mxu0
    %v2894 = vadd.f32 %v2717, %v2893
    %v2895 = vpop.f32.mrb[0].mxu0
    %2896 = vdwg.mxu0
    %vm2897 = vcmask 261120
    %v2899 = vsel %vm2897, %v2804, 0
    %v2902 = vsel %vm2897, %v2810, 0
    %v2905 = vsel %vm2897, %v2816, 0
    %v2908 = vsel %vm2897, %v2822, 0
    %v2911 = vsel %vm2897, %v2828, 0
    %v2914 = vsel %vm2897, %v2834, 0
    %v2917 = vsel %vm2897, %v2840, 0
    %v2920 = vsel %vm2897, %v2846, 0
    %v2923 = vsel %vm2897, %v2852, 0
    %v2926 = vsel %vm2897, %v2858, 0
    %v2929 = vsel %vm2897, %v2864, 0
    %v2932 = vsel %vm2897, %v2870, 0
    %v2935 = vsel %vm2897, %v2876, 0
    %v2938 = vsel %vm2897, %v2882, 0
    %v2941 = vsel %vm2897, %v2888, 0
    %v2944 = vsel %vm2897, %v2894, 0
    %2946 = vmatprep.subr.mxu0 0.0
    %v2947 = vand.u32 %v1607, 4294901760
    %2948 = vmatpush1.msra.mxu0 %v2947
    %2949 = vmatprep.subr.mxu0 0.0
    %v2950 = vand.u32 %v1608, 4294901760
    %2951 = vmatpush1.msra.mxu0 %v2950
    %2952 = vmatprep.subr.mxu0 0.0
    %v2953 = vand.u32 %v1609, 4294901760
    %2954 = vmatpush1.msra.mxu0 %v2953
    %2955 = vmatprep.subr.mxu0 0.0
    %v2956 = vand.u32 %v1610, 4294901760
    %2957 = vmatpush1.msra.mxu0 %v2956
    %2958 = vmatprep.subr.mxu0 0.0
    %2959 = vmatpush1.msra.mxu0 0.0
    %2960 = vmatprep.subr.mxu0 0.0
    %2961 = vmatpush1.msra.mxu0 0.0
    %2962 = vmatprep.subr.mxu0 0.0
    %2963 = vmatpush1.msra.mxu0 0.0
    %2964 = vmatprep.subr.mxu0 0.0
    %2965 = vmatpush1.msra.mxu0 0.0
    %2966 = vmatprep.subr.mxu0 0.0
    %2967 = vmatpush1.msra.mxu0 0.0
    %2968 = vmatprep.subr.mxu0 0.0
    %2969 = vmatpush1.msra.mxu0 0.0
    %2970 = vmatprep.subr.mxu0 0.0
    %2971 = vmatpush1.msra.mxu0 0.0
    %2972 = vmatprep.subr.mxu0 0.0
    %2973 = vmatpush1.msra.mxu0 0.0
    %2974 = vmatprep.subr.mxu0 0.0
    %2975 = vmatpush1.msra.mxu0 0.0
    %2976 = vmatprep.subr.mxu0 0.0
    %2977 = vmatpush1.msra.mxu0 0.0
    %2978 = vmatprep.subr.mxu0 0.0
    %2979 = vmatpush1.msra.mxu0 0.0
    %2980 = vmatprep.subr.mxu0 0.0
    %2981 = vmatpush1.msra.mxu0 0.0
    %2982 = vmatprep.subr.mxu0 0.0
    %2983 = vmatpush1.msra.mxu0 0.0
    %2984 = vmatprep.subr.mxu0 0.0
    %2985 = vmatpush1.msra.mxu0 0.0
    %2986 = vmatprep.subr.mxu0 0.0
    %2987 = vmatpush1.msra.mxu0 0.0
    %2988 = vmatprep.subr.mxu0 0.0
    %2989 = vmatpush1.msra.mxu0 0.0
    %2990 = vmatprep.subr.mxu0 0.0
    %2991 = vmatpush1.msra.mxu0 0.0
    %2992 = vmatprep.subr.mxu0 0.0
    %2993 = vmatpush1.msra.mxu0 0.0
    %2994 = vmatprep.subr.mxu0 0.0
    %2995 = vmatpush1.msra.mxu0 0.0
    %2996 = vmatprep.subr.mxu0 0.0
    %2997 = vmatpush1.msra.mxu0 0.0
    %2998 = vmatprep.subr.mxu0 0.0
    %2999 = vmatpush1.msra.mxu0 0.0
    %3000 = vmatprep.subr.mxu0 0.0
    %3001 = vmatpush1.msra.mxu0 0.0
    %3002 = vmatprep.subr.mxu0 0.0
    %3003 = vmatpush1.msra.mxu0 0.0
    %3004 = vmatprep.subr.mxu0 0.0
    %3005 = vmatpush1.msra.mxu0 0.0
    %3006 = vmatprep.subr.mxu0 0.0
    %3007 = vmatpush1.msra.mxu0 0.0
    %3008 = vmatprep.subr.mxu0 0.0
    %3009 = vmatpush1.msra.mxu0 0.0
    %3010 = vmatprep.subr.mxu0 0.0
    %3011 = vmatpush1.msra.mxu0 0.0
    %3012 = vmatprep.subr.mxu0 0.0
    %3013 = vmatpush1.msra.mxu0 0.0
    %3014 = vmatprep.mubr.f32.mxu0 0.0
    %v3015 = vand.u32 %v2899, 4294901760
    %v3016 = vsub.f32 %v2899, %v3015
    %v3017 = vand.u32 %v3016, 4294901760
    %v3018 = vsub.f32 %v3016, %v3017
    %v3019 = vand.u32 %v3018, 4294901760
    %3020 = vmatmul.mubr.f32.gmra.mrb[0].mxu0 %v3019
    %v3021 = vpop.f32.mrb[0].mxu0
    %v3022 = vadd.f32 0.0, %v3021
    %v3023 = vpop.f32.mrb[0].mxu0
    %3024 = vmatprep.mubr.f32.mxu0 0.0
    %v3025 = vand.u32 %v2902, 4294901760
    %v3026 = vsub.f32 %v2902, %v3025
    %v3027 = vand.u32 %v3026, 4294901760
    %v3028 = vsub.f32 %v3026, %v3027
    %v3029 = vand.u32 %v3028, 4294901760
    %3030 = vmatmul.mubr.f32.gmra.mrb[0].mxu0 %v3029
    %v3031 = vpop.f32.mrb[0].mxu0
    %v3032 = vadd.f32 0.0, %v3031
    %v3033 = vpop.f32.mrb[0].mxu0
    %3034 = vmatprep.mubr.f32.mxu0 0.0
    %v3035 = vand.u32 %v2905, 4294901760
    %v3036 = vsub.f32 %v2905, %v3035
    %v3037 = vand.u32 %v3036, 4294901760
    %v3038 = vsub.f32 %v3036, %v3037
    %v3039 = vand.u32 %v3038, 4294901760
    %3040 = vmatmul.mubr.f32.gmra.mrb[0].mxu0 %v3039
    %v3041 = vpop.f32.mrb[0].mxu0
    %v3042 = vadd.f32 0.0, %v3041
    %v3043 = vpop.f32.mrb[0].mxu0
    %3044 = vmatprep.mubr.f32.mxu0 0.0
    %v3045 = vand.u32 %v2908, 4294901760
    %v3046 = vsub.f32 %v2908, %v3045
    %v3047 = vand.u32 %v3046, 4294901760
    %v3048 = vsub.f32 %v3046, %v3047
    %v3049 = vand.u32 %v3048, 4294901760
    %3050 = vmatmul.mubr.f32.gmra.mrb[0].mxu0 %v3049
    %v3051 = vpop.f32.mrb[0].mxu0
    %v3052 = vadd.f32 0.0, %v3051
    %v3053 = vpop.f32.mrb[0].mxu0
    %3054 = vmatprep.mubr.f32.mxu0 0.0
    %v3055 = vand.u32 %v2911, 4294901760
    %v3056 = vsub.f32 %v2911, %v3055
    %v3057 = vand.u32 %v3056, 4294901760
    %v3058 = vsub.f32 %v3056, %v3057
    %v3059 = vand.u32 %v3058, 4294901760
    %3060 = vmatmul.mubr.f32.gmra.mrb[0].mxu0 %v3059
    %v3061 = vpop.f32.mrb[0].mxu0
    %v3062 = vadd.f32 0.0, %v3061
    %v3063 = vpop.f32.mrb[0].mxu0
    %3064 = vmatprep.mubr.f32.mxu0 0.0
    %v3065 = vand.u32 %v2914, 4294901760
    %v3066 = vsub.f32 %v2914, %v3065
    %v3067 = vand.u32 %v3066, 4294901760
    %v3068 = vsub.f32 %v3066, %v3067
    %v3069 = vand.u32 %v3068, 4294901760
    %3070 = vmatmul.mubr.f32.gmra.mrb[0].mxu0 %v3069
    %v3071 = vpop.f32.mrb[0].mxu0
    %v3072 = vadd.f32 0.0, %v3071
    %v3073 = vpop.f32.mrb[0].mxu0
    %3074 = vmatprep.mubr.f32.mxu0 0.0
    %v3075 = vand.u32 %v2917, 4294901760
    %v3076 = vsub.f32 %v2917, %v3075
    %v3077 = vand.u32 %v3076, 4294901760
    %v3078 = vsub.f32 %v3076, %v3077
    %v3079 = vand.u32 %v3078, 4294901760
    %3080 = vmatmul.mubr.f32.gmra.mrb[0].mxu0 %v3079
    %v3081 = vpop.f32.mrb[0].mxu0
    %v3082 = vadd.f32 0.0, %v3081
    %v3083 = vpop.f32.mrb[0].mxu0
    %3084 = vmatprep.mubr.f32.mxu0 0.0
    %v3085 = vand.u32 %v2920, 4294901760
    %v3086 = vsub.f32 %v2920, %v3085
    %v3087 = vand.u32 %v3086, 4294901760
    %v3088 = vsub.f32 %v3086, %v3087
    %v3089 = vand.u32 %v3088, 4294901760
    %3090 = vmatmul.mubr.f32.gmra.mrb[0].mxu0 %v3089
    %v3091 = vpop.f32.mrb[0].mxu0
    %v3092 = vadd.f32 0.0, %v3091
    %v3093 = vpop.f32.mrb[0].mxu0
    %3094 = vmatprep.mubr.f32.mxu0 0.0
    %v3095 = vand.u32 %v2923, 4294901760
    %v3096 = vsub.f32 %v2923, %v3095
    %v3097 = vand.u32 %v3096, 4294901760
    %v3098 = vsub.f32 %v3096, %v3097
    %v3099 = vand.u32 %v3098, 4294901760
    %3100 = vmatmul.mubr.f32.gmra.mrb[0].mxu0 %v3099
    %v3101 = vpop.f32.mrb[0].mxu0
    %v3102 = vadd.f32 0.0, %v3101
    %v3103 = vpop.f32.mrb[0].mxu0
    %3104 = vmatprep.mubr.f32.mxu0 0.0
    %v3105 = vand.u32 %v2926, 4294901760
    %v3106 = vsub.f32 %v2926, %v3105
    %v3107 = vand.u32 %v3106, 4294901760
    %v3108 = vsub.f32 %v3106, %v3107
    %v3109 = vand.u32 %v3108, 4294901760
    %3110 = vmatmul.mubr.f32.gmra.mrb[0].mxu0 %v3109
    %v3111 = vpop.f32.mrb[0].mxu0
    %v3112 = vadd.f32 0.0, %v3111
    %v3113 = vpop.f32.mrb[0].mxu0
    %3114 = vmatprep.mubr.f32.mxu0 0.0
    %v3115 = vand.u32 %v2929, 4294901760
    %v3116 = vsub.f32 %v2929, %v3115
    %v3117 = vand.u32 %v3116, 4294901760
    %v3118 = vsub.f32 %v3116, %v3117
    %v3119 = vand.u32 %v3118, 4294901760
    %3120 = vmatmul.mubr.f32.gmra.mrb[0].mxu0 %v3119
    %v3121 = vpop.f32.mrb[0].mxu0
    %v3122 = vadd.f32 0.0, %v3121
    %v3123 = vpop.f32.mrb[0].mxu0
    %3124 = vmatprep.mubr.f32.mxu0 0.0
    %v3125 = vand.u32 %v2932, 4294901760
    %v3126 = vsub.f32 %v2932, %v3125
    %v3127 = vand.u32 %v3126, 4294901760
    %v3128 = vsub.f32 %v3126, %v3127
    %v3129 = vand.u32 %v3128, 4294901760
    %3130 = vmatmul.mubr.f32.gmra.mrb[0].mxu0 %v3129
    %v3131 = vpop.f32.mrb[0].mxu0
    %v3132 = vadd.f32 0.0, %v3131
    %v3133 = vpop.f32.mrb[0].mxu0
    %3134 = vmatprep.mubr.f32.mxu0 0.0
    %v3135 = vand.u32 %v2935, 4294901760
    %v3136 = vsub.f32 %v2935, %v3135
    %v3137 = vand.u32 %v3136, 4294901760
    %v3138 = vsub.f32 %v3136, %v3137
    %v3139 = vand.u32 %v3138, 4294901760
    %3140 = vmatmul.mubr.f32.gmra.mrb[0].mxu0 %v3139
    %v3141 = vpop.f32.mrb[0].mxu0
    %v3142 = vadd.f32 0.0, %v3141
    %v3143 = vpop.f32.mrb[0].mxu0
    %3144 = vmatprep.mubr.f32.mxu0 0.0
    %v3145 = vand.u32 %v2938, 4294901760
    %v3146 = vsub.f32 %v2938, %v3145
    %v3147 = vand.u32 %v3146, 4294901760
    %v3148 = vsub.f32 %v3146, %v3147
    %v3149 = vand.u32 %v3148, 4294901760
    %3150 = vmatmul.mubr.f32.gmra.mrb[0].mxu0 %v3149
    %v3151 = vpop.f32.mrb[0].mxu0
    %v3152 = vadd.f32 0.0, %v3151
    %v3153 = vpop.f32.mrb[0].mxu0
    %3154 = vmatprep.mubr.f32.mxu0 0.0
    %v3155 = vand.u32 %v2941, 4294901760
    %v3156 = vsub.f32 %v2941, %v3155
    %v3157 = vand.u32 %v3156, 4294901760
    %v3158 = vsub.f32 %v3156, %v3157
    %v3159 = vand.u32 %v3158, 4294901760
    %3160 = vmatmul.mubr.f32.gmra.mrb[0].mxu0 %v3159
    %v3161 = vpop.f32.mrb[0].mxu0
    %v3162 = vadd.f32 0.0, %v3161
    %v3163 = vpop.f32.mrb[0].mxu0
    %3164 = vmatprep.mubr.f32.mxu0 0.0
    %v3165 = vand.u32 %v2944, 4294901760
    %v3166 = vsub.f32 %v2944, %v3165
    %v3167 = vand.u32 %v3166, 4294901760
    %v3168 = vsub.f32 %v3166, %v3167
    %v3169 = vand.u32 %v3168, 4294901760
    %3170 = vmatmul.mubr.f32.gmra.mrb[0].mxu0 %v3169
    %v3171 = vpop.f32.mrb[0].mxu0
    %v3172 = vadd.f32 0.0, %v3171
    %v3173 = vpop.f32.mrb[0].mxu0
    %3174 = vdwg.mxu0
    %3175 = vmatprep.subr.mxu0 0.0
    %v3176 = vand.u32 %v1607, 4294901760
    %v3177 = vsub.f32 %v1607, %v3176
    %v3178 = vand.u32 %v3177, 4294901760
    %v3179 = vsub.f32 %v3177, %v3178
    %v3180 = vand.u32 %v3179, 4294901760
    %3181 = vmatpush1.msra.mxu0 %v3180
    %3182 = vmatprep.subr.mxu0 0.0
    %v3183 = vand.u32 %v1608, 4294901760
    %v3184 = vsub.f32 %v1608, %v3183
    %v3185 = vand.u32 %v3184, 4294901760
    %v3186 = vsub.f32 %v3184, %v3185
    %v3187 = vand.u32 %v3186, 4294901760
    %3188 = vmatpush1.msra.mxu0 %v3187
    %3189 = vmatprep.subr.mxu0 0.0
    %v3190 = vand.u32 %v1609, 4294901760
    %v3191 = vsub.f32 %v1609, %v3190
    %v3192 = vand.u32 %v3191, 4294901760
    %v3193 = vsub.f32 %v3191, %v3192
    %v3194 = vand.u32 %v3193, 4294901760
    %3195 = vmatpush1.msra.mxu0 %v3194
    %3196 = vmatprep.subr.mxu0 0.0
    %v3197 = vand.u32 %v1610, 4294901760
    %v3198 = vsub.f32 %v1610, %v3197
    %v3199 = vand.u32 %v3198, 4294901760
    %v3200 = vsub.f32 %v3198, %v3199
    %v3201 = vand.u32 %v3200, 4294901760
    %3202 = vmatpush1.msra.mxu0 %v3201
    %3203 = vmatprep.subr.mxu0 0.0
    %3204 = vmatpush1.msra.mxu0 0.0
    %3205 = vmatprep.subr.mxu0 0.0
    %3206 = vmatpush1.msra.mxu0 0.0
    %3207 = vmatprep.subr.mxu0 0.0
    %3208 = vmatpush1.msra.mxu0 0.0
    %3209 = vmatprep.subr.mxu0 0.0
    %3210 = vmatpush1.msra.mxu0 0.0
    %3211 = vmatprep.subr.mxu0 0.0
    %3212 = vmatpush1.msra.mxu0 0.0
    %3213 = vmatprep.subr.mxu0 0.0
    %3214 = vmatpush1.msra.mxu0 0.0
    %3215 = vmatprep.subr.mxu0 0.0
    %3216 = vmatpush1.msra.mxu0 0.0
    %3217 = vmatprep.subr.mxu0 0.0
    %3218 = vmatpush1.msra.mxu0 0.0
    %3219 = vmatprep.subr.mxu0 0.0
    %3220 = vmatpush1.msra.mxu0 0.0
    %3221 = vmatprep.subr.mxu0 0.0
    %3222 = vmatpush1.msra.mxu0 0.0
    %3223 = vmatprep.subr.mxu0 0.0
    %3224 = vmatpush1.msra.mxu0 0.0
    %3225 = vmatprep.subr.mxu0 0.0
    %3226 = vmatpush1.msra.mxu0 0.0
    %3227 = vmatprep.subr.mxu0 0.0
    %3228 = vmatpush1.msra.mxu0 0.0
    %3229 = vmatprep.subr.mxu0 0.0
    %3230 = vmatpush1.msra.mxu0 0.0
    %3231 = vmatprep.subr.mxu0 0.0
    %3232 = vmatpush1.msra.mxu0 0.0
    %3233 = vmatprep.subr.mxu0 0.0
    %3234 = vmatpush1.msra.mxu0 0.0
    %3235 = vmatprep.subr.mxu0 0.0
    %3236 = vmatpush1.msra.mxu0 0.0
    %3237 = vmatprep.subr.mxu0 0.0
    %3238 = vmatpush1.msra.mxu0 0.0
    %3239 = vmatprep.subr.mxu0 0.0
    %3240 = vmatpush1.msra.mxu0 0.0
    %3241 = vmatprep.subr.mxu0 0.0
    %3242 = vmatpush1.msra.mxu0 0.0
    %3243 = vmatprep.subr.mxu0 0.0
    %3244 = vmatpush1.msra.mxu0 0.0
    %3245 = vmatprep.subr.mxu0 0.0
    %3246 = vmatpush1.msra.mxu0 0.0
    %3247 = vmatprep.subr.mxu0 0.0
    %3248 = vmatpush1.msra.mxu0 0.0
    %3249 = vmatprep.subr.mxu0 0.0
    %3250 = vmatpush1.msra.mxu0 0.0
    %3251 = vmatprep.subr.mxu0 0.0
    %3252 = vmatpush1.msra.mxu0 0.0
    %3253 = vmatprep.subr.mxu0 0.0
    %3254 = vmatpush1.msra.mxu0 0.0
    %3255 = vmatprep.subr.mxu0 0.0
    %3256 = vmatpush1.msra.mxu0 0.0
    %3257 = vmatprep.subr.mxu0 0.0
    %3258 = vmatpush1.msra.mxu0 0.0
    %3259 = vmatprep.mubr.f32.mxu0 0.0
    %v3260 = vand.u32 %v2899, 4294901760
    %3261 = vmatmul.mubr.f32.gmra.mrb[0].mxu0 %v3260
    %v3262 = vpop.f32.mrb[0].mxu0
    %v3263 = vadd.f32 %v3022, %v3262
    %v3264 = vpop.f32.mrb[0].mxu0
    %3265 = vmatprep.mubr.f32.mxu0 0.0
    %v3266 = vand.u32 %v2902, 4294901760
    %3267 = vmatmul.mubr.f32.gmra.mrb[0].mxu0 %v3266
    %v3268 = vpop.f32.mrb[0].mxu0
    %v3269 = vadd.f32 %v3032, %v3268
    %v3270 = vpop.f32.mrb[0].mxu0
    %3271 = vmatprep.mubr.f32.mxu0 0.0
    %v3272 = vand.u32 %v2905, 4294901760
    %3273 = vmatmul.mubr.f32.gmra.mrb[0].mxu0 %v3272
    %v3274 = vpop.f32.mrb[0].mxu0
    %v3275 = vadd.f32 %v3042, %v3274
    %v3276 = vpop.f32.mrb[0].mxu0
    %3277 = vmatprep.mubr.f32.mxu0 0.0
    %v3278 = vand.u32 %v2908, 4294901760
    %3279 = vmatmul.mubr.f32.gmra.mrb[0].mxu0 %v3278
    %v3280 = vpop.f32.mrb[0].mxu0
    %v3281 = vadd.f32 %v3052, %v3280
    %v3282 = vpop.f32.mrb[0].mxu0
    %3283 = vmatprep.mubr.f32.mxu0 0.0
    %v3284 = vand.u32 %v2911, 4294901760
    %3285 = vmatmul.mubr.f32.gmra.mrb[0].mxu0 %v3284
    %v3286 = vpop.f32.mrb[0].mxu0
    %v3287 = vadd.f32 %v3062, %v3286
    %v3288 = vpop.f32.mrb[0].mxu0
    %3289 = vmatprep.mubr.f32.mxu0 0.0
    %v3290 = vand.u32 %v2914, 4294901760
    %3291 = vmatmul.mubr.f32.gmra.mrb[0].mxu0 %v3290
    %v3292 = vpop.f32.mrb[0].mxu0
    %v3293 = vadd.f32 %v3072, %v3292
    %v3294 = vpop.f32.mrb[0].mxu0
    %3295 = vmatprep.mubr.f32.mxu0 0.0
    %v3296 = vand.u32 %v2917, 4294901760
    %3297 = vmatmul.mubr.f32.gmra.mrb[0].mxu0 %v3296
    %v3298 = vpop.f32.mrb[0].mxu0
    %v3299 = vadd.f32 %v3082, %v3298
    %v3300 = vpop.f32.mrb[0].mxu0
    %3301 = vmatprep.mubr.f32.mxu0 0.0
    %v3302 = vand.u32 %v2920, 4294901760
    %3303 = vmatmul.mubr.f32.gmra.mrb[0].mxu0 %v3302
    %v3304 = vpop.f32.mrb[0].mxu0
    %v3305 = vadd.f32 %v3092, %v3304
    %v3306 = vpop.f32.mrb[0].mxu0
    %3307 = vmatprep.mubr.f32.mxu0 0.0
    %v3308 = vand.u32 %v2923, 4294901760
    %3309 = vmatmul.mubr.f32.gmra.mrb[0].mxu0 %v3308
    %v3310 = vpop.f32.mrb[0].mxu0
    %v3311 = vadd.f32 %v3102, %v3310
    %v3312 = vpop.f32.mrb[0].mxu0
    %3313 = vmatprep.mubr.f32.mxu0 0.0
    %v3314 = vand.u32 %v2926, 4294901760
    %3315 = vmatmul.mubr.f32.gmra.mrb[0].mxu0 %v3314
    %v3316 = vpop.f32.mrb[0].mxu0
    %v3317 = vadd.f32 %v3112, %v3316
    %v3318 = vpop.f32.mrb[0].mxu0
    %3319 = vmatprep.mubr.f32.mxu0 0.0
    %v3320 = vand.u32 %v2929, 4294901760
    %3321 = vmatmul.mubr.f32.gmra.mrb[0].mxu0 %v3320
    %v3322 = vpop.f32.mrb[0].mxu0
    %v3323 = vadd.f32 %v3122, %v3322
    %v3324 = vpop.f32.mrb[0].mxu0
    %3325 = vmatprep.mubr.f32.mxu0 0.0
    %v3326 = vand.u32 %v2932, 4294901760
    %3327 = vmatmul.mubr.f32.gmra.mrb[0].mxu0 %v3326
    %v3328 = vpop.f32.mrb[0].mxu0
    %v3329 = vadd.f32 %v3132, %v3328
    %v3330 = vpop.f32.mrb[0].mxu0
    %3331 = vmatprep.mubr.f32.mxu0 0.0
    %v3332 = vand.u32 %v2935, 4294901760
    %3333 = vmatmul.mubr.f32.gmra.mrb[0].mxu0 %v3332
    %v3334 = vpop.f32.mrb[0].mxu0
    %v3335 = vadd.f32 %v3142, %v3334
    %v3336 = vpop.f32.mrb[0].mxu0
    %3337 = vmatprep.mubr.f32.mxu0 0.0
    %v3338 = vand.u32 %v2938, 4294901760
    %3339 = vmatmul.mubr.f32.gmra.mrb[0].mxu0 %v3338
    %v3340 = vpop.f32.mrb[0].mxu0
    %v3341 = vadd.f32 %v3152, %v3340
    %v3342 = vpop.f32.mrb[0].mxu0
    %3343 = vmatprep.mubr.f32.mxu0 0.0
    %v3344 = vand.u32 %v2941, 4294901760
    %3345 = vmatmul.mubr.f32.gmra.mrb[0].mxu0 %v3344
    %v3346 = vpop.f32.mrb[0].mxu0
    %v3347 = vadd.f32 %v3162, %v3346
    %v3348 = vpop.f32.mrb[0].mxu0
    %3349 = vmatprep.mubr.f32.mxu0 0.0
    %v3350 = vand.u32 %v2944, 4294901760
    %3351 = vmatmul.mubr.f32.gmra.mrb[0].mxu0 %v3350
    %v3352 = vpop.f32.mrb[0].mxu0
    %v3353 = vadd.f32 %v3172, %v3352
    %v3354 = vpop.f32.mrb[0].mxu0
    %3355 = vdwg.mxu0
    %3356 = vmatprep.subr.mxu0 0.0
    %v3357 = vand.u32 %v1607, 4294901760
    %v3358 = vsub.f32 %v1607, %v3357
    %3359 = vmatpush1.msra.mxu0 %v3358
    %3360 = vmatprep.subr.mxu0 0.0
    %v3361 = vand.u32 %v1608, 4294901760
    %v3362 = vsub.f32 %v1608, %v3361
    %3363 = vmatpush1.msra.mxu0 %v3362
    %3364 = vmatprep.subr.mxu0 0.0
    %v3365 = vand.u32 %v1609, 4294901760
    %v3366 = vsub.f32 %v1609, %v3365
    %3367 = vmatpush1.msra.mxu0 %v3366
    %3368 = vmatprep.subr.mxu0 0.0
    %v3369 = vand.u32 %v1610, 4294901760
    %v3370 = vsub.f32 %v1610, %v3369
    %3371 = vmatpush1.msra.mxu0 %v3370
    %3372 = vmatprep.subr.mxu0 0.0
    %3373 = vmatpush1.msra.mxu0 0.0
    %3374 = vmatprep.subr.mxu0 0.0
    %3375 = vmatpush1.msra.mxu0 0.0
    %3376 = vmatprep.subr.mxu0 0.0
    %3377 = vmatpush1.msra.mxu0 0.0
    %3378 = vmatprep.subr.mxu0 0.0
    %3379 = vmatpush1.msra.mxu0 0.0
    %3380 = vmatprep.subr.mxu0 0.0
    %3381 = vmatpush1.msra.mxu0 0.0
    %3382 = vmatprep.subr.mxu0 0.0
    %3383 = vmatpush1.msra.mxu0 0.0
    %3384 = vmatprep.subr.mxu0 0.0
    %3385 = vmatpush1.msra.mxu0 0.0
    %3386 = vmatprep.subr.mxu0 0.0
    %3387 = vmatpush1.msra.mxu0 0.0
    %3388 = vmatprep.subr.mxu0 0.0
    %3389 = vmatpush1.msra.mxu0 0.0
    %3390 = vmatprep.subr.mxu0 0.0
    %3391 = vmatpush1.msra.mxu0 0.0
    %3392 = vmatprep.subr.mxu0 0.0
    %3393 = vmatpush1.msra.mxu0 0.0
    %3394 = vmatprep.subr.mxu0 0.0
    %3395 = vmatpush1.msra.mxu0 0.0
    %3396 = vmatprep.subr.mxu0 0.0
    %3397 = vmatpush1.msra.mxu0 0.0
    %3398 = vmatprep.subr.mxu0 0.0
    %3399 = vmatpush1.msra.mxu0 0.0
    %3400 = vmatprep.subr.mxu0 0.0
    %3401 = vmatpush1.msra.mxu0 0.0
    %3402 = vmatprep.subr.mxu0 0.0
    %3403 = vmatpush1.msra.mxu0 0.0
    %3404 = vmatprep.subr.mxu0 0.0
    %3405 = vmatpush1.msra.mxu0 0.0
    %3406 = vmatprep.subr.mxu0 0.0
    %3407 = vmatpush1.msra.mxu0 0.0
    %3408 = vmatprep.subr.mxu0 0.0
    %3409 = vmatpush1.msra.mxu0 0.0
    %3410 = vmatprep.subr.mxu0 0.0
    %3411 = vmatpush1.msra.mxu0 0.0
    %3412 = vmatprep.subr.mxu0 0.0
    %3413 = vmatpush1.msra.mxu0 0.0
    %3414 = vmatprep.subr.mxu0 0.0
    %3415 = vmatpush1.msra.mxu0 0.0
    %3416 = vmatprep.subr.mxu0 0.0
    %3417 = vmatpush1.msra.mxu0 0.0
    %3418 = vmatprep.subr.mxu0 0.0
    %3419 = vmatpush1.msra.mxu0 0.0
    %3420 = vmatprep.subr.mxu0 0.0
    %3421 = vmatpush1.msra.mxu0 0.0
    %3422 = vmatprep.subr.mxu0 0.0
    %3423 = vmatpush1.msra.mxu0 0.0
    %3424 = vmatprep.subr.mxu0 0.0
    %3425 = vmatpush1.msra.mxu0 0.0
    %3426 = vmatprep.subr.mxu0 0.0
    %3427 = vmatpush1.msra.mxu0 0.0
    %3428 = vmatprep.mubr.f32.mxu0 0.0
    %v3429 = vand.u32 %v2899, 4294901760
    %v3430 = vsub.f32 %v2899, %v3429
    %3431 = vmatmul.mubr.f32.gmra.mrb[0].mxu0 %v3430
    %v3432 = vpop.f32.mrb[0].mxu0
    %v3433 = vadd.f32 %v3263, %v3432
    %v3434 = vpop.f32.mrb[0].mxu0
    %3435 = vmatprep.mubr.f32.mxu0 0.0
    %v3436 = vand.u32 %v2902, 4294901760
    %v3437 = vsub.f32 %v2902, %v3436
    %3438 = vmatmul.mubr.f32.gmra.mrb[0].mxu0 %v3437
    %v3439 = vpop.f32.mrb[0].mxu0
    %v3440 = vadd.f32 %v3269, %v3439
    %v3441 = vpop.f32.mrb[0].mxu0
    %3442 = vmatprep.mubr.f32.mxu0 0.0
    %v3443 = vand.u32 %v2905, 4294901760
    %v3444 = vsub.f32 %v2905, %v3443
    %3445 = vmatmul.mubr.f32.gmra.mrb[0].mxu0 %v3444
    %v3446 = vpop.f32.mrb[0].mxu0
    %v3447 = vadd.f32 %v3275, %v3446
    %v3448 = vpop.f32.mrb[0].mxu0
    %3449 = vmatprep.mubr.f32.mxu0 0.0
    %v3450 = vand.u32 %v2908, 4294901760
    %v3451 = vsub.f32 %v2908, %v3450
    %3452 = vmatmul.mubr.f32.gmra.mrb[0].mxu0 %v3451
    %v3453 = vpop.f32.mrb[0].mxu0
    %v3454 = vadd.f32 %v3281, %v3453
    %v3455 = vpop.f32.mrb[0].mxu0
    %3456 = vmatprep.mubr.f32.mxu0 0.0
    %v3457 = vand.u32 %v2911, 4294901760
    %v3458 = vsub.f32 %v2911, %v3457
    %3459 = vmatmul.mubr.f32.gmra.mrb[0].mxu0 %v3458
    %v3460 = vpop.f32.mrb[0].mxu0
    %v3461 = vadd.f32 %v3287, %v3460
    %v3462 = vpop.f32.mrb[0].mxu0
    %3463 = vmatprep.mubr.f32.mxu0 0.0
    %v3464 = vand.u32 %v2914, 4294901760
    %v3465 = vsub.f32 %v2914, %v3464
    %3466 = vmatmul.mubr.f32.gmra.mrb[0].mxu0 %v3465
    %v3467 = vpop.f32.mrb[0].mxu0
    %v3468 = vadd.f32 %v3293, %v3467
    %v3469 = vpop.f32.mrb[0].mxu0
    %3470 = vmatprep.mubr.f32.mxu0 0.0
    %v3471 = vand.u32 %v2917, 4294901760
    %v3472 = vsub.f32 %v2917, %v3471
    %3473 = vmatmul.mubr.f32.gmra.mrb[0].mxu0 %v3472
    %v3474 = vpop.f32.mrb[0].mxu0
    %v3475 = vadd.f32 %v3299, %v3474
    %v3476 = vpop.f32.mrb[0].mxu0
    %3477 = vmatprep.mubr.f32.mxu0 0.0
    %v3478 = vand.u32 %v2920, 4294901760
    %v3479 = vsub.f32 %v2920, %v3478
    %3480 = vmatmul.mubr.f32.gmra.mrb[0].mxu0 %v3479
    %v3481 = vpop.f32.mrb[0].mxu0
    %v3482 = vadd.f32 %v3305, %v3481
    %v3483 = vpop.f32.mrb[0].mxu0
    %3484 = vmatprep.mubr.f32.mxu0 0.0
    %v3485 = vand.u32 %v2923, 4294901760
    %v3486 = vsub.f32 %v2923, %v3485
    %3487 = vmatmul.mubr.f32.gmra.mrb[0].mxu0 %v3486
    %v3488 = vpop.f32.mrb[0].mxu0
    %v3489 = vadd.f32 %v3311, %v3488
    %v3490 = vpop.f32.mrb[0].mxu0
    %3491 = vmatprep.mubr.f32.mxu0 0.0
    %v3492 = vand.u32 %v2926, 4294901760
    %v3493 = vsub.f32 %v2926, %v3492
    %3494 = vmatmul.mubr.f32.gmra.mrb[0].mxu0 %v3493
    %v3495 = vpop.f32.mrb[0].mxu0
    %v3496 = vadd.f32 %v3317, %v3495
    %v3497 = vpop.f32.mrb[0].mxu0
    %3498 = vmatprep.mubr.f32.mxu0 0.0
    %v3499 = vand.u32 %v2929, 4294901760
    %v3500 = vsub.f32 %v2929, %v3499
    %3501 = vmatmul.mubr.f32.gmra.mrb[0].mxu0 %v3500
    %v3502 = vpop.f32.mrb[0].mxu0
    %v3503 = vadd.f32 %v3323, %v3502
    %v3504 = vpop.f32.mrb[0].mxu0
    %3505 = vmatprep.mubr.f32.mxu0 0.0
    %v3506 = vand.u32 %v2932, 4294901760
    %v3507 = vsub.f32 %v2932, %v3506
    %3508 = vmatmul.mubr.f32.gmra.mrb[0].mxu0 %v3507
    %v3509 = vpop.f32.mrb[0].mxu0
    %v3510 = vadd.f32 %v3329, %v3509
    %v3511 = vpop.f32.mrb[0].mxu0
    %3512 = vmatprep.mubr.f32.mxu0 0.0
    %v3513 = vand.u32 %v2935, 4294901760
    %v3514 = vsub.f32 %v2935, %v3513
    %3515 = vmatmul.mubr.f32.gmra.mrb[0].mxu0 %v3514
    %v3516 = vpop.f32.mrb[0].mxu0
    %v3517 = vadd.f32 %v3335, %v3516
    %v3518 = vpop.f32.mrb[0].mxu0
    %3519 = vmatprep.mubr.f32.mxu0 0.0
    %v3520 = vand.u32 %v2938, 4294901760
    %v3521 = vsub.f32 %v2938, %v3520
    %3522 = vmatmul.mubr.f32.gmra.mrb[0].mxu0 %v3521
    %v3523 = vpop.f32.mrb[0].mxu0
    %v3524 = vadd.f32 %v3341, %v3523
    %v3525 = vpop.f32.mrb[0].mxu0
    %3526 = vmatprep.mubr.f32.mxu0 0.0
    %v3527 = vand.u32 %v2941, 4294901760
    %v3528 = vsub.f32 %v2941, %v3527
    %3529 = vmatmul.mubr.f32.gmra.mrb[0].mxu0 %v3528
    %v3530 = vpop.f32.mrb[0].mxu0
    %v3531 = vadd.f32 %v3347, %v3530
    %v3532 = vpop.f32.mrb[0].mxu0
    %3533 = vmatprep.mubr.f32.mxu0 0.0
    %v3534 = vand.u32 %v2944, 4294901760
    %v3535 = vsub.f32 %v2944, %v3534
    %3536 = vmatmul.mubr.f32.gmra.mrb[0].mxu0 %v3535
    %v3537 = vpop.f32.mrb[0].mxu0
    %v3538 = vadd.f32 %v3353, %v3537
    %v3539 = vpop.f32.mrb[0].mxu0
    %3540 = vdwg.mxu0
    %3541 = vmatprep.subr.mxu0 0.0
    %v3542 = vand.u32 %v1607, 4294901760
    %3543 = vmatpush1.msra.mxu0 %v3542
    %3544 = vmatprep.subr.mxu0 0.0
    %v3545 = vand.u32 %v1608, 4294901760
    %3546 = vmatpush1.msra.mxu0 %v3545
    %3547 = vmatprep.subr.mxu0 0.0
    %v3548 = vand.u32 %v1609, 4294901760
    %3549 = vmatpush1.msra.mxu0 %v3548
    %3550 = vmatprep.subr.mxu0 0.0
    %v3551 = vand.u32 %v1610, 4294901760
    %3552 = vmatpush1.msra.mxu0 %v3551
    %3553 = vmatprep.subr.mxu0 0.0
    %3554 = vmatpush1.msra.mxu0 0.0
    %3555 = vmatprep.subr.mxu0 0.0
    %3556 = vmatpush1.msra.mxu0 0.0
    %3557 = vmatprep.subr.mxu0 0.0
    %3558 = vmatpush1.msra.mxu0 0.0
    %3559 = vmatprep.subr.mxu0 0.0
    %3560 = vmatpush1.msra.mxu0 0.0
    %3561 = vmatprep.subr.mxu0 0.0
    %3562 = vmatpush1.msra.mxu0 0.0
    %3563 = vmatprep.subr.mxu0 0.0
    %3564 = vmatpush1.msra.mxu0 0.0
    %3565 = vmatprep.subr.mxu0 0.0
    %3566 = vmatpush1.msra.mxu0 0.0
    %3567 = vmatprep.subr.mxu0 0.0
    %3568 = vmatpush1.msra.mxu0 0.0
    %3569 = vmatprep.subr.mxu0 0.0
    %3570 = vmatpush1.msra.mxu0 0.0
    %3571 = vmatprep.subr.mxu0 0.0
    %3572 = vmatpush1.msra.mxu0 0.0
    %3573 = vmatprep.subr.mxu0 0.0
    %3574 = vmatpush1.msra.mxu0 0.0
    %3575 = vmatprep.subr.mxu0 0.0
    %3576 = vmatpush1.msra.mxu0 0.0
    %3577 = vmatprep.subr.mxu0 0.0
    %3578 = vmatpush1.msra.mxu0 0.0
    %3579 = vmatprep.subr.mxu0 0.0
    %3580 = vmatpush1.msra.mxu0 0.0
    %3581 = vmatprep.subr.mxu0 0.0
    %3582 = vmatpush1.msra.mxu0 0.0
    %3583 = vmatprep.subr.mxu0 0.0
    %3584 = vmatpush1.msra.mxu0 0.0
    %3585 = vmatprep.subr.mxu0 0.0
    %3586 = vmatpush1.msra.mxu0 0.0
    %3587 = vmatprep.subr.mxu0 0.0
    %3588 = vmatpush1.msra.mxu0 0.0
    %3589 = vmatprep.subr.mxu0 0.0
    %3590 = vmatpush1.msra.mxu0 0.0
    %3591 = vmatprep.subr.mxu0 0.0
    %3592 = vmatpush1.msra.mxu0 0.0
    %3593 = vmatprep.subr.mxu0 0.0
    %3594 = vmatpush1.msra.mxu0 0.0
    %3595 = vmatprep.subr.mxu0 0.0
    %3596 = vmatpush1.msra.mxu0 0.0
    %3597 = vmatprep.subr.mxu0 0.0
    %3598 = vmatpush1.msra.mxu0 0.0
    %3599 = vmatprep.subr.mxu0 0.0
    %3600 = vmatpush1.msra.mxu0 0.0
    %3601 = vmatprep.subr.mxu0 0.0
    %3602 = vmatpush1.msra.mxu0 0.0
    %3603 = vmatprep.subr.mxu0 0.0
    %3604 = vmatpush1.msra.mxu0 0.0
    %3605 = vmatprep.subr.mxu0 0.0
    %3606 = vmatpush1.msra.mxu0 0.0
    %3607 = vmatprep.subr.mxu0 0.0
    %3608 = vmatpush1.msra.mxu0 0.0
    %3609 = vmatprep.mubr.f32.mxu0 0.0
    %v3610 = vand.u32 %v2899, 4294901760
    %v3611 = vsub.f32 %v2899, %v3610
    %v3612 = vand.u32 %v3611, 4294901760
    %3613 = vmatmul.mubr.f32.gmra.mrb[0].mxu0 %v3612
    %v3614 = vpop.f32.mrb[0].mxu0
    %v3615 = vadd.f32 %v3433, %v3614
    %v3616 = vpop.f32.mrb[0].mxu0
    %3617 = vmatprep.mubr.f32.mxu0 0.0
    %v3618 = vand.u32 %v2902, 4294901760
    %v3619 = vsub.f32 %v2902, %v3618
    %v3620 = vand.u32 %v3619, 4294901760
    %3621 = vmatmul.mubr.f32.gmra.mrb[0].mxu0 %v3620
    %v3622 = vpop.f32.mrb[0].mxu0
    %v3623 = vadd.f32 %v3440, %v3622
    %v3624 = vpop.f32.mrb[0].mxu0
    %3625 = vmatprep.mubr.f32.mxu0 0.0
    %v3626 = vand.u32 %v2905, 4294901760
    %v3627 = vsub.f32 %v2905, %v3626
    %v3628 = vand.u32 %v3627, 4294901760
    %3629 = vmatmul.mubr.f32.gmra.mrb[0].mxu0 %v3628
    %v3630 = vpop.f32.mrb[0].mxu0
    %v3631 = vadd.f32 %v3447, %v3630
    %v3632 = vpop.f32.mrb[0].mxu0
    %3633 = vmatprep.mubr.f32.mxu0 0.0
    %v3634 = vand.u32 %v2908, 4294901760
    %v3635 = vsub.f32 %v2908, %v3634
    %v3636 = vand.u32 %v3635, 4294901760
    %3637 = vmatmul.mubr.f32.gmra.mrb[0].mxu0 %v3636
    %v3638 = vpop.f32.mrb[0].mxu0
    %v3639 = vadd.f32 %v3454, %v3638
    %v3640 = vpop.f32.mrb[0].mxu0
    %3641 = vmatprep.mubr.f32.mxu0 0.0
    %v3642 = vand.u32 %v2911, 4294901760
    %v3643 = vsub.f32 %v2911, %v3642
    %v3644 = vand.u32 %v3643, 4294901760
    %3645 = vmatmul.mubr.f32.gmra.mrb[0].mxu0 %v3644
    %v3646 = vpop.f32.mrb[0].mxu0
    %v3647 = vadd.f32 %v3461, %v3646
    %v3648 = vpop.f32.mrb[0].mxu0
    %3649 = vmatprep.mubr.f32.mxu0 0.0
    %v3650 = vand.u32 %v2914, 4294901760
    %v3651 = vsub.f32 %v2914, %v3650
    %v3652 = vand.u32 %v3651, 4294901760
    %3653 = vmatmul.mubr.f32.gmra.mrb[0].mxu0 %v3652
    %v3654 = vpop.f32.mrb[0].mxu0
    %v3655 = vadd.f32 %v3468, %v3654
    %v3656 = vpop.f32.mrb[0].mxu0
    %3657 = vmatprep.mubr.f32.mxu0 0.0
    %v3658 = vand.u32 %v2917, 4294901760
    %v3659 = vsub.f32 %v2917, %v3658
    %v3660 = vand.u32 %v3659, 4294901760
    %3661 = vmatmul.mubr.f32.gmra.mrb[0].mxu0 %v3660
    %v3662 = vpop.f32.mrb[0].mxu0
    %v3663 = vadd.f32 %v3475, %v3662
    %v3664 = vpop.f32.mrb[0].mxu0
    %3665 = vmatprep.mubr.f32.mxu0 0.0
    %v3666 = vand.u32 %v2920, 4294901760
    %v3667 = vsub.f32 %v2920, %v3666
    %v3668 = vand.u32 %v3667, 4294901760
    %3669 = vmatmul.mubr.f32.gmra.mrb[0].mxu0 %v3668
    %v3670 = vpop.f32.mrb[0].mxu0
    %v3671 = vadd.f32 %v3482, %v3670
    %v3672 = vpop.f32.mrb[0].mxu0
    %3673 = vmatprep.mubr.f32.mxu0 0.0
    %v3674 = vand.u32 %v2923, 4294901760
    %v3675 = vsub.f32 %v2923, %v3674
    %v3676 = vand.u32 %v3675, 4294901760
    %3677 = vmatmul.mubr.f32.gmra.mrb[0].mxu0 %v3676
    %v3678 = vpop.f32.mrb[0].mxu0
    %v3679 = vadd.f32 %v3489, %v3678
    %v3680 = vpop.f32.mrb[0].mxu0
    %3681 = vmatprep.mubr.f32.mxu0 0.0
    %v3682 = vand.u32 %v2926, 4294901760
    %v3683 = vsub.f32 %v2926, %v3682
    %v3684 = vand.u32 %v3683, 4294901760
    %3685 = vmatmul.mubr.f32.gmra.mrb[0].mxu0 %v3684
    %v3686 = vpop.f32.mrb[0].mxu0
    %v3687 = vadd.f32 %v3496, %v3686
    %v3688 = vpop.f32.mrb[0].mxu0
    %3689 = vmatprep.mubr.f32.mxu0 0.0
    %v3690 = vand.u32 %v2929, 4294901760
    %v3691 = vsub.f32 %v2929, %v3690
    %v3692 = vand.u32 %v3691, 4294901760
    %3693 = vmatmul.mubr.f32.gmra.mrb[0].mxu0 %v3692
    %v3694 = vpop.f32.mrb[0].mxu0
    %v3695 = vadd.f32 %v3503, %v3694
    %v3696 = vpop.f32.mrb[0].mxu0
    %3697 = vmatprep.mubr.f32.mxu0 0.0
    %v3698 = vand.u32 %v2932, 4294901760
    %v3699 = vsub.f32 %v2932, %v3698
    %v3700 = vand.u32 %v3699, 4294901760
    %3701 = vmatmul.mubr.f32.gmra.mrb[0].mxu0 %v3700
    %v3702 = vpop.f32.mrb[0].mxu0
    %v3703 = vadd.f32 %v3510, %v3702
    %v3704 = vpop.f32.mrb[0].mxu0
    %3705 = vmatprep.mubr.f32.mxu0 0.0
    %v3706 = vand.u32 %v2935, 4294901760
    %v3707 = vsub.f32 %v2935, %v3706
    %v3708 = vand.u32 %v3707, 4294901760
    %3709 = vmatmul.mubr.f32.gmra.mrb[0].mxu0 %v3708
    %v3710 = vpop.f32.mrb[0].mxu0
    %v3711 = vadd.f32 %v3517, %v3710
    %v3712 = vpop.f32.mrb[0].mxu0
    %3713 = vmatprep.mubr.f32.mxu0 0.0
    %v3714 = vand.u32 %v2938, 4294901760
    %v3715 = vsub.f32 %v2938, %v3714
    %v3716 = vand.u32 %v3715, 4294901760
    %3717 = vmatmul.mubr.f32.gmra.mrb[0].mxu0 %v3716
    %v3718 = vpop.f32.mrb[0].mxu0
    %v3719 = vadd.f32 %v3524, %v3718
    %v3720 = vpop.f32.mrb[0].mxu0
    %3721 = vmatprep.mubr.f32.mxu0 0.0
    %v3722 = vand.u32 %v2941, 4294901760
    %v3723 = vsub.f32 %v2941, %v3722
    %v3724 = vand.u32 %v3723, 4294901760
    %3725 = vmatmul.mubr.f32.gmra.mrb[0].mxu0 %v3724
    %v3726 = vpop.f32.mrb[0].mxu0
    %v3727 = vadd.f32 %v3531, %v3726
    %v3728 = vpop.f32.mrb[0].mxu0
    %3729 = vmatprep.mubr.f32.mxu0 0.0
    %v3730 = vand.u32 %v2944, 4294901760
    %v3731 = vsub.f32 %v2944, %v3730
    %v3732 = vand.u32 %v3731, 4294901760
    %3733 = vmatmul.mubr.f32.gmra.mrb[0].mxu0 %v3732
    %v3734 = vpop.f32.mrb[0].mxu0
    %v3735 = vadd.f32 %v3538, %v3734
    %v3736 = vpop.f32.mrb[0].mxu0
    %3737 = vdwg.mxu0
    %3738 = vmatprep.subr.mxu0 0.0
    %v3739 = vand.u32 %v1607, 4294901760
    %v3740 = vsub.f32 %v1607, %v3739
    %v3741 = vand.u32 %v3740, 4294901760
    %3742 = vmatpush1.msra.mxu0 %v3741
    %3743 = vmatprep.subr.mxu0 0.0
    %v3744 = vand.u32 %v1608, 4294901760
    %v3745 = vsub.f32 %v1608, %v3744
    %v3746 = vand.u32 %v3745, 4294901760
    %3747 = vmatpush1.msra.mxu0 %v3746
    %3748 = vmatprep.subr.mxu0 0.0
    %v3749 = vand.u32 %v1609, 4294901760
    %v3750 = vsub.f32 %v1609, %v3749
    %v3751 = vand.u32 %v3750, 4294901760
    %3752 = vmatpush1.msra.mxu0 %v3751
    %3753 = vmatprep.subr.mxu0 0.0
    %v3754 = vand.u32 %v1610, 4294901760
    %v3755 = vsub.f32 %v1610, %v3754
    %v3756 = vand.u32 %v3755, 4294901760
    %3757 = vmatpush1.msra.mxu0 %v3756
    %3758 = vmatprep.subr.mxu0 0.0
    %3759 = vmatpush1.msra.mxu0 0.0
    %3760 = vmatprep.subr.mxu0 0.0
    %3761 = vmatpush1.msra.mxu0 0.0
    %3762 = vmatprep.subr.mxu0 0.0
    %3763 = vmatpush1.msra.mxu0 0.0
    %3764 = vmatprep.subr.mxu0 0.0
    %3765 = vmatpush1.msra.mxu0 0.0
    %3766 = vmatprep.subr.mxu0 0.0
    %3767 = vmatpush1.msra.mxu0 0.0
    %3768 = vmatprep.subr.mxu0 0.0
    %3769 = vmatpush1.msra.mxu0 0.0
    %3770 = vmatprep.subr.mxu0 0.0
    %3771 = vmatpush1.msra.mxu0 0.0
    %3772 = vmatprep.subr.mxu0 0.0
    %3773 = vmatpush1.msra.mxu0 0.0
    %3774 = vmatprep.subr.mxu0 0.0
    %3775 = vmatpush1.msra.mxu0 0.0
    %3776 = vmatprep.subr.mxu0 0.0
    %3777 = vmatpush1.msra.mxu0 0.0
    %3778 = vmatprep.subr.mxu0 0.0
    %3779 = vmatpush1.msra.mxu0 0.0
    %3780 = vmatprep.subr.mxu0 0.0
    %3781 = vmatpush1.msra.mxu0 0.0
    %3782 = vmatprep.subr.mxu0 0.0
    %3783 = vmatpush1.msra.mxu0 0.0
    %3784 = vmatprep.subr.mxu0 0.0
    %3785 = vmatpush1.msra.mxu0 0.0
    %3786 = vmatprep.subr.mxu0 0.0
    %3787 = vmatpush1.msra.mxu0 0.0
    %3788 = vmatprep.subr.mxu0 0.0
    %3789 = vmatpush1.msra.mxu0 0.0
    %3790 = vmatprep.subr.mxu0 0.0
    %3791 = vmatpush1.msra.mxu0 0.0
    %3792 = vmatprep.subr.mxu0 0.0
    %3793 = vmatpush1.msra.mxu0 0.0
    %3794 = vmatprep.subr.mxu0 0.0
    %3795 = vmatpush1.msra.mxu0 0.0
    %3796 = vmatprep.subr.mxu0 0.0
    %3797 = vmatpush1.msra.mxu0 0.0
    %3798 = vmatprep.subr.mxu0 0.0
    %3799 = vmatpush1.msra.mxu0 0.0
    %3800 = vmatprep.subr.mxu0 0.0
    %3801 = vmatpush1.msra.mxu0 0.0
    %3802 = vmatprep.subr.mxu0 0.0
    %3803 = vmatpush1.msra.mxu0 0.0
    %3804 = vmatprep.subr.mxu0 0.0
    %3805 = vmatpush1.msra.mxu0 0.0
    %3806 = vmatprep.subr.mxu0 0.0
    %3807 = vmatpush1.msra.mxu0 0.0
    %3808 = vmatprep.subr.mxu0 0.0
    %3809 = vmatpush1.msra.mxu0 0.0
    %3810 = vmatprep.subr.mxu0 0.0
    %3811 = vmatpush1.msra.mxu0 0.0
    %3812 = vmatprep.subr.mxu0 0.0
    %3813 = vmatpush1.msra.mxu0 0.0
    %3814 = vmatprep.mubr.f32.mxu0 0.0
    %v3815 = vand.u32 %v2899, 4294901760
    %3816 = vmatmul.mubr.f32.gmra.mrb[0].mxu0 %v3815
    %v3817 = vpop.f32.mrb[0].mxu0
    %v3818 = vadd.f32 %v3615, %v3817
    %v3819 = vpop.f32.mrb[0].mxu0
    %3820 = vmatprep.mubr.f32.mxu0 0.0
    %v3821 = vand.u32 %v2902, 4294901760
    %3822 = vmatmul.mubr.f32.gmra.mrb[0].mxu0 %v3821
    %v3823 = vpop.f32.mrb[0].mxu0
    %v3824 = vadd.f32 %v3623, %v3823
    %v3825 = vpop.f32.mrb[0].mxu0
    %3826 = vmatprep.mubr.f32.mxu0 0.0
    %v3827 = vand.u32 %v2905, 4294901760
    %3828 = vmatmul.mubr.f32.gmra.mrb[0].mxu0 %v3827
    %v3829 = vpop.f32.mrb[0].mxu0
    %v3830 = vadd.f32 %v3631, %v3829
    %v3831 = vpop.f32.mrb[0].mxu0
    %3832 = vmatprep.mubr.f32.mxu0 0.0
    %v3833 = vand.u32 %v2908, 4294901760
    %3834 = vmatmul.mubr.f32.gmra.mrb[0].mxu0 %v3833
    %v3835 = vpop.f32.mrb[0].mxu0
    %v3836 = vadd.f32 %v3639, %v3835
    %v3837 = vpop.f32.mrb[0].mxu0
    %3838 = vmatprep.mubr.f32.mxu0 0.0
    %v3839 = vand.u32 %v2911, 4294901760
    %3840 = vmatmul.mubr.f32.gmra.mrb[0].mxu0 %v3839
    %v3841 = vpop.f32.mrb[0].mxu0
    %v3842 = vadd.f32 %v3647, %v3841
    %v3843 = vpop.f32.mrb[0].mxu0
    %3844 = vmatprep.mubr.f32.mxu0 0.0
    %v3845 = vand.u32 %v2914, 4294901760
    %3846 = vmatmul.mubr.f32.gmra.mrb[0].mxu0 %v3845
    %v3847 = vpop.f32.mrb[0].mxu0
    %v3848 = vadd.f32 %v3655, %v3847
    %v3849 = vpop.f32.mrb[0].mxu0
    %3850 = vmatprep.mubr.f32.mxu0 0.0
    %v3851 = vand.u32 %v2917, 4294901760
    %3852 = vmatmul.mubr.f32.gmra.mrb[0].mxu0 %v3851
    %v3853 = vpop.f32.mrb[0].mxu0
    %v3854 = vadd.f32 %v3663, %v3853
    %v3855 = vpop.f32.mrb[0].mxu0
    %3856 = vmatprep.mubr.f32.mxu0 0.0
    %v3857 = vand.u32 %v2920, 4294901760
    %3858 = vmatmul.mubr.f32.gmra.mrb[0].mxu0 %v3857
    %v3859 = vpop.f32.mrb[0].mxu0
    %v3860 = vadd.f32 %v3671, %v3859
    %v3861 = vpop.f32.mrb[0].mxu0
    %3862 = vmatprep.mubr.f32.mxu0 0.0
    %v3863 = vand.u32 %v2923, 4294901760
    %3864 = vmatmul.mubr.f32.gmra.mrb[0].mxu0 %v3863
    %v3865 = vpop.f32.mrb[0].mxu0
    %v3866 = vadd.f32 %v3679, %v3865
    %v3867 = vpop.f32.mrb[0].mxu0
    %3868 = vmatprep.mubr.f32.mxu0 0.0
    %v3869 = vand.u32 %v2926, 4294901760
    %3870 = vmatmul.mubr.f32.gmra.mrb[0].mxu0 %v3869
    %v3871 = vpop.f32.mrb[0].mxu0
    %v3872 = vadd.f32 %v3687, %v3871
    %v3873 = vpop.f32.mrb[0].mxu0
    %3874 = vmatprep.mubr.f32.mxu0 0.0
    %v3875 = vand.u32 %v2929, 4294901760
    %3876 = vmatmul.mubr.f32.gmra.mrb[0].mxu0 %v3875
    %v3877 = vpop.f32.mrb[0].mxu0
    %v3878 = vadd.f32 %v3695, %v3877
    %v3879 = vpop.f32.mrb[0].mxu0
    %3880 = vmatprep.mubr.f32.mxu0 0.0
    %v3881 = vand.u32 %v2932, 4294901760
    %3882 = vmatmul.mubr.f32.gmra.mrb[0].mxu0 %v3881
    %v3883 = vpop.f32.mrb[0].mxu0
    %v3884 = vadd.f32 %v3703, %v3883
    %v3885 = vpop.f32.mrb[0].mxu0
    %3886 = vmatprep.mubr.f32.mxu0 0.0
    %v3887 = vand.u32 %v2935, 4294901760
    %3888 = vmatmul.mubr.f32.gmra.mrb[0].mxu0 %v3887
    %v3889 = vpop.f32.mrb[0].mxu0
    %v3890 = vadd.f32 %v3711, %v3889
    %v3891 = vpop.f32.mrb[0].mxu0
    %3892 = vmatprep.mubr.f32.mxu0 0.0
    %v3893 = vand.u32 %v2938, 4294901760
    %3894 = vmatmul.mubr.f32.gmra.mrb[0].mxu0 %v3893
    %v3895 = vpop.f32.mrb[0].mxu0
    %v3896 = vadd.f32 %v3719, %v3895
    %v3897 = vpop.f32.mrb[0].mxu0
    %3898 = vmatprep.mubr.f32.mxu0 0.0
    %v3899 = vand.u32 %v2941, 4294901760
    %3900 = vmatmul.mubr.f32.gmra.mrb[0].mxu0 %v3899
    %v3901 = vpop.f32.mrb[0].mxu0
    %v3902 = vadd.f32 %v3727, %v3901
    %v3903 = vpop.f32.mrb[0].mxu0
    %3904 = vmatprep.mubr.f32.mxu0 0.0
    %v3905 = vand.u32 %v2944, 4294901760
    %3906 = vmatmul.mubr.f32.gmra.mrb[0].mxu0 %v3905
    %v3907 = vpop.f32.mrb[0].mxu0
    %v3908 = vadd.f32 %v3735, %v3907
    %v3909 = vpop.f32.mrb[0].mxu0
    %3910 = vdwg.mxu0
    %3911 = vmatprep.subr.mxu0 0.0
    %v3912 = vand.u32 %v1607, 4294901760
    %3913 = vmatpush1.msra.mxu0 %v3912
    %3914 = vmatprep.subr.mxu0 0.0
    %v3915 = vand.u32 %v1608, 4294901760
    %3916 = vmatpush1.msra.mxu0 %v3915
    %3917 = vmatprep.subr.mxu0 0.0
    %v3918 = vand.u32 %v1609, 4294901760
    %3919 = vmatpush1.msra.mxu0 %v3918
    %3920 = vmatprep.subr.mxu0 0.0
    %v3921 = vand.u32 %v1610, 4294901760
    %3922 = vmatpush1.msra.mxu0 %v3921
    %3923 = vmatprep.subr.mxu0 0.0
    %3924 = vmatpush1.msra.mxu0 0.0
    %3925 = vmatprep.subr.mxu0 0.0
    %3926 = vmatpush1.msra.mxu0 0.0
    %3927 = vmatprep.subr.mxu0 0.0
    %3928 = vmatpush1.msra.mxu0 0.0
    %3929 = vmatprep.subr.mxu0 0.0
    %3930 = vmatpush1.msra.mxu0 0.0
    %3931 = vmatprep.subr.mxu0 0.0
    %3932 = vmatpush1.msra.mxu0 0.0
    %3933 = vmatprep.subr.mxu0 0.0
    %3934 = vmatpush1.msra.mxu0 0.0
    %3935 = vmatprep.subr.mxu0 0.0
    %3936 = vmatpush1.msra.mxu0 0.0
    %3937 = vmatprep.subr.mxu0 0.0
    %3938 = vmatpush1.msra.mxu0 0.0
    %3939 = vmatprep.subr.mxu0 0.0
    %3940 = vmatpush1.msra.mxu0 0.0
    %3941 = vmatprep.subr.mxu0 0.0
    %3942 = vmatpush1.msra.mxu0 0.0
    %3943 = vmatprep.subr.mxu0 0.0
    %3944 = vmatpush1.msra.mxu0 0.0
    %3945 = vmatprep.subr.mxu0 0.0
    %3946 = vmatpush1.msra.mxu0 0.0
    %3947 = vmatprep.subr.mxu0 0.0
    %3948 = vmatpush1.msra.mxu0 0.0
    %3949 = vmatprep.subr.mxu0 0.0
    %3950 = vmatpush1.msra.mxu0 0.0
    %3951 = vmatprep.subr.mxu0 0.0
    %3952 = vmatpush1.msra.mxu0 0.0
    %3953 = vmatprep.subr.mxu0 0.0
    %3954 = vmatpush1.msra.mxu0 0.0
    %3955 = vmatprep.subr.mxu0 0.0
    %3956 = vmatpush1.msra.mxu0 0.0
    %3957 = vmatprep.subr.mxu0 0.0
    %3958 = vmatpush1.msra.mxu0 0.0
    %3959 = vmatprep.subr.mxu0 0.0
    %3960 = vmatpush1.msra.mxu0 0.0
    %3961 = vmatprep.subr.mxu0 0.0
    %3962 = vmatpush1.msra.mxu0 0.0
    %3963 = vmatprep.subr.mxu0 0.0
    %3964 = vmatpush1.msra.mxu0 0.0
    %3965 = vmatprep.subr.mxu0 0.0
    %3966 = vmatpush1.msra.mxu0 0.0
    %3967 = vmatprep.subr.mxu0 0.0
    %3968 = vmatpush1.msra.mxu0 0.0
    %3969 = vmatprep.subr.mxu0 0.0
    %3970 = vmatpush1.msra.mxu0 0.0
    %3971 = vmatprep.subr.mxu0 0.0
    %3972 = vmatpush1.msra.mxu0 0.0
    %3973 = vmatprep.subr.mxu0 0.0
    %3974 = vmatpush1.msra.mxu0 0.0
    %3975 = vmatprep.subr.mxu0 0.0
    %3976 = vmatpush1.msra.mxu0 0.0
    %3977 = vmatprep.subr.mxu0 0.0
    %3978 = vmatpush1.msra.mxu0 0.0
    %3979 = vmatprep.mubr.f32.mxu0 0.0
    %v3980 = vand.u32 %v2899, 4294901760
    %3981 = vmatmul.mubr.f32.gmra.mrb[0].mxu0 %v3980
    %v3982 = vpop.f32.mrb[0].mxu0
    %v3983 = vadd.f32 %v3818, %v3982
    %v3984 = vpop.f32.mrb[0].mxu0
    %3985 = vmatprep.mubr.f32.mxu0 0.0
    %v3986 = vand.u32 %v2902, 4294901760
    %3987 = vmatmul.mubr.f32.gmra.mrb[0].mxu0 %v3986
    %v3988 = vpop.f32.mrb[0].mxu0
    %v3989 = vadd.f32 %v3824, %v3988
    %v3990 = vpop.f32.mrb[0].mxu0
    %3991 = vmatprep.mubr.f32.mxu0 0.0
    %v3992 = vand.u32 %v2905, 4294901760
    %3993 = vmatmul.mubr.f32.gmra.mrb[0].mxu0 %v3992
    %v3994 = vpop.f32.mrb[0].mxu0
    %v3995 = vadd.f32 %v3830, %v3994
    %v3996 = vpop.f32.mrb[0].mxu0
    %3997 = vmatprep.mubr.f32.mxu0 0.0
    %v3998 = vand.u32 %v2908, 4294901760
    %3999 = vmatmul.mubr.f32.gmra.mrb[0].mxu0 %v3998
    %v4000 = vpop.f32.mrb[0].mxu0
    %v4001 = vadd.f32 %v3836, %v4000
    %v4002 = vpop.f32.mrb[0].mxu0
    %4003 = vmatprep.mubr.f32.mxu0 0.0
    %v4004 = vand.u32 %v2911, 4294901760
    %4005 = vmatmul.mubr.f32.gmra.mrb[0].mxu0 %v4004
    %v4006 = vpop.f32.mrb[0].mxu0
    %v4007 = vadd.f32 %v3842, %v4006
    %v4008 = vpop.f32.mrb[0].mxu0
    %4009 = vmatprep.mubr.f32.mxu0 0.0
    %v4010 = vand.u32 %v2914, 4294901760
    %4011 = vmatmul.mubr.f32.gmra.mrb[0].mxu0 %v4010
    %v4012 = vpop.f32.mrb[0].mxu0
    %v4013 = vadd.f32 %v3848, %v4012
    %v4014 = vpop.f32.mrb[0].mxu0
    %4015 = vmatprep.mubr.f32.mxu0 0.0
    %v4016 = vand.u32 %v2917, 4294901760
    %4017 = vmatmul.mubr.f32.gmra.mrb[0].mxu0 %v4016
    %v4018 = vpop.f32.mrb[0].mxu0
    %v4019 = vadd.f32 %v3854, %v4018
    %v4020 = vpop.f32.mrb[0].mxu0
    %4021 = vmatprep.mubr.f32.mxu0 0.0
    %v4022 = vand.u32 %v2920, 4294901760
    %4023 = vmatmul.mubr.f32.gmra.mrb[0].mxu0 %v4022
    %v4024 = vpop.f32.mrb[0].mxu0
    %v4025 = vadd.f32 %v3860, %v4024
    %v4026 = vpop.f32.mrb[0].mxu0
    %4027 = vmatprep.mubr.f32.mxu0 0.0
    %v4028 = vand.u32 %v2923, 4294901760
    %4029 = vmatmul.mubr.f32.gmra.mrb[0].mxu0 %v4028
    %v4030 = vpop.f32.mrb[0].mxu0
    %v4031 = vadd.f32 %v3866, %v4030
    %v4032 = vpop.f32.mrb[0].mxu0
    %4033 = vmatprep.mubr.f32.mxu0 0.0
    %v4034 = vand.u32 %v2926, 4294901760
    %4035 = vmatmul.mubr.f32.gmra.mrb[0].mxu0 %v4034
    %v4036 = vpop.f32.mrb[0].mxu0
    %v4037 = vadd.f32 %v3872, %v4036
    %v4038 = vpop.f32.mrb[0].mxu0
    %4039 = vmatprep.mubr.f32.mxu0 0.0
    %v4040 = vand.u32 %v2929, 4294901760
    %4041 = vmatmul.mubr.f32.gmra.mrb[0].mxu0 %v4040
    %v4042 = vpop.f32.mrb[0].mxu0
    %v4043 = vadd.f32 %v3878, %v4042
    %v4044 = vpop.f32.mrb[0].mxu0
    %4045 = vmatprep.mubr.f32.mxu0 0.0
    %v4046 = vand.u32 %v2932, 4294901760
    %4047 = vmatmul.mubr.f32.gmra.mrb[0].mxu0 %v4046
    %v4048 = vpop.f32.mrb[0].mxu0
    %v4049 = vadd.f32 %v3884, %v4048
    %v4050 = vpop.f32.mrb[0].mxu0
    %4051 = vmatprep.mubr.f32.mxu0 0.0
    %v4052 = vand.u32 %v2935, 4294901760
    %4053 = vmatmul.mubr.f32.gmra.mrb[0].mxu0 %v4052
    %v4054 = vpop.f32.mrb[0].mxu0
    %v4055 = vadd.f32 %v3890, %v4054
    %v4056 = vpop.f32.mrb[0].mxu0
    %4057 = vmatprep.mubr.f32.mxu0 0.0
    %v4058 = vand.u32 %v2938, 4294901760
    %4059 = vmatmul.mubr.f32.gmra.mrb[0].mxu0 %v4058
    %v4060 = vpop.f32.mrb[0].mxu0
    %v4061 = vadd.f32 %v3896, %v4060
    %v4062 = vpop.f32.mrb[0].mxu0
    %4063 = vmatprep.mubr.f32.mxu0 0.0
    %v4064 = vand.u32 %v2941, 4294901760
    %4065 = vmatmul.mubr.f32.gmra.mrb[0].mxu0 %v4064
    %v4066 = vpop.f32.mrb[0].mxu0
    %v4067 = vadd.f32 %v3902, %v4066
    %v4068 = vpop.f32.mrb[0].mxu0
    %4069 = vmatprep.mubr.f32.mxu0 0.0
    %v4070 = vand.u32 %v2944, 4294901760
    %4071 = vmatmul.mubr.f32.gmra.mrb[0].mxu0 %v4070
    %v4072 = vpop.f32.mrb[0].mxu0
    %v4073 = vadd.f32 %v3908, %v4072
    %v4074 = vpop.f32.mrb[0].mxu0
    %4075 = vdwg.mxu0
    %v4076 = vsub.f32 %v1483, %v3983
    %v4077 = vsub.f32 %v1490, %v3989
    %v4078 = vsub.f32 %v1497, %v3995
    %v4079 = vsub.f32 %v1504, %v4001
    %v4080 = vsub.f32 %v1511, %v4007
    %v4081 = vsub.f32 %v1518, %v4013
    %v4082 = vsub.f32 %v1525, %v4019
    %v4083 = vsub.f32 %v1532, %v4025
    %v4084 = vsub.f32 %v1539, %v4031
    %v4085 = vsub.f32 %v1546, %v4037
    %v4086 = vsub.f32 %v1553, %v4043
    %v4087 = vsub.f32 %v1560, %v4049
    %v4088 = vsub.f32 %v1567, %v4055
    %v4089 = vsub.f32 %v1574, %v4061
    %v4090 = vsub.f32 %v1581, %v4067
    %v4091 = vsub.f32 %v1588, %v4073
    %v4092 = vmul.f32 %v4076, %v4076
    %v4093 = vmul.f32 %v4077, %v4077
    %v4094 = vmul.f32 %v4078, %v4078
    %v4095 = vmul.f32 %v4079, %v4079
    %v4096 = vmul.f32 %v4080, %v4080
    %v4097 = vmul.f32 %v4081, %v4081
    %v4098 = vmul.f32 %v4082, %v4082
    %v4099 = vmul.f32 %v4083, %v4083
    %v4100 = vmul.f32 %v4084, %v4084
    %v4101 = vmul.f32 %v4085, %v4085
    %v4102 = vmul.f32 %v4086, %v4086
    %v4103 = vmul.f32 %v4087, %v4087
    %v4104 = vmul.f32 %v4088, %v4088
    %v4105 = vmul.f32 %v4089, %v4089
    %v4106 = vmul.f32 %v4090, %v4090
    %v4107 = vmul.f32 %v4091, %v4091
    %4108 = vmatprep.subr.mxu0 0.0
    %v4109 = vand.u32 %v4092, 4294901760
    %4110 = vmatpush1.msra.mxu0 %v4109
    %4111 = vmatprep.subr.mxu0 0.0
    %v4112 = vand.u32 %v4093, 4294901760
    %4113 = vmatpush1.msra.mxu0 %v4112
    %4114 = vmatprep.subr.mxu0 0.0
    %v4115 = vand.u32 %v4094, 4294901760
    %4116 = vmatpush1.msra.mxu0 %v4115
    %4117 = vmatprep.subr.mxu0 0.0
    %v4118 = vand.u32 %v4095, 4294901760
    %4119 = vmatpush1.msra.mxu0 %v4118
    %4120 = vmatprep.subr.mxu0 0.0
    %v4121 = vand.u32 %v4096, 4294901760
    %4122 = vmatpush1.msra.mxu0 %v4121
    %4123 = vmatprep.subr.mxu0 0.0
    %v4124 = vand.u32 %v4097, 4294901760
    %4125 = vmatpush1.msra.mxu0 %v4124
    %4126 = vmatprep.subr.mxu0 0.0
    %v4127 = vand.u32 %v4098, 4294901760
    %4128 = vmatpush1.msra.mxu0 %v4127
    %4129 = vmatprep.subr.mxu0 0.0
    %v4130 = vand.u32 %v4099, 4294901760
    %4131 = vmatpush1.msra.mxu0 %v4130
    %4132 = vmatprep.subr.mxu0 0.0
    %v4133 = vand.u32 %v4100, 4294901760
    %4134 = vmatpush1.msra.mxu0 %v4133
    %4135 = vmatprep.subr.mxu0 0.0
    %v4136 = vand.u32 %v4101, 4294901760
    %4137 = vmatpush1.msra.mxu0 %v4136
    %4138 = vmatprep.subr.mxu0 0.0
    %v4139 = vand.u32 %v4102, 4294901760
    %4140 = vmatpush1.msra.mxu0 %v4139
    %4141 = vmatprep.subr.mxu0 0.0
    %v4142 = vand.u32 %v4103, 4294901760
    %4143 = vmatpush1.msra.mxu0 %v4142
    %4144 = vmatprep.subr.mxu0 0.0
    %v4145 = vand.u32 %v4104, 4294901760
    %4146 = vmatpush1.msra.mxu0 %v4145
    %4147 = vmatprep.subr.mxu0 0.0
    %v4148 = vand.u32 %v4105, 4294901760
    %4149 = vmatpush1.msra.mxu0 %v4148
    %4150 = vmatprep.subr.mxu0 0.0
    %v4151 = vand.u32 %v4106, 4294901760
    %4152 = vmatpush1.msra.mxu0 %v4151
    %4153 = vmatprep.subr.mxu0 0.0
    %v4154 = vand.u32 %v4107, 4294901760
    %4155 = vmatpush1.msra.mxu0 %v4154
    %4156 = vmatprep.subr.mxu0 0.0
    %4157 = vmatpush1.msra.mxu0 0.0
    %4158 = vmatprep.subr.mxu0 0.0
    %4159 = vmatpush1.msra.mxu0 0.0
    %4160 = vmatprep.subr.mxu0 0.0
    %4161 = vmatpush1.msra.mxu0 0.0
    %4162 = vmatprep.subr.mxu0 0.0
    %4163 = vmatpush1.msra.mxu0 0.0
    %4164 = vmatprep.subr.mxu0 0.0
    %4165 = vmatpush1.msra.mxu0 0.0
    %4166 = vmatprep.subr.mxu0 0.0
    %4167 = vmatpush1.msra.mxu0 0.0
    %4168 = vmatprep.subr.mxu0 0.0
    %4169 = vmatpush1.msra.mxu0 0.0
    %4170 = vmatprep.subr.mxu0 0.0
    %4171 = vmatpush1.msra.mxu0 0.0
    %4172 = vmatprep.subr.mxu0 0.0
    %4173 = vmatpush1.msra.mxu0 0.0
    %4174 = vmatprep.subr.mxu0 0.0
    %4175 = vmatpush1.msra.mxu0 0.0
    %4176 = vmatprep.subr.mxu0 0.0
    %4177 = vmatpush1.msra.mxu0 0.0
    %4178 = vmatprep.subr.mxu0 0.0
    %4179 = vmatpush1.msra.mxu0 0.0
    %4180 = vmatprep.subr.mxu0 0.0
    %4181 = vmatpush1.msra.mxu0 0.0
    %4182 = vmatprep.subr.mxu0 0.0
    %4183 = vmatpush1.msra.mxu0 0.0
    %4184 = vmatprep.subr.mxu0 0.0
    %4185 = vmatpush1.msra.mxu0 0.0
    %4186 = vmatprep.subr.mxu0 0.0
    %4187 = vmatpush1.msra.mxu0 0.0
    %4188 = vmatprep.mubr.f32.mxu0 0.0
    %v4189 = vand.u32 %v1591, 4294901760
    %v4190 = vsub.f32 %v1591, %v4189
    %v4191 = vand.u32 %v4190, 4294901760
    %v4192 = vsub.f32 %v4190, %v4191
    %v4193 = vand.u32 %v4192, 4294901760
    %4194 = vmatmul.mubr.f32.gmra.mrb[0].mxu0 %v4193
    %v4195 = vpop.f32.mrb[0].mxu0
    %v4196 = vadd.f32 0.0, %v4195
    %v4197 = vpop.f32.mrb[0].mxu0
    %4198 = vmatprep.mubr.f32.mxu0 0.0
    %v4199 = vand.u32 %v1592, 4294901760
    %v4200 = vsub.f32 %v1592, %v4199
    %v4201 = vand.u32 %v4200, 4294901760
    %v4202 = vsub.f32 %v4200, %v4201
    %v4203 = vand.u32 %v4202, 4294901760
    %4204 = vmatmul.mubr.f32.gmra.mrb[0].mxu0 %v4203
    %v4205 = vpop.f32.mrb[0].mxu0
    %v4206 = vadd.f32 0.0, %v4205
    %v4207 = vpop.f32.mrb[0].mxu0
    %4208 = vmatprep.mubr.f32.mxu0 0.0
    %v4209 = vand.u32 %v1593, 4294901760
    %v4210 = vsub.f32 %v1593, %v4209
    %v4211 = vand.u32 %v4210, 4294901760
    %v4212 = vsub.f32 %v4210, %v4211
    %v4213 = vand.u32 %v4212, 4294901760
    %4214 = vmatmul.mubr.f32.gmra.mrb[0].mxu0 %v4213
    %v4215 = vpop.f32.mrb[0].mxu0
    %v4216 = vadd.f32 0.0, %v4215
    %v4217 = vpop.f32.mrb[0].mxu0
    %4218 = vmatprep.mubr.f32.mxu0 0.0
    %v4219 = vand.u32 %v1594, 4294901760
    %v4220 = vsub.f32 %v1594, %v4219
    %v4221 = vand.u32 %v4220, 4294901760
    %v4222 = vsub.f32 %v4220, %v4221
    %v4223 = vand.u32 %v4222, 4294901760
    %4224 = vmatmul.mubr.f32.gmra.mrb[0].mxu0 %v4223
    %v4225 = vpop.f32.mrb[0].mxu0
    %v4226 = vadd.f32 0.0, %v4225
    %v4227 = vpop.f32.mrb[0].mxu0
    %4228 = vmatprep.mubr.f32.mxu0 0.0
    %v4229 = vand.u32 %v1595, 4294901760
    %v4230 = vsub.f32 %v1595, %v4229
    %v4231 = vand.u32 %v4230, 4294901760
    %v4232 = vsub.f32 %v4230, %v4231
    %v4233 = vand.u32 %v4232, 4294901760
    %4234 = vmatmul.mubr.f32.gmra.mrb[0].mxu0 %v4233
    %v4235 = vpop.f32.mrb[0].mxu0
    %v4236 = vadd.f32 0.0, %v4235
    %v4237 = vpop.f32.mrb[0].mxu0
    %4238 = vmatprep.mubr.f32.mxu0 0.0
    %v4239 = vand.u32 %v1596, 4294901760
    %v4240 = vsub.f32 %v1596, %v4239
    %v4241 = vand.u32 %v4240, 4294901760
    %v4242 = vsub.f32 %v4240, %v4241
    %v4243 = vand.u32 %v4242, 4294901760
    %4244 = vmatmul.mubr.f32.gmra.mrb[0].mxu0 %v4243
    %v4245 = vpop.f32.mrb[0].mxu0
    %v4246 = vadd.f32 0.0, %v4245
    %v4247 = vpop.f32.mrb[0].mxu0
    %4248 = vmatprep.mubr.f32.mxu0 0.0
    %v4249 = vand.u32 %v1597, 4294901760
    %v4250 = vsub.f32 %v1597, %v4249
    %v4251 = vand.u32 %v4250, 4294901760
    %v4252 = vsub.f32 %v4250, %v4251
    %v4253 = vand.u32 %v4252, 4294901760
    %4254 = vmatmul.mubr.f32.gmra.mrb[0].mxu0 %v4253
    %v4255 = vpop.f32.mrb[0].mxu0
    %v4256 = vadd.f32 0.0, %v4255
    %v4257 = vpop.f32.mrb[0].mxu0
    %4258 = vmatprep.mubr.f32.mxu0 0.0
    %v4259 = vand.u32 %v1598, 4294901760
    %v4260 = vsub.f32 %v1598, %v4259
    %v4261 = vand.u32 %v4260, 4294901760
    %v4262 = vsub.f32 %v4260, %v4261
    %v4263 = vand.u32 %v4262, 4294901760
    %4264 = vmatmul.mubr.f32.gmra.mrb[0].mxu0 %v4263
    %v4265 = vpop.f32.mrb[0].mxu0
    %v4266 = vadd.f32 0.0, %v4265
    %v4267 = vpop.f32.mrb[0].mxu0
    %4268 = vmatprep.mubr.f32.mxu0 0.0
    %v4269 = vand.u32 %v1599, 4294901760
    %v4270 = vsub.f32 %v1599, %v4269
    %v4271 = vand.u32 %v4270, 4294901760
    %v4272 = vsub.f32 %v4270, %v4271
    %v4273 = vand.u32 %v4272, 4294901760
    %4274 = vmatmul.mubr.f32.gmra.mrb[0].mxu0 %v4273
    %v4275 = vpop.f32.mrb[0].mxu0
    %v4276 = vadd.f32 0.0, %v4275
    %v4277 = vpop.f32.mrb[0].mxu0
    %4278 = vmatprep.mubr.f32.mxu0 0.0
    %v4279 = vand.u32 %v1600, 4294901760
    %v4280 = vsub.f32 %v1600, %v4279
    %v4281 = vand.u32 %v4280, 4294901760
    %v4282 = vsub.f32 %v4280, %v4281
    %v4283 = vand.u32 %v4282, 4294901760
    %4284 = vmatmul.mubr.f32.gmra.mrb[0].mxu0 %v4283
    %v4285 = vpop.f32.mrb[0].mxu0
    %v4286 = vadd.f32 0.0, %v4285
    %v4287 = vpop.f32.mrb[0].mxu0
    %4288 = vmatprep.mubr.f32.mxu0 0.0
    %v4289 = vand.u32 %v1601, 4294901760
    %v4290 = vsub.f32 %v1601, %v4289
    %v4291 = vand.u32 %v4290, 4294901760
    %v4292 = vsub.f32 %v4290, %v4291
    %v4293 = vand.u32 %v4292, 4294901760
    %4294 = vmatmul.mubr.f32.gmra.mrb[0].mxu0 %v4293
    %v4295 = vpop.f32.mrb[0].mxu0
    %v4296 = vadd.f32 0.0, %v4295
    %v4297 = vpop.f32.mrb[0].mxu0
    %4298 = vmatprep.mubr.f32.mxu0 0.0
    %v4299 = vand.u32 %v1602, 4294901760
    %v4300 = vsub.f32 %v1602, %v4299
    %v4301 = vand.u32 %v4300, 4294901760
    %v4302 = vsub.f32 %v4300, %v4301
    %v4303 = vand.u32 %v4302, 4294901760
    %4304 = vmatmul.mubr.f32.gmra.mrb[0].mxu0 %v4303
    %v4305 = vpop.f32.mrb[0].mxu0
    %v4306 = vadd.f32 0.0, %v4305
    %v4307 = vpop.f32.mrb[0].mxu0
    %4308 = vmatprep.mubr.f32.mxu0 0.0
    %v4309 = vand.u32 %v1603, 4294901760
    %v4310 = vsub.f32 %v1603, %v4309
    %v4311 = vand.u32 %v4310, 4294901760
    %v4312 = vsub.f32 %v4310, %v4311
    %v4313 = vand.u32 %v4312, 4294901760
    %4314 = vmatmul.mubr.f32.gmra.mrb[0].mxu0 %v4313
    %v4315 = vpop.f32.mrb[0].mxu0
    %v4316 = vadd.f32 0.0, %v4315
    %v4317 = vpop.f32.mrb[0].mxu0
    %4318 = vmatprep.mubr.f32.mxu0 0.0
    %v4319 = vand.u32 %v1604, 4294901760
    %v4320 = vsub.f32 %v1604, %v4319
    %v4321 = vand.u32 %v4320, 4294901760
    %v4322 = vsub.f32 %v4320, %v4321
    %v4323 = vand.u32 %v4322, 4294901760
    %4324 = vmatmul.mubr.f32.gmra.mrb[0].mxu0 %v4323
    %v4325 = vpop.f32.mrb[0].mxu0
    %v4326 = vadd.f32 0.0, %v4325
    %v4327 = vpop.f32.mrb[0].mxu0
    %4328 = vmatprep.mubr.f32.mxu0 0.0
    %v4329 = vand.u32 %v1605, 4294901760
    %v4330 = vsub.f32 %v1605, %v4329
    %v4331 = vand.u32 %v4330, 4294901760
    %v4332 = vsub.f32 %v4330, %v4331
    %v4333 = vand.u32 %v4332, 4294901760
    %4334 = vmatmul.mubr.f32.gmra.mrb[0].mxu0 %v4333
    %v4335 = vpop.f32.mrb[0].mxu0
    %v4336 = vadd.f32 0.0, %v4335
    %v4337 = vpop.f32.mrb[0].mxu0
    %4338 = vmatprep.mubr.f32.mxu0 0.0
    %v4339 = vand.u32 %v1606, 4294901760
    %v4340 = vsub.f32 %v1606, %v4339
    %v4341 = vand.u32 %v4340, 4294901760
    %v4342 = vsub.f32 %v4340, %v4341
    %v4343 = vand.u32 %v4342, 4294901760
    %4344 = vmatmul.mubr.f32.gmra.mrb[0].mxu0 %v4343
    %v4345 = vpop.f32.mrb[0].mxu0
    %v4346 = vadd.f32 0.0, %v4345
    %v4347 = vpop.f32.mrb[0].mxu0
    %4348 = vdwg.mxu0
    %4349 = vmatprep.subr.mxu0 0.0
    %v4350 = vand.u32 %v4092, 4294901760
    %v4351 = vsub.f32 %v4092, %v4350
    %v4352 = vand.u32 %v4351, 4294901760
    %v4353 = vsub.f32 %v4351, %v4352
    %v4354 = vand.u32 %v4353, 4294901760
    %4355 = vmatpush1.msra.mxu0 %v4354
    %4356 = vmatprep.subr.mxu0 0.0
    %v4357 = vand.u32 %v4093, 4294901760
    %v4358 = vsub.f32 %v4093, %v4357
    %v4359 = vand.u32 %v4358, 4294901760
    %v4360 = vsub.f32 %v4358, %v4359
    %v4361 = vand.u32 %v4360, 4294901760
    %4362 = vmatpush1.msra.mxu0 %v4361
    %4363 = vmatprep.subr.mxu0 0.0
    %v4364 = vand.u32 %v4094, 4294901760
    %v4365 = vsub.f32 %v4094, %v4364
    %v4366 = vand.u32 %v4365, 4294901760
    %v4367 = vsub.f32 %v4365, %v4366
    %v4368 = vand.u32 %v4367, 4294901760
    %4369 = vmatpush1.msra.mxu0 %v4368
    %4370 = vmatprep.subr.mxu0 0.0
    %v4371 = vand.u32 %v4095, 4294901760
    %v4372 = vsub.f32 %v4095, %v4371
    %v4373 = vand.u32 %v4372, 4294901760
    %v4374 = vsub.f32 %v4372, %v4373
    %v4375 = vand.u32 %v4374, 4294901760
    %4376 = vmatpush1.msra.mxu0 %v4375
    %4377 = vmatprep.subr.mxu0 0.0
    %v4378 = vand.u32 %v4096, 4294901760
    %v4379 = vsub.f32 %v4096, %v4378
    %v4380 = vand.u32 %v4379, 4294901760
    %v4381 = vsub.f32 %v4379, %v4380
    %v4382 = vand.u32 %v4381, 4294901760
    %4383 = vmatpush1.msra.mxu0 %v4382
    %4384 = vmatprep.subr.mxu0 0.0
    %v4385 = vand.u32 %v4097, 4294901760
    %v4386 = vsub.f32 %v4097, %v4385
    %v4387 = vand.u32 %v4386, 4294901760
    %v4388 = vsub.f32 %v4386, %v4387
    %v4389 = vand.u32 %v4388, 4294901760
    %4390 = vmatpush1.msra.mxu0 %v4389
    %4391 = vmatprep.subr.mxu0 0.0
    %v4392 = vand.u32 %v4098, 4294901760
    %v4393 = vsub.f32 %v4098, %v4392
    %v4394 = vand.u32 %v4393, 4294901760
    %v4395 = vsub.f32 %v4393, %v4394
    %v4396 = vand.u32 %v4395, 4294901760
    %4397 = vmatpush1.msra.mxu0 %v4396
    %4398 = vmatprep.subr.mxu0 0.0
    %v4399 = vand.u32 %v4099, 4294901760
    %v4400 = vsub.f32 %v4099, %v4399
    %v4401 = vand.u32 %v4400, 4294901760
    %v4402 = vsub.f32 %v4400, %v4401
    %v4403 = vand.u32 %v4402, 4294901760
    %4404 = vmatpush1.msra.mxu0 %v4403
    %4405 = vmatprep.subr.mxu0 0.0
    %v4406 = vand.u32 %v4100, 4294901760
    %v4407 = vsub.f32 %v4100, %v4406
    %v4408 = vand.u32 %v4407, 4294901760
    %v4409 = vsub.f32 %v4407, %v4408
    %v4410 = vand.u32 %v4409, 4294901760
    %4411 = vmatpush1.msra.mxu0 %v4410
    %4412 = vmatprep.subr.mxu0 0.0
    %v4413 = vand.u32 %v4101, 4294901760
    %v4414 = vsub.f32 %v4101, %v4413
    %v4415 = vand.u32 %v4414, 4294901760
    %v4416 = vsub.f32 %v4414, %v4415
    %v4417 = vand.u32 %v4416, 4294901760
    %4418 = vmatpush1.msra.mxu0 %v4417
    %4419 = vmatprep.subr.mxu0 0.0
    %v4420 = vand.u32 %v4102, 4294901760
    %v4421 = vsub.f32 %v4102, %v4420
    %v4422 = vand.u32 %v4421, 4294901760
    %v4423 = vsub.f32 %v4421, %v4422
    %v4424 = vand.u32 %v4423, 4294901760
    %4425 = vmatpush1.msra.mxu0 %v4424
    %4426 = vmatprep.subr.mxu0 0.0
    %v4427 = vand.u32 %v4103, 4294901760
    %v4428 = vsub.f32 %v4103, %v4427
    %v4429 = vand.u32 %v4428, 4294901760
    %v4430 = vsub.f32 %v4428, %v4429
    %v4431 = vand.u32 %v4430, 4294901760
    %4432 = vmatpush1.msra.mxu0 %v4431
    %4433 = vmatprep.subr.mxu0 0.0
    %v4434 = vand.u32 %v4104, 4294901760
    %v4435 = vsub.f32 %v4104, %v4434
    %v4436 = vand.u32 %v4435, 4294901760
    %v4437 = vsub.f32 %v4435, %v4436
    %v4438 = vand.u32 %v4437, 4294901760
    %4439 = vmatpush1.msra.mxu0 %v4438
    %4440 = vmatprep.subr.mxu0 0.0
    %v4441 = vand.u32 %v4105, 4294901760
    %v4442 = vsub.f32 %v4105, %v4441
    %v4443 = vand.u32 %v4442, 4294901760
    %v4444 = vsub.f32 %v4442, %v4443
    %v4445 = vand.u32 %v4444, 4294901760
    %4446 = vmatpush1.msra.mxu0 %v4445
    %4447 = vmatprep.subr.mxu0 0.0
    %v4448 = vand.u32 %v4106, 4294901760
    %v4449 = vsub.f32 %v4106, %v4448
    %v4450 = vand.u32 %v4449, 4294901760
    %v4451 = vsub.f32 %v4449, %v4450
    %v4452 = vand.u32 %v4451, 4294901760
    %4453 = vmatpush1.msra.mxu0 %v4452
    %4454 = vmatprep.subr.mxu0 0.0
    %v4455 = vand.u32 %v4107, 4294901760
    %v4456 = vsub.f32 %v4107, %v4455
    %v4457 = vand.u32 %v4456, 4294901760
    %v4458 = vsub.f32 %v4456, %v4457
    %v4459 = vand.u32 %v4458, 4294901760
    %4460 = vmatpush1.msra.mxu0 %v4459
    %4461 = vmatprep.subr.mxu0 0.0
    %4462 = vmatpush1.msra.mxu0 0.0
    %4463 = vmatprep.subr.mxu0 0.0
    %4464 = vmatpush1.msra.mxu0 0.0
    %4465 = vmatprep.subr.mxu0 0.0
    %4466 = vmatpush1.msra.mxu0 0.0
    %4467 = vmatprep.subr.mxu0 0.0
    %4468 = vmatpush1.msra.mxu0 0.0
    %4469 = vmatprep.subr.mxu0 0.0
    %4470 = vmatpush1.msra.mxu0 0.0
    %4471 = vmatprep.subr.mxu0 0.0
    %4472 = vmatpush1.msra.mxu0 0.0
    %4473 = vmatprep.subr.mxu0 0.0
    %4474 = vmatpush1.msra.mxu0 0.0
    %4475 = vmatprep.subr.mxu0 0.0
    %4476 = vmatpush1.msra.mxu0 0.0
    %4477 = vmatprep.subr.mxu0 0.0
    %4478 = vmatpush1.msra.mxu0 0.0
    %4479 = vmatprep.subr.mxu0 0.0
    %4480 = vmatpush1.msra.mxu0 0.0
    %4481 = vmatprep.subr.mxu0 0.0
    %4482 = vmatpush1.msra.mxu0 0.0
    %4483 = vmatprep.subr.mxu0 0.0
    %4484 = vmatpush1.msra.mxu0 0.0
    %4485 = vmatprep.subr.mxu0 0.0
    %4486 = vmatpush1.msra.mxu0 0.0
    %4487 = vmatprep.subr.mxu0 0.0
    %4488 = vmatpush1.msra.mxu0 0.0
    %4489 = vmatprep.subr.mxu0 0.0
    %4490 = vmatpush1.msra.mxu0 0.0
    %4491 = vmatprep.subr.mxu0 0.0
    %4492 = vmatpush1.msra.mxu0 0.0
    %4493 = vmatprep.mubr.f32.mxu0 0.0
    %v4494 = vand.u32 %v1591, 4294901760
    %4495 = vmatmul.mubr.f32.gmra.mrb[0].mxu0 %v4494
    %v4496 = vpop.f32.mrb[0].mxu0
    %v4497 = vadd.f32 %v4196, %v4496
    %v4498 = vpop.f32.mrb[0].mxu0
    %4499 = vmatprep.mubr.f32.mxu0 0.0
    %v4500 = vand.u32 %v1592, 4294901760
    %4501 = vmatmul.mubr.f32.gmra.mrb[0].mxu0 %v4500
    %v4502 = vpop.f32.mrb[0].mxu0
    %v4503 = vadd.f32 %v4206, %v4502
    %v4504 = vpop.f32.mrb[0].mxu0
    %4505 = vmatprep.mubr.f32.mxu0 0.0
    %v4506 = vand.u32 %v1593, 4294901760
    %4507 = vmatmul.mubr.f32.gmra.mrb[0].mxu0 %v4506
    %v4508 = vpop.f32.mrb[0].mxu0
    %v4509 = vadd.f32 %v4216, %v4508
    %v4510 = vpop.f32.mrb[0].mxu0
    %4511 = vmatprep.mubr.f32.mxu0 0.0
    %v4512 = vand.u32 %v1594, 4294901760
    %4513 = vmatmul.mubr.f32.gmra.mrb[0].mxu0 %v4512
    %v4514 = vpop.f32.mrb[0].mxu0
    %v4515 = vadd.f32 %v4226, %v4514
    %v4516 = vpop.f32.mrb[0].mxu0
    %4517 = vmatprep.mubr.f32.mxu0 0.0
    %v4518 = vand.u32 %v1595, 4294901760
    %4519 = vmatmul.mubr.f32.gmra.mrb[0].mxu0 %v4518
    %v4520 = vpop.f32.mrb[0].mxu0
    %v4521 = vadd.f32 %v4236, %v4520
    %v4522 = vpop.f32.mrb[0].mxu0
    %4523 = vmatprep.mubr.f32.mxu0 0.0
    %v4524 = vand.u32 %v1596, 4294901760
    %4525 = vmatmul.mubr.f32.gmra.mrb[0].mxu0 %v4524
    %v4526 = vpop.f32.mrb[0].mxu0
    %v4527 = vadd.f32 %v4246, %v4526
    %v4528 = vpop.f32.mrb[0].mxu0
    %4529 = vmatprep.mubr.f32.mxu0 0.0
    %v4530 = vand.u32 %v1597, 4294901760
    %4531 = vmatmul.mubr.f32.gmra.mrb[0].mxu0 %v4530
    %v4532 = vpop.f32.mrb[0].mxu0
    %v4533 = vadd.f32 %v4256, %v4532
    %v4534 = vpop.f32.mrb[0].mxu0
    %4535 = vmatprep.mubr.f32.mxu0 0.0
    %v4536 = vand.u32 %v1598, 4294901760
    %4537 = vmatmul.mubr.f32.gmra.mrb[0].mxu0 %v4536
    %v4538 = vpop.f32.mrb[0].mxu0
    %v4539 = vadd.f32 %v4266, %v4538
    %v4540 = vpop.f32.mrb[0].mxu0
    %4541 = vmatprep.mubr.f32.mxu0 0.0
    %v4542 = vand.u32 %v1599, 4294901760
    %4543 = vmatmul.mubr.f32.gmra.mrb[0].mxu0 %v4542
    %v4544 = vpop.f32.mrb[0].mxu0
    %v4545 = vadd.f32 %v4276, %v4544
    %v4546 = vpop.f32.mrb[0].mxu0
    %4547 = vmatprep.mubr.f32.mxu0 0.0
    %v4548 = vand.u32 %v1600, 4294901760
    %4549 = vmatmul.mubr.f32.gmra.mrb[0].mxu0 %v4548
    %v4550 = vpop.f32.mrb[0].mxu0
    %v4551 = vadd.f32 %v4286, %v4550
    %v4552 = vpop.f32.mrb[0].mxu0
    %4553 = vmatprep.mubr.f32.mxu0 0.0
    %v4554 = vand.u32 %v1601, 4294901760
    %4555 = vmatmul.mubr.f32.gmra.mrb[0].mxu0 %v4554
    %v4556 = vpop.f32.mrb[0].mxu0
    %v4557 = vadd.f32 %v4296, %v4556
    %v4558 = vpop.f32.mrb[0].mxu0
    %4559 = vmatprep.mubr.f32.mxu0 0.0
    %v4560 = vand.u32 %v1602, 4294901760
    %4561 = vmatmul.mubr.f32.gmra.mrb[0].mxu0 %v4560
    %v4562 = vpop.f32.mrb[0].mxu0
    %v4563 = vadd.f32 %v4306, %v4562
    %v4564 = vpop.f32.mrb[0].mxu0
    %4565 = vmatprep.mubr.f32.mxu0 0.0
    %v4566 = vand.u32 %v1603, 4294901760
    %4567 = vmatmul.mubr.f32.gmra.mrb[0].mxu0 %v4566
    %v4568 = vpop.f32.mrb[0].mxu0
    %v4569 = vadd.f32 %v4316, %v4568
    %v4570 = vpop.f32.mrb[0].mxu0
    %4571 = vmatprep.mubr.f32.mxu0 0.0
    %v4572 = vand.u32 %v1604, 4294901760
    %4573 = vmatmul.mubr.f32.gmra.mrb[0].mxu0 %v4572
    %v4574 = vpop.f32.mrb[0].mxu0
    %v4575 = vadd.f32 %v4326, %v4574
    %v4576 = vpop.f32.mrb[0].mxu0
    %4577 = vmatprep.mubr.f32.mxu0 0.0
    %v4578 = vand.u32 %v1605, 4294901760
    %4579 = vmatmul.mubr.f32.gmra.mrb[0].mxu0 %v4578
    %v4580 = vpop.f32.mrb[0].mxu0
    %v4581 = vadd.f32 %v4336, %v4580
    %v4582 = vpop.f32.mrb[0].mxu0
    %4583 = vmatprep.mubr.f32.mxu0 0.0
    %v4584 = vand.u32 %v1606, 4294901760
    %4585 = vmatmul.mubr.f32.gmra.mrb[0].mxu0 %v4584
    %v4586 = vpop.f32.mrb[0].mxu0
    %v4587 = vadd.f32 %v4346, %v4586
    %v4588 = vpop.f32.mrb[0].mxu0
    %4589 = vdwg.mxu0
    %4590 = vmatprep.subr.mxu0 0.0
    %v4591 = vand.u32 %v4092, 4294901760
    %v4592 = vsub.f32 %v4092, %v4591
    %4593 = vmatpush1.msra.mxu0 %v4592
    %4594 = vmatprep.subr.mxu0 0.0
    %v4595 = vand.u32 %v4093, 4294901760
    %v4596 = vsub.f32 %v4093, %v4595
    %4597 = vmatpush1.msra.mxu0 %v4596
    %4598 = vmatprep.subr.mxu0 0.0
    %v4599 = vand.u32 %v4094, 4294901760
    %v4600 = vsub.f32 %v4094, %v4599
    %4601 = vmatpush1.msra.mxu0 %v4600
    %4602 = vmatprep.subr.mxu0 0.0
    %v4603 = vand.u32 %v4095, 4294901760
    %v4604 = vsub.f32 %v4095, %v4603
    %4605 = vmatpush1.msra.mxu0 %v4604
    %4606 = vmatprep.subr.mxu0 0.0
    %v4607 = vand.u32 %v4096, 4294901760
    %v4608 = vsub.f32 %v4096, %v4607
    %4609 = vmatpush1.msra.mxu0 %v4608
    %4610 = vmatprep.subr.mxu0 0.0
    %v4611 = vand.u32 %v4097, 4294901760
    %v4612 = vsub.f32 %v4097, %v4611
    %4613 = vmatpush1.msra.mxu0 %v4612
    %4614 = vmatprep.subr.mxu0 0.0
    %v4615 = vand.u32 %v4098, 4294901760
    %v4616 = vsub.f32 %v4098, %v4615
    %4617 = vmatpush1.msra.mxu0 %v4616
    %4618 = vmatprep.subr.mxu0 0.0
    %v4619 = vand.u32 %v4099, 4294901760
    %v4620 = vsub.f32 %v4099, %v4619
    %4621 = vmatpush1.msra.mxu0 %v4620
    %4622 = vmatprep.subr.mxu0 0.0
    %v4623 = vand.u32 %v4100, 4294901760
    %v4624 = vsub.f32 %v4100, %v4623
    %4625 = vmatpush1.msra.mxu0 %v4624
    %4626 = vmatprep.subr.mxu0 0.0
    %v4627 = vand.u32 %v4101, 4294901760
    %v4628 = vsub.f32 %v4101, %v4627
    %4629 = vmatpush1.msra.mxu0 %v4628
    %4630 = vmatprep.subr.mxu0 0.0
    %v4631 = vand.u32 %v4102, 4294901760
    %v4632 = vsub.f32 %v4102, %v4631
    %4633 = vmatpush1.msra.mxu0 %v4632
    %4634 = vmatprep.subr.mxu0 0.0
    %v4635 = vand.u32 %v4103, 4294901760
    %v4636 = vsub.f32 %v4103, %v4635
    %4637 = vmatpush1.msra.mxu0 %v4636
    %4638 = vmatprep.subr.mxu0 0.0
    %v4639 = vand.u32 %v4104, 4294901760
    %v4640 = vsub.f32 %v4104, %v4639
    %4641 = vmatpush1.msra.mxu0 %v4640
    %4642 = vmatprep.subr.mxu0 0.0
    %v4643 = vand.u32 %v4105, 4294901760
    %v4644 = vsub.f32 %v4105, %v4643
    %4645 = vmatpush1.msra.mxu0 %v4644
    %4646 = vmatprep.subr.mxu0 0.0
    %v4647 = vand.u32 %v4106, 4294901760
    %v4648 = vsub.f32 %v4106, %v4647
    %4649 = vmatpush1.msra.mxu0 %v4648
    %4650 = vmatprep.subr.mxu0 0.0
    %v4651 = vand.u32 %v4107, 4294901760
    %v4652 = vsub.f32 %v4107, %v4651
    %4653 = vmatpush1.msra.mxu0 %v4652
    %4654 = vmatprep.subr.mxu0 0.0
    %4655 = vmatpush1.msra.mxu0 0.0
    %4656 = vmatprep.subr.mxu0 0.0
    %4657 = vmatpush1.msra.mxu0 0.0
    %4658 = vmatprep.subr.mxu0 0.0
    %4659 = vmatpush1.msra.mxu0 0.0
    %4660 = vmatprep.subr.mxu0 0.0
    %4661 = vmatpush1.msra.mxu0 0.0
    %4662 = vmatprep.subr.mxu0 0.0
    %4663 = vmatpush1.msra.mxu0 0.0
    %4664 = vmatprep.subr.mxu0 0.0
    %4665 = vmatpush1.msra.mxu0 0.0
    %4666 = vmatprep.subr.mxu0 0.0
    %4667 = vmatpush1.msra.mxu0 0.0
    %4668 = vmatprep.subr.mxu0 0.0
    %4669 = vmatpush1.msra.mxu0 0.0
    %4670 = vmatprep.subr.mxu0 0.0
    %4671 = vmatpush1.msra.mxu0 0.0
    %4672 = vmatprep.subr.mxu0 0.0
    %4673 = vmatpush1.msra.mxu0 0.0
    %4674 = vmatprep.subr.mxu0 0.0
    %4675 = vmatpush1.msra.mxu0 0.0
    %4676 = vmatprep.subr.mxu0 0.0
    %4677 = vmatpush1.msra.mxu0 0.0
    %4678 = vmatprep.subr.mxu0 0.0
    %4679 = vmatpush1.msra.mxu0 0.0
    %4680 = vmatprep.subr.mxu0 0.0
    %4681 = vmatpush1.msra.mxu0 0.0
    %4682 = vmatprep.subr.mxu0 0.0
    %4683 = vmatpush1.msra.mxu0 0.0
    %4684 = vmatprep.subr.mxu0 0.0
    %4685 = vmatpush1.msra.mxu0 0.0
    %4686 = vmatprep.mubr.f32.mxu0 0.0
    %v4687 = vand.u32 %v1591, 4294901760
    %v4688 = vsub.f32 %v1591, %v4687
    %4689 = vmatmul.mubr.f32.gmra.mrb[0].mxu0 %v4688
    %v4690 = vpop.f32.mrb[0].mxu0
    %v4691 = vadd.f32 %v4497, %v4690
    %v4692 = vpop.f32.mrb[0].mxu0
    %4693 = vmatprep.mubr.f32.mxu0 0.0
    %v4694 = vand.u32 %v1592, 4294901760
    %v4695 = vsub.f32 %v1592, %v4694
    %4696 = vmatmul.mubr.f32.gmra.mrb[0].mxu0 %v4695
    %v4697 = vpop.f32.mrb[0].mxu0
    %v4698 = vadd.f32 %v4503, %v4697
    %v4699 = vpop.f32.mrb[0].mxu0
    %4700 = vmatprep.mubr.f32.mxu0 0.0
    %v4701 = vand.u32 %v1593, 4294901760
    %v4702 = vsub.f32 %v1593, %v4701
    %4703 = vmatmul.mubr.f32.gmra.mrb[0].mxu0 %v4702
    %v4704 = vpop.f32.mrb[0].mxu0
    %v4705 = vadd.f32 %v4509, %v4704
    %v4706 = vpop.f32.mrb[0].mxu0
    %4707 = vmatprep.mubr.f32.mxu0 0.0
    %v4708 = vand.u32 %v1594, 4294901760
    %v4709 = vsub.f32 %v1594, %v4708
    %4710 = vmatmul.mubr.f32.gmra.mrb[0].mxu0 %v4709
    %v4711 = vpop.f32.mrb[0].mxu0
    %v4712 = vadd.f32 %v4515, %v4711
    %v4713 = vpop.f32.mrb[0].mxu0
    %4714 = vmatprep.mubr.f32.mxu0 0.0
    %v4715 = vand.u32 %v1595, 4294901760
    %v4716 = vsub.f32 %v1595, %v4715
    %4717 = vmatmul.mubr.f32.gmra.mrb[0].mxu0 %v4716
    %v4718 = vpop.f32.mrb[0].mxu0
    %v4719 = vadd.f32 %v4521, %v4718
    %v4720 = vpop.f32.mrb[0].mxu0
    %4721 = vmatprep.mubr.f32.mxu0 0.0
    %v4722 = vand.u32 %v1596, 4294901760
    %v4723 = vsub.f32 %v1596, %v4722
    %4724 = vmatmul.mubr.f32.gmra.mrb[0].mxu0 %v4723
    %v4725 = vpop.f32.mrb[0].mxu0
    %v4726 = vadd.f32 %v4527, %v4725
    %v4727 = vpop.f32.mrb[0].mxu0
    %4728 = vmatprep.mubr.f32.mxu0 0.0
    %v4729 = vand.u32 %v1597, 4294901760
    %v4730 = vsub.f32 %v1597, %v4729
    %4731 = vmatmul.mubr.f32.gmra.mrb[0].mxu0 %v4730
    %v4732 = vpop.f32.mrb[0].mxu0
    %v4733 = vadd.f32 %v4533, %v4732
    %v4734 = vpop.f32.mrb[0].mxu0
    %4735 = vmatprep.mubr.f32.mxu0 0.0
    %v4736 = vand.u32 %v1598, 4294901760
    %v4737 = vsub.f32 %v1598, %v4736
    %4738 = vmatmul.mubr.f32.gmra.mrb[0].mxu0 %v4737
    %v4739 = vpop.f32.mrb[0].mxu0
    %v4740 = vadd.f32 %v4539, %v4739
    %v4741 = vpop.f32.mrb[0].mxu0
    %4742 = vmatprep.mubr.f32.mxu0 0.0
    %v4743 = vand.u32 %v1599, 4294901760
    %v4744 = vsub.f32 %v1599, %v4743
    %4745 = vmatmul.mubr.f32.gmra.mrb[0].mxu0 %v4744
    %v4746 = vpop.f32.mrb[0].mxu0
    %v4747 = vadd.f32 %v4545, %v4746
    %v4748 = vpop.f32.mrb[0].mxu0
    %4749 = vmatprep.mubr.f32.mxu0 0.0
    %v4750 = vand.u32 %v1600, 4294901760
    %v4751 = vsub.f32 %v1600, %v4750
    %4752 = vmatmul.mubr.f32.gmra.mrb[0].mxu0 %v4751
    %v4753 = vpop.f32.mrb[0].mxu0
    %v4754 = vadd.f32 %v4551, %v4753
    %v4755 = vpop.f32.mrb[0].mxu0
    %4756 = vmatprep.mubr.f32.mxu0 0.0
    %v4757 = vand.u32 %v1601, 4294901760
    %v4758 = vsub.f32 %v1601, %v4757
    %4759 = vmatmul.mubr.f32.gmra.mrb[0].mxu0 %v4758
    %v4760 = vpop.f32.mrb[0].mxu0
    %v4761 = vadd.f32 %v4557, %v4760
    %v4762 = vpop.f32.mrb[0].mxu0
    %4763 = vmatprep.mubr.f32.mxu0 0.0
    %v4764 = vand.u32 %v1602, 4294901760
    %v4765 = vsub.f32 %v1602, %v4764
    %4766 = vmatmul.mubr.f32.gmra.mrb[0].mxu0 %v4765
    %v4767 = vpop.f32.mrb[0].mxu0
    %v4768 = vadd.f32 %v4563, %v4767
    %v4769 = vpop.f32.mrb[0].mxu0
    %4770 = vmatprep.mubr.f32.mxu0 0.0
    %v4771 = vand.u32 %v1603, 4294901760
    %v4772 = vsub.f32 %v1603, %v4771
    %4773 = vmatmul.mubr.f32.gmra.mrb[0].mxu0 %v4772
    %v4774 = vpop.f32.mrb[0].mxu0
    %v4775 = vadd.f32 %v4569, %v4774
    %v4776 = vpop.f32.mrb[0].mxu0
    %4777 = vmatprep.mubr.f32.mxu0 0.0
    %v4778 = vand.u32 %v1604, 4294901760
    %v4779 = vsub.f32 %v1604, %v4778
    %4780 = vmatmul.mubr.f32.gmra.mrb[0].mxu0 %v4779
    %v4781 = vpop.f32.mrb[0].mxu0
    %v4782 = vadd.f32 %v4575, %v4781
    %v4783 = vpop.f32.mrb[0].mxu0
    %4784 = vmatprep.mubr.f32.mxu0 0.0
    %v4785 = vand.u32 %v1605, 4294901760
    %v4786 = vsub.f32 %v1605, %v4785
    %4787 = vmatmul.mubr.f32.gmra.mrb[0].mxu0 %v4786
    %v4788 = vpop.f32.mrb[0].mxu0
    %v4789 = vadd.f32 %v4581, %v4788
    %v4790 = vpop.f32.mrb[0].mxu0
    %4791 = vmatprep.mubr.f32.mxu0 0.0
    %v4792 = vand.u32 %v1606, 4294901760
    %v4793 = vsub.f32 %v1606, %v4792
    %4794 = vmatmul.mubr.f32.gmra.mrb[0].mxu0 %v4793
    %v4795 = vpop.f32.mrb[0].mxu0
    %v4796 = vadd.f32 %v4587, %v4795
    %v4797 = vpop.f32.mrb[0].mxu0
    %4798 = vdwg.mxu0
    %4799 = vmatprep.subr.mxu0 0.0
    %v4800 = vand.u32 %v4092, 4294901760
    %4801 = vmatpush1.msra.mxu0 %v4800
    %4802 = vmatprep.subr.mxu0 0.0
    %v4803 = vand.u32 %v4093, 4294901760
    %4804 = vmatpush1.msra.mxu0 %v4803
    %4805 = vmatprep.subr.mxu0 0.0
    %v4806 = vand.u32 %v4094, 4294901760
    %4807 = vmatpush1.msra.mxu0 %v4806
    %4808 = vmatprep.subr.mxu0 0.0
    %v4809 = vand.u32 %v4095, 4294901760
    %4810 = vmatpush1.msra.mxu0 %v4809
    %4811 = vmatprep.subr.mxu0 0.0
    %v4812 = vand.u32 %v4096, 4294901760
    %4813 = vmatpush1.msra.mxu0 %v4812
    %4814 = vmatprep.subr.mxu0 0.0
    %v4815 = vand.u32 %v4097, 4294901760
    %4816 = vmatpush1.msra.mxu0 %v4815
    %4817 = vmatprep.subr.mxu0 0.0
    %v4818 = vand.u32 %v4098, 4294901760
    %4819 = vmatpush1.msra.mxu0 %v4818
    %4820 = vmatprep.subr.mxu0 0.0
    %v4821 = vand.u32 %v4099, 4294901760
    %4822 = vmatpush1.msra.mxu0 %v4821
    %4823 = vmatprep.subr.mxu0 0.0
    %v4824 = vand.u32 %v4100, 4294901760
    %4825 = vmatpush1.msra.mxu0 %v4824
    %4826 = vmatprep.subr.mxu0 0.0
    %v4827 = vand.u32 %v4101, 4294901760
    %4828 = vmatpush1.msra.mxu0 %v4827
    %4829 = vmatprep.subr.mxu0 0.0
    %v4830 = vand.u32 %v4102, 4294901760
    %4831 = vmatpush1.msra.mxu0 %v4830
    %4832 = vmatprep.subr.mxu0 0.0
    %v4833 = vand.u32 %v4103, 4294901760
    %4834 = vmatpush1.msra.mxu0 %v4833
    %4835 = vmatprep.subr.mxu0 0.0
    %v4836 = vand.u32 %v4104, 4294901760
    %4837 = vmatpush1.msra.mxu0 %v4836
    %4838 = vmatprep.subr.mxu0 0.0
    %v4839 = vand.u32 %v4105, 4294901760
    %4840 = vmatpush1.msra.mxu0 %v4839
    %4841 = vmatprep.subr.mxu0 0.0
    %v4842 = vand.u32 %v4106, 4294901760
    %4843 = vmatpush1.msra.mxu0 %v4842
    %4844 = vmatprep.subr.mxu0 0.0
    %v4845 = vand.u32 %v4107, 4294901760
    %4846 = vmatpush1.msra.mxu0 %v4845
    %4847 = vmatprep.subr.mxu0 0.0
    %4848 = vmatpush1.msra.mxu0 0.0
    %4849 = vmatprep.subr.mxu0 0.0
    %4850 = vmatpush1.msra.mxu0 0.0
    %4851 = vmatprep.subr.mxu0 0.0
    %4852 = vmatpush1.msra.mxu0 0.0
    %4853 = vmatprep.subr.mxu0 0.0
    %4854 = vmatpush1.msra.mxu0 0.0
    %4855 = vmatprep.subr.mxu0 0.0
    %4856 = vmatpush1.msra.mxu0 0.0
    %4857 = vmatprep.subr.mxu0 0.0
    %4858 = vmatpush1.msra.mxu0 0.0
    %4859 = vmatprep.subr.mxu0 0.0
    %4860 = vmatpush1.msra.mxu0 0.0
    %4861 = vmatprep.subr.mxu0 0.0
    %4862 = vmatpush1.msra.mxu0 0.0
    %4863 = vmatprep.subr.mxu0 0.0
    %4864 = vmatpush1.msra.mxu0 0.0
    %4865 = vmatprep.subr.mxu0 0.0
    %4866 = vmatpush1.msra.mxu0 0.0
    %4867 = vmatprep.subr.mxu0 0.0
    %4868 = vmatpush1.msra.mxu0 0.0
    %4869 = vmatprep.subr.mxu0 0.0
    %4870 = vmatpush1.msra.mxu0 0.0
    %4871 = vmatprep.subr.mxu0 0.0
    %4872 = vmatpush1.msra.mxu0 0.0
    %4873 = vmatprep.subr.mxu0 0.0
    %4874 = vmatpush1.msra.mxu0 0.0
    %4875 = vmatprep.subr.mxu0 0.0
    %4876 = vmatpush1.msra.mxu0 0.0
    %4877 = vmatprep.subr.mxu0 0.0
    %4878 = vmatpush1.msra.mxu0 0.0
    %4879 = vmatprep.mubr.f32.mxu0 0.0
    %v4880 = vand.u32 %v1591, 4294901760
    %v4881 = vsub.f32 %v1591, %v4880
    %v4882 = vand.u32 %v4881, 4294901760
    %4883 = vmatmul.mubr.f32.gmra.mrb[0].mxu0 %v4882
    %v4884 = vpop.f32.mrb[0].mxu0
    %v4885 = vadd.f32 %v4691, %v4884
    %v4886 = vpop.f32.mrb[0].mxu0
    %4887 = vmatprep.mubr.f32.mxu0 0.0
    %v4888 = vand.u32 %v1592, 4294901760
    %v4889 = vsub.f32 %v1592, %v4888
    %v4890 = vand.u32 %v4889, 4294901760
    %4891 = vmatmul.mubr.f32.gmra.mrb[0].mxu0 %v4890
    %v4892 = vpop.f32.mrb[0].mxu0
    %v4893 = vadd.f32 %v4698, %v4892
    %v4894 = vpop.f32.mrb[0].mxu0
    %4895 = vmatprep.mubr.f32.mxu0 0.0
    %v4896 = vand.u32 %v1593, 4294901760
    %v4897 = vsub.f32 %v1593, %v4896
    %v4898 = vand.u32 %v4897, 4294901760
    %4899 = vmatmul.mubr.f32.gmra.mrb[0].mxu0 %v4898
    %v4900 = vpop.f32.mrb[0].mxu0
    %v4901 = vadd.f32 %v4705, %v4900
    %v4902 = vpop.f32.mrb[0].mxu0
    %4903 = vmatprep.mubr.f32.mxu0 0.0
    %v4904 = vand.u32 %v1594, 4294901760
    %v4905 = vsub.f32 %v1594, %v4904
    %v4906 = vand.u32 %v4905, 4294901760
    %4907 = vmatmul.mubr.f32.gmra.mrb[0].mxu0 %v4906
    %v4908 = vpop.f32.mrb[0].mxu0
    %v4909 = vadd.f32 %v4712, %v4908
    %v4910 = vpop.f32.mrb[0].mxu0
    %4911 = vmatprep.mubr.f32.mxu0 0.0
    %v4912 = vand.u32 %v1595, 4294901760
    %v4913 = vsub.f32 %v1595, %v4912
    %v4914 = vand.u32 %v4913, 4294901760
    %4915 = vmatmul.mubr.f32.gmra.mrb[0].mxu0 %v4914
    %v4916 = vpop.f32.mrb[0].mxu0
    %v4917 = vadd.f32 %v4719, %v4916
    %v4918 = vpop.f32.mrb[0].mxu0
    %4919 = vmatprep.mubr.f32.mxu0 0.0
    %v4920 = vand.u32 %v1596, 4294901760
    %v4921 = vsub.f32 %v1596, %v4920
    %v4922 = vand.u32 %v4921, 4294901760
    %4923 = vmatmul.mubr.f32.gmra.mrb[0].mxu0 %v4922
    %v4924 = vpop.f32.mrb[0].mxu0
    %v4925 = vadd.f32 %v4726, %v4924
    %v4926 = vpop.f32.mrb[0].mxu0
    %4927 = vmatprep.mubr.f32.mxu0 0.0
    %v4928 = vand.u32 %v1597, 4294901760
    %v4929 = vsub.f32 %v1597, %v4928
    %v4930 = vand.u32 %v4929, 4294901760
    %4931 = vmatmul.mubr.f32.gmra.mrb[0].mxu0 %v4930
    %v4932 = vpop.f32.mrb[0].mxu0
    %v4933 = vadd.f32 %v4733, %v4932
    %v4934 = vpop.f32.mrb[0].mxu0
    %4935 = vmatprep.mubr.f32.mxu0 0.0
    %v4936 = vand.u32 %v1598, 4294901760
    %v4937 = vsub.f32 %v1598, %v4936
    %v4938 = vand.u32 %v4937, 4294901760
    %4939 = vmatmul.mubr.f32.gmra.mrb[0].mxu0 %v4938
    %v4940 = vpop.f32.mrb[0].mxu0
    %v4941 = vadd.f32 %v4740, %v4940
    %v4942 = vpop.f32.mrb[0].mxu0
    %4943 = vmatprep.mubr.f32.mxu0 0.0
    %v4944 = vand.u32 %v1599, 4294901760
    %v4945 = vsub.f32 %v1599, %v4944
    %v4946 = vand.u32 %v4945, 4294901760
    %4947 = vmatmul.mubr.f32.gmra.mrb[0].mxu0 %v4946
    %v4948 = vpop.f32.mrb[0].mxu0
    %v4949 = vadd.f32 %v4747, %v4948
    %v4950 = vpop.f32.mrb[0].mxu0
    %4951 = vmatprep.mubr.f32.mxu0 0.0
    %v4952 = vand.u32 %v1600, 4294901760
    %v4953 = vsub.f32 %v1600, %v4952
    %v4954 = vand.u32 %v4953, 4294901760
    %4955 = vmatmul.mubr.f32.gmra.mrb[0].mxu0 %v4954
    %v4956 = vpop.f32.mrb[0].mxu0
    %v4957 = vadd.f32 %v4754, %v4956
    %v4958 = vpop.f32.mrb[0].mxu0
    %4959 = vmatprep.mubr.f32.mxu0 0.0
    %v4960 = vand.u32 %v1601, 4294901760
    %v4961 = vsub.f32 %v1601, %v4960
    %v4962 = vand.u32 %v4961, 4294901760
    %4963 = vmatmul.mubr.f32.gmra.mrb[0].mxu0 %v4962
    %v4964 = vpop.f32.mrb[0].mxu0
    %v4965 = vadd.f32 %v4761, %v4964
    %v4966 = vpop.f32.mrb[0].mxu0
    %4967 = vmatprep.mubr.f32.mxu0 0.0
    %v4968 = vand.u32 %v1602, 4294901760
    %v4969 = vsub.f32 %v1602, %v4968
    %v4970 = vand.u32 %v4969, 4294901760
    %4971 = vmatmul.mubr.f32.gmra.mrb[0].mxu0 %v4970
    %v4972 = vpop.f32.mrb[0].mxu0
    %v4973 = vadd.f32 %v4768, %v4972
    %v4974 = vpop.f32.mrb[0].mxu0
    %4975 = vmatprep.mubr.f32.mxu0 0.0
    %v4976 = vand.u32 %v1603, 4294901760
    %v4977 = vsub.f32 %v1603, %v4976
    %v4978 = vand.u32 %v4977, 4294901760
    %4979 = vmatmul.mubr.f32.gmra.mrb[0].mxu0 %v4978
    %v4980 = vpop.f32.mrb[0].mxu0
    %v4981 = vadd.f32 %v4775, %v4980
    %v4982 = vpop.f32.mrb[0].mxu0
    %4983 = vmatprep.mubr.f32.mxu0 0.0
    %v4984 = vand.u32 %v1604, 4294901760
    %v4985 = vsub.f32 %v1604, %v4984
    %v4986 = vand.u32 %v4985, 4294901760
    %4987 = vmatmul.mubr.f32.gmra.mrb[0].mxu0 %v4986
    %v4988 = vpop.f32.mrb[0].mxu0
    %v4989 = vadd.f32 %v4782, %v4988
    %v4990 = vpop.f32.mrb[0].mxu0
    %4991 = vmatprep.mubr.f32.mxu0 0.0
    %v4992 = vand.u32 %v1605, 4294901760
    %v4993 = vsub.f32 %v1605, %v4992
    %v4994 = vand.u32 %v4993, 4294901760
    %4995 = vmatmul.mubr.f32.gmra.mrb[0].mxu0 %v4994
    %v4996 = vpop.f32.mrb[0].mxu0
    %v4997 = vadd.f32 %v4789, %v4996
    %v4998 = vpop.f32.mrb[0].mxu0
    %4999 = vmatprep.mubr.f32.mxu0 0.0
    %v5000 = vand.u32 %v1606, 4294901760
    %v5001 = vsub.f32 %v1606, %v5000
    %v5002 = vand.u32 %v5001, 4294901760
    %5003 = vmatmul.mubr.f32.gmra.mrb[0].mxu0 %v5002
    %v5004 = vpop.f32.mrb[0].mxu0
    %v5005 = vadd.f32 %v4796, %v5004
    %v5006 = vpop.f32.mrb[0].mxu0
    %5007 = vdwg.mxu0
    %5008 = vmatprep.subr.mxu0 0.0
    %v5009 = vand.u32 %v4092, 4294901760
    %v5010 = vsub.f32 %v4092, %v5009
    %v5011 = vand.u32 %v5010, 4294901760
    %5012 = vmatpush1.msra.mxu0 %v5011
    %5013 = vmatprep.subr.mxu0 0.0
    %v5014 = vand.u32 %v4093, 4294901760
    %v5015 = vsub.f32 %v4093, %v5014
    %v5016 = vand.u32 %v5015, 4294901760
    %5017 = vmatpush1.msra.mxu0 %v5016
    %5018 = vmatprep.subr.mxu0 0.0
    %v5019 = vand.u32 %v4094, 4294901760
    %v5020 = vsub.f32 %v4094, %v5019
    %v5021 = vand.u32 %v5020, 4294901760
    %5022 = vmatpush1.msra.mxu0 %v5021
    %5023 = vmatprep.subr.mxu0 0.0
    %v5024 = vand.u32 %v4095, 4294901760
    %v5025 = vsub.f32 %v4095, %v5024
    %v5026 = vand.u32 %v5025, 4294901760
    %5027 = vmatpush1.msra.mxu0 %v5026
    %5028 = vmatprep.subr.mxu0 0.0
    %v5029 = vand.u32 %v4096, 4294901760
    %v5030 = vsub.f32 %v4096, %v5029
    %v5031 = vand.u32 %v5030, 4294901760
    %5032 = vmatpush1.msra.mxu0 %v5031
    %5033 = vmatprep.subr.mxu0 0.0
    %v5034 = vand.u32 %v4097, 4294901760
    %v5035 = vsub.f32 %v4097, %v5034
    %v5036 = vand.u32 %v5035, 4294901760
    %5037 = vmatpush1.msra.mxu0 %v5036
    %5038 = vmatprep.subr.mxu0 0.0
    %v5039 = vand.u32 %v4098, 4294901760
    %v5040 = vsub.f32 %v4098, %v5039
    %v5041 = vand.u32 %v5040, 4294901760
    %5042 = vmatpush1.msra.mxu0 %v5041
    %5043 = vmatprep.subr.mxu0 0.0
    %v5044 = vand.u32 %v4099, 4294901760
    %v5045 = vsub.f32 %v4099, %v5044
    %v5046 = vand.u32 %v5045, 4294901760
    %5047 = vmatpush1.msra.mxu0 %v5046
    %5048 = vmatprep.subr.mxu0 0.0
    %v5049 = vand.u32 %v4100, 4294901760
    %v5050 = vsub.f32 %v4100, %v5049
    %v5051 = vand.u32 %v5050, 4294901760
    %5052 = vmatpush1.msra.mxu0 %v5051
    %5053 = vmatprep.subr.mxu0 0.0
    %v5054 = vand.u32 %v4101, 4294901760
    %v5055 = vsub.f32 %v4101, %v5054
    %v5056 = vand.u32 %v5055, 4294901760
    %5057 = vmatpush1.msra.mxu0 %v5056
    %5058 = vmatprep.subr.mxu0 0.0
    %v5059 = vand.u32 %v4102, 4294901760
    %v5060 = vsub.f32 %v4102, %v5059
    %v5061 = vand.u32 %v5060, 4294901760
    %5062 = vmatpush1.msra.mxu0 %v5061
    %5063 = vmatprep.subr.mxu0 0.0
    %v5064 = vand.u32 %v4103, 4294901760
    %v5065 = vsub.f32 %v4103, %v5064
    %v5066 = vand.u32 %v5065, 4294901760
    %5067 = vmatpush1.msra.mxu0 %v5066
    %5068 = vmatprep.subr.mxu0 0.0
    %v5069 = vand.u32 %v4104, 4294901760
    %v5070 = vsub.f32 %v4104, %v5069
    %v5071 = vand.u32 %v5070, 4294901760
    %5072 = vmatpush1.msra.mxu0 %v5071
    %5073 = vmatprep.subr.mxu0 0.0
    %v5074 = vand.u32 %v4105, 4294901760
    %v5075 = vsub.f32 %v4105, %v5074
    %v5076 = vand.u32 %v5075, 4294901760
    %5077 = vmatpush1.msra.mxu0 %v5076
    %5078 = vmatprep.subr.mxu0 0.0
    %v5079 = vand.u32 %v4106, 4294901760
    %v5080 = vsub.f32 %v4106, %v5079
    %v5081 = vand.u32 %v5080, 4294901760
    %5082 = vmatpush1.msra.mxu0 %v5081
    %5083 = vmatprep.subr.mxu0 0.0
    %v5084 = vand.u32 %v4107, 4294901760
    %v5085 = vsub.f32 %v4107, %v5084
    %v5086 = vand.u32 %v5085, 4294901760
    %5087 = vmatpush1.msra.mxu0 %v5086
    %5088 = vmatprep.subr.mxu0 0.0
    %5089 = vmatpush1.msra.mxu0 0.0
    %5090 = vmatprep.subr.mxu0 0.0
    %5091 = vmatpush1.msra.mxu0 0.0
    %5092 = vmatprep.subr.mxu0 0.0
    %5093 = vmatpush1.msra.mxu0 0.0
    %5094 = vmatprep.subr.mxu0 0.0
    %5095 = vmatpush1.msra.mxu0 0.0
    %5096 = vmatprep.subr.mxu0 0.0
    %5097 = vmatpush1.msra.mxu0 0.0
    %5098 = vmatprep.subr.mxu0 0.0
    %5099 = vmatpush1.msra.mxu0 0.0
    %5100 = vmatprep.subr.mxu0 0.0
    %5101 = vmatpush1.msra.mxu0 0.0
    %5102 = vmatprep.subr.mxu0 0.0
    %5103 = vmatpush1.msra.mxu0 0.0
    %5104 = vmatprep.subr.mxu0 0.0
    %5105 = vmatpush1.msra.mxu0 0.0
    %5106 = vmatprep.subr.mxu0 0.0
    %5107 = vmatpush1.msra.mxu0 0.0
    %5108 = vmatprep.subr.mxu0 0.0
    %5109 = vmatpush1.msra.mxu0 0.0
    %5110 = vmatprep.subr.mxu0 0.0
    %5111 = vmatpush1.msra.mxu0 0.0
    %5112 = vmatprep.subr.mxu0 0.0
    %5113 = vmatpush1.msra.mxu0 0.0
    %5114 = vmatprep.subr.mxu0 0.0
    %5115 = vmatpush1.msra.mxu0 0.0
    %5116 = vmatprep.subr.mxu0 0.0
    %5117 = vmatpush1.msra.mxu0 0.0
    %5118 = vmatprep.subr.mxu0 0.0
    %5119 = vmatpush1.msra.mxu0 0.0
    %5120 = vmatprep.mubr.f32.mxu0 0.0
    %v5121 = vand.u32 %v1591, 4294901760
    %5122 = vmatmul.mubr.f32.gmra.mrb[0].mxu0 %v5121
    %v5123 = vpop.f32.mrb[0].mxu0
    %v5124 = vadd.f32 %v4885, %v5123
    %v5125 = vpop.f32.mrb[0].mxu0
    %5126 = vmatprep.mubr.f32.mxu0 0.0
    %v5127 = vand.u32 %v1592, 4294901760
    %5128 = vmatmul.mubr.f32.gmra.mrb[0].mxu0 %v5127
    %v5129 = vpop.f32.mrb[0].mxu0
    %v5130 = vadd.f32 %v4893, %v5129
    %v5131 = vpop.f32.mrb[0].mxu0
    %5132 = vmatprep.mubr.f32.mxu0 0.0
    %v5133 = vand.u32 %v1593, 4294901760
    %5134 = vmatmul.mubr.f32.gmra.mrb[0].mxu0 %v5133
    %v5135 = vpop.f32.mrb[0].mxu0
    %v5136 = vadd.f32 %v4901, %v5135
    %v5137 = vpop.f32.mrb[0].mxu0
    %5138 = vmatprep.mubr.f32.mxu0 0.0
    %v5139 = vand.u32 %v1594, 4294901760
    %5140 = vmatmul.mubr.f32.gmra.mrb[0].mxu0 %v5139
    %v5141 = vpop.f32.mrb[0].mxu0
    %v5142 = vadd.f32 %v4909, %v5141
    %v5143 = vpop.f32.mrb[0].mxu0
    %5144 = vmatprep.mubr.f32.mxu0 0.0
    %v5145 = vand.u32 %v1595, 4294901760
    %5146 = vmatmul.mubr.f32.gmra.mrb[0].mxu0 %v5145
    %v5147 = vpop.f32.mrb[0].mxu0
    %v5148 = vadd.f32 %v4917, %v5147
    %v5149 = vpop.f32.mrb[0].mxu0
    %5150 = vmatprep.mubr.f32.mxu0 0.0
    %v5151 = vand.u32 %v1596, 4294901760
    %5152 = vmatmul.mubr.f32.gmra.mrb[0].mxu0 %v5151
    %v5153 = vpop.f32.mrb[0].mxu0
    %v5154 = vadd.f32 %v4925, %v5153
    %v5155 = vpop.f32.mrb[0].mxu0
    %5156 = vmatprep.mubr.f32.mxu0 0.0
    %v5157 = vand.u32 %v1597, 4294901760
    %5158 = vmatmul.mubr.f32.gmra.mrb[0].mxu0 %v5157
    %v5159 = vpop.f32.mrb[0].mxu0
    %v5160 = vadd.f32 %v4933, %v5159
    %v5161 = vpop.f32.mrb[0].mxu0
    %5162 = vmatprep.mubr.f32.mxu0 0.0
    %v5163 = vand.u32 %v1598, 4294901760
    %5164 = vmatmul.mubr.f32.gmra.mrb[0].mxu0 %v5163
    %v5165 = vpop.f32.mrb[0].mxu0
    %v5166 = vadd.f32 %v4941, %v5165
    %v5167 = vpop.f32.mrb[0].mxu0
    %5168 = vmatprep.mubr.f32.mxu0 0.0
    %v5169 = vand.u32 %v1599, 4294901760
    %5170 = vmatmul.mubr.f32.gmra.mrb[0].mxu0 %v5169
    %v5171 = vpop.f32.mrb[0].mxu0
    %v5172 = vadd.f32 %v4949, %v5171
    %v5173 = vpop.f32.mrb[0].mxu0
    %5174 = vmatprep.mubr.f32.mxu0 0.0
    %v5175 = vand.u32 %v1600, 4294901760
    %5176 = vmatmul.mubr.f32.gmra.mrb[0].mxu0 %v5175
    %v5177 = vpop.f32.mrb[0].mxu0
    %v5178 = vadd.f32 %v4957, %v5177
    %v5179 = vpop.f32.mrb[0].mxu0
    %5180 = vmatprep.mubr.f32.mxu0 0.0
    %v5181 = vand.u32 %v1601, 4294901760
    %5182 = vmatmul.mubr.f32.gmra.mrb[0].mxu0 %v5181
    %v5183 = vpop.f32.mrb[0].mxu0
    %v5184 = vadd.f32 %v4965, %v5183
    %v5185 = vpop.f32.mrb[0].mxu0
    %5186 = vmatprep.mubr.f32.mxu0 0.0
    %v5187 = vand.u32 %v1602, 4294901760
    %5188 = vmatmul.mubr.f32.gmra.mrb[0].mxu0 %v5187
    %v5189 = vpop.f32.mrb[0].mxu0
    %v5190 = vadd.f32 %v4973, %v5189
    %v5191 = vpop.f32.mrb[0].mxu0
    %5192 = vmatprep.mubr.f32.mxu0 0.0
    %v5193 = vand.u32 %v1603, 4294901760
    %5194 = vmatmul.mubr.f32.gmra.mrb[0].mxu0 %v5193
    %v5195 = vpop.f32.mrb[0].mxu0
    %v5196 = vadd.f32 %v4981, %v5195
    %v5197 = vpop.f32.mrb[0].mxu0
    %5198 = vmatprep.mubr.f32.mxu0 0.0
    %v5199 = vand.u32 %v1604, 4294901760
    %5200 = vmatmul.mubr.f32.gmra.mrb[0].mxu0 %v5199
    %v5201 = vpop.f32.mrb[0].mxu0
    %v5202 = vadd.f32 %v4989, %v5201
    %v5203 = vpop.f32.mrb[0].mxu0
    %5204 = vmatprep.mubr.f32.mxu0 0.0
    %v5205 = vand.u32 %v1605, 4294901760
    %5206 = vmatmul.mubr.f32.gmra.mrb[0].mxu0 %v5205
    %v5207 = vpop.f32.mrb[0].mxu0
    %v5208 = vadd.f32 %v4997, %v5207
    %v5209 = vpop.f32.mrb[0].mxu0
    %5210 = vmatprep.mubr.f32.mxu0 0.0
    %v5211 = vand.u32 %v1606, 4294901760
    %5212 = vmatmul.mubr.f32.gmra.mrb[0].mxu0 %v5211
    %v5213 = vpop.f32.mrb[0].mxu0
    %v5214 = vadd.f32 %v5005, %v5213
    %v5215 = vpop.f32.mrb[0].mxu0
    %5216 = vdwg.mxu0
    %5217 = vmatprep.subr.mxu0 0.0
    %v5218 = vand.u32 %v4092, 4294901760
    %5219 = vmatpush1.msra.mxu0 %v5218
    %5220 = vmatprep.subr.mxu0 0.0
    %v5221 = vand.u32 %v4093, 4294901760
    %5222 = vmatpush1.msra.mxu0 %v5221
    %5223 = vmatprep.subr.mxu0 0.0
    %v5224 = vand.u32 %v4094, 4294901760
    %5225 = vmatpush1.msra.mxu0 %v5224
    %5226 = vmatprep.subr.mxu0 0.0
    %v5227 = vand.u32 %v4095, 4294901760
    %5228 = vmatpush1.msra.mxu0 %v5227
    %5229 = vmatprep.subr.mxu0 0.0
    %v5230 = vand.u32 %v4096, 4294901760
    %5231 = vmatpush1.msra.mxu0 %v5230
    %5232 = vmatprep.subr.mxu0 0.0
    %v5233 = vand.u32 %v4097, 4294901760
    %5234 = vmatpush1.msra.mxu0 %v5233
    %5235 = vmatprep.subr.mxu0 0.0
    %v5236 = vand.u32 %v4098, 4294901760
    %5237 = vmatpush1.msra.mxu0 %v5236
    %5238 = vmatprep.subr.mxu0 0.0
    %v5239 = vand.u32 %v4099, 4294901760
    %5240 = vmatpush1.msra.mxu0 %v5239
    %5241 = vmatprep.subr.mxu0 0.0
    %v5242 = vand.u32 %v4100, 4294901760
    %5243 = vmatpush1.msra.mxu0 %v5242
    %5244 = vmatprep.subr.mxu0 0.0
    %v5245 = vand.u32 %v4101, 4294901760
    %5246 = vmatpush1.msra.mxu0 %v5245
    %5247 = vmatprep.subr.mxu0 0.0
    %v5248 = vand.u32 %v4102, 4294901760
    %5249 = vmatpush1.msra.mxu0 %v5248
    %5250 = vmatprep.subr.mxu0 0.0
    %v5251 = vand.u32 %v4103, 4294901760
    %5252 = vmatpush1.msra.mxu0 %v5251
    %5253 = vmatprep.subr.mxu0 0.0
    %v5254 = vand.u32 %v4104, 4294901760
    %5255 = vmatpush1.msra.mxu0 %v5254
    %5256 = vmatprep.subr.mxu0 0.0
    %v5257 = vand.u32 %v4105, 4294901760
    %5258 = vmatpush1.msra.mxu0 %v5257
    %5259 = vmatprep.subr.mxu0 0.0
    %v5260 = vand.u32 %v4106, 4294901760
    %5261 = vmatpush1.msra.mxu0 %v5260
    %5262 = vmatprep.subr.mxu0 0.0
    %v5263 = vand.u32 %v4107, 4294901760
    %5264 = vmatpush1.msra.mxu0 %v5263
    %5265 = vmatprep.subr.mxu0 0.0
    %5266 = vmatpush1.msra.mxu0 0.0
    %5267 = vmatprep.subr.mxu0 0.0
    %5268 = vmatpush1.msra.mxu0 0.0
    %5269 = vmatprep.subr.mxu0 0.0
    %5270 = vmatpush1.msra.mxu0 0.0
    %5271 = vmatprep.subr.mxu0 0.0
    %5272 = vmatpush1.msra.mxu0 0.0
    %5273 = vmatprep.subr.mxu0 0.0
    %5274 = vmatpush1.msra.mxu0 0.0
    %5275 = vmatprep.subr.mxu0 0.0
    %5276 = vmatpush1.msra.mxu0 0.0
    %5277 = vmatprep.subr.mxu0 0.0
    %5278 = vmatpush1.msra.mxu0 0.0
    %5279 = vmatprep.subr.mxu0 0.0
    %5280 = vmatpush1.msra.mxu0 0.0
    %5281 = vmatprep.subr.mxu0 0.0
    %5282 = vmatpush1.msra.mxu0 0.0
    %5283 = vmatprep.subr.mxu0 0.0
    %5284 = vmatpush1.msra.mxu0 0.0
    %5285 = vmatprep.subr.mxu0 0.0
    %5286 = vmatpush1.msra.mxu0 0.0
    %5287 = vmatprep.subr.mxu0 0.0
    %5288 = vmatpush1.msra.mxu0 0.0
    %5289 = vmatprep.subr.mxu0 0.0
    %5290 = vmatpush1.msra.mxu0 0.0
    %5291 = vmatprep.subr.mxu0 0.0
    %5292 = vmatpush1.msra.mxu0 0.0
    %5293 = vmatprep.subr.mxu0 0.0
    %5294 = vmatpush1.msra.mxu0 0.0
    %5295 = vmatprep.subr.mxu0 0.0
    %5296 = vmatpush1.msra.mxu0 0.0
    %5297 = vmatprep.mubr.f32.mxu0 0.0
    %v5298 = vand.u32 %v1591, 4294901760
    %5299 = vmatmul.mubr.f32.gmra.mrb[0].mxu0 %v5298
    %v5300 = vpop.f32.mrb[0].mxu0
    %v5301 = vadd.f32 %v5124, %v5300
    %v5302 = vpop.f32.mrb[0].mxu0
    %5303 = vmatprep.mubr.f32.mxu0 0.0
    %v5304 = vand.u32 %v1592, 4294901760
    %5305 = vmatmul.mubr.f32.gmra.mrb[0].mxu0 %v5304
    %v5306 = vpop.f32.mrb[0].mxu0
    %v5307 = vadd.f32 %v5130, %v5306
    %v5308 = vpop.f32.mrb[0].mxu0
    %5309 = vmatprep.mubr.f32.mxu0 0.0
    %v5310 = vand.u32 %v1593, 4294901760
    %5311 = vmatmul.mubr.f32.gmra.mrb[0].mxu0 %v5310
    %v5312 = vpop.f32.mrb[0].mxu0
    %v5313 = vadd.f32 %v5136, %v5312
    %v5314 = vpop.f32.mrb[0].mxu0
    %5315 = vmatprep.mubr.f32.mxu0 0.0
    %v5316 = vand.u32 %v1594, 4294901760
    %5317 = vmatmul.mubr.f32.gmra.mrb[0].mxu0 %v5316
    %v5318 = vpop.f32.mrb[0].mxu0
    %v5319 = vadd.f32 %v5142, %v5318
    %v5320 = vpop.f32.mrb[0].mxu0
    %5321 = vmatprep.mubr.f32.mxu0 0.0
    %v5322 = vand.u32 %v1595, 4294901760
    %5323 = vmatmul.mubr.f32.gmra.mrb[0].mxu0 %v5322
    %v5324 = vpop.f32.mrb[0].mxu0
    %v5325 = vadd.f32 %v5148, %v5324
    %v5326 = vpop.f32.mrb[0].mxu0
    %5327 = vmatprep.mubr.f32.mxu0 0.0
    %v5328 = vand.u32 %v1596, 4294901760
    %5329 = vmatmul.mubr.f32.gmra.mrb[0].mxu0 %v5328
    %v5330 = vpop.f32.mrb[0].mxu0
    %v5331 = vadd.f32 %v5154, %v5330
    %v5332 = vpop.f32.mrb[0].mxu0
    %5333 = vmatprep.mubr.f32.mxu0 0.0
    %v5334 = vand.u32 %v1597, 4294901760
    %5335 = vmatmul.mubr.f32.gmra.mrb[0].mxu0 %v5334
    %v5336 = vpop.f32.mrb[0].mxu0
    %v5337 = vadd.f32 %v5160, %v5336
    %v5338 = vpop.f32.mrb[0].mxu0
    %5339 = vmatprep.mubr.f32.mxu0 0.0
    %v5340 = vand.u32 %v1598, 4294901760
    %5341 = vmatmul.mubr.f32.gmra.mrb[0].mxu0 %v5340
    %v5342 = vpop.f32.mrb[0].mxu0
    %v5343 = vadd.f32 %v5166, %v5342
    %v5344 = vpop.f32.mrb[0].mxu0
    %5345 = vmatprep.mubr.f32.mxu0 0.0
    %v5346 = vand.u32 %v1599, 4294901760
    %5347 = vmatmul.mubr.f32.gmra.mrb[0].mxu0 %v5346
    %v5348 = vpop.f32.mrb[0].mxu0
    %v5349 = vadd.f32 %v5172, %v5348
    %v5350 = vpop.f32.mrb[0].mxu0
    %5351 = vmatprep.mubr.f32.mxu0 0.0
    %v5352 = vand.u32 %v1600, 4294901760
    %5353 = vmatmul.mubr.f32.gmra.mrb[0].mxu0 %v5352
    %v5354 = vpop.f32.mrb[0].mxu0
    %v5355 = vadd.f32 %v5178, %v5354
    %v5356 = vpop.f32.mrb[0].mxu0
    %5357 = vmatprep.mubr.f32.mxu0 0.0
    %v5358 = vand.u32 %v1601, 4294901760
    %5359 = vmatmul.mubr.f32.gmra.mrb[0].mxu0 %v5358
    %v5360 = vpop.f32.mrb[0].mxu0
    %v5361 = vadd.f32 %v5184, %v5360
    %v5362 = vpop.f32.mrb[0].mxu0
    %5363 = vmatprep.mubr.f32.mxu0 0.0
    %v5364 = vand.u32 %v1602, 4294901760
    %5365 = vmatmul.mubr.f32.gmra.mrb[0].mxu0 %v5364
    %v5366 = vpop.f32.mrb[0].mxu0
    %v5367 = vadd.f32 %v5190, %v5366
    %v5368 = vpop.f32.mrb[0].mxu0
    %5369 = vmatprep.mubr.f32.mxu0 0.0
    %v5370 = vand.u32 %v1603, 4294901760
    %5371 = vmatmul.mubr.f32.gmra.mrb[0].mxu0 %v5370
    %v5372 = vpop.f32.mrb[0].mxu0
    %v5373 = vadd.f32 %v5196, %v5372
    %v5374 = vpop.f32.mrb[0].mxu0
    %5375 = vmatprep.mubr.f32.mxu0 0.0
    %v5376 = vand.u32 %v1604, 4294901760
    %5377 = vmatmul.mubr.f32.gmra.mrb[0].mxu0 %v5376
    %v5378 = vpop.f32.mrb[0].mxu0
    %v5379 = vadd.f32 %v5202, %v5378
    %v5380 = vpop.f32.mrb[0].mxu0
    %5381 = vmatprep.mubr.f32.mxu0 0.0
    %v5382 = vand.u32 %v1605, 4294901760
    %5383 = vmatmul.mubr.f32.gmra.mrb[0].mxu0 %v5382
    %v5384 = vpop.f32.mrb[0].mxu0
    %v5385 = vadd.f32 %v5208, %v5384
    %v5386 = vpop.f32.mrb[0].mxu0
    %5387 = vmatprep.mubr.f32.mxu0 0.0
    %v5388 = vand.u32 %v1606, 4294901760
    %5389 = vmatmul.mubr.f32.gmra.mrb[0].mxu0 %v5388
    %v5390 = vpop.f32.mrb[0].mxu0
    %v5391 = vadd.f32 %v5214, %v5390
    %v5392 = vpop.f32.mrb[0].mxu0
    %5393 = vdwg.mxu0
    %v5395 = vsel %vm2897, %v5301, 0
    %v5398 = vsel %vm2897, %v5307, 0
    %v5401 = vsel %vm2897, %v5313, 0
    %v5404 = vsel %vm2897, %v5319, 0
    %v5407 = vsel %vm2897, %v5325, 0
    %v5410 = vsel %vm2897, %v5331, 0
    %v5413 = vsel %vm2897, %v5337, 0
    %v5416 = vsel %vm2897, %v5343, 0
    %v5419 = vsel %vm2897, %v5349, 0
    %v5422 = vsel %vm2897, %v5355, 0
    %v5425 = vsel %vm2897, %v5361, 0
    %v5428 = vsel %vm2897, %v5367, 0
    %v5431 = vsel %vm2897, %v5373, 0
    %v5434 = vsel %vm2897, %v5379, 0
    %v5437 = vsel %vm2897, %v5385, 0
    %v5440 = vsel %vm2897, %v5391, 0
    %5442 = vmatprep.subr.mxu0 0.0
    %v5443 = vand.u32 %v1607, 4294901760
    %5444 = vmatpush1.msra.mxu0 %v5443
    %5445 = vmatprep.subr.mxu0 0.0
    %v5446 = vand.u32 %v1608, 4294901760
    %5447 = vmatpush1.msra.mxu0 %v5446
    %5448 = vmatprep.subr.mxu0 0.0
    %v5449 = vand.u32 %v1609, 4294901760
    %5450 = vmatpush1.msra.mxu0 %v5449
    %5451 = vmatprep.subr.mxu0 0.0
    %v5452 = vand.u32 %v1610, 4294901760
    %5453 = vmatpush1.msra.mxu0 %v5452
    %5454 = vmatprep.subr.mxu0 0.0
    %5455 = vmatpush1.msra.mxu0 0.0
    %5456 = vmatprep.subr.mxu0 0.0
    %5457 = vmatpush1.msra.mxu0 0.0
    %5458 = vmatprep.subr.mxu0 0.0
    %5459 = vmatpush1.msra.mxu0 0.0
    %5460 = vmatprep.subr.mxu0 0.0
    %5461 = vmatpush1.msra.mxu0 0.0
    %5462 = vmatprep.subr.mxu0 0.0
    %5463 = vmatpush1.msra.mxu0 0.0
    %5464 = vmatprep.subr.mxu0 0.0
    %5465 = vmatpush1.msra.mxu0 0.0
    %5466 = vmatprep.subr.mxu0 0.0
    %5467 = vmatpush1.msra.mxu0 0.0
    %5468 = vmatprep.subr.mxu0 0.0
    %5469 = vmatpush1.msra.mxu0 0.0
    %5470 = vmatprep.subr.mxu0 0.0
    %5471 = vmatpush1.msra.mxu0 0.0
    %5472 = vmatprep.subr.mxu0 0.0
    %5473 = vmatpush1.msra.mxu0 0.0
    %5474 = vmatprep.subr.mxu0 0.0
    %5475 = vmatpush1.msra.mxu0 0.0
    %5476 = vmatprep.subr.mxu0 0.0
    %5477 = vmatpush1.msra.mxu0 0.0
    %5478 = vmatprep.subr.mxu0 0.0
    %5479 = vmatpush1.msra.mxu0 0.0
    %5480 = vmatprep.subr.mxu0 0.0
    %5481 = vmatpush1.msra.mxu0 0.0
    %5482 = vmatprep.subr.mxu0 0.0
    %5483 = vmatpush1.msra.mxu0 0.0
    %5484 = vmatprep.subr.mxu0 0.0
    %5485 = vmatpush1.msra.mxu0 0.0
    %5486 = vmatprep.subr.mxu0 0.0
    %5487 = vmatpush1.msra.mxu0 0.0
    %5488 = vmatprep.subr.mxu0 0.0
    %5489 = vmatpush1.msra.mxu0 0.0
    %5490 = vmatprep.subr.mxu0 0.0
    %5491 = vmatpush1.msra.mxu0 0.0
    %5492 = vmatprep.subr.mxu0 0.0
    %5493 = vmatpush1.msra.mxu0 0.0
    %5494 = vmatprep.subr.mxu0 0.0
    %5495 = vmatpush1.msra.mxu0 0.0
    %5496 = vmatprep.subr.mxu0 0.0
    %5497 = vmatpush1.msra.mxu0 0.0
    %5498 = vmatprep.subr.mxu0 0.0
    %5499 = vmatpush1.msra.mxu0 0.0
    %5500 = vmatprep.subr.mxu0 0.0
    %5501 = vmatpush1.msra.mxu0 0.0
    %5502 = vmatprep.subr.mxu0 0.0
    %5503 = vmatpush1.msra.mxu0 0.0
    %5504 = vmatprep.subr.mxu0 0.0
    %5505 = vmatpush1.msra.mxu0 0.0
    %5506 = vmatprep.subr.mxu0 0.0
    %5507 = vmatpush1.msra.mxu0 0.0
    %5508 = vmatprep.subr.mxu0 0.0
    %5509 = vmatpush1.msra.mxu0 0.0
    %5510 = vmatprep.mubr.f32.mxu0 0.0
    %v5511 = vand.u32 %v5395, 4294901760
    %v5512 = vsub.f32 %v5395, %v5511
    %v5513 = vand.u32 %v5512, 4294901760
    %v5514 = vsub.f32 %v5512, %v5513
    %v5515 = vand.u32 %v5514, 4294901760
    %5516 = vmatmul.mubr.f32.gmra.mrb[0].mxu0 %v5515
    %v5517 = vpop.f32.mrb[0].mxu0
    %v5518 = vadd.f32 1e-05, %v5517
    %v5519 = vpop.f32.mrb[0].mxu0
    %5520 = vmatprep.mubr.f32.mxu0 0.0
    %v5521 = vand.u32 %v5398, 4294901760
    %v5522 = vsub.f32 %v5398, %v5521
    %v5523 = vand.u32 %v5522, 4294901760
    %v5524 = vsub.f32 %v5522, %v5523
    %v5525 = vand.u32 %v5524, 4294901760
    %5526 = vmatmul.mubr.f32.gmra.mrb[0].mxu0 %v5525
    %v5527 = vpop.f32.mrb[0].mxu0
    %v5528 = vadd.f32 1e-05, %v5527
    %v5529 = vpop.f32.mrb[0].mxu0
    %5530 = vmatprep.mubr.f32.mxu0 0.0
    %v5531 = vand.u32 %v5401, 4294901760
    %v5532 = vsub.f32 %v5401, %v5531
    %v5533 = vand.u32 %v5532, 4294901760
    %v5534 = vsub.f32 %v5532, %v5533
    %v5535 = vand.u32 %v5534, 4294901760
    %5536 = vmatmul.mubr.f32.gmra.mrb[0].mxu0 %v5535
    %v5537 = vpop.f32.mrb[0].mxu0
    %v5538 = vadd.f32 1e-05, %v5537
    %v5539 = vpop.f32.mrb[0].mxu0
    %5540 = vmatprep.mubr.f32.mxu0 0.0
    %v5541 = vand.u32 %v5404, 4294901760
    %v5542 = vsub.f32 %v5404, %v5541
    %v5543 = vand.u32 %v5542, 4294901760
    %v5544 = vsub.f32 %v5542, %v5543
    %v5545 = vand.u32 %v5544, 4294901760
    %5546 = vmatmul.mubr.f32.gmra.mrb[0].mxu0 %v5545
    %v5547 = vpop.f32.mrb[0].mxu0
    %v5548 = vadd.f32 1e-05, %v5547
    %v5549 = vpop.f32.mrb[0].mxu0
    %5550 = vmatprep.mubr.f32.mxu0 0.0
    %v5551 = vand.u32 %v5407, 4294901760
    %v5552 = vsub.f32 %v5407, %v5551
    %v5553 = vand.u32 %v5552, 4294901760
    %v5554 = vsub.f32 %v5552, %v5553
    %v5555 = vand.u32 %v5554, 4294901760
    %5556 = vmatmul.mubr.f32.gmra.mrb[0].mxu0 %v5555
    %v5557 = vpop.f32.mrb[0].mxu0
    %v5558 = vadd.f32 1e-05, %v5557
    %v5559 = vpop.f32.mrb[0].mxu0
    %5560 = vmatprep.mubr.f32.mxu0 0.0
    %v5561 = vand.u32 %v5410, 4294901760
    %v5562 = vsub.f32 %v5410, %v5561
    %v5563 = vand.u32 %v5562, 4294901760
    %v5564 = vsub.f32 %v5562, %v5563
    %v5565 = vand.u32 %v5564, 4294901760
    %5566 = vmatmul.mubr.f32.gmra.mrb[0].mxu0 %v5565
    %v5567 = vpop.f32.mrb[0].mxu0
    %v5568 = vadd.f32 1e-05, %v5567
    %v5569 = vpop.f32.mrb[0].mxu0
    %5570 = vmatprep.mubr.f32.mxu0 0.0
    %v5571 = vand.u32 %v5413, 4294901760
    %v5572 = vsub.f32 %v5413, %v5571
    %v5573 = vand.u32 %v5572, 4294901760
    %v5574 = vsub.f32 %v5572, %v5573
    %v5575 = vand.u32 %v5574, 4294901760
    %5576 = vmatmul.mubr.f32.gmra.mrb[0].mxu0 %v5575
    %v5577 = vpop.f32.mrb[0].mxu0
    %v5578 = vadd.f32 1e-05, %v5577
    %v5579 = vpop.f32.mrb[0].mxu0
    %5580 = vmatprep.mubr.f32.mxu0 0.0
    %v5581 = vand.u32 %v5416, 4294901760
    %v5582 = vsub.f32 %v5416, %v5581
    %v5583 = vand.u32 %v5582, 4294901760
    %v5584 = vsub.f32 %v5582, %v5583
    %v5585 = vand.u32 %v5584, 4294901760
    %5586 = vmatmul.mubr.f32.gmra.mrb[0].mxu0 %v5585
    %v5587 = vpop.f32.mrb[0].mxu0
    %v5588 = vadd.f32 1e-05, %v5587
    %v5589 = vpop.f32.mrb[0].mxu0
    %5590 = vmatprep.mubr.f32.mxu0 0.0
    %v5591 = vand.u32 %v5419, 4294901760
    %v5592 = vsub.f32 %v5419, %v5591
    %v5593 = vand.u32 %v5592, 4294901760
    %v5594 = vsub.f32 %v5592, %v5593
    %v5595 = vand.u32 %v5594, 4294901760
    %5596 = vmatmul.mubr.f32.gmra.mrb[0].mxu0 %v5595
    %v5597 = vpop.f32.mrb[0].mxu0
    %v5598 = vadd.f32 1e-05, %v5597
    %v5599 = vpop.f32.mrb[0].mxu0
    %5600 = vmatprep.mubr.f32.mxu0 0.0
    %v5601 = vand.u32 %v5422, 4294901760
    %v5602 = vsub.f32 %v5422, %v5601
    %v5603 = vand.u32 %v5602, 4294901760
    %v5604 = vsub.f32 %v5602, %v5603
    %v5605 = vand.u32 %v5604, 4294901760
    %5606 = vmatmul.mubr.f32.gmra.mrb[0].mxu0 %v5605
    %v5607 = vpop.f32.mrb[0].mxu0
    %v5608 = vadd.f32 1e-05, %v5607
    %v5609 = vpop.f32.mrb[0].mxu0
    %5610 = vmatprep.mubr.f32.mxu0 0.0
    %v5611 = vand.u32 %v5425, 4294901760
    %v5612 = vsub.f32 %v5425, %v5611
    %v5613 = vand.u32 %v5612, 4294901760
    %v5614 = vsub.f32 %v5612, %v5613
    %v5615 = vand.u32 %v5614, 4294901760
    %5616 = vmatmul.mubr.f32.gmra.mrb[0].mxu0 %v5615
    %v5617 = vpop.f32.mrb[0].mxu0
    %v5618 = vadd.f32 1e-05, %v5617
    %v5619 = vpop.f32.mrb[0].mxu0
    %5620 = vmatprep.mubr.f32.mxu0 0.0
    %v5621 = vand.u32 %v5428, 4294901760
    %v5622 = vsub.f32 %v5428, %v5621
    %v5623 = vand.u32 %v5622, 4294901760
    %v5624 = vsub.f32 %v5622, %v5623
    %v5625 = vand.u32 %v5624, 4294901760
    %5626 = vmatmul.mubr.f32.gmra.mrb[0].mxu0 %v5625
    %v5627 = vpop.f32.mrb[0].mxu0
    %v5628 = vadd.f32 1e-05, %v5627
    %v5629 = vpop.f32.mrb[0].mxu0
    %5630 = vmatprep.mubr.f32.mxu0 0.0
    %v5631 = vand.u32 %v5431, 4294901760
    %v5632 = vsub.f32 %v5431, %v5631
    %v5633 = vand.u32 %v5632, 4294901760
    %v5634 = vsub.f32 %v5632, %v5633
    %v5635 = vand.u32 %v5634, 4294901760
    %5636 = vmatmul.mubr.f32.gmra.mrb[0].mxu0 %v5635
    %v5637 = vpop.f32.mrb[0].mxu0
    %v5638 = vadd.f32 1e-05, %v5637
    %v5639 = vpop.f32.mrb[0].mxu0
    %5640 = vmatprep.mubr.f32.mxu0 0.0
    %v5641 = vand.u32 %v5434, 4294901760
    %v5642 = vsub.f32 %v5434, %v5641
    %v5643 = vand.u32 %v5642, 4294901760
    %v5644 = vsub.f32 %v5642, %v5643
    %v5645 = vand.u32 %v5644, 4294901760
    %5646 = vmatmul.mubr.f32.gmra.mrb[0].mxu0 %v5645
    %v5647 = vpop.f32.mrb[0].mxu0
    %v5648 = vadd.f32 1e-05, %v5647
    %v5649 = vpop.f32.mrb[0].mxu0
    %5650 = vmatprep.mubr.f32.mxu0 0.0
    %v5651 = vand.u32 %v5437, 4294901760
    %v5652 = vsub.f32 %v5437, %v5651
    %v5653 = vand.u32 %v5652, 4294901760
    %v5654 = vsub.f32 %v5652, %v5653
    %v5655 = vand.u32 %v5654, 4294901760
    %5656 = vmatmul.mubr.f32.gmra.mrb[0].mxu0 %v5655
    %v5657 = vpop.f32.mrb[0].mxu0
    %v5658 = vadd.f32 1e-05, %v5657
    %v5659 = vpop.f32.mrb[0].mxu0
    %5660 = vmatprep.mubr.f32.mxu0 0.0
    %v5661 = vand.u32 %v5440, 4294901760
    %v5662 = vsub.f32 %v5440, %v5661
    %v5663 = vand.u32 %v5662, 4294901760
    %v5664 = vsub.f32 %v5662, %v5663
    %v5665 = vand.u32 %v5664, 4294901760
    %5666 = vmatmul.mubr.f32.gmra.mrb[0].mxu0 %v5665
    %v5667 = vpop.f32.mrb[0].mxu0
    %v5668 = vadd.f32 1e-05, %v5667
    %v5669 = vpop.f32.mrb[0].mxu0
    %5670 = vdwg.mxu0
    %5671 = vmatprep.subr.mxu0 0.0
    %v5672 = vand.u32 %v1607, 4294901760
    %v5673 = vsub.f32 %v1607, %v5672
    %v5674 = vand.u32 %v5673, 4294901760
    %v5675 = vsub.f32 %v5673, %v5674
    %v5676 = vand.u32 %v5675, 4294901760
    %5677 = vmatpush1.msra.mxu0 %v5676
    %5678 = vmatprep.subr.mxu0 0.0
    %v5679 = vand.u32 %v1608, 4294901760
    %v5680 = vsub.f32 %v1608, %v5679
    %v5681 = vand.u32 %v5680, 4294901760
    %v5682 = vsub.f32 %v5680, %v5681
    %v5683 = vand.u32 %v5682, 4294901760
    %5684 = vmatpush1.msra.mxu0 %v5683
    %5685 = vmatprep.subr.mxu0 0.0
    %v5686 = vand.u32 %v1609, 4294901760
    %v5687 = vsub.f32 %v1609, %v5686
    %v5688 = vand.u32 %v5687, 4294901760
    %v5689 = vsub.f32 %v5687, %v5688
    %v5690 = vand.u32 %v5689, 4294901760
    %5691 = vmatpush1.msra.mxu0 %v5690
    %5692 = vmatprep.subr.mxu0 0.0
    %v5693 = vand.u32 %v1610, 4294901760
    %v5694 = vsub.f32 %v1610, %v5693
    %v5695 = vand.u32 %v5694, 4294901760
    %v5696 = vsub.f32 %v5694, %v5695
    %v5697 = vand.u32 %v5696, 4294901760
    %5698 = vmatpush1.msra.mxu0 %v5697
    %5699 = vmatprep.subr.mxu0 0.0
    %5700 = vmatpush1.msra.mxu0 0.0
    %5701 = vmatprep.subr.mxu0 0.0
    %5702 = vmatpush1.msra.mxu0 0.0
    %5703 = vmatprep.subr.mxu0 0.0
    %5704 = vmatpush1.msra.mxu0 0.0
    %5705 = vmatprep.subr.mxu0 0.0
    %5706 = vmatpush1.msra.mxu0 0.0
    %5707 = vmatprep.subr.mxu0 0.0
    %5708 = vmatpush1.msra.mxu0 0.0
    %5709 = vmatprep.subr.mxu0 0.0
    %5710 = vmatpush1.msra.mxu0 0.0
    %5711 = vmatprep.subr.mxu0 0.0
    %5712 = vmatpush1.msra.mxu0 0.0
    %5713 = vmatprep.subr.mxu0 0.0
    %5714 = vmatpush1.msra.mxu0 0.0
    %5715 = vmatprep.subr.mxu0 0.0
    %5716 = vmatpush1.msra.mxu0 0.0
    %5717 = vmatprep.subr.mxu0 0.0
    %5718 = vmatpush1.msra.mxu0 0.0
    %5719 = vmatprep.subr.mxu0 0.0
    %5720 = vmatpush1.msra.mxu0 0.0
    %5721 = vmatprep.subr.mxu0 0.0
    %5722 = vmatpush1.msra.mxu0 0.0
    %5723 = vmatprep.subr.mxu0 0.0
    %5724 = vmatpush1.msra.mxu0 0.0
    %5725 = vmatprep.subr.mxu0 0.0
    %5726 = vmatpush1.msra.mxu0 0.0
    %5727 = vmatprep.subr.mxu0 0.0
    %5728 = vmatpush1.msra.mxu0 0.0
    %5729 = vmatprep.subr.mxu0 0.0
    %5730 = vmatpush1.msra.mxu0 0.0
    %5731 = vmatprep.subr.mxu0 0.0
    %5732 = vmatpush1.msra.mxu0 0.0
    %5733 = vmatprep.subr.mxu0 0.0
    %5734 = vmatpush1.msra.mxu0 0.0
    %5735 = vmatprep.subr.mxu0 0.0
    %5736 = vmatpush1.msra.mxu0 0.0
    %5737 = vmatprep.subr.mxu0 0.0
    %5738 = vmatpush1.msra.mxu0 0.0
    %5739 = vmatprep.subr.mxu0 0.0
    %5740 = vmatpush1.msra.mxu0 0.0
    %5741 = vmatprep.subr.mxu0 0.0
    %5742 = vmatpush1.msra.mxu0 0.0
    %5743 = vmatprep.subr.mxu0 0.0
    %5744 = vmatpush1.msra.mxu0 0.0
    %5745 = vmatprep.subr.mxu0 0.0
    %5746 = vmatpush1.msra.mxu0 0.0
    %5747 = vmatprep.subr.mxu0 0.0
    %5748 = vmatpush1.msra.mxu0 0.0
    %5749 = vmatprep.subr.mxu0 0.0
    %5750 = vmatpush1.msra.mxu0 0.0
    %5751 = vmatprep.subr.mxu0 0.0
    %5752 = vmatpush1.msra.mxu0 0.0
    %5753 = vmatprep.subr.mxu0 0.0
    %5754 = vmatpush1.msra.mxu0 0.0
    %5755 = vmatprep.mubr.f32.mxu0 0.0
    %v5756 = vand.u32 %v5395, 4294901760
    %5757 = vmatmul.mubr.f32.gmra.mrb[0].mxu0 %v5756
    %v5758 = vpop.f32.mrb[0].mxu0
    %v5759 = vadd.f32 %v5518, %v5758
    %v5760 = vpop.f32.mrb[0].mxu0
    %5761 = vmatprep.mubr.f32.mxu0 0.0
    %v5762 = vand.u32 %v5398, 4294901760
    %5763 = vmatmul.mubr.f32.gmra.mrb[0].mxu0 %v5762
    %v5764 = vpop.f32.mrb[0].mxu0
    %v5765 = vadd.f32 %v5528, %v5764
    %v5766 = vpop.f32.mrb[0].mxu0
    %5767 = vmatprep.mubr.f32.mxu0 0.0
    %v5768 = vand.u32 %v5401, 4294901760
    %5769 = vmatmul.mubr.f32.gmra.mrb[0].mxu0 %v5768
    %v5770 = vpop.f32.mrb[0].mxu0
    %v5771 = vadd.f32 %v5538, %v5770
    %v5772 = vpop.f32.mrb[0].mxu0
    %5773 = vmatprep.mubr.f32.mxu0 0.0
    %v5774 = vand.u32 %v5404, 4294901760
    %5775 = vmatmul.mubr.f32.gmra.mrb[0].mxu0 %v5774
    %v5776 = vpop.f32.mrb[0].mxu0
    %v5777 = vadd.f32 %v5548, %v5776
    %v5778 = vpop.f32.mrb[0].mxu0
    %5779 = vmatprep.mubr.f32.mxu0 0.0
    %v5780 = vand.u32 %v5407, 4294901760
    %5781 = vmatmul.mubr.f32.gmra.mrb[0].mxu0 %v5780
    %v5782 = vpop.f32.mrb[0].mxu0
    %v5783 = vadd.f32 %v5558, %v5782
    %v5784 = vpop.f32.mrb[0].mxu0
    %5785 = vmatprep.mubr.f32.mxu0 0.0
    %v5786 = vand.u32 %v5410, 4294901760
    %5787 = vmatmul.mubr.f32.gmra.mrb[0].mxu0 %v5786
    %v5788 = vpop.f32.mrb[0].mxu0
    %v5789 = vadd.f32 %v5568, %v5788
    %v5790 = vpop.f32.mrb[0].mxu0
    %5791 = vmatprep.mubr.f32.mxu0 0.0
    %v5792 = vand.u32 %v5413, 4294901760
    %5793 = vmatmul.mubr.f32.gmra.mrb[0].mxu0 %v5792
    %v5794 = vpop.f32.mrb[0].mxu0
    %v5795 = vadd.f32 %v5578, %v5794
    %v5796 = vpop.f32.mrb[0].mxu0
    %5797 = vmatprep.mubr.f32.mxu0 0.0
    %v5798 = vand.u32 %v5416, 4294901760
    %5799 = vmatmul.mubr.f32.gmra.mrb[0].mxu0 %v5798
    %v5800 = vpop.f32.mrb[0].mxu0
    %v5801 = vadd.f32 %v5588, %v5800
    %v5802 = vpop.f32.mrb[0].mxu0
    %5803 = vmatprep.mubr.f32.mxu0 0.0
    %v5804 = vand.u32 %v5419, 4294901760
    %5805 = vmatmul.mubr.f32.gmra.mrb[0].mxu0 %v5804
    %v5806 = vpop.f32.mrb[0].mxu0
    %v5807 = vadd.f32 %v5598, %v5806
    %v5808 = vpop.f32.mrb[0].mxu0
    %5809 = vmatprep.mubr.f32.mxu0 0.0
    %v5810 = vand.u32 %v5422, 4294901760
    %5811 = vmatmul.mubr.f32.gmra.mrb[0].mxu0 %v5810
    %v5812 = vpop.f32.mrb[0].mxu0
    %v5813 = vadd.f32 %v5608, %v5812
    %v5814 = vpop.f32.mrb[0].mxu0
    %5815 = vmatprep.mubr.f32.mxu0 0.0
    %v5816 = vand.u32 %v5425, 4294901760
    %5817 = vmatmul.mubr.f32.gmra.mrb[0].mxu0 %v5816
    %v5818 = vpop.f32.mrb[0].mxu0
    %v5819 = vadd.f32 %v5618, %v5818
    %v5820 = vpop.f32.mrb[0].mxu0
    %5821 = vmatprep.mubr.f32.mxu0 0.0
    %v5822 = vand.u32 %v5428, 4294901760
    %5823 = vmatmul.mubr.f32.gmra.mrb[0].mxu0 %v5822
    %v5824 = vpop.f32.mrb[0].mxu0
    %v5825 = vadd.f32 %v5628, %v5824
    %v5826 = vpop.f32.mrb[0].mxu0
    %5827 = vmatprep.mubr.f32.mxu0 0.0
    %v5828 = vand.u32 %v5431, 4294901760
    %5829 = vmatmul.mubr.f32.gmra.mrb[0].mxu0 %v5828
    %v5830 = vpop.f32.mrb[0].mxu0
    %v5831 = vadd.f32 %v5638, %v5830
    %v5832 = vpop.f32.mrb[0].mxu0
    %5833 = vmatprep.mubr.f32.mxu0 0.0
    %v5834 = vand.u32 %v5434, 4294901760
    %5835 = vmatmul.mubr.f32.gmra.mrb[0].mxu0 %v5834
    %v5836 = vpop.f32.mrb[0].mxu0
    %v5837 = vadd.f32 %v5648, %v5836
    %v5838 = vpop.f32.mrb[0].mxu0
    %5839 = vmatprep.mubr.f32.mxu0 0.0
    %v5840 = vand.u32 %v5437, 4294901760
    %5841 = vmatmul.mubr.f32.gmra.mrb[0].mxu0 %v5840
    %v5842 = vpop.f32.mrb[0].mxu0
    %v5843 = vadd.f32 %v5658, %v5842
    %v5844 = vpop.f32.mrb[0].mxu0
    %5845 = vmatprep.mubr.f32.mxu0 0.0
    %v5846 = vand.u32 %v5440, 4294901760
    %5847 = vmatmul.mubr.f32.gmra.mrb[0].mxu0 %v5846
    %v5848 = vpop.f32.mrb[0].mxu0
    %v5849 = vadd.f32 %v5668, %v5848
    %v5850 = vpop.f32.mrb[0].mxu0
    %5851 = vdwg.mxu0
    %5852 = vmatprep.subr.mxu0 0.0
    %v5853 = vand.u32 %v1607, 4294901760
    %v5854 = vsub.f32 %v1607, %v5853
    %5855 = vmatpush1.msra.mxu0 %v5854
    %5856 = vmatprep.subr.mxu0 0.0
    %v5857 = vand.u32 %v1608, 4294901760
    %v5858 = vsub.f32 %v1608, %v5857
    %5859 = vmatpush1.msra.mxu0 %v5858
    %5860 = vmatprep.subr.mxu0 0.0
    %v5861 = vand.u32 %v1609, 4294901760
    %v5862 = vsub.f32 %v1609, %v5861
    %5863 = vmatpush1.msra.mxu0 %v5862
    %5864 = vmatprep.subr.mxu0 0.0
    %v5865 = vand.u32 %v1610, 4294901760
    %v5866 = vsub.f32 %v1610, %v5865
    %5867 = vmatpush1.msra.mxu0 %v5866
    %5868 = vmatprep.subr.mxu0 0.0
    %5869 = vmatpush1.msra.mxu0 0.0
    %5870 = vmatprep.subr.mxu0 0.0
    %5871 = vmatpush1.msra.mxu0 0.0
    %5872 = vmatprep.subr.mxu0 0.0
    %5873 = vmatpush1.msra.mxu0 0.0
    %5874 = vmatprep.subr.mxu0 0.0
    %5875 = vmatpush1.msra.mxu0 0.0
    %5876 = vmatprep.subr.mxu0 0.0
    %5877 = vmatpush1.msra.mxu0 0.0
    %5878 = vmatprep.subr.mxu0 0.0
    %5879 = vmatpush1.msra.mxu0 0.0
    %5880 = vmatprep.subr.mxu0 0.0
    %5881 = vmatpush1.msra.mxu0 0.0
    %5882 = vmatprep.subr.mxu0 0.0
    %5883 = vmatpush1.msra.mxu0 0.0
    %5884 = vmatprep.subr.mxu0 0.0
    %5885 = vmatpush1.msra.mxu0 0.0
    %5886 = vmatprep.subr.mxu0 0.0
    %5887 = vmatpush1.msra.mxu0 0.0
    %5888 = vmatprep.subr.mxu0 0.0
    %5889 = vmatpush1.msra.mxu0 0.0
    %5890 = vmatprep.subr.mxu0 0.0
    %5891 = vmatpush1.msra.mxu0 0.0
    %5892 = vmatprep.subr.mxu0 0.0
    %5893 = vmatpush1.msra.mxu0 0.0
    %5894 = vmatprep.subr.mxu0 0.0
    %5895 = vmatpush1.msra.mxu0 0.0
    %5896 = vmatprep.subr.mxu0 0.0
    %5897 = vmatpush1.msra.mxu0 0.0
    %5898 = vmatprep.subr.mxu0 0.0
    %5899 = vmatpush1.msra.mxu0 0.0
    %5900 = vmatprep.subr.mxu0 0.0
    %5901 = vmatpush1.msra.mxu0 0.0
    %5902 = vmatprep.subr.mxu0 0.0
    %5903 = vmatpush1.msra.mxu0 0.0
    %5904 = vmatprep.subr.mxu0 0.0
    %5905 = vmatpush1.msra.mxu0 0.0
    %5906 = vmatprep.subr.mxu0 0.0
    %5907 = vmatpush1.msra.mxu0 0.0
    %5908 = vmatprep.subr.mxu0 0.0
    %5909 = vmatpush1.msra.mxu0 0.0
    %5910 = vmatprep.subr.mxu0 0.0
    %5911 = vmatpush1.msra.mxu0 0.0
    %5912 = vmatprep.subr.mxu0 0.0
    %5913 = vmatpush1.msra.mxu0 0.0
    %5914 = vmatprep.subr.mxu0 0.0
    %5915 = vmatpush1.msra.mxu0 0.0
    %5916 = vmatprep.subr.mxu0 0.0
    %5917 = vmatpush1.msra.mxu0 0.0
    %5918 = vmatprep.subr.mxu0 0.0
    %5919 = vmatpush1.msra.mxu0 0.0
    %5920 = vmatprep.subr.mxu0 0.0
    %5921 = vmatpush1.msra.mxu0 0.0
    %5922 = vmatprep.subr.mxu0 0.0
    %5923 = vmatpush1.msra.mxu0 0.0
    %5924 = vmatprep.mubr.f32.mxu0 0.0
    %v5925 = vand.u32 %v5395, 4294901760
    %v5926 = vsub.f32 %v5395, %v5925
    %5927 = vmatmul.mubr.f32.gmra.mrb[0].mxu0 %v5926
    %v5928 = vpop.f32.mrb[0].mxu0
    %v5929 = vadd.f32 %v5759, %v5928
    %v5930 = vpop.f32.mrb[0].mxu0
    %5931 = vmatprep.mubr.f32.mxu0 0.0
    %v5932 = vand.u32 %v5398, 4294901760
    %v5933 = vsub.f32 %v5398, %v5932
    %5934 = vmatmul.mubr.f32.gmra.mrb[0].mxu0 %v5933
    %v5935 = vpop.f32.mrb[0].mxu0
    %v5936 = vadd.f32 %v5765, %v5935
    %v5937 = vpop.f32.mrb[0].mxu0
    %5938 = vmatprep.mubr.f32.mxu0 0.0
    %v5939 = vand.u32 %v5401, 4294901760
    %v5940 = vsub.f32 %v5401, %v5939
    %5941 = vmatmul.mubr.f32.gmra.mrb[0].mxu0 %v5940
    %v5942 = vpop.f32.mrb[0].mxu0
    %v5943 = vadd.f32 %v5771, %v5942
    %v5944 = vpop.f32.mrb[0].mxu0
    %5945 = vmatprep.mubr.f32.mxu0 0.0
    %v5946 = vand.u32 %v5404, 4294901760
    %v5947 = vsub.f32 %v5404, %v5946
    %5948 = vmatmul.mubr.f32.gmra.mrb[0].mxu0 %v5947
    %v5949 = vpop.f32.mrb[0].mxu0
    %v5950 = vadd.f32 %v5777, %v5949
    %v5951 = vpop.f32.mrb[0].mxu0
    %5952 = vmatprep.mubr.f32.mxu0 0.0
    %v5953 = vand.u32 %v5407, 4294901760
    %v5954 = vsub.f32 %v5407, %v5953
    %5955 = vmatmul.mubr.f32.gmra.mrb[0].mxu0 %v5954
    %v5956 = vpop.f32.mrb[0].mxu0
    %v5957 = vadd.f32 %v5783, %v5956
    %v5958 = vpop.f32.mrb[0].mxu0
    %5959 = vmatprep.mubr.f32.mxu0 0.0
    %v5960 = vand.u32 %v5410, 4294901760
    %v5961 = vsub.f32 %v5410, %v5960
    %5962 = vmatmul.mubr.f32.gmra.mrb[0].mxu0 %v5961
    %v5963 = vpop.f32.mrb[0].mxu0
    %v5964 = vadd.f32 %v5789, %v5963
    %v5965 = vpop.f32.mrb[0].mxu0
    %5966 = vmatprep.mubr.f32.mxu0 0.0
    %v5967 = vand.u32 %v5413, 4294901760
    %v5968 = vsub.f32 %v5413, %v5967
    %5969 = vmatmul.mubr.f32.gmra.mrb[0].mxu0 %v5968
    %v5970 = vpop.f32.mrb[0].mxu0
    %v5971 = vadd.f32 %v5795, %v5970
    %v5972 = vpop.f32.mrb[0].mxu0
    %5973 = vmatprep.mubr.f32.mxu0 0.0
    %v5974 = vand.u32 %v5416, 4294901760
    %v5975 = vsub.f32 %v5416, %v5974
    %5976 = vmatmul.mubr.f32.gmra.mrb[0].mxu0 %v5975
    %v5977 = vpop.f32.mrb[0].mxu0
    %v5978 = vadd.f32 %v5801, %v5977
    %v5979 = vpop.f32.mrb[0].mxu0
    %5980 = vmatprep.mubr.f32.mxu0 0.0
    %v5981 = vand.u32 %v5419, 4294901760
    %v5982 = vsub.f32 %v5419, %v5981
    %5983 = vmatmul.mubr.f32.gmra.mrb[0].mxu0 %v5982
    %v5984 = vpop.f32.mrb[0].mxu0
    %v5985 = vadd.f32 %v5807, %v5984
    %v5986 = vpop.f32.mrb[0].mxu0
    %5987 = vmatprep.mubr.f32.mxu0 0.0
    %v5988 = vand.u32 %v5422, 4294901760
    %v5989 = vsub.f32 %v5422, %v5988
    %5990 = vmatmul.mubr.f32.gmra.mrb[0].mxu0 %v5989
    %v5991 = vpop.f32.mrb[0].mxu0
    %v5992 = vadd.f32 %v5813, %v5991
    %v5993 = vpop.f32.mrb[0].mxu0
    %5994 = vmatprep.mubr.f32.mxu0 0.0
    %v5995 = vand.u32 %v5425, 4294901760
    %v5996 = vsub.f32 %v5425, %v5995
    %5997 = vmatmul.mubr.f32.gmra.mrb[0].mxu0 %v5996
    %v5998 = vpop.f32.mrb[0].mxu0
    %v5999 = vadd.f32 %v5819, %v5998
    %v6000 = vpop.f32.mrb[0].mxu0
    %6001 = vmatprep.mubr.f32.mxu0 0.0
    %v6002 = vand.u32 %v5428, 4294901760
    %v6003 = vsub.f32 %v5428, %v6002
    %6004 = vmatmul.mubr.f32.gmra.mrb[0].mxu0 %v6003
    %v6005 = vpop.f32.mrb[0].mxu0
    %v6006 = vadd.f32 %v5825, %v6005
    %v6007 = vpop.f32.mrb[0].mxu0
    %6008 = vmatprep.mubr.f32.mxu0 0.0
    %v6009 = vand.u32 %v5431, 4294901760
    %v6010 = vsub.f32 %v5431, %v6009
    %6011 = vmatmul.mubr.f32.gmra.mrb[0].mxu0 %v6010
    %v6012 = vpop.f32.mrb[0].mxu0
    %v6013 = vadd.f32 %v5831, %v6012
    %v6014 = vpop.f32.mrb[0].mxu0
    %6015 = vmatprep.mubr.f32.mxu0 0.0
    %v6016 = vand.u32 %v5434, 4294901760
    %v6017 = vsub.f32 %v5434, %v6016
    %6018 = vmatmul.mubr.f32.gmra.mrb[0].mxu0 %v6017
    %v6019 = vpop.f32.mrb[0].mxu0
    %v6020 = vadd.f32 %v5837, %v6019
    %v6021 = vpop.f32.mrb[0].mxu0
    %6022 = vmatprep.mubr.f32.mxu0 0.0
    %v6023 = vand.u32 %v5437, 4294901760
    %v6024 = vsub.f32 %v5437, %v6023
    %6025 = vmatmul.mubr.f32.gmra.mrb[0].mxu0 %v6024
    %v6026 = vpop.f32.mrb[0].mxu0
    %v6027 = vadd.f32 %v5843, %v6026
    %v6028 = vpop.f32.mrb[0].mxu0
    %6029 = vmatprep.mubr.f32.mxu0 0.0
    %v6030 = vand.u32 %v5440, 4294901760
    %v6031 = vsub.f32 %v5440, %v6030
    %6032 = vmatmul.mubr.f32.gmra.mrb[0].mxu0 %v6031
    %v6033 = vpop.f32.mrb[0].mxu0
    %v6034 = vadd.f32 %v5849, %v6033
    %v6035 = vpop.f32.mrb[0].mxu0
    %6036 = vdwg.mxu0
    %6037 = vmatprep.subr.mxu0 0.0
    %v6038 = vand.u32 %v1607, 4294901760
    %6039 = vmatpush1.msra.mxu0 %v6038
    %6040 = vmatprep.subr.mxu0 0.0
    %v6041 = vand.u32 %v1608, 4294901760
    %6042 = vmatpush1.msra.mxu0 %v6041
    %6043 = vmatprep.subr.mxu0 0.0
    %v6044 = vand.u32 %v1609, 4294901760
    %6045 = vmatpush1.msra.mxu0 %v6044
    %6046 = vmatprep.subr.mxu0 0.0
    %v6047 = vand.u32 %v1610, 4294901760
    %6048 = vmatpush1.msra.mxu0 %v6047
    %6049 = vmatprep.subr.mxu0 0.0
    %6050 = vmatpush1.msra.mxu0 0.0
    %6051 = vmatprep.subr.mxu0 0.0
    %6052 = vmatpush1.msra.mxu0 0.0
    %6053 = vmatprep.subr.mxu0 0.0
    %6054 = vmatpush1.msra.mxu0 0.0
    %6055 = vmatprep.subr.mxu0 0.0
    %6056 = vmatpush1.msra.mxu0 0.0
    %6057 = vmatprep.subr.mxu0 0.0
    %6058 = vmatpush1.msra.mxu0 0.0
    %6059 = vmatprep.subr.mxu0 0.0
    %6060 = vmatpush1.msra.mxu0 0.0
    %6061 = vmatprep.subr.mxu0 0.0
    %6062 = vmatpush1.msra.mxu0 0.0
    %6063 = vmatprep.subr.mxu0 0.0
    %6064 = vmatpush1.msra.mxu0 0.0
    %6065 = vmatprep.subr.mxu0 0.0
    %6066 = vmatpush1.msra.mxu0 0.0
    %6067 = vmatprep.subr.mxu0 0.0
    %6068 = vmatpush1.msra.mxu0 0.0
    %6069 = vmatprep.subr.mxu0 0.0
    %6070 = vmatpush1.msra.mxu0 0.0
    %6071 = vmatprep.subr.mxu0 0.0
    %6072 = vmatpush1.msra.mxu0 0.0
    %6073 = vmatprep.subr.mxu0 0.0
    %6074 = vmatpush1.msra.mxu0 0.0
    %6075 = vmatprep.subr.mxu0 0.0
    %6076 = vmatpush1.msra.mxu0 0.0
    %6077 = vmatprep.subr.mxu0 0.0
    %6078 = vmatpush1.msra.mxu0 0.0
    %6079 = vmatprep.subr.mxu0 0.0
    %6080 = vmatpush1.msra.mxu0 0.0
    %6081 = vmatprep.subr.mxu0 0.0
    %6082 = vmatpush1.msra.mxu0 0.0
    %6083 = vmatprep.subr.mxu0 0.0
    %6084 = vmatpush1.msra.mxu0 0.0
    %6085 = vmatprep.subr.mxu0 0.0
    %6086 = vmatpush1.msra.mxu0 0.0
    %6087 = vmatprep.subr.mxu0 0.0
    %6088 = vmatpush1.msra.mxu0 0.0
    %6089 = vmatprep.subr.mxu0 0.0
    %6090 = vmatpush1.msra.mxu0 0.0
    %6091 = vmatprep.subr.mxu0 0.0
    %6092 = vmatpush1.msra.mxu0 0.0
    %6093 = vmatprep.subr.mxu0 0.0
    %6094 = vmatpush1.msra.mxu0 0.0
    %6095 = vmatprep.subr.mxu0 0.0
    %6096 = vmatpush1.msra.mxu0 0.0
    %6097 = vmatprep.subr.mxu0 0.0
    %6098 = vmatpush1.msra.mxu0 0.0
    %6099 = vmatprep.subr.mxu0 0.0
    %6100 = vmatpush1.msra.mxu0 0.0
    %6101 = vmatprep.subr.mxu0 0.0
    %6102 = vmatpush1.msra.mxu0 0.0
    %6103 = vmatprep.subr.mxu0 0.0
    %6104 = vmatpush1.msra.mxu0 0.0
    %6105 = vmatprep.mubr.f32.mxu0 0.0
    %v6106 = vand.u32 %v5395, 4294901760
    %v6107 = vsub.f32 %v5395, %v6106
    %v6108 = vand.u32 %v6107, 4294901760
    %6109 = vmatmul.mubr.f32.gmra.mrb[0].mxu0 %v6108
    %v6110 = vpop.f32.mrb[0].mxu0
    %v6111 = vadd.f32 %v5929, %v6110
    %v6112 = vpop.f32.mrb[0].mxu0
    %6113 = vmatprep.mubr.f32.mxu0 0.0
    %v6114 = vand.u32 %v5398, 4294901760
    %v6115 = vsub.f32 %v5398, %v6114
    %v6116 = vand.u32 %v6115, 4294901760
    %6117 = vmatmul.mubr.f32.gmra.mrb[0].mxu0 %v6116
    %v6118 = vpop.f32.mrb[0].mxu0
    %v6119 = vadd.f32 %v5936, %v6118
    %v6120 = vpop.f32.mrb[0].mxu0
    %6121 = vmatprep.mubr.f32.mxu0 0.0
    %v6122 = vand.u32 %v5401, 4294901760
    %v6123 = vsub.f32 %v5401, %v6122
    %v6124 = vand.u32 %v6123, 4294901760
    %6125 = vmatmul.mubr.f32.gmra.mrb[0].mxu0 %v6124
    %v6126 = vpop.f32.mrb[0].mxu0
    %v6127 = vadd.f32 %v5943, %v6126
    %v6128 = vpop.f32.mrb[0].mxu0
    %6129 = vmatprep.mubr.f32.mxu0 0.0
    %v6130 = vand.u32 %v5404, 4294901760
    %v6131 = vsub.f32 %v5404, %v6130
    %v6132 = vand.u32 %v6131, 4294901760
    %6133 = vmatmul.mubr.f32.gmra.mrb[0].mxu0 %v6132
    %v6134 = vpop.f32.mrb[0].mxu0
    %v6135 = vadd.f32 %v5950, %v6134
    %v6136 = vpop.f32.mrb[0].mxu0
    %6137 = vmatprep.mubr.f32.mxu0 0.0
    %v6138 = vand.u32 %v5407, 4294901760
    %v6139 = vsub.f32 %v5407, %v6138
    %v6140 = vand.u32 %v6139, 4294901760
    %6141 = vmatmul.mubr.f32.gmra.mrb[0].mxu0 %v6140
    %v6142 = vpop.f32.mrb[0].mxu0
    %v6143 = vadd.f32 %v5957, %v6142
    %v6144 = vpop.f32.mrb[0].mxu0
    %6145 = vmatprep.mubr.f32.mxu0 0.0
    %v6146 = vand.u32 %v5410, 4294901760
    %v6147 = vsub.f32 %v5410, %v6146
    %v6148 = vand.u32 %v6147, 4294901760
    %6149 = vmatmul.mubr.f32.gmra.mrb[0].mxu0 %v6148
    %v6150 = vpop.f32.mrb[0].mxu0
    %v6151 = vadd.f32 %v5964, %v6150
    %v6152 = vpop.f32.mrb[0].mxu0
    %6153 = vmatprep.mubr.f32.mxu0 0.0
    %v6154 = vand.u32 %v5413, 4294901760
    %v6155 = vsub.f32 %v5413, %v6154
    %v6156 = vand.u32 %v6155, 4294901760
    %6157 = vmatmul.mubr.f32.gmra.mrb[0].mxu0 %v6156
    %v6158 = vpop.f32.mrb[0].mxu0
    %v6159 = vadd.f32 %v5971, %v6158
    %v6160 = vpop.f32.mrb[0].mxu0
    %6161 = vmatprep.mubr.f32.mxu0 0.0
    %v6162 = vand.u32 %v5416, 4294901760
    %v6163 = vsub.f32 %v5416, %v6162
    %v6164 = vand.u32 %v6163, 4294901760
    %6165 = vmatmul.mubr.f32.gmra.mrb[0].mxu0 %v6164
    %v6166 = vpop.f32.mrb[0].mxu0
    %v6167 = vadd.f32 %v5978, %v6166
    %v6168 = vpop.f32.mrb[0].mxu0
    %6169 = vmatprep.mubr.f32.mxu0 0.0
    %v6170 = vand.u32 %v5419, 4294901760
    %v6171 = vsub.f32 %v5419, %v6170
    %v6172 = vand.u32 %v6171, 4294901760
    %6173 = vmatmul.mubr.f32.gmra.mrb[0].mxu0 %v6172
    %v6174 = vpop.f32.mrb[0].mxu0
    %v6175 = vadd.f32 %v5985, %v6174
    %v6176 = vpop.f32.mrb[0].mxu0
    %6177 = vmatprep.mubr.f32.mxu0 0.0
    %v6178 = vand.u32 %v5422, 4294901760
    %v6179 = vsub.f32 %v5422, %v6178
    %v6180 = vand.u32 %v6179, 4294901760
    %6181 = vmatmul.mubr.f32.gmra.mrb[0].mxu0 %v6180
    %v6182 = vpop.f32.mrb[0].mxu0
    %v6183 = vadd.f32 %v5992, %v6182
    %v6184 = vpop.f32.mrb[0].mxu0
    %6185 = vmatprep.mubr.f32.mxu0 0.0
    %v6186 = vand.u32 %v5425, 4294901760
    %v6187 = vsub.f32 %v5425, %v6186
    %v6188 = vand.u32 %v6187, 4294901760
    %6189 = vmatmul.mubr.f32.gmra.mrb[0].mxu0 %v6188
    %v6190 = vpop.f32.mrb[0].mxu0
    %v6191 = vadd.f32 %v5999, %v6190
    %v6192 = vpop.f32.mrb[0].mxu0
    %6193 = vmatprep.mubr.f32.mxu0 0.0
    %v6194 = vand.u32 %v5428, 4294901760
    %v6195 = vsub.f32 %v5428, %v6194
    %v6196 = vand.u32 %v6195, 4294901760
    %6197 = vmatmul.mubr.f32.gmra.mrb[0].mxu0 %v6196
    %v6198 = vpop.f32.mrb[0].mxu0
    %v6199 = vadd.f32 %v6006, %v6198
    %v6200 = vpop.f32.mrb[0].mxu0
    %6201 = vmatprep.mubr.f32.mxu0 0.0
    %v6202 = vand.u32 %v5431, 4294901760
    %v6203 = vsub.f32 %v5431, %v6202
    %v6204 = vand.u32 %v6203, 4294901760
    %6205 = vmatmul.mubr.f32.gmra.mrb[0].mxu0 %v6204
    %v6206 = vpop.f32.mrb[0].mxu0
    %v6207 = vadd.f32 %v6013, %v6206
    %v6208 = vpop.f32.mrb[0].mxu0
    %6209 = vmatprep.mubr.f32.mxu0 0.0
    %v6210 = vand.u32 %v5434, 4294901760
    %v6211 = vsub.f32 %v5434, %v6210
    %v6212 = vand.u32 %v6211, 4294901760
    %6213 = vmatmul.mubr.f32.gmra.mrb[0].mxu0 %v6212
    %v6214 = vpop.f32.mrb[0].mxu0
    %v6215 = vadd.f32 %v6020, %v6214
    %v6216 = vpop.f32.mrb[0].mxu0
    %6217 = vmatprep.mubr.f32.mxu0 0.0
    %v6218 = vand.u32 %v5437, 4294901760
    %v6219 = vsub.f32 %v5437, %v6218
    %v6220 = vand.u32 %v6219, 4294901760
    %6221 = vmatmul.mubr.f32.gmra.mrb[0].mxu0 %v6220
    %v6222 = vpop.f32.mrb[0].mxu0
    %v6223 = vadd.f32 %v6027, %v6222
    %v6224 = vpop.f32.mrb[0].mxu0
    %6225 = vmatprep.mubr.f32.mxu0 0.0
    %v6226 = vand.u32 %v5440, 4294901760
    %v6227 = vsub.f32 %v5440, %v6226
    %v6228 = vand.u32 %v6227, 4294901760
    %6229 = vmatmul.mubr.f32.gmra.mrb[0].mxu0 %v6228
    %v6230 = vpop.f32.mrb[0].mxu0
    %v6231 = vadd.f32 %v6034, %v6230
    %v6232 = vpop.f32.mrb[0].mxu0
    %6233 = vdwg.mxu0
    %6234 = vmatprep.subr.mxu0 0.0
    %v6235 = vand.u32 %v1607, 4294901760
    %v6236 = vsub.f32 %v1607, %v6235
    %v6237 = vand.u32 %v6236, 4294901760
    %6238 = vmatpush1.msra.mxu0 %v6237
    %6239 = vmatprep.subr.mxu0 0.0
    %v6240 = vand.u32 %v1608, 4294901760
    %v6241 = vsub.f32 %v1608, %v6240
    %v6242 = vand.u32 %v6241, 4294901760
    %6243 = vmatpush1.msra.mxu0 %v6242
    %6244 = vmatprep.subr.mxu0 0.0
    %v6245 = vand.u32 %v1609, 4294901760
    %v6246 = vsub.f32 %v1609, %v6245
    %v6247 = vand.u32 %v6246, 4294901760
    %6248 = vmatpush1.msra.mxu0 %v6247
    %6249 = vmatprep.subr.mxu0 0.0
    %v6250 = vand.u32 %v1610, 4294901760
    %v6251 = vsub.f32 %v1610, %v6250
    %v6252 = vand.u32 %v6251, 4294901760
    %6253 = vmatpush1.msra.mxu0 %v6252
    %6254 = vmatprep.subr.mxu0 0.0
    %6255 = vmatpush1.msra.mxu0 0.0
    %6256 = vmatprep.subr.mxu0 0.0
    %6257 = vmatpush1.msra.mxu0 0.0
    %6258 = vmatprep.subr.mxu0 0.0
    %6259 = vmatpush1.msra.mxu0 0.0
    %6260 = vmatprep.subr.mxu0 0.0
    %6261 = vmatpush1.msra.mxu0 0.0
    %6262 = vmatprep.subr.mxu0 0.0
    %6263 = vmatpush1.msra.mxu0 0.0
    %6264 = vmatprep.subr.mxu0 0.0
    %6265 = vmatpush1.msra.mxu0 0.0
    %6266 = vmatprep.subr.mxu0 0.0
    %6267 = vmatpush1.msra.mxu0 0.0
    %6268 = vmatprep.subr.mxu0 0.0
    %6269 = vmatpush1.msra.mxu0 0.0
    %6270 = vmatprep.subr.mxu0 0.0
    %6271 = vmatpush1.msra.mxu0 0.0
    %6272 = vmatprep.subr.mxu0 0.0
    %6273 = vmatpush1.msra.mxu0 0.0
    %6274 = vmatprep.subr.mxu0 0.0
    %6275 = vmatpush1.msra.mxu0 0.0
    %6276 = vmatprep.subr.mxu0 0.0
    %6277 = vmatpush1.msra.mxu0 0.0
    %6278 = vmatprep.subr.mxu0 0.0
    %6279 = vmatpush1.msra.mxu0 0.0
    %6280 = vmatprep.subr.mxu0 0.0
    %6281 = vmatpush1.msra.mxu0 0.0
    %6282 = vmatprep.subr.mxu0 0.0
    %6283 = vmatpush1.msra.mxu0 0.0
    %6284 = vmatprep.subr.mxu0 0.0
    %6285 = vmatpush1.msra.mxu0 0.0
    %6286 = vmatprep.subr.mxu0 0.0
    %6287 = vmatpush1.msra.mxu0 0.0
    %6288 = vmatprep.subr.mxu0 0.0
    %6289 = vmatpush1.msra.mxu0 0.0
    %6290 = vmatprep.subr.mxu0 0.0
    %6291 = vmatpush1.msra.mxu0 0.0
    %6292 = vmatprep.subr.mxu0 0.0
    %6293 = vmatpush1.msra.mxu0 0.0
    %6294 = vmatprep.subr.mxu0 0.0
    %6295 = vmatpush1.msra.mxu0 0.0
    %6296 = vmatprep.subr.mxu0 0.0
    %6297 = vmatpush1.msra.mxu0 0.0
    %6298 = vmatprep.subr.mxu0 0.0
    %6299 = vmatpush1.msra.mxu0 0.0
    %6300 = vmatprep.subr.mxu0 0.0
    %6301 = vmatpush1.msra.mxu0 0.0
    %6302 = vmatprep.subr.mxu0 0.0
    %6303 = vmatpush1.msra.mxu0 0.0
    %6304 = vmatprep.subr.mxu0 0.0
    %6305 = vmatpush1.msra.mxu0 0.0
    %6306 = vmatprep.subr.mxu0 0.0
    %6307 = vmatpush1.msra.mxu0 0.0
    %6308 = vmatprep.subr.mxu0 0.0
    %6309 = vmatpush1.msra.mxu0 0.0
    %6310 = vmatprep.mubr.f32.mxu0 0.0
    %v6311 = vand.u32 %v5395, 4294901760
    %6312 = vmatmul.mubr.f32.gmra.mrb[0].mxu0 %v6311
    %v6313 = vpop.f32.mrb[0].mxu0
    %v6314 = vadd.f32 %v6111, %v6313
    %v6315 = vpop.f32.mrb[0].mxu0
    %6316 = vmatprep.mubr.f32.mxu0 0.0
    %v6317 = vand.u32 %v5398, 4294901760
    %6318 = vmatmul.mubr.f32.gmra.mrb[0].mxu0 %v6317
    %v6319 = vpop.f32.mrb[0].mxu0
    %v6320 = vadd.f32 %v6119, %v6319
    %v6321 = vpop.f32.mrb[0].mxu0
    %6322 = vmatprep.mubr.f32.mxu0 0.0
    %v6323 = vand.u32 %v5401, 4294901760
    %6324 = vmatmul.mubr.f32.gmra.mrb[0].mxu0 %v6323
    %v6325 = vpop.f32.mrb[0].mxu0
    %v6326 = vadd.f32 %v6127, %v6325
    %v6327 = vpop.f32.mrb[0].mxu0
    %6328 = vmatprep.mubr.f32.mxu0 0.0
    %v6329 = vand.u32 %v5404, 4294901760
    %6330 = vmatmul.mubr.f32.gmra.mrb[0].mxu0 %v6329
    %v6331 = vpop.f32.mrb[0].mxu0
    %v6332 = vadd.f32 %v6135, %v6331
    %v6333 = vpop.f32.mrb[0].mxu0
    %6334 = vmatprep.mubr.f32.mxu0 0.0
    %v6335 = vand.u32 %v5407, 4294901760
    %6336 = vmatmul.mubr.f32.gmra.mrb[0].mxu0 %v6335
    %v6337 = vpop.f32.mrb[0].mxu0
    %v6338 = vadd.f32 %v6143, %v6337
    %v6339 = vpop.f32.mrb[0].mxu0
    %6340 = vmatprep.mubr.f32.mxu0 0.0
    %v6341 = vand.u32 %v5410, 4294901760
    %6342 = vmatmul.mubr.f32.gmra.mrb[0].mxu0 %v6341
    %v6343 = vpop.f32.mrb[0].mxu0
    %v6344 = vadd.f32 %v6151, %v6343
    %v6345 = vpop.f32.mrb[0].mxu0
    %6346 = vmatprep.mubr.f32.mxu0 0.0
    %v6347 = vand.u32 %v5413, 4294901760
    %6348 = vmatmul.mubr.f32.gmra.mrb[0].mxu0 %v6347
    %v6349 = vpop.f32.mrb[0].mxu0
    %v6350 = vadd.f32 %v6159, %v6349
    %v6351 = vpop.f32.mrb[0].mxu0
    %6352 = vmatprep.mubr.f32.mxu0 0.0
    %v6353 = vand.u32 %v5416, 4294901760
    %6354 = vmatmul.mubr.f32.gmra.mrb[0].mxu0 %v6353
    %v6355 = vpop.f32.mrb[0].mxu0
    %v6356 = vadd.f32 %v6167, %v6355
    %v6357 = vpop.f32.mrb[0].mxu0
    %6358 = vmatprep.mubr.f32.mxu0 0.0
    %v6359 = vand.u32 %v5419, 4294901760
    %6360 = vmatmul.mubr.f32.gmra.mrb[0].mxu0 %v6359
    %v6361 = vpop.f32.mrb[0].mxu0
    %v6362 = vadd.f32 %v6175, %v6361
    %v6363 = vpop.f32.mrb[0].mxu0
    %6364 = vmatprep.mubr.f32.mxu0 0.0
    %v6365 = vand.u32 %v5422, 4294901760
    %6366 = vmatmul.mubr.f32.gmra.mrb[0].mxu0 %v6365
    %v6367 = vpop.f32.mrb[0].mxu0
    %v6368 = vadd.f32 %v6183, %v6367
    %v6369 = vpop.f32.mrb[0].mxu0
    %6370 = vmatprep.mubr.f32.mxu0 0.0
    %v6371 = vand.u32 %v5425, 4294901760
    %6372 = vmatmul.mubr.f32.gmra.mrb[0].mxu0 %v6371
    %v6373 = vpop.f32.mrb[0].mxu0
    %v6374 = vadd.f32 %v6191, %v6373
    %v6375 = vpop.f32.mrb[0].mxu0
    %6376 = vmatprep.mubr.f32.mxu0 0.0
    %v6377 = vand.u32 %v5428, 4294901760
    %6378 = vmatmul.mubr.f32.gmra.mrb[0].mxu0 %v6377
    %v6379 = vpop.f32.mrb[0].mxu0
    %v6380 = vadd.f32 %v6199, %v6379
    %v6381 = vpop.f32.mrb[0].mxu0
    %6382 = vmatprep.mubr.f32.mxu0 0.0
    %v6383 = vand.u32 %v5431, 4294901760
    %6384 = vmatmul.mubr.f32.gmra.mrb[0].mxu0 %v6383
    %v6385 = vpop.f32.mrb[0].mxu0
    %v6386 = vadd.f32 %v6207, %v6385
    %v6387 = vpop.f32.mrb[0].mxu0
    %6388 = vmatprep.mubr.f32.mxu0 0.0
    %v6389 = vand.u32 %v5434, 4294901760
    %6390 = vmatmul.mubr.f32.gmra.mrb[0].mxu0 %v6389
    %v6391 = vpop.f32.mrb[0].mxu0
    %v6392 = vadd.f32 %v6215, %v6391
    %v6393 = vpop.f32.mrb[0].mxu0
    %6394 = vmatprep.mubr.f32.mxu0 0.0
    %v6395 = vand.u32 %v5437, 4294901760
    %6396 = vmatmul.mubr.f32.gmra.mrb[0].mxu0 %v6395
    %v6397 = vpop.f32.mrb[0].mxu0
    %v6398 = vadd.f32 %v6223, %v6397
    %v6399 = vpop.f32.mrb[0].mxu0
    %6400 = vmatprep.mubr.f32.mxu0 0.0
    %v6401 = vand.u32 %v5440, 4294901760
    %6402 = vmatmul.mubr.f32.gmra.mrb[0].mxu0 %v6401
    %v6403 = vpop.f32.mrb[0].mxu0
    %v6404 = vadd.f32 %v6231, %v6403
    %v6405 = vpop.f32.mrb[0].mxu0
    %6406 = vdwg.mxu0
    %6407 = vmatprep.subr.mxu0 0.0
    %v6408 = vand.u32 %v1607, 4294901760
    %6409 = vmatpush1.msra.mxu0 %v6408
    %6410 = vmatprep.subr.mxu0 0.0
    %v6411 = vand.u32 %v1608, 4294901760
    %6412 = vmatpush1.msra.mxu0 %v6411
    %6413 = vmatprep.subr.mxu0 0.0
    %v6414 = vand.u32 %v1609, 4294901760
    %6415 = vmatpush1.msra.mxu0 %v6414
    %6416 = vmatprep.subr.mxu0 0.0
    %v6417 = vand.u32 %v1610, 4294901760
    %6418 = vmatpush1.msra.mxu0 %v6417
    %6419 = vmatprep.subr.mxu0 0.0
    %6420 = vmatpush1.msra.mxu0 0.0
    %6421 = vmatprep.subr.mxu0 0.0
    %6422 = vmatpush1.msra.mxu0 0.0
    %6423 = vmatprep.subr.mxu0 0.0
    %6424 = vmatpush1.msra.mxu0 0.0
    %6425 = vmatprep.subr.mxu0 0.0
    %6426 = vmatpush1.msra.mxu0 0.0
    %6427 = vmatprep.subr.mxu0 0.0
    %6428 = vmatpush1.msra.mxu0 0.0
    %6429 = vmatprep.subr.mxu0 0.0
    %6430 = vmatpush1.msra.mxu0 0.0
    %6431 = vmatprep.subr.mxu0 0.0
    %6432 = vmatpush1.msra.mxu0 0.0
    %6433 = vmatprep.subr.mxu0 0.0
    %6434 = vmatpush1.msra.mxu0 0.0
    %6435 = vmatprep.subr.mxu0 0.0
    %6436 = vmatpush1.msra.mxu0 0.0
    %6437 = vmatprep.subr.mxu0 0.0
    %6438 = vmatpush1.msra.mxu0 0.0
    %6439 = vmatprep.subr.mxu0 0.0
    %6440 = vmatpush1.msra.mxu0 0.0
    %6441 = vmatprep.subr.mxu0 0.0
    %6442 = vmatpush1.msra.mxu0 0.0
    %6443 = vmatprep.subr.mxu0 0.0
    %6444 = vmatpush1.msra.mxu0 0.0
    %6445 = vmatprep.subr.mxu0 0.0
    %6446 = vmatpush1.msra.mxu0 0.0
    %6447 = vmatprep.subr.mxu0 0.0
    %6448 = vmatpush1.msra.mxu0 0.0
    %6449 = vmatprep.subr.mxu0 0.0
    %6450 = vmatpush1.msra.mxu0 0.0
    %6451 = vmatprep.subr.mxu0 0.0
    %6452 = vmatpush1.msra.mxu0 0.0
    %6453 = vmatprep.subr.mxu0 0.0
    %6454 = vmatpush1.msra.mxu0 0.0
    %6455 = vmatprep.subr.mxu0 0.0
    %6456 = vmatpush1.msra.mxu0 0.0
    %6457 = vmatprep.subr.mxu0 0.0
    %6458 = vmatpush1.msra.mxu0 0.0
    %6459 = vmatprep.subr.mxu0 0.0
    %6460 = vmatpush1.msra.mxu0 0.0
    %6461 = vmatprep.subr.mxu0 0.0
    %6462 = vmatpush1.msra.mxu0 0.0
    %6463 = vmatprep.subr.mxu0 0.0
    %6464 = vmatpush1.msra.mxu0 0.0
    %6465 = vmatprep.subr.mxu0 0.0
    %6466 = vmatpush1.msra.mxu0 0.0
    %6467 = vmatprep.subr.mxu0 0.0
    %6468 = vmatpush1.msra.mxu0 0.0
    %6469 = vmatprep.subr.mxu0 0.0
    %6470 = vmatpush1.msra.mxu0 0.0
    %6471 = vmatprep.subr.mxu0 0.0
    %6472 = vmatpush1.msra.mxu0 0.0
    %6473 = vmatprep.subr.mxu0 0.0
    %6474 = vmatpush1.msra.mxu0 0.0
    %6475 = vmatprep.mubr.f32.mxu0 0.0
    %v6476 = vand.u32 %v5395, 4294901760
    %6477 = vmatmul.mubr.f32.gmra.mrb[0].mxu0 %v6476
    %v6478 = vpop.f32.mrb[0].mxu0
    %v6479 = vadd.f32 %v6314, %v6478
    %v6480 = vpop.f32.mrb[0].mxu0
    %6481 = vmatprep.mubr.f32.mxu0 0.0
    %v6482 = vand.u32 %v5398, 4294901760
    %6483 = vmatmul.mubr.f32.gmra.mrb[0].mxu0 %v6482
    %v6484 = vpop.f32.mrb[0].mxu0
    %v6485 = vadd.f32 %v6320, %v6484
    %v6486 = vpop.f32.mrb[0].mxu0
    %6487 = vmatprep.mubr.f32.mxu0 0.0
    %v6488 = vand.u32 %v5401, 4294901760
    %6489 = vmatmul.mubr.f32.gmra.mrb[0].mxu0 %v6488
    %v6490 = vpop.f32.mrb[0].mxu0
    %v6491 = vadd.f32 %v6326, %v6490
    %v6492 = vpop.f32.mrb[0].mxu0
    %6493 = vmatprep.mubr.f32.mxu0 0.0
    %v6494 = vand.u32 %v5404, 4294901760
    %6495 = vmatmul.mubr.f32.gmra.mrb[0].mxu0 %v6494
    %v6496 = vpop.f32.mrb[0].mxu0
    %v6497 = vadd.f32 %v6332, %v6496
    %v6498 = vpop.f32.mrb[0].mxu0
    %6499 = vmatprep.mubr.f32.mxu0 0.0
    %v6500 = vand.u32 %v5407, 4294901760
    %6501 = vmatmul.mubr.f32.gmra.mrb[0].mxu0 %v6500
    %v6502 = vpop.f32.mrb[0].mxu0
    %v6503 = vadd.f32 %v6338, %v6502
    %v6504 = vpop.f32.mrb[0].mxu0
    %6505 = vmatprep.mubr.f32.mxu0 0.0
    %v6506 = vand.u32 %v5410, 4294901760
    %6507 = vmatmul.mubr.f32.gmra.mrb[0].mxu0 %v6506
    %v6508 = vpop.f32.mrb[0].mxu0
    %v6509 = vadd.f32 %v6344, %v6508
    %v6510 = vpop.f32.mrb[0].mxu0
    %6511 = vmatprep.mubr.f32.mxu0 0.0
    %v6512 = vand.u32 %v5413, 4294901760
    %6513 = vmatmul.mubr.f32.gmra.mrb[0].mxu0 %v6512
    %v6514 = vpop.f32.mrb[0].mxu0
    %v6515 = vadd.f32 %v6350, %v6514
    %v6516 = vpop.f32.mrb[0].mxu0
    %6517 = vmatprep.mubr.f32.mxu0 0.0
    %v6518 = vand.u32 %v5416, 4294901760
    %6519 = vmatmul.mubr.f32.gmra.mrb[0].mxu0 %v6518
    %v6520 = vpop.f32.mrb[0].mxu0
    %v6521 = vadd.f32 %v6356, %v6520
    %v6522 = vpop.f32.mrb[0].mxu0
    %6523 = vmatprep.mubr.f32.mxu0 0.0
    %v6524 = vand.u32 %v5419, 4294901760
    %6525 = vmatmul.mubr.f32.gmra.mrb[0].mxu0 %v6524
    %v6526 = vpop.f32.mrb[0].mxu0
    %v6527 = vadd.f32 %v6362, %v6526
    %v6528 = vpop.f32.mrb[0].mxu0
    %6529 = vmatprep.mubr.f32.mxu0 0.0
    %v6530 = vand.u32 %v5422, 4294901760
    %6531 = vmatmul.mubr.f32.gmra.mrb[0].mxu0 %v6530
    %v6532 = vpop.f32.mrb[0].mxu0
    %v6533 = vadd.f32 %v6368, %v6532
    %v6534 = vpop.f32.mrb[0].mxu0
    %6535 = vmatprep.mubr.f32.mxu0 0.0
    %v6536 = vand.u32 %v5425, 4294901760
    %6537 = vmatmul.mubr.f32.gmra.mrb[0].mxu0 %v6536
    %v6538 = vpop.f32.mrb[0].mxu0
    %v6539 = vadd.f32 %v6374, %v6538
    %v6540 = vpop.f32.mrb[0].mxu0
    %6541 = vmatprep.mubr.f32.mxu0 0.0
    %v6542 = vand.u32 %v5428, 4294901760
    %6543 = vmatmul.mubr.f32.gmra.mrb[0].mxu0 %v6542
    %v6544 = vpop.f32.mrb[0].mxu0
    %v6545 = vadd.f32 %v6380, %v6544
    %v6546 = vpop.f32.mrb[0].mxu0
    %6547 = vmatprep.mubr.f32.mxu0 0.0
    %v6548 = vand.u32 %v5431, 4294901760
    %6549 = vmatmul.mubr.f32.gmra.mrb[0].mxu0 %v6548
    %v6550 = vpop.f32.mrb[0].mxu0
    %v6551 = vadd.f32 %v6386, %v6550
    %v6552 = vpop.f32.mrb[0].mxu0
    %6553 = vmatprep.mubr.f32.mxu0 0.0
    %v6554 = vand.u32 %v5434, 4294901760
    %6555 = vmatmul.mubr.f32.gmra.mrb[0].mxu0 %v6554
    %v6556 = vpop.f32.mrb[0].mxu0
    %v6557 = vadd.f32 %v6392, %v6556
    %v6558 = vpop.f32.mrb[0].mxu0
    %6559 = vmatprep.mubr.f32.mxu0 0.0
    %v6560 = vand.u32 %v5437, 4294901760
    %6561 = vmatmul.mubr.f32.gmra.mrb[0].mxu0 %v6560
    %v6562 = vpop.f32.mrb[0].mxu0
    %v6563 = vadd.f32 %v6398, %v6562
    %v6564 = vpop.f32.mrb[0].mxu0
    %6565 = vmatprep.mubr.f32.mxu0 0.0
    %v6566 = vand.u32 %v5440, 4294901760
    %6567 = vmatmul.mubr.f32.gmra.mrb[0].mxu0 %v6566
    %v6568 = vpop.f32.mrb[0].mxu0
    %v6569 = vadd.f32 %v6404, %v6568
    %v6570 = vpop.f32.mrb[0].mxu0
    %6571 = vdwg.mxu0
    %v6572 = vrsqrt.pop %v6479
    %v6573 = vrsqrt.pop %v6485
    %v6574 = vrsqrt.pop %v6491
    %v6575 = vrsqrt.pop %v6497
    %v6576 = vrsqrt.pop %v6503
    %v6577 = vrsqrt.pop %v6509
    %v6578 = vrsqrt.pop %v6515
    %v6579 = vrsqrt.pop %v6521
    %v6580 = vrsqrt.pop %v6527
    %v6581 = vrsqrt.pop %v6533
    %v6582 = vrsqrt.pop %v6539
    %v6583 = vrsqrt.pop %v6545
    %v6584 = vrsqrt.pop %v6551
    %v6585 = vrsqrt.pop %v6557
    %v6586 = vrsqrt.pop %v6563
    %v6587 = vrsqrt.pop %v6569
    %v6588 = vmul.f32 %v4076, %v6572
    %v6589 = vmul.f32 %v4077, %v6573
    %v6590 = vmul.f32 %v4078, %v6574
    %v6591 = vmul.f32 %v4079, %v6575
    %v6592 = vmul.f32 %v4080, %v6576
    %v6593 = vmul.f32 %v4081, %v6577
    %v6594 = vmul.f32 %v4082, %v6578
    %v6595 = vmul.f32 %v4083, %v6579
    %v6596 = vmul.f32 %v4084, %v6580
    %v6597 = vmul.f32 %v4085, %v6581
    %v6598 = vmul.f32 %v4086, %v6582
    %v6599 = vmul.f32 %v4087, %v6583
    %v6600 = vmul.f32 %v4088, %v6584
    %v6601 = vmul.f32 %v4089, %v6585
    %v6602 = vmul.f32 %v4090, %v6586
    %v6603 = vmul.f32 %v4091, %v6587
    %v6604 = vld [vmem:[%s5] sm:$0x1]
    %v6606 = vlaneseq
    %v6607 = vshrl.u32 %v6606, 7
    %v6608 = vsub.s32 0, %v6607
    %v6609 = vrot.slane %v6604, %v6608
    %v6611 = vmul.f32 %v6588, %v6609
    %v6612 = vmul.f32 %v6589, %v6609
    %v6613 = vmul.f32 %v6590, %v6609
    %v6614 = vmul.f32 %v6591, %v6609
    %v6615 = vmul.f32 %v6592, %v6609
    %v6616 = vmul.f32 %v6593, %v6609
    %v6617 = vmul.f32 %v6594, %v6609
    %v6618 = vmul.f32 %v6595, %v6609
    %v6619 = vmul.f32 %v6596, %v6609
    %v6620 = vmul.f32 %v6597, %v6609
    %v6621 = vmul.f32 %v6598, %v6609
    %v6622 = vmul.f32 %v6599, %v6609
    %v6623 = vmul.f32 %v6600, %v6609
    %v6624 = vmul.f32 %v6601, %v6609
    %v6625 = vmul.f32 %v6602, %v6609
    %v6626 = vmul.f32 %v6603, %v6609
    %v6627 = vld [vmem:[%s6] sm:$0x1]
    %v6629 = vlaneseq
    %v6630 = vshrl.u32 %v6629, 7
    %v6631 = vsub.s32 0, %v6630
    %v6632 = vrot.slane %v6627, %v6631
    %v6634 = vadd.f32 %v6611, %v6632
    %v6635 = vadd.f32 %v6612, %v6632
    %v6636 = vadd.f32 %v6613, %v6632
    %v6637 = vadd.f32 %v6614, %v6632
    %v6638 = vadd.f32 %v6615, %v6632
    %v6639 = vadd.f32 %v6616, %v6632
    %v6640 = vadd.f32 %v6617, %v6632
    %v6641 = vadd.f32 %v6618, %v6632
    %v6642 = vadd.f32 %v6619, %v6632
    %v6643 = vadd.f32 %v6620, %v6632
    %v6644 = vadd.f32 %v6621, %v6632
    %v6645 = vadd.f32 %v6622, %v6632
    %v6646 = vadd.f32 %v6623, %v6632
    %v6647 = vadd.f32 %v6624, %v6632
    %v6648 = vadd.f32 %v6625, %v6632
    %v6649 = vadd.f32 %v6626, %v6632
    %v6650 = vmax.f32 %v6634, 0.0
    %v6651 = vmax.f32 %v6635, 0.0
    %v6652 = vmax.f32 %v6636, 0.0
    %v6653 = vmax.f32 %v6637, 0.0
    %v6654 = vmax.f32 %v6638, 0.0
    %v6655 = vmax.f32 %v6639, 0.0
    %v6656 = vmax.f32 %v6640, 0.0
    %v6657 = vmax.f32 %v6641, 0.0
    %v6658 = vmax.f32 %v6642, 0.0
    %v6659 = vmax.f32 %v6643, 0.0
    %v6660 = vmax.f32 %v6644, 0.0
    %v6661 = vmax.f32 %v6645, 0.0
    %v6662 = vmax.f32 %v6646, 0.0
    %v6663 = vmax.f32 %v6647, 0.0
    %v6664 = vmax.f32 %v6648, 0.0
    %v6665 = vmax.f32 %v6649, 0.0
    %v6666 = vld [vmem:[%s4] sm:$0xff]
    %v6667 = vld [vmem:[%s4 + $0x8] sm:$0xff]
    %v6668 = vld [vmem:[%s4 + $0x10] sm:$0xff]
    %v6669 = vld [vmem:[%s4 + $0x18] sm:$0xff]
    %v6670 = vld [vmem:[%s4 + $0x20] sm:$0xff]
    %v6671 = vld [vmem:[%s4 + $0x28] sm:$0xff]
    %v6672 = vld [vmem:[%s4 + $0x30] sm:$0xff]
    %v6673 = vld [vmem:[%s4 + $0x38] sm:$0xff]
    %v6674 = vld [vmem:[%s4 + $0x40] sm:$0xff]
    %v6675 = vld [vmem:[%s4 + $0x48] sm:$0xff]
    %v6676 = vld [vmem:[%s4 + $0x50] sm:$0xff]
    %v6677 = vld [vmem:[%s4 + $0x58] sm:$0xff]
    %v6678 = vld [vmem:[%s4 + $0x60] sm:$0xff]
    %v6679 = vld [vmem:[%s4 + $0x68] sm:$0xff]
    %v6680 = vld [vmem:[%s4 + $0x70] sm:$0xff]
    %v6681 = vld [vmem:[%s4 + $0x78] sm:$0xff]
    %v6682 = vld [vmem:[%s4 + $0x80] sm:$0xff]
    %v6683 = vld [vmem:[%s4 + $0x88] sm:$0xff]
    %v6684 = vld [vmem:[%s4 + $0x90] sm:$0xff]
    %v6685 = vld [vmem:[%s4 + $0x98] sm:$0xff]
    %v6686 = vld [vmem:[%s4 + $0xa0] sm:$0xff]
    %v6687 = vld [vmem:[%s4 + $0xa8] sm:$0xff]
    %v6688 = vld [vmem:[%s4 + $0xb0] sm:$0xff]
    %v6689 = vld [vmem:[%s4 + $0xb8] sm:$0xff]
    %v6690 = vld [vmem:[%s4 + $0xc0] sm:$0xff]
    %v6691 = vld [vmem:[%s4 + $0xc8] sm:$0xff]
    %v6692 = vld [vmem:[%s4 + $0xd0] sm:$0xff]
    %v6693 = vld [vmem:[%s4 + $0xd8] sm:$0xff]
    %v6694 = vld [vmem:[%s4 + $0xe0] sm:$0xff]
    %v6695 = vld [vmem:[%s4 + $0xe8] sm:$0xff]
    %v6696 = vld [vmem:[%s4 + $0xf0] sm:$0xff]
    %v6697 = vld [vmem:[%s4 + $0xf8] sm:$0xff]
    %v6698 = vld [vmem:[%s4 + $0x100] sm:$0xff]
    %v6699 = vld [vmem:[%s4 + $0x108] sm:$0xff]
    %v6700 = vld [vmem:[%s4 + $0x110] sm:$0xff]
    %v6701 = vld [vmem:[%s4 + $0x118] sm:$0xff]
    %6702 = vmatprep.subr.mxu0 0.0
    %6703 = vmatpush1.msra.mxu0 %v6650
    %6704 = vmatprep.subr.mxu0 0.0
    %6705 = vmatpush1.msra.mxu0 %v6651
    %6706 = vmatprep.subr.mxu0 0.0
    %6707 = vmatpush1.msra.mxu0 %v6652
    %6708 = vmatprep.subr.mxu0 0.0
    %6709 = vmatpush1.msra.mxu0 %v6653
    %6710 = vmatprep.subr.mxu0 0.0
    %6711 = vmatpush1.msra.mxu0 %v6654
    %6712 = vmatprep.subr.mxu0 0.0
    %6713 = vmatpush1.msra.mxu0 %v6655
    %6714 = vmatprep.subr.mxu0 0.0
    %6715 = vmatpush1.msra.mxu0 %v6656
    %6716 = vmatprep.subr.mxu0 0.0
    %6717 = vmatpush1.msra.mxu0 %v6657
    %6718 = vmatprep.subr.mxu0 0.0
    %6719 = vmatpush1.msra.mxu0 %v6658
    %6720 = vmatprep.subr.mxu0 0.0
    %6721 = vmatpush1.msra.mxu0 %v6659
    %6722 = vmatprep.subr.mxu0 0.0
    %6723 = vmatpush1.msra.mxu0 %v6660
    %6724 = vmatprep.subr.mxu0 0.0
    %6725 = vmatpush1.msra.mxu0 %v6661
    %6726 = vmatprep.subr.mxu0 0.0
    %6727 = vmatpush1.msra.mxu0 %v6662
    %6728 = vmatprep.subr.mxu0 0.0
    %6729 = vmatpush1.msra.mxu0 %v6663
    %6730 = vmatprep.subr.mxu0 0.0
    %6731 = vmatpush1.msra.mxu0 %v6664
    %6732 = vmatprep.subr.mxu0 0.0
    %6733 = vmatpush1.msra.mxu0 %v6665
    %6734 = vmatprep.subr.mxu0 0.0
    %6735 = vmatpush1.msra.mxu0 0.0
    %6736 = vmatprep.subr.mxu0 0.0
    %6737 = vmatpush1.msra.mxu0 0.0
    %6738 = vmatprep.subr.mxu0 0.0
    %6739 = vmatpush1.msra.mxu0 0.0
    %6740 = vmatprep.subr.mxu0 0.0
    %6741 = vmatpush1.msra.mxu0 0.0
    %6742 = vmatprep.subr.mxu0 0.0
    %6743 = vmatpush1.msra.mxu0 0.0
    %6744 = vmatprep.subr.mxu0 0.0
    %6745 = vmatpush1.msra.mxu0 0.0
    %6746 = vmatprep.subr.mxu0 0.0
    %6747 = vmatpush1.msra.mxu0 0.0
    %6748 = vmatprep.subr.mxu0 0.0
    %6749 = vmatpush1.msra.mxu0 0.0
    %6750 = vmatprep.subr.mxu0 0.0
    %6751 = vmatpush1.msra.mxu0 0.0
    %6752 = vmatprep.subr.mxu0 0.0
    %6753 = vmatpush1.msra.mxu0 0.0
    %6754 = vmatprep.subr.mxu0 0.0
    %6755 = vmatpush1.msra.mxu0 0.0
    %6756 = vmatprep.subr.mxu0 0.0
    %6757 = vmatpush1.msra.mxu0 0.0
    %6758 = vmatprep.subr.mxu0 0.0
    %6759 = vmatpush1.msra.mxu0 0.0
    %6760 = vmatprep.subr.mxu0 0.0
    %6761 = vmatpush1.msra.mxu0 0.0
    %6762 = vmatprep.subr.mxu0 0.0
    %6763 = vmatpush1.msra.mxu0 0.0
    %6764 = vmatprep.subr.mxu0 0.0
    %6765 = vmatpush1.msra.mxu0 0.0
    %6766 = vmatprep.mubr.f32.mxu0 0.0
    %6767 = vmatmul.mubr.f32.gmra.mrb[0].mxu0 %v6666
    %v6768 = vpop.f32.mrb[0].mxu0
    %v6769 = vadd.f32 0.0, %v6768
    %v6770 = vpop.f32.mrb[0].mxu0
    %6771 = vmatprep.mubr.f32.mxu0 0.0
    %6772 = vmatmul.mubr.f32.gmra.mrb[0].mxu0 %v6667
    %v6773 = vpop.f32.mrb[0].mxu0
    %v6774 = vadd.f32 0.0, %v6773
    %v6775 = vpop.f32.mrb[0].mxu0
    %6776 = vmatprep.mubr.f32.mxu0 0.0
    %6777 = vmatmul.mubr.f32.gmra.mrb[0].mxu0 %v6668
    %v6778 = vpop.f32.mrb[0].mxu0
    %v6779 = vadd.f32 0.0, %v6778
    %v6780 = vpop.f32.mrb[0].mxu0
    %6781 = vmatprep.mubr.f32.mxu0 0.0
    %6782 = vmatmul.mubr.f32.gmra.mrb[0].mxu0 %v6669
    %v6783 = vpop.f32.mrb[0].mxu0
    %v6784 = vadd.f32 0.0, %v6783
    %v6785 = vpop.f32.mrb[0].mxu0
    %6786 = vmatprep.mubr.f32.mxu0 0.0
    %6787 = vmatmul.mubr.f32.gmra.mrb[0].mxu0 %v6670
    %v6788 = vpop.f32.mrb[0].mxu0
    %v6789 = vadd.f32 0.0, %v6788
    %v6790 = vpop.f32.mrb[0].mxu0
    %6791 = vmatprep.mubr.f32.mxu0 0.0
    %6792 = vmatmul.mubr.f32.gmra.mrb[0].mxu0 %v6671
    %v6793 = vpop.f32.mrb[0].mxu0
    %v6794 = vadd.f32 0.0, %v6793
    %v6795 = vpop.f32.mrb[0].mxu0
    %6796 = vmatprep.mubr.f32.mxu0 0.0
    %6797 = vmatmul.mubr.f32.gmra.mrb[0].mxu0 %v6672
    %v6798 = vpop.f32.mrb[0].mxu0
    %v6799 = vadd.f32 0.0, %v6798
    %v6800 = vpop.f32.mrb[0].mxu0
    %6801 = vmatprep.mubr.f32.mxu0 0.0
    %6802 = vmatmul.mubr.f32.gmra.mrb[0].mxu0 %v6673
    %v6803 = vpop.f32.mrb[0].mxu0
    %v6804 = vadd.f32 0.0, %v6803
    %v6805 = vpop.f32.mrb[0].mxu0
    %6806 = vmatprep.mubr.f32.mxu0 0.0
    %6807 = vmatmul.mubr.f32.gmra.mrb[0].mxu0 %v6674
    %v6808 = vpop.f32.mrb[0].mxu0
    %v6809 = vadd.f32 0.0, %v6808
    %v6810 = vpop.f32.mrb[0].mxu0
    %6811 = vmatprep.mubr.f32.mxu0 0.0
    %6812 = vmatmul.mubr.f32.gmra.mrb[0].mxu0 %v6675
    %v6813 = vpop.f32.mrb[0].mxu0
    %v6814 = vadd.f32 0.0, %v6813
    %v6815 = vpop.f32.mrb[0].mxu0
    %6816 = vmatprep.mubr.f32.mxu0 0.0
    %6817 = vmatmul.mubr.f32.gmra.mrb[0].mxu0 %v6676
    %v6818 = vpop.f32.mrb[0].mxu0
    %v6819 = vadd.f32 0.0, %v6818
    %v6820 = vpop.f32.mrb[0].mxu0
    %6821 = vmatprep.mubr.f32.mxu0 0.0
    %6822 = vmatmul.mubr.f32.gmra.mrb[0].mxu0 %v6677
    %v6823 = vpop.f32.mrb[0].mxu0
    %v6824 = vadd.f32 0.0, %v6823
    %v6825 = vpop.f32.mrb[0].mxu0
    %6826 = vmatprep.mubr.f32.mxu0 0.0
    %6827 = vmatmul.mubr.f32.gmra.mrb[0].mxu0 %v6678
    %v6828 = vpop.f32.mrb[0].mxu0
    %v6829 = vadd.f32 0.0, %v6828
    %v6830 = vpop.f32.mrb[0].mxu0
    %6831 = vmatprep.mubr.f32.mxu0 0.0
    %6832 = vmatmul.mubr.f32.gmra.mrb[0].mxu0 %v6679
    %v6833 = vpop.f32.mrb[0].mxu0
    %v6834 = vadd.f32 0.0, %v6833
    %v6835 = vpop.f32.mrb[0].mxu0
    %6836 = vmatprep.mubr.f32.mxu0 0.0
    %6837 = vmatmul.mubr.f32.gmra.mrb[0].mxu0 %v6680
    %v6838 = vpop.f32.mrb[0].mxu0
    %v6839 = vadd.f32 0.0, %v6838
    %v6840 = vpop.f32.mrb[0].mxu0
    %6841 = vmatprep.mubr.f32.mxu0 0.0
    %6842 = vmatmul.mubr.f32.gmra.mrb[0].mxu0 %v6681
    %v6843 = vpop.f32.mrb[0].mxu0
    %v6844 = vadd.f32 0.0, %v6843
    %v6845 = vpop.f32.mrb[0].mxu0
    %6846 = vmatprep.mubr.f32.mxu0 0.0
    %6847 = vmatmul.mubr.f32.gmra.mrb[0].mxu0 %v6682
    %v6848 = vpop.f32.mrb[0].mxu0
    %v6849 = vadd.f32 0.0, %v6848
    %v6850 = vpop.f32.mrb[0].mxu0
    %6851 = vmatprep.mubr.f32.mxu0 0.0
    %6852 = vmatmul.mubr.f32.gmra.mrb[0].mxu0 %v6683
    %v6853 = vpop.f32.mrb[0].mxu0
    %v6854 = vadd.f32 0.0, %v6853
    %v6855 = vpop.f32.mrb[0].mxu0
    %6856 = vmatprep.mubr.f32.mxu0 0.0
    %6857 = vmatmul.mubr.f32.gmra.mrb[0].mxu0 %v6684
    %v6858 = vpop.f32.mrb[0].mxu0
    %v6859 = vadd.f32 0.0, %v6858
    %v6860 = vpop.f32.mrb[0].mxu0
    %6861 = vmatprep.mubr.f32.mxu0 0.0
    %6862 = vmatmul.mubr.f32.gmra.mrb[0].mxu0 %v6685
    %v6863 = vpop.f32.mrb[0].mxu0
    %v6864 = vadd.f32 0.0, %v6863
    %v6865 = vpop.f32.mrb[0].mxu0
    %6866 = vmatprep.mubr.f32.mxu0 0.0
    %6867 = vmatmul.mubr.f32.gmra.mrb[0].mxu0 %v6686
    %v6868 = vpop.f32.mrb[0].mxu0
    %v6869 = vadd.f32 0.0, %v6868
    %v6870 = vpop.f32.mrb[0].mxu0
    %6871 = vmatprep.mubr.f32.mxu0 0.0
    %6872 = vmatmul.mubr.f32.gmra.mrb[0].mxu0 %v6687
    %v6873 = vpop.f32.mrb[0].mxu0
    %v6874 = vadd.f32 0.0, %v6873
    %v6875 = vpop.f32.mrb[0].mxu0
    %6876 = vmatprep.mubr.f32.mxu0 0.0
    %6877 = vmatmul.mubr.f32.gmra.mrb[0].mxu0 %v6688
    %v6878 = vpop.f32.mrb[0].mxu0
    %v6879 = vadd.f32 0.0, %v6878
    %v6880 = vpop.f32.mrb[0].mxu0
    %6881 = vmatprep.mubr.f32.mxu0 0.0
    %6882 = vmatmul.mubr.f32.gmra.mrb[0].mxu0 %v6689
    %v6883 = vpop.f32.mrb[0].mxu0
    %v6884 = vadd.f32 0.0, %v6883
    %v6885 = vpop.f32.mrb[0].mxu0
    %6886 = vmatprep.mubr.f32.mxu0 0.0
    %6887 = vmatmul.mubr.f32.gmra.mrb[0].mxu0 %v6690
    %v6888 = vpop.f32.mrb[0].mxu0
    %v6889 = vadd.f32 0.0, %v6888
    %v6890 = vpop.f32.mrb[0].mxu0
    %6891 = vmatprep.mubr.f32.mxu0 0.0
    %6892 = vmatmul.mubr.f32.gmra.mrb[0].mxu0 %v6691
    %v6893 = vpop.f32.mrb[0].mxu0
    %v6894 = vadd.f32 0.0, %v6893
    %v6895 = vpop.f32.mrb[0].mxu0
    %6896 = vmatprep.mubr.f32.mxu0 0.0
    %6897 = vmatmul.mubr.f32.gmra.mrb[0].mxu0 %v6692
    %v6898 = vpop.f32.mrb[0].mxu0
    %v6899 = vadd.f32 0.0, %v6898
    %v6900 = vpop.f32.mrb[0].mxu0
    %6901 = vmatprep.mubr.f32.mxu0 0.0
    %6902 = vmatmul.mubr.f32.gmra.mrb[0].mxu0 %v6693
    %v6903 = vpop.f32.mrb[0].mxu0
    %v6904 = vadd.f32 0.0, %v6903
    %v6905 = vpop.f32.mrb[0].mxu0
    %6906 = vmatprep.mubr.f32.mxu0 0.0
    %6907 = vmatmul.mubr.f32.gmra.mrb[0].mxu0 %v6694
    %v6908 = vpop.f32.mrb[0].mxu0
    %v6909 = vadd.f32 0.0, %v6908
    %v6910 = vpop.f32.mrb[0].mxu0
    %6911 = vmatprep.mubr.f32.mxu0 0.0
    %6912 = vmatmul.mubr.f32.gmra.mrb[0].mxu0 %v6695
    %v6913 = vpop.f32.mrb[0].mxu0
    %v6914 = vadd.f32 0.0, %v6913
    %v6915 = vpop.f32.mrb[0].mxu0
    %6916 = vmatprep.mubr.f32.mxu0 0.0
    %6917 = vmatmul.mubr.f32.gmra.mrb[0].mxu0 %v6696
    %v6918 = vpop.f32.mrb[0].mxu0
    %v6919 = vadd.f32 0.0, %v6918
    %v6920 = vpop.f32.mrb[0].mxu0
    %6921 = vmatprep.mubr.f32.mxu0 0.0
    %6922 = vmatmul.mubr.f32.gmra.mrb[0].mxu0 %v6697
    %v6923 = vpop.f32.mrb[0].mxu0
    %v6924 = vadd.f32 0.0, %v6923
    %v6925 = vpop.f32.mrb[0].mxu0
    %6926 = vmatprep.mubr.f32.mxu0 0.0
    %6927 = vmatmul.mubr.f32.gmra.mrb[0].mxu0 %v6698
    %v6928 = vpop.f32.mrb[0].mxu0
    %v6929 = vadd.f32 0.0, %v6928
    %v6930 = vpop.f32.mrb[0].mxu0
    %6931 = vmatprep.mubr.f32.mxu0 0.0
    %6932 = vmatmul.mubr.f32.gmra.mrb[0].mxu0 %v6699
    %v6933 = vpop.f32.mrb[0].mxu0
    %v6934 = vadd.f32 0.0, %v6933
    %v6935 = vpop.f32.mrb[0].mxu0
    %6936 = vmatprep.mubr.f32.mxu0 0.0
    %6937 = vmatmul.mubr.f32.gmra.mrb[0].mxu0 %v6700
    %v6938 = vpop.f32.mrb[0].mxu0
    %v6939 = vadd.f32 0.0, %v6938
    %v6940 = vpop.f32.mrb[0].mxu0
    %6941 = vmatprep.mubr.f32.mxu0 0.0
    %6942 = vmatmul.mubr.f32.gmra.mrb[0].mxu0 %v6701
    %v6943 = vpop.f32.mrb[0].mxu0
    %v6944 = vadd.f32 0.0, %v6943
    %v6945 = vpop.f32.mrb[0].mxu0
    %6946 = vdwg.mxu0
    %v6947 = vsel %vm2897, %v6769, -inf
    %v6948 = vsel %vm2897, %v6789, -inf
    %v6949 = vmax.f32 %v6947, %v6948
    %v6950 = vsel %vm2897, %v6809, -inf
    %v6951 = vmax.f32 %v6949, %v6950
    %v6952 = vsel %vm2897, %v6829, -inf
    %v6953 = vmax.f32 %v6951, %v6952
    %v6954 = vsel %vm2897, %v6849, -inf
    %v6955 = vmax.f32 %v6953, %v6954
    %v6956 = vsel %vm2897, %v6869, -inf
    %v6957 = vmax.f32 %v6955, %v6956
    %v6958 = vsel %vm2897, %v6889, -inf
    %v6959 = vmax.f32 %v6957, %v6958
    %v6960 = vsel %vm2897, %v6909, -inf
    %v6961 = vmax.f32 %v6959, %v6960
    %v6962 = vsel %vm2897, %v6929, -inf
    %v6963 = vmax.f32 %v6961, %v6962
    %v6964 = vsel %vm2897, %v6774, -inf
    %v6965 = vsel %vm2897, %v6794, -inf
    %v6966 = vmax.f32 %v6964, %v6965
    %v6967 = vsel %vm2897, %v6814, -inf
    %v6968 = vmax.f32 %v6966, %v6967
    %v6969 = vsel %vm2897, %v6834, -inf
    %v6970 = vmax.f32 %v6968, %v6969
    %v6971 = vsel %vm2897, %v6854, -inf
    %v6972 = vmax.f32 %v6970, %v6971
    %v6973 = vsel %vm2897, %v6874, -inf
    %v6974 = vmax.f32 %v6972, %v6973
    %v6975 = vsel %vm2897, %v6894, -inf
    %v6976 = vmax.f32 %v6974, %v6975
    %v6977 = vsel %vm2897, %v6914, -inf
    %v6978 = vmax.f32 %v6976, %v6977
    %v6979 = vsel %vm2897, %v6934, -inf
    %v6980 = vmax.f32 %v6978, %v6979
    %v6981 = vsel %vm2897, %v6779, -inf
    %v6982 = vsel %vm2897, %v6799, -inf
    %v6983 = vmax.f32 %v6981, %v6982
    %v6984 = vsel %vm2897, %v6819, -inf
    %v6985 = vmax.f32 %v6983, %v6984
    %v6986 = vsel %vm2897, %v6839, -inf
    %v6987 = vmax.f32 %v6985, %v6986
    %v6988 = vsel %vm2897, %v6859, -inf
    %v6989 = vmax.f32 %v6987, %v6988
    %v6990 = vsel %vm2897, %v6879, -inf
    %v6991 = vmax.f32 %v6989, %v6990
    %v6992 = vsel %vm2897, %v6899, -inf
    %v6993 = vmax.f32 %v6991, %v6992
    %v6994 = vsel %vm2897, %v6919, -inf
    %v6995 = vmax.f32 %v6993, %v6994
    %v6996 = vsel %vm2897, %v6939, -inf
    %v6997 = vmax.f32 %v6995, %v6996
    %v6998 = vsel %vm2897, %v6784, -inf
    %v6999 = vsel %vm2897, %v6804, -inf
    %v7000 = vmax.f32 %v6998, %v6999
    %v7001 = vsel %vm2897, %v6824, -inf
    %v7002 = vmax.f32 %v7000, %v7001
    %v7003 = vsel %vm2897, %v6844, -inf
    %v7004 = vmax.f32 %v7002, %v7003
    %v7005 = vsel %vm2897, %v6864, -inf
    %v7006 = vmax.f32 %v7004, %v7005
    %v7007 = vsel %vm2897, %v6884, -inf
    %v7008 = vmax.f32 %v7006, %v7007
    %v7009 = vsel %vm2897, %v6904, -inf
    %v7010 = vmax.f32 %v7008, %v7009
    %v7011 = vsel %vm2897, %v6924, -inf
    %v7012 = vmax.f32 %v7010, %v7011
    %v7013 = vsel %vm2897, %v6944, -inf
    %v7014 = vmax.f32 %v7012, %v7013
    %7015 = vst.msk [vmem:[#allocation2] sm:$0xff] %vm2897, %v6963
    %7016 = vst.msk [vmem:[#allocation2 + $0x8] sm:$0xff] %vm2897, %v6980
    %7017 = vst.msk [vmem:[#allocation2 + $0x10] sm:$0xff] %vm2897, %v6997
    %7018 = vst.msk [vmem:[#allocation2 + $0x18] sm:$0xff] %vm2897, %v7014
    // Predicated region
    $region30: #{bit_embeddings_forward.1} parent=1 // pred_check
      _
    $region31: #{bit_embeddings_forward.1} parent=1 // pred_check_branch
      %7020 = sbr.rel (0) target = $region33
    $region32: #{bit_embeddings_forward.1} parent=1 // pred_region
      %s7022 = ssub.s32 512, 512
      %7023 = vsyncadd [#allocation3], %s7022
      %s7024 = sshll.u32 [#allocation2], 4
      %s7025 = int_to_ptr.vmem [resolvable:$true] %s7024
      %7030 = dma.vmem_to_hbm [thread:$0]  %s7025, 512, %s7, [#allocation3], 128, 128, 8
    $region33: #{bit_embeddings_forward.1} parent=1 // pred_fallthru
      _
    // Predicated region
    $region34: #{bit_embeddings_forward.1} parent=1 // pred_check
      _
    $region35: #{bit_embeddings_forward.1} parent=1 // pred_check_branch
      %7032 = sbr.rel (0) target = $region37
    $region36: #{bit_embeddings_forward.1} parent=1 // pred_region
      %7033 = dma.done [#allocation3], 512
    $region37: #{bit_embeddings_forward.1} parent=1 // pred_fallthru
      _
    %7034 = vsyncpa [#allocation3], 1

</llo_original>
